<compile_context>
chip_gen: v7x
topology: tpu7x:2x2x1
jax: 0.10.0
libtpu: 0.0.40
codegen_flags: <defaults>
</compile_context>

<pallas_src>
import functools

import jax
import jax.numpy as jnp
import numpy as np
from jax import lax
from jax.experimental import pallas as pl
from jax.experimental.pallas import tpu as pltpu

LEAKY_SLOPE = 0.01            # nn.LeakyReLU default negative_slope

# Geometry fixed by the module (fc1 expects 32*16*9 = 4608 inputs):
#   obs (B,3,128,72) --conv1(k8,s4,p2)--> (B,16,32,18) --conv2(k4,s2,p1)--> (B,32,16,9)
H_IN, W_IN = 128, 72
H1, W1 = 32, 18               # conv1 output spatial
H2, W2 = 16, 9                # conv2 output spatial
C1, C2 = 16, 32               # conv output channels
K1 = 3 * 8 * 8                # conv1 patch length, k = (ci, i, j) -> 192
FM_W = (W1 + 2) * C1          # 320 : feature-map row = (w_pad, ci), w padded by 1
A2_COLS = W2 * C2             # 288 : conv2 output columns = (wo, co)

# conv1 column groups (split so both feature-map writes start at lane 0 / 128)
W_SPLIT = 7                   # group A: w = 0..6, group B: w = 7..17
GA_K = W_SPLIT * K1           # 1344
GB_K = (W1 - W_SPLIT) * K1    # 2112
GA_N = C1 + W_SPLIT * C1      # 128  (16 left-pad cols + 7*16)
GB_N = FM_W - GA_N            # 192  (11*16 + 16 right-pad cols)


# ---------------------------------------------------------------------------
# Fused kernel: conv1 + conv2 + fc1 + fc2 (+ LeakyReLU), one batch tile/step.
# ---------------------------------------------------------------------------
def _bird_dqn_kernel(lhsa_ref, lhsb_ref, w1a_ref, w1b_ref, b1_ref,
                     w2_ref, b2_ref, w3_ref, b3_ref, w4_ref, b4_ref,
                     out_ref, fm_ref, a2_ref):
    tb = out_ref.shape[0]              # batch-tile size
    r16 = 16 * tb                      # rows per h-parity slab

    def leaky(x):
        return jnp.where(x >= 0, x, LEAKY_SLOPE * x)

    # Zero only the top/bottom pad rows of the feature map (the 16-col side
    # pads are baked into conv1's weights; everything else is overwritten).
    zrow = jnp.zeros((tb, FM_W), jnp.bfloat16)
    for p in range(2):
        fm_ref[p, 0:tb, :] = zrow
        fm_ref[p, 17 * tb:18 * tb, :] = zrow

    # ---- conv1: two batched MXU matmuls, rows = (p, h', b) ------------------
    a1a = jnp.dot(lhsa_ref[...], w1a_ref[...], preferred_element_type=jnp.float32)
    a1a = leaky(a1a + b1_ref[:, 0:GA_N]).astype(jnp.bfloat16)
    a1b = jnp.dot(lhsb_ref[...], w1b_ref[...], preferred_element_type=jnp.float32)
    a1b = leaky(a1b + b1_ref[:, GA_N:FM_W]).astype(jnp.bfloat16)

    # Scatter into the zero-padded, h-parity-split feature map: 4 slab writes,
    # all starting at lane offset 0 or 128.
    for p in range(2):
        fm_ref[p, tb:17 * tb, 0:GA_N] = a1a[p * r16:(p + 1) * r16, :]
        fm_ref[p, tb:17 * tb, GA_N:FM_W] = a1b[p * r16:(p + 1) * r16, :]

    # ---- conv2: 4 vertical taps, each ONE batched matmul with M = 16*tb -----
    # fm rows are (row_pad, b) so every tap is a contiguous slab across batch.
    taps = ((1, 0), (0, 1), (1, 1), (0, 2))            # (h-parity, row offset)
    acc = None
    for i, (p, off) in enumerate(taps):
        d = jnp.dot(fm_ref[p, off * tb:off * tb + r16, :], w2_ref[i],
                    preferred_element_type=jnp.float32)
        acc = d if acc is None else acc + d
    a2_ref[...] = leaky(acc + b2_ref[...]).astype(jnp.bfloat16)

    # ---- fc1: 16 accumulating matmuls with M = tb ----------------------------
    # PyTorch's C-major view(B,-1) flatten is folded into w3's blocks.
    h = None
    for ho in range(H2):
        d = jnp.dot(a2_ref[ho * tb:(ho + 1) * tb, :], w3_ref[ho],
                    preferred_element_type=jnp.float32)
        h = d if h is None else h + d
    h = leaky(h + b3_ref[...]).astype(jnp.bfloat16)

    # ---- fc2 (output padded to 128 lanes; real Q-values in the first cols) --
    out_ref[...] = (jnp.dot(h, w4_ref[...], preferred_element_type=jnp.float32)
                    + b4_ref[...])


def _fused_forward(kp, lhsa, lhsb, n_tiles, tb):
    rows = 32 * tb
    b_pad = n_tiles * tb

    flops = 2 * b_pad * (32 * (GA_K * GA_N + GB_K * GB_N)
                         + 4 * H2 * FM_W * A2_COLS
                         + H2 * A2_COLS * 128
                         + 128 * 128)
    bytes_accessed = int(sum(int(v.size) * v.dtype.itemsize for v in kp.values())
                         + int(lhsa.size) * 2 + int(lhsb.size) * 2
                         + b_pad * 128 * 4)

    def wspec(shape):                      # weight: full block, VMEM-resident
        if len(shape) == 2:
            return pl.BlockSpec(shape, lambda g: (0, 0))
        return pl.BlockSpec(shape, lambda g: (0, 0, 0))

    return pl.pallas_call(
        _bird_dqn_kernel,
        out_shape=jax.ShapeDtypeStruct((b_pad, 128), jnp.float32),
        grid=(n_tiles,),
        in_specs=[
            pl.BlockSpec((rows, GA_K), lambda g: (g, 0)),   # conv1 patches, grp A
            pl.BlockSpec((rows, GB_K), lambda g: (g, 0)),   # conv1 patches, grp B
            wspec((GA_K, GA_N)),                            # conv1 weight, grp A
            wspec((GB_K, GB_N)),                            # conv1 weight, grp B
            wspec((1, FM_W)),                               # conv1 bias (fm-row layout)
            wspec((4, FM_W, A2_COLS)),                      # conv2 banded weights
            wspec((1, A2_COLS)),                            # conv2 bias (tiled over wo)
            wspec((H2, A2_COLS, 128)),                      # fc1 weight, one block / ho
            wspec((1, 128)),                                # fc1 bias
            wspec((128, 128)),                              # fc2 weight (padded)
            wspec((1, 128)),                                # fc2 bias (padded)
        ],
        out_specs=pl.BlockSpec((tb, 128), lambda g: (g, 0)),
        scratch_shapes=[
            pltpu.VMEM((2, 18 * tb, FM_W), jnp.bfloat16),   # padded feature map
            pltpu.VMEM((16 * tb, A2_COLS), jnp.bfloat16),   # conv2 activations
        ],
        compiler_params=pltpu.CompilerParams(
            dimension_semantics=("parallel",),              # batch tiles -> 2 TCs on v7x
            vmem_limit_bytes=48 * 1024 * 1024,
        ),
        cost_estimate=pl.CostEstimate(flops=flops, transcendentals=0,
                                      bytes_accessed=bytes_accessed),
    )(lhsa, lhsb, kp["w1ga"], kp["w1gb"], kp["b1p"], kp["w2bd"], kp["b2t"],
      kp["w3blk"], kp["b3"], kp["w4p"], kp["b4p"])


# ---------------------------------------------------------------------------
# Wrapper-side conv1 im2col (raw observation only; layout matches the kernel).
# ---------------------------------------------------------------------------
def _conv1_patches(obs, n_tiles, tb):
    """obs (B,3,128,72), B = n_tiles*tb -> two patch matrices whose rows are
    ordered (tile, h-parity, h', b-in-tile) and whose cols are (w, ci, i, j)."""
    b_pad = obs.shape[0]
    xp = jnp.pad(obs, ((0, 0), (0, 0), (2, 2), (2, 2)))          # (B,3,132,76)
    # stride 4, kernel 8: every 8x8 patch is 2x2 aligned 4x4 blocks.
    blk = xp.reshape(b_pad, 3, 33, 4, 19, 4)                     # [b,c,hb,ir,wb,jr]
    pat = jnp.stack(
        [jnp.stack([blk[:, :, ib:ib + H1, :, jb:jb + W1, :] for jb in range(2)],
                   axis=0) for ib in range(2)],
        axis=0)                                                  # [ib,jb,b,c,h,ir,w,jr]
    pat = pat.transpose(4, 2, 6, 3, 0, 5, 1, 7)                  # [h,b,w,c,ib,ir,jb,jr]
    pat = pat.reshape(H1 // 2, 2, b_pad, W1, K1)                 # [h',p,b,w,k]
    pat = pat.transpose(1, 0, 2, 3, 4)                           # [p,h',b,w,k]
    pat = pat.reshape(2, H1 // 2, n_tiles, tb, W1, K1)
    pat = pat.transpose(2, 0, 1, 3, 4, 5)                        # [tile,p,h',b_t,w,k]
    rows = n_tiles * 32 * tb
    lhsa = pat[..., :W_SPLIT, :].reshape(rows, GA_K).astype(jnp.bfloat16)
    lhsb = pat[..., W_SPLIT:, :].reshape(rows, GB_K).astype(jnp.bfloat16)
    return lhsa, lhsb


def _pick_tb(batch):
    """Batch-tile size: big enough to feed the MXU, without excess padding."""
    if batch <= 8:
        return batch
    pad8 = -(-batch // 8) * 8
    for tb in (32, 16, 8):
        if -(-batch // tb) * tb <= pad8:
            return tb
    return 8


def bird_dqn_forward(kparams, obs, *, actions_num):
    B, C, H, W = obs.shape
    assert C == 3 and (H, W) == (H_IN, W_IN), \
        "fc1 (4608 inputs) requires 3x128x72 observations"
    tb = _pick_tb(B)
    n_tiles = -(-B // tb)
    b_pad = n_tiles * tb
    if b_pad != B:
        obs = jnp.pad(obs, ((0, b_pad - B), (0, 0), (0, 0), (0, 0)))
    lhsa, lhsb = _conv1_patches(obs, n_tiles, tb)
    q = _fused_forward(kparams, lhsa, lhsb, n_tiles, tb)
    return q[:B, :actions_num]


# ---------------------------------------------------------------------------
# Parameters: PyTorch-layout init + one-time repack into kernel layout.
# ---------------------------------------------------------------------------
def init_torch_params(key, actions_num):
    ks = jax.random.split(key, 8)

    def u(k, shape, fan_in):
        bound = 1.0 / np.sqrt(float(fan_in))
        return jax.random.uniform(k, shape, jnp.float32, -bound, bound)

    flat = C2 * H2 * W2   # 4608
    return {
        "conv1_w": u(ks[0], (C1, 3, 8, 8), 3 * 8 * 8),
        "conv1_b": u(ks[1], (C1,), 3 * 8 * 8),
        "conv2_w": u(ks[2], (C2, C1, 4, 4), C1 * 4 * 4),
        "conv2_b": u(ks[3], (C2,), C1 * 4 * 4),
        "fc1_w":   u(ks[4], (128, flat), flat),
        "fc1_b":   u(ks[5], (128,), flat),
        "fc2_w":   u(ks[6], (actions_num, 128), 128),
        "fc2_b":   u(ks[7], (actions_num,), 128),
    }


def prepare_kernel_params(tp):
    """Init-time repack of PyTorch-layout weights into the fused-kernel layout."""
    w1 = np.asarray(tp["conv1_w"], np.float32)
    b1 = np.asarray(tp["conv1_b"], np.float32)
    w2 = np.asarray(tp["conv2_w"], np.float32)
    b2 = np.asarray(tp["conv2_b"], np.float32)
    w3 = np.asarray(tp["fc1_w"], np.float32)
    b3 = np.asarray(tp["fc1_b"], np.float32)
    w4 = np.asarray(tp["fc2_w"], np.float32)
    b4 = np.asarray(tp["fc2_b"], np.float32)

    # conv1: block-diagonal over output width, split into 2 lane-aligned column
    # groups; the 16-col horizontal fm padding is baked in as zero weight cols,
    # so the matmul output drops into the padded feature map at lane 0 / 128.
    w1mat = w1.reshape(C1, K1).T                                   # (192,16), k=(ci,i,j)
    w1ga = np.zeros((GA_K, GA_N), np.float32)
    for wl in range(W_SPLIT):                                      # w = wl
        w1ga[wl * K1:(wl + 1) * K1, C1 + wl * C1:C1 + (wl + 1) * C1] = w1mat
    w1gb = np.zeros((GB_K, GB_N), np.float32)
    for wl in range(W1 - W_SPLIT):                                 # w = 7 + wl
        w1gb[wl * K1:(wl + 1) * K1, wl * C1:(wl + 1) * C1] = w1mat
    b1p = np.zeros((1, FM_W), np.float32)
    for w in range(W1):
        b1p[0, C1 + w * C1:C1 + (w + 1) * C1] = b1

    # conv2: per vertical tap i, a banded matrix folding horizontal taps j and
    # the channel contraction:  (w_pad, ci) -> (wo, co).
    w2bd = np.zeros((4, FM_W, A2_COLS), np.float32)
    for i in range(4):
        for j in range(4):
            blkw = w2[:, :, i, j].T                                # (ci, co)
            for wo in range(W2):
                wp = 2 * wo + j                                    # padded in-col
                w2bd[i, wp * C1:(wp + 1) * C1, wo * C2:(wo + 1) * C2] = blkw
    b2t = np.tile(b2, W2)[None, :]                                 # (1, 288)

    # fc1: fold PyTorch's C-major view(B,-1) flatten into the weight layout:
    # w3blk[ho, wo*32 + co, n] = fc1_w[n, co*144 + ho*9 + wo]
    w3blk = (w3.reshape(128, C2, H2, W2)
               .transpose(2, 3, 1, 0)
               .reshape(H2, A2_COLS, 128))

    # fc2: pre-transposed + zero-padded to 128 output lanes (lane-dense store).
    acts = w4.shape[0]
    w4p = np.zeros((128, 128), np.float32)
    w4p[:, :acts] = w4.T
    b4p = np.zeros((1, 128), np.float32)
    b4p[0, :acts] = b4

    return {
        "w1ga": jnp.asarray(w1ga, jnp.bfloat16),
        "w1gb": jnp.asarray(w1gb, jnp.bfloat16),
        "b1p": jnp.asarray(b1p, jnp.float32),
        "w2bd": jnp.asarray(w2bd, jnp.bfloat16),
        "b2t": jnp.asarray(b2t, jnp.float32),
        "w3blk": jnp.asarray(w3blk, jnp.bfloat16),
        "b3": jnp.asarray(b3[None, :], jnp.float32),
        "w4p": jnp.asarray(w4p, jnp.bfloat16),
        "b4p": jnp.asarray(b4p, jnp.float32),
    }


# ---------------------------------------------------------------------------
# Pure-JAX f32 reference (mirrors the PyTorch module) for a numerical check.
# ---------------------------------------------------------------------------
def reference_forward(tp, obs):
    def leaky(x):
        return jnp.where(x >= 0, x, LEAKY_SLOPE * x)
    dn = ("NCHW", "OIHW", "NCHW")
    hp = lax.Precision.HIGHEST
    x = lax.conv_general_dilated(obs, tp["conv1_w"], (4, 4), ((2, 2), (2, 2)),
                                 dimension_numbers=dn, precision=hp)
    x = leaky(x + tp["conv1_b"][None, :, None, None])
    x = lax.conv_general_dilated(x, tp["conv2_w"], (2, 2), ((1, 1), (1, 1)),
                                 dimension_numbers=dn, precision=hp)
    x = leaky(x + tp["conv2_b"][None, :, None, None])
    x = x.reshape(x.shape[0], -1)
    x = leaky(jnp.dot(x, tp["fc1_w"].T, precision=hp) + tp["fc1_b"])
    return jnp.dot(x, tp["fc2_w"].T, precision=hp) + tp["fc2_b"]


if __name__ == "__main__":
    key = jax.random.PRNGKey(0)
    k_params, k_obs = jax.random.split(key)

    actions_num = 2                 # Flappy Bird: {do nothing, flap}
    torch_params = init_torch_params(k_params, actions_num)
    kparams = prepare_kernel_params(torch_params)

    fwd = jax.jit(functools.partial(bird_dqn_forward, actions_num=actions_num))
    ref = jax.jit(reference_forward)

    # batch=2: single-step grid; batch=20: batch padding + 3-step parallel grid.
    for batch in (2, 20):
        obs = jax.random.normal(jax.random.fold_in(k_obs, batch),
                                (batch, 3, H_IN, W_IN), dtype=jnp.float32)
        q = jax.block_until_ready(fwd(kparams, obs))
        assert q.shape == (batch, actions_num) and q.dtype == jnp.float32

        # Numerical sanity check against the f32 reference (bf16 weights/acts).
        q_ref = jax.block_until_ready(ref(torch_params, obs))
        err = float(jnp.max(jnp.abs(q - q_ref)))
        assert err < 3e-2, f"batch={batch}: kernel/reference mismatch {err}"

    print("KERNEL_OK")
</pallas_src>

<mosaic_0001>
module attributes {stable_mosaic.version = 11 : i64} {
  func.func @_bird_dqn_kernel(%arg0: i32, %arg1: memref<64x1344xbf16, #tpu.memory_space<vmem>>, %arg2: memref<64x2112xbf16, #tpu.memory_space<vmem>>, %arg3: memref<1344x128xbf16, #tpu.memory_space<vmem>>, %arg4: memref<2112x192xbf16, #tpu.memory_space<vmem>>, %arg5: memref<1x320xf32, #tpu.memory_space<vmem>>, %arg6: memref<4x320x288xbf16, #tpu.memory_space<vmem>>, %arg7: memref<1x288xf32, #tpu.memory_space<vmem>>, %arg8: memref<16x288x128xbf16, #tpu.memory_space<vmem>>, %arg9: memref<1x128xf32, #tpu.memory_space<vmem>>, %arg10: memref<128x128xbf16, #tpu.memory_space<vmem>>, %arg11: memref<1x128xf32, #tpu.memory_space<vmem>>, %arg12: memref<2x128xf32, #tpu.memory_space<vmem>>, %arg13: memref<2x36x320xbf16, #tpu.memory_space<vmem>>, %arg14: memref<32x288xbf16, #tpu.memory_space<vmem>>) attributes {dimension_semantics = [#tpu.dimension_semantics<parallel>], iteration_bounds = array<i64: 1>, scalar_prefetch = 0 : i64, scratch_operands = 2 : i64, tpu.core_type = #tpu.core_type<tc>, window_params = [{transform_indices = @transform_0, window_bounds = array<i64: 64, 1344>}, {transform_indices = @transform_1, window_bounds = array<i64: 64, 2112>}, {pipeline_mode = #tpu.pipeline_mode<synchronous>, transform_indices = @transform_2, window_bounds = array<i64: 1344, 128>}, {pipeline_mode = #tpu.pipeline_mode<synchronous>, transform_indices = @transform_3, window_bounds = array<i64: 2112, 192>}, {pipeline_mode = #tpu.pipeline_mode<synchronous>, transform_indices = @transform_4, window_bounds = array<i64: 1, 320>}, {pipeline_mode = #tpu.pipeline_mode<synchronous>, transform_indices = @transform_5, window_bounds = array<i64: 4, 320, 288>}, {pipeline_mode = #tpu.pipeline_mode<synchronous>, transform_indices = @transform_6, window_bounds = array<i64: 1, 288>}, {pipeline_mode = #tpu.pipeline_mode<synchronous>, transform_indices = @transform_7, window_bounds = array<i64: 16, 288, 128>}, {pipeline_mode = #tpu.pipeline_mode<synchronous>, transform_indices = @transform_8, window_bounds = array<i64: 1, 128>}, {pipeline_mode = #tpu.pipeline_mode<synchronous>, transform_indices = @transform_9, window_bounds = array<i64: 128, 128>}, {pipeline_mode = #tpu.pipeline_mode<synchronous>, transform_indices = @transform_10, window_bounds = array<i64: 1, 128>}, {transform_indices = @transform_11, window_bounds = array<i64: 2, 128>}]} {
    %cst = arith.constant 0.000000e+00 : bf16
    %0 = vector.broadcast %cst : bf16 to vector<2x320xbf16>
    %c0 = arith.constant 0 : index
    %c0_0 = arith.constant 0 : index
    %c0_1 = arith.constant 0 : index
    %1 = vector.load %arg13[%c0, %c0_0, %c0_1] : memref<2x36x320xbf16, #tpu.memory_space<vmem>>, vector<1x2x320xbf16>
    %2 = vector.shape_cast %1 : vector<1x2x320xbf16> to vector<2x320xbf16>
    %3 = vector.shape_cast %0 : vector<2x320xbf16> to vector<1x2x320xbf16>
    tpu.vector_store %arg13[%c0, %c0_0, %c0_1], %3 {strides = array<i32>} : memref<2x36x320xbf16, #tpu.memory_space<vmem>>, vector<1x2x320xbf16>,
    %c0_2 = arith.constant 0 : index
    %c34 = arith.constant 34 : index
    %c0_3 = arith.constant 0 : index
    %4 = vector.load %arg13[%c0_2, %c34, %c0_3] : memref<2x36x320xbf16, #tpu.memory_space<vmem>>, vector<1x2x320xbf16>
    %5 = vector.shape_cast %4 : vector<1x2x320xbf16> to vector<2x320xbf16>
    %6 = vector.shape_cast %0 : vector<2x320xbf16> to vector<1x2x320xbf16>
    tpu.vector_store %arg13[%c0_2, %c34, %c0_3], %6 {strides = array<i32>} : memref<2x36x320xbf16, #tpu.memory_space<vmem>>, vector<1x2x320xbf16>,
    %c1 = arith.constant 1 : index
    %c0_4 = arith.constant 0 : index
    %c0_5 = arith.constant 0 : index
    %7 = vector.load %arg13[%c1, %c0_4, %c0_5] : memref<2x36x320xbf16, #tpu.memory_space<vmem>>, vector<1x2x320xbf16>
    %8 = vector.shape_cast %7 : vector<1x2x320xbf16> to vector<2x320xbf16>
    %9 = vector.shape_cast %0 : vector<2x320xbf16> to vector<1x2x320xbf16>
    tpu.vector_store %arg13[%c1, %c0_4, %c0_5], %9 {strides = array<i32>} : memref<2x36x320xbf16, #tpu.memory_space<vmem>>, vector<1x2x320xbf16>,
    %c1_6 = arith.constant 1 : index
    %c34_7 = arith.constant 34 : index
    %c0_8 = arith.constant 0 : index
    %10 = vector.load %arg13[%c1_6, %c34_7, %c0_8] : memref<2x36x320xbf16, #tpu.memory_space<vmem>>, vector<1x2x320xbf16>
    %11 = vector.shape_cast %10 : vector<1x2x320xbf16> to vector<2x320xbf16>
    %12 = vector.shape_cast %0 : vector<2x320xbf16> to vector<1x2x320xbf16>
    tpu.vector_store %arg13[%c1_6, %c34_7, %c0_8], %12 {strides = array<i32>} : memref<2x36x320xbf16, #tpu.memory_space<vmem>>, vector<1x2x320xbf16>,
    %c0_9 = arith.constant 0 : index
    %c0_10 = arith.constant 0 : index
    %13 = vector.load %arg1[%c0_9, %c0_10] : memref<64x1344xbf16, #tpu.memory_space<vmem>>, vector<64x1344xbf16>
    %c0_11 = arith.constant 0 : index
    %c0_12 = arith.constant 0 : index
    %14 = vector.load %arg3[%c0_11, %c0_12] : memref<1344x128xbf16, #tpu.memory_space<vmem>>, vector<1344x128xbf16>
    %cst_13 = arith.constant dense<0.000000e+00> : vector<64x128xf32>
    %15 = tpu.matmul %13, %14, %cst_13 {dimension_numbers = #tpu.dot_dimension_numbers<[1], [0], [0], [1], [0, 0, 1, 1], [], []>} : vector<64x1344xbf16>, vector<1344x128xbf16>, vector<64x128xf32> -> vector<64x128xf32>
    %c0_14 = arith.constant 0 : index
    %c0_15 = arith.constant 0 : index
    %16 = vector.load %arg5[%c0_14, %c0_15] : memref<1x320xf32, #tpu.memory_space<vmem>>, vector<1x128xf32>
    %17 = vector.broadcast %16 : vector<1x128xf32> to vector<64x128xf32>
    %18 = arith.addf %15, %17 : vector<64x128xf32>
    %cst_16 = arith.constant 0.000000e+00 : f32
    %19 = vector.broadcast %cst_16 : f32 to vector<64x128xf32>
    %20 = arith.cmpf oge, %18, %19 : vector<64x128xf32>
    %cst_17 = arith.constant 0.00999999977 : f32
    %21 = vector.broadcast %cst_17 : f32 to vector<64x128xf32>
    %22 = arith.mulf %21, %18 : vector<64x128xf32>
    %23 = arith.select %20, %18, %22 : vector<64x128xi1>, vector<64x128xf32>
    %24 = arith.truncf %23 : vector<64x128xf32> to vector<64x128xbf16>
    %c0_18 = arith.constant 0 : index
    %c0_19 = arith.constant 0 : index
    %25 = vector.load %arg2[%c0_18, %c0_19] : memref<64x2112xbf16, #tpu.memory_space<vmem>>, vector<64x2112xbf16>
    %c0_20 = arith.constant 0 : index
    %c0_21 = arith.constant 0 : index
    %26 = vector.load %arg4[%c0_20, %c0_21] : memref<2112x192xbf16, #tpu.memory_space<vmem>>, vector<2112x192xbf16>
    %cst_22 = arith.constant dense<0.000000e+00> : vector<64x192xf32>
    %27 = tpu.matmul %25, %26, %cst_22 {dimension_numbers = #tpu.dot_dimension_numbers<[1], [0], [0], [1], [0, 0, 1, 1], [], []>} : vector<64x2112xbf16>, vector<2112x192xbf16>, vector<64x192xf32> -> vector<64x192xf32>
    %c0_23 = arith.constant 0 : index
    %c128 = arith.constant 128 : index
    %28 = vector.load %arg5[%c0_23, %c128] : memref<1x320xf32, #tpu.memory_space<vmem>>, vector<1x192xf32>
    %29 = vector.broadcast %28 : vector<1x192xf32> to vector<64x192xf32>
    %30 = arith.addf %27, %29 : vector<64x192xf32>
    %cst_24 = arith.constant 0.000000e+00 : f32
    %31 = vector.broadcast %cst_24 : f32 to vector<64x192xf32>
    %32 = arith.cmpf oge, %30, %31 : vector<64x192xf32>
    %cst_25 = arith.constant 0.00999999977 : f32
    %33 = vector.broadcast %cst_25 : f32 to vector<64x192xf32>
    %34 = arith.mulf %33, %30 : vector<64x192xf32>
    %35 = arith.select %32, %30, %34 : vector<64x192xi1>, vector<64x192xf32>
    %36 = arith.truncf %35 : vector<64x192xf32> to vector<64x192xbf16>
    %37 = vector.extract_strided_slice %24 {offsets = [0, 0], sizes = [32, 128], strides = [1, 1]} : vector<64x128xbf16> to vector<32x128xbf16>
    %c0_26 = arith.constant 0 : index
    %c2 = arith.constant 2 : index
    %c0_27 = arith.constant 0 : index
    %38 = vector.load %arg13[%c0_26, %c2, %c0_27] : memref<2x36x320xbf16, #tpu.memory_space<vmem>>, vector<1x32x128xbf16>
    %39 = vector.shape_cast %38 : vector<1x32x128xbf16> to vector<32x128xbf16>
    %40 = vector.shape_cast %37 : vector<32x128xbf16> to vector<1x32x128xbf16>
    tpu.vector_store %arg13[%c0_26, %c2, %c0_27], %40 {strides = array<i32>} : memref<2x36x320xbf16, #tpu.memory_space<vmem>>, vector<1x32x128xbf16>,
    %41 = vector.extract_strided_slice %36 {offsets = [0, 0], sizes = [32, 192], strides = [1, 1]} : vector<64x192xbf16> to vector<32x192xbf16>
    %c0_28 = arith.constant 0 : index
    %c2_29 = arith.constant 2 : index
    %c128_30 = arith.constant 128 : index
    %42 = vector.load %arg13[%c0_28, %c2_29, %c128_30] : memref<2x36x320xbf16, #tpu.memory_space<vmem>>, vector<1x32x192xbf16>
    %43 = vector.shape_cast %42 : vector<1x32x192xbf16> to vector<32x192xbf16>
    %44 = vector.shape_cast %41 : vector<32x192xbf16> to vector<1x32x192xbf16>
    tpu.vector_store %arg13[%c0_28, %c2_29, %c128_30], %44 {strides = array<i32>} : memref<2x36x320xbf16, #tpu.memory_space<vmem>>, vector<1x32x192xbf16>,
    %45 = vector.extract_strided_slice %24 {offsets = [32, 0], sizes = [32, 128], strides = [1, 1]} : vector<64x128xbf16> to vector<32x128xbf16>
    %c1_31 = arith.constant 1 : index
    %c2_32 = arith.constant 2 : index
    %c0_33 = arith.constant 0 : index
    %46 = vector.load %arg13[%c1_31, %c2_32, %c0_33] : memref<2x36x320xbf16, #tpu.memory_space<vmem>>, vector<1x32x128xbf16>
    %47 = vector.shape_cast %46 : vector<1x32x128xbf16> to vector<32x128xbf16>
    %48 = vector.shape_cast %45 : vector<32x128xbf16> to vector<1x32x128xbf16>
    tpu.vector_store %arg13[%c1_31, %c2_32, %c0_33], %48 {strides = array<i32>} : memref<2x36x320xbf16, #tpu.memory_space<vmem>>, vector<1x32x128xbf16>,
    %49 = vector.extract_strided_slice %36 {offsets = [32, 0], sizes = [32, 192], strides = [1, 1]} : vector<64x192xbf16> to vector<32x192xbf16>
    %c1_34 = arith.constant 1 : index
    %c2_35 = arith.constant 2 : index
    %c128_36 = arith.constant 128 : index
    %50 = vector.load %arg13[%c1_34, %c2_35, %c128_36] : memref<2x36x320xbf16, #tpu.memory_space<vmem>>, vector<1x32x192xbf16>
    %51 = vector.shape_cast %50 : vector<1x32x192xbf16> to vector<32x192xbf16>
    %52 = vector.shape_cast %49 : vector<32x192xbf16> to vector<1x32x192xbf16>
    tpu.vector_store %arg13[%c1_34, %c2_35, %c128_36], %52 {strides = array<i32>} : memref<2x36x320xbf16, #tpu.memory_space<vmem>>, vector<1x32x192xbf16>,
    %c1_37 = arith.constant 1 : index
    %c0_38 = arith.constant 0 : index
    %c0_39 = arith.constant 0 : index
    %53 = vector.load %arg13[%c1_37, %c0_38, %c0_39] : memref<2x36x320xbf16, #tpu.memory_space<vmem>>, vector<1x32x320xbf16>
    %54 = vector.shape_cast %53 : vector<1x32x320xbf16> to vector<32x320xbf16>
    %c0_40 = arith.constant 0 : index
    %c0_41 = arith.constant 0 : index
    %c0_42 = arith.constant 0 : index
    %55 = vector.load %arg6[%c0_40, %c0_41, %c0_42] : memref<4x320x288xbf16, #tpu.memory_space<vmem>>, vector<1x320x288xbf16>
    %56 = vector.shape_cast %55 : vector<1x320x288xbf16> to vector<320x288xbf16>
    %cst_43 = arith.constant dense<0.000000e+00> : vector<32x288xf32>
    %57 = tpu.matmul %54, %56, %cst_43 {dimension_numbers = #tpu.dot_dimension_numbers<[1], [0], [0], [1], [0, 0, 1, 1], [], []>} : vector<32x320xbf16>, vector<320x288xbf16>, vector<32x288xf32> -> vector<32x288xf32>
    %c0_44 = arith.constant 0 : index
    %c2_45 = arith.constant 2 : index
    %c0_46 = arith.constant 0 : index
    %58 = vector.load %arg13[%c0_44, %c2_45, %c0_46] : memref<2x36x320xbf16, #tpu.memory_space<vmem>>, vector<1x32x320xbf16>
    %59 = vector.shape_cast %58 : vector<1x32x320xbf16> to vector<32x320xbf16>
    %c1_47 = arith.constant 1 : index
    %c0_48 = arith.constant 0 : index
    %c0_49 = arith.constant 0 : index
    %60 = vector.load %arg6[%c1_47, %c0_48, %c0_49] : memref<4x320x288xbf16, #tpu.memory_space<vmem>>, vector<1x320x288xbf16>
    %61 = vector.shape_cast %60 : vector<1x320x288xbf16> to vector<320x288xbf16>
    %cst_50 = arith.constant dense<0.000000e+00> : vector<32x288xf32>
    %62 = tpu.matmul %59, %61, %cst_50 {dimension_numbers = #tpu.dot_dimension_numbers<[1], [0], [0], [1], [0, 0, 1, 1], [], []>} : vector<32x320xbf16>, vector<320x288xbf16>, vector<32x288xf32> -> vector<32x288xf32>
    %63 = arith.addf %57, %62 : vector<32x288xf32>
    %c1_51 = arith.constant 1 : index
    %c2_52 = arith.constant 2 : index
    %c0_53 = arith.constant 0 : index
    %64 = vector.load %arg13[%c1_51, %c2_52, %c0_53] : memref<2x36x320xbf16, #tpu.memory_space<vmem>>, vector<1x32x320xbf16>
    %65 = vector.shape_cast %64 : vector<1x32x320xbf16> to vector<32x320xbf16>
    %c2_54 = arith.constant 2 : index
    %c0_55 = arith.constant 0 : index
    %c0_56 = arith.constant 0 : index
    %66 = vector.load %arg6[%c2_54, %c0_55, %c0_56] : memref<4x320x288xbf16, #tpu.memory_space<vmem>>, vector<1x320x288xbf16>
    %67 = vector.shape_cast %66 : vector<1x320x288xbf16> to vector<320x288xbf16>
    %cst_57 = arith.constant dense<0.000000e+00> : vector<32x288xf32>
    %68 = tpu.matmul %65, %67, %cst_57 {dimension_numbers = #tpu.dot_dimension_numbers<[1], [0], [0], [1], [0, 0, 1, 1], [], []>} : vector<32x320xbf16>, vector<320x288xbf16>, vector<32x288xf32> -> vector<32x288xf32>
    %69 = arith.addf %63, %68 : vector<32x288xf32>
    %c0_58 = arith.constant 0 : index
    %c4 = arith.constant 4 : index
    %c0_59 = arith.constant 0 : index
    %70 = vector.load %arg13[%c0_58, %c4, %c0_59] : memref<2x36x320xbf16, #tpu.memory_space<vmem>>, vector<1x32x320xbf16>
    %71 = vector.shape_cast %70 : vector<1x32x320xbf16> to vector<32x320xbf16>
    %c3 = arith.constant 3 : index
    %c0_60 = arith.constant 0 : index
    %c0_61 = arith.constant 0 : index
    %72 = vector.load %arg6[%c3, %c0_60, %c0_61] : memref<4x320x288xbf16, #tpu.memory_space<vmem>>, vector<1x320x288xbf16>
    %73 = vector.shape_cast %72 : vector<1x320x288xbf16> to vector<320x288xbf16>
    %cst_62 = arith.constant dense<0.000000e+00> : vector<32x288xf32>
    %74 = tpu.matmul %71, %73, %cst_62 {dimension_numbers = #tpu.dot_dimension_numbers<[1], [0], [0], [1], [0, 0, 1, 1], [], []>} : vector<32x320xbf16>, vector<320x288xbf16>, vector<32x288xf32> -> vector<32x288xf32>
    %75 = arith.addf %69, %74 : vector<32x288xf32>
    %c0_63 = arith.constant 0 : index
    %c0_64 = arith.constant 0 : index
    %76 = vector.load %arg7[%c0_63, %c0_64] : memref<1x288xf32, #tpu.memory_space<vmem>>, vector<1x288xf32>
    %77 = vector.broadcast %76 : vector<1x288xf32> to vector<32x288xf32>
    %78 = arith.addf %75, %77 : vector<32x288xf32>
    %cst_65 = arith.constant 0.000000e+00 : f32
    %79 = vector.broadcast %cst_65 : f32 to vector<32x288xf32>
    %80 = arith.cmpf oge, %78, %79 : vector<32x288xf32>
    %cst_66 = arith.constant 0.00999999977 : f32
    %81 = vector.broadcast %cst_66 : f32 to vector<32x288xf32>
    %82 = arith.mulf %81, %78 : vector<32x288xf32>
    %83 = arith.select %80, %78, %82 : vector<32x288xi1>, vector<32x288xf32>
    %84 = arith.truncf %83 : vector<32x288xf32> to vector<32x288xbf16>
    %c0_67 = arith.constant 0 : index
    %c0_68 = arith.constant 0 : index
    %85 = vector.load %arg14[%c0_67, %c0_68] : memref<32x288xbf16, #tpu.memory_space<vmem>>, vector<32x288xbf16>
    tpu.vector_store %arg14[%c0_67, %c0_68], %84 {strides = array<i32>} : memref<32x288xbf16, #tpu.memory_space<vmem>>, vector<32x288xbf16>,
    %c0_69 = arith.constant 0 : index
    %c0_70 = arith.constant 0 : index
    %86 = vector.load %arg14[%c0_69, %c0_70] : memref<32x288xbf16, #tpu.memory_space<vmem>>, vector<2x288xbf16>
    %c0_71 = arith.constant 0 : index
    %c0_72 = arith.constant 0 : index
    %c0_73 = arith.constant 0 : index
    %87 = vector.load %arg8[%c0_71, %c0_72, %c0_73] : memref<16x288x128xbf16, #tpu.memory_space<vmem>>, vector<1x288x128xbf16>
    %88 = vector.shape_cast %87 : vector<1x288x128xbf16> to vector<288x128xbf16>
    %cst_74 = arith.constant dense<0.000000e+00> : vector<2x128xf32>
    %89 = tpu.matmul %86, %88, %cst_74 {dimension_numbers = #tpu.dot_dimension_numbers<[1], [0], [0], [1], [0, 0, 1, 1], [], []>} : vector<2x288xbf16>, vector<288x128xbf16>, vector<2x128xf32> -> vector<2x128xf32>
    %c2_75 = arith.constant 2 : index
    %c0_76 = arith.constant 0 : index
    %90 = vector.load %arg14[%c2_75, %c0_76] : memref<32x288xbf16, #tpu.memory_space<vmem>>, vector<2x288xbf16>
    %c1_77 = arith.constant 1 : index
    %c0_78 = arith.constant 0 : index
    %c0_79 = arith.constant 0 : index
    %91 = vector.load %arg8[%c1_77, %c0_78, %c0_79] : memref<16x288x128xbf16, #tpu.memory_space<vmem>>, vector<1x288x128xbf16>
    %92 = vector.shape_cast %91 : vector<1x288x128xbf16> to vector<288x128xbf16>
    %cst_80 = arith.constant dense<0.000000e+00> : vector<2x128xf32>
    %93 = tpu.matmul %90, %92, %cst_80 {dimension_numbers = #tpu.dot_dimension_numbers<[1], [0], [0], [1], [0, 0, 1, 1], [], []>} : vector<2x288xbf16>, vector<288x128xbf16>, vector<2x128xf32> -> vector<2x128xf32>
    %94 = arith.addf %89, %93 : vector<2x128xf32>
    %c4_81 = arith.constant 4 : index
    %c0_82 = arith.constant 0 : index
    %95 = vector.load %arg14[%c4_81, %c0_82] : memref<32x288xbf16, #tpu.memory_space<vmem>>, vector<2x288xbf16>
    %c2_83 = arith.constant 2 : index
    %c0_84 = arith.constant 0 : index
    %c0_85 = arith.constant 0 : index
    %96 = vector.load %arg8[%c2_83, %c0_84, %c0_85] : memref<16x288x128xbf16, #tpu.memory_space<vmem>>, vector<1x288x128xbf16>
    %97 = vector.shape_cast %96 : vector<1x288x128xbf16> to vector<288x128xbf16>
    %cst_86 = arith.constant dense<0.000000e+00> : vector<2x128xf32>
    %98 = tpu.matmul %95, %97, %cst_86 {dimension_numbers = #tpu.dot_dimension_numbers<[1], [0], [0], [1], [0, 0, 1, 1], [], []>} : vector<2x288xbf16>, vector<288x128xbf16>, vector<2x128xf32> -> vector<2x128xf32>
    %99 = arith.addf %94, %98 : vector<2x128xf32>
    %c6 = arith.constant 6 : index
    %c0_87 = arith.constant 0 : index
    %100 = vector.load %arg14[%c6, %c0_87] : memref<32x288xbf16, #tpu.memory_space<vmem>>, vector<2x288xbf16>
    %c3_88 = arith.constant 3 : index
    %c0_89 = arith.constant 0 : index
    %c0_90 = arith.constant 0 : index
    %101 = vector.load %arg8[%c3_88, %c0_89, %c0_90] : memref<16x288x128xbf16, #tpu.memory_space<vmem>>, vector<1x288x128xbf16>
    %102 = vector.shape_cast %101 : vector<1x288x128xbf16> to vector<288x128xbf16>
    %cst_91 = arith.constant dense<0.000000e+00> : vector<2x128xf32>
    %103 = tpu.matmul %100, %102, %cst_91 {dimension_numbers = #tpu.dot_dimension_numbers<[1], [0], [0], [1], [0, 0, 1, 1], [], []>} : vector<2x288xbf16>, vector<288x128xbf16>, vector<2x128xf32> -> vector<2x128xf32>
    %104 = arith.addf %99, %103 : vector<2x128xf32>
    %c8 = arith.constant 8 : index
    %c0_92 = arith.constant 0 : index
    %105 = vector.load %arg14[%c8, %c0_92] : memref<32x288xbf16, #tpu.memory_space<vmem>>, vector<2x288xbf16>
    %c4_93 = arith.constant 4 : index
    %c0_94 = arith.constant 0 : index
    %c0_95 = arith.constant 0 : index
    %106 = vector.load %arg8[%c4_93, %c0_94, %c0_95] : memref<16x288x128xbf16, #tpu.memory_space<vmem>>, vector<1x288x128xbf16>
    %107 = vector.shape_cast %106 : vector<1x288x128xbf16> to vector<288x128xbf16>
    %cst_96 = arith.constant dense<0.000000e+00> : vector<2x128xf32>
    %108 = tpu.matmul %105, %107, %cst_96 {dimension_numbers = #tpu.dot_dimension_numbers<[1], [0], [0], [1], [0, 0, 1, 1], [], []>} : vector<2x288xbf16>, vector<288x128xbf16>, vector<2x128xf32> -> vector<2x128xf32>
    %109 = arith.addf %104, %108 : vector<2x128xf32>
    %c10 = arith.constant 10 : index
    %c0_97 = arith.constant 0 : index
    %110 = vector.load %arg14[%c10, %c0_97] : memref<32x288xbf16, #tpu.memory_space<vmem>>, vector<2x288xbf16>
    %c5 = arith.constant 5 : index
    %c0_98 = arith.constant 0 : index
    %c0_99 = arith.constant 0 : index
    %111 = vector.load %arg8[%c5, %c0_98, %c0_99] : memref<16x288x128xbf16, #tpu.memory_space<vmem>>, vector<1x288x128xbf16>
    %112 = vector.shape_cast %111 : vector<1x288x128xbf16> to vector<288x128xbf16>
    %cst_100 = arith.constant dense<0.000000e+00> : vector<2x128xf32>
    %113 = tpu.matmul %110, %112, %cst_100 {dimension_numbers = #tpu.dot_dimension_numbers<[1], [0], [0], [1], [0, 0, 1, 1], [], []>} : vector<2x288xbf16>, vector<288x128xbf16>, vector<2x128xf32> -> vector<2x128xf32>
    %114 = arith.addf %109, %113 : vector<2x128xf32>
    %c12 = arith.constant 12 : index
    %c0_101 = arith.constant 0 : index
    %115 = vector.load %arg14[%c12, %c0_101] : memref<32x288xbf16, #tpu.memory_space<vmem>>, vector<2x288xbf16>
    %c6_102 = arith.constant 6 : index
    %c0_103 = arith.constant 0 : index
    %c0_104 = arith.constant 0 : index
    %116 = vector.load %arg8[%c6_102, %c0_103, %c0_104] : memref<16x288x128xbf16, #tpu.memory_space<vmem>>, vector<1x288x128xbf16>
    %117 = vector.shape_cast %116 : vector<1x288x128xbf16> to vector<288x128xbf16>
    %cst_105 = arith.constant dense<0.000000e+00> : vector<2x128xf32>
    %118 = tpu.matmul %115, %117, %cst_105 {dimension_numbers = #tpu.dot_dimension_numbers<[1], [0], [0], [1], [0, 0, 1, 1], [], []>} : vector<2x288xbf16>, vector<288x128xbf16>, vector<2x128xf32> -> vector<2x128xf32>
    %119 = arith.addf %114, %118 : vector<2x128xf32>
    %c14 = arith.constant 14 : index
    %c0_106 = arith.constant 0 : index
    %120 = vector.load %arg14[%c14, %c0_106] : memref<32x288xbf16, #tpu.memory_space<vmem>>, vector<2x288xbf16>
    %c7 = arith.constant 7 : index
    %c0_107 = arith.constant 0 : index
    %c0_108 = arith.constant 0 : index
    %121 = vector.load %arg8[%c7, %c0_107, %c0_108] : memref<16x288x128xbf16, #tpu.memory_space<vmem>>, vector<1x288x128xbf16>
    %122 = vector.shape_cast %121 : vector<1x288x128xbf16> to vector<288x128xbf16>
    %cst_109 = arith.constant dense<0.000000e+00> : vector<2x128xf32>
    %123 = tpu.matmul %120, %122, %cst_109 {dimension_numbers = #tpu.dot_dimension_numbers<[1], [0], [0], [1], [0, 0, 1, 1], [], []>} : vector<2x288xbf16>, vector<288x128xbf16>, vector<2x128xf32> -> vector<2x128xf32>
    %124 = arith.addf %119, %123 : vector<2x128xf32>
    %c16 = arith.constant 16 : index
    %c0_110 = arith.constant 0 : index
    %125 = vector.load %arg14[%c16, %c0_110] : memref<32x288xbf16, #tpu.memory_space<vmem>>, vector<2x288xbf16>
    %c8_111 = arith.constant 8 : index
    %c0_112 = arith.constant 0 : index
    %c0_113 = arith.constant 0 : index
    %126 = vector.load %arg8[%c8_111, %c0_112, %c0_113] : memref<16x288x128xbf16, #tpu.memory_space<vmem>>, vector<1x288x128xbf16>
    %127 = vector.shape_cast %126 : vector<1x288x128xbf16> to vector<288x128xbf16>
    %cst_114 = arith.constant dense<0.000000e+00> : vector<2x128xf32>
    %128 = tpu.matmul %125, %127, %cst_114 {dimension_numbers = #tpu.dot_dimension_numbers<[1], [0], [0], [1], [0, 0, 1, 1], [], []>} : vector<2x288xbf16>, vector<288x128xbf16>, vector<2x128xf32> -> vector<2x128xf32>
    %129 = arith.addf %124, %128 : vector<2x128xf32>
    %c18 = arith.constant 18 : index
    %c0_115 = arith.constant 0 : index
    %130 = vector.load %arg14[%c18, %c0_115] : memref<32x288xbf16, #tpu.memory_space<vmem>>, vector<2x288xbf16>
    %c9 = arith.constant 9 : index
    %c0_116 = arith.constant 0 : index
    %c0_117 = arith.constant 0 : index
    %131 = vector.load %arg8[%c9, %c0_116, %c0_117] : memref<16x288x128xbf16, #tpu.memory_space<vmem>>, vector<1x288x128xbf16>
    %132 = vector.shape_cast %131 : vector<1x288x128xbf16> to vector<288x128xbf16>
    %cst_118 = arith.constant dense<0.000000e+00> : vector<2x128xf32>
    %133 = tpu.matmul %130, %132, %cst_118 {dimension_numbers = #tpu.dot_dimension_numbers<[1], [0], [0], [1], [0, 0, 1, 1], [], []>} : vector<2x288xbf16>, vector<288x128xbf16>, vector<2x128xf32> -> vector<2x128xf32>
    %134 = arith.addf %129, %133 : vector<2x128xf32>
    %c20 = arith.constant 20 : index
    %c0_119 = arith.constant 0 : index
    %135 = vector.load %arg14[%c20, %c0_119] : memref<32x288xbf16, #tpu.memory_space<vmem>>, vector<2x288xbf16>
    %c10_120 = arith.constant 10 : index
    %c0_121 = arith.constant 0 : index
    %c0_122 = arith.constant 0 : index
    %136 = vector.load %arg8[%c10_120, %c0_121, %c0_122] : memref<16x288x128xbf16, #tpu.memory_space<vmem>>, vector<1x288x128xbf16>
    %137 = vector.shape_cast %136 : vector<1x288x128xbf16> to vector<288x128xbf16>
    %cst_123 = arith.constant dense<0.000000e+00> : vector<2x128xf32>
    %138 = tpu.matmul %135, %137, %cst_123 {dimension_numbers = #tpu.dot_dimension_numbers<[1], [0], [0], [1], [0, 0, 1, 1], [], []>} : vector<2x288xbf16>, vector<288x128xbf16>, vector<2x128xf32> -> vector<2x128xf32>
    %139 = arith.addf %134, %138 : vector<2x128xf32>
    %c22 = arith.constant 22 : index
    %c0_124 = arith.constant 0 : index
    %140 = vector.load %arg14[%c22, %c0_124] : memref<32x288xbf16, #tpu.memory_space<vmem>>, vector<2x288xbf16>
    %c11 = arith.constant 11 : index
    %c0_125 = arith.constant 0 : index
    %c0_126 = arith.constant 0 : index
    %141 = vector.load %arg8[%c11, %c0_125, %c0_126] : memref<16x288x128xbf16, #tpu.memory_space<vmem>>, vector<1x288x128xbf16>
    %142 = vector.shape_cast %141 : vector<1x288x128xbf16> to vector<288x128xbf16>
    %cst_127 = arith.constant dense<0.000000e+00> : vector<2x128xf32>
    %143 = tpu.matmul %140, %142, %cst_127 {dimension_numbers = #tpu.dot_dimension_numbers<[1], [0], [0], [1], [0, 0, 1, 1], [], []>} : vector<2x288xbf16>, vector<288x128xbf16>, vector<2x128xf32> -> vector<2x128xf32>
    %144 = arith.addf %139, %143 : vector<2x128xf32>
    %c24 = arith.constant 24 : index
    %c0_128 = arith.constant 0 : index
    %145 = vector.load %arg14[%c24, %c0_128] : memref<32x288xbf16, #tpu.memory_space<vmem>>, vector<2x288xbf16>
    %c12_129 = arith.constant 12 : index
    %c0_130 = arith.constant 0 : index
    %c0_131 = arith.constant 0 : index
    %146 = vector.load %arg8[%c12_129, %c0_130, %c0_131] : memref<16x288x128xbf16, #tpu.memory_space<vmem>>, vector<1x288x128xbf16>
    %147 = vector.shape_cast %146 : vector<1x288x128xbf16> to vector<288x128xbf16>
    %cst_132 = arith.constant dense<0.000000e+00> : vector<2x128xf32>
    %148 = tpu.matmul %145, %147, %cst_132 {dimension_numbers = #tpu.dot_dimension_numbers<[1], [0], [0], [1], [0, 0, 1, 1], [], []>} : vector<2x288xbf16>, vector<288x128xbf16>, vector<2x128xf32> -> vector<2x128xf32>
    %149 = arith.addf %144, %148 : vector<2x128xf32>
    %c26 = arith.constant 26 : index
    %c0_133 = arith.constant 0 : index
    %150 = vector.load %arg14[%c26, %c0_133] : memref<32x288xbf16, #tpu.memory_space<vmem>>, vector<2x288xbf16>
    %c13 = arith.constant 13 : index
    %c0_134 = arith.constant 0 : index
    %c0_135 = arith.constant 0 : index
    %151 = vector.load %arg8[%c13, %c0_134, %c0_135] : memref<16x288x128xbf16, #tpu.memory_space<vmem>>, vector<1x288x128xbf16>
    %152 = vector.shape_cast %151 : vector<1x288x128xbf16> to vector<288x128xbf16>
    %cst_136 = arith.constant dense<0.000000e+00> : vector<2x128xf32>
    %153 = tpu.matmul %150, %152, %cst_136 {dimension_numbers = #tpu.dot_dimension_numbers<[1], [0], [0], [1], [0, 0, 1, 1], [], []>} : vector<2x288xbf16>, vector<288x128xbf16>, vector<2x128xf32> -> vector<2x128xf32>
    %154 = arith.addf %149, %153 : vector<2x128xf32>
    %c28 = arith.constant 28 : index
    %c0_137 = arith.constant 0 : index
    %155 = vector.load %arg14[%c28, %c0_137] : memref<32x288xbf16, #tpu.memory_space<vmem>>, vector<2x288xbf16>
    %c14_138 = arith.constant 14 : index
    %c0_139 = arith.constant 0 : index
    %c0_140 = arith.constant 0 : index
    %156 = vector.load %arg8[%c14_138, %c0_139, %c0_140] : memref<16x288x128xbf16, #tpu.memory_space<vmem>>, vector<1x288x128xbf16>
    %157 = vector.shape_cast %156 : vector<1x288x128xbf16> to vector<288x128xbf16>
    %cst_141 = arith.constant dense<0.000000e+00> : vector<2x128xf32>
    %158 = tpu.matmul %155, %157, %cst_141 {dimension_numbers = #tpu.dot_dimension_numbers<[1], [0], [0], [1], [0, 0, 1, 1], [], []>} : vector<2x288xbf16>, vector<288x128xbf16>, vector<2x128xf32> -> vector<2x128xf32>
    %159 = arith.addf %154, %158 : vector<2x128xf32>
    %c30 = arith.constant 30 : index
    %c0_142 = arith.constant 0 : index
    %160 = vector.load %arg14[%c30, %c0_142] : memref<32x288xbf16, #tpu.memory_space<vmem>>, vector<2x288xbf16>
    %c15 = arith.constant 15 : index
    %c0_143 = arith.constant 0 : index
    %c0_144 = arith.constant 0 : index
    %161 = vector.load %arg8[%c15, %c0_143, %c0_144] : memref<16x288x128xbf16, #tpu.memory_space<vmem>>, vector<1x288x128xbf16>
    %162 = vector.shape_cast %161 : vector<1x288x128xbf16> to vector<288x128xbf16>
    %cst_145 = arith.constant dense<0.000000e+00> : vector<2x128xf32>
    %163 = tpu.matmul %160, %162, %cst_145 {dimension_numbers = #tpu.dot_dimension_numbers<[1], [0], [0], [1], [0, 0, 1, 1], [], []>} : vector<2x288xbf16>, vector<288x128xbf16>, vector<2x128xf32> -> vector<2x128xf32>
    %164 = arith.addf %159, %163 : vector<2x128xf32>
    %c0_146 = arith.constant 0 : index
    %c0_147 = arith.constant 0 : index
    %165 = vector.load %arg9[%c0_146, %c0_147] : memref<1x128xf32, #tpu.memory_space<vmem>>, vector<1x128xf32>
    %166 = vector.broadcast %165 : vector<1x128xf32> to vector<2x128xf32>
    %167 = arith.addf %164, %166 : vector<2x128xf32>
    %cst_148 = arith.constant 0.000000e+00 : f32
    %168 = vector.broadcast %cst_148 : f32 to vector<2x128xf32>
    %169 = arith.cmpf oge, %167, %168 : vector<2x128xf32>
    %cst_149 = arith.constant 0.00999999977 : f32
    %170 = vector.broadcast %cst_149 : f32 to vector<2x128xf32>
    %171 = arith.mulf %170, %167 : vector<2x128xf32>
    %172 = arith.select %169, %167, %171 : vector<2x128xi1>, vector<2x128xf32>
    %173 = arith.truncf %172 : vector<2x128xf32> to vector<2x128xbf16>
    %c0_150 = arith.constant 0 : index
    %c0_151 = arith.constant 0 : index
    %174 = vector.load %arg10[%c0_150, %c0_151] : memref<128x128xbf16, #tpu.memory_space<vmem>>, vector<128x128xbf16>
    %cst_152 = arith.constant dense<0.000000e+00> : vector<2x128xf32>
    %175 = tpu.matmul %173, %174, %cst_152 {dimension_numbers = #tpu.dot_dimension_numbers<[1], [0], [0], [1], [0, 0, 1, 1], [], []>} : vector<2x128xbf16>, vector<128x128xbf16>, vector<2x128xf32> -> vector<2x128xf32>
    %c0_153 = arith.constant 0 : index
    %c0_154 = arith.constant 0 : index
    %176 = vector.load %arg11[%c0_153, %c0_154] : memref<1x128xf32, #tpu.memory_space<vmem>>, vector<1x128xf32>
    %177 = vector.broadcast %176 : vector<1x128xf32> to vector<2x128xf32>
    %178 = arith.addf %175, %177 : vector<2x128xf32>
    %c0_155 = arith.constant 0 : index
    %c0_156 = arith.constant 0 : index
    %179 = vector.load %arg12[%c0_155, %c0_156] : memref<2x128xf32, #tpu.memory_space<vmem>>, vector<2x128xf32>
    tpu.vector_store %arg12[%c0_155, %c0_156], %178 {strides = array<i32>} : memref<2x128xf32, #tpu.memory_space<vmem>>, vector<2x128xf32>,
    return
  }
  func.func @transform_0(%arg0: i32) -> (i32, i32) {
    %c0_i32 = arith.constant 0 : i32
    %c0_i32_0 = arith.constant 0 : i32
    return %arg0, %c0_i32 : i32, i32
  }
  func.func @transform_1(%arg0: i32) -> (i32, i32) {
    %c0_i32 = arith.constant 0 : i32
    %c0_i32_0 = arith.constant 0 : i32
    return %arg0, %c0_i32 : i32, i32
  }
  func.func @transform_2(%arg0: i32) -> (i32, i32) {
    %c0_i32 = arith.constant 0 : i32
    %c0_i32_0 = arith.constant 0 : i32
    %c0_i32_1 = arith.constant 0 : i32
    return %c0_i32, %c0_i32_0 : i32, i32
  }
  func.func @transform_3(%arg0: i32) -> (i32, i32) {
    %c0_i32 = arith.constant 0 : i32
    %c0_i32_0 = arith.constant 0 : i32
    %c0_i32_1 = arith.constant 0 : i32
    return %c0_i32, %c0_i32_0 : i32, i32
  }
  func.func @transform_4(%arg0: i32) -> (i32, i32) {
    %c0_i32 = arith.constant 0 : i32
    %c0_i32_0 = arith.constant 0 : i32
    %c0_i32_1 = arith.constant 0 : i32
    return %c0_i32, %c0_i32_0 : i32, i32
  }
  func.func @transform_5(%arg0: i32) -> (i32, i32, i32) {
    %c0_i32 = arith.constant 0 : i32
    %c0_i32_0 = arith.constant 0 : i32
    %c0_i32_1 = arith.constant 0 : i32
    %c0_i32_2 = arith.constant 0 : i32
    return %c0_i32, %c0_i32_0, %c0_i32_1 : i32, i32, i32
  }
  func.func @transform_6(%arg0: i32) -> (i32, i32) {
    %c0_i32 = arith.constant 0 : i32
    %c0_i32_0 = arith.constant 0 : i32
    %c0_i32_1 = arith.constant 0 : i32
    return %c0_i32, %c0_i32_0 : i32, i32
  }
  func.func @transform_7(%arg0: i32) -> (i32, i32, i32) {
    %c0_i32 = arith.constant 0 : i32
    %c0_i32_0 = arith.constant 0 : i32
    %c0_i32_1 = arith.constant 0 : i32
    %c0_i32_2 = arith.constant 0 : i32
    return %c0_i32, %c0_i32_0, %c0_i32_1 : i32, i32, i32
  }
  func.func @transform_8(%arg0: i32) -> (i32, i32) {
    %c0_i32 = arith.constant 0 : i32
    %c0_i32_0 = arith.constant 0 : i32
    %c0_i32_1 = arith.constant 0 : i32
    return %c0_i32, %c0_i32_0 : i32, i32
  }
  func.func @transform_9(%arg0: i32) -> (i32, i32) {
    %c0_i32 = arith.constant 0 : i32
    %c0_i32_0 = arith.constant 0 : i32
    %c0_i32_1 = arith.constant 0 : i32
    return %c0_i32, %c0_i32_0 : i32, i32
  }
  func.func @transform_10(%arg0: i32) -> (i32, i32) {
    %c0_i32 = arith.constant 0 : i32
    %c0_i32_0 = arith.constant 0 : i32
    %c0_i32_1 = arith.constant 0 : i32
    return %c0_i32, %c0_i32_0 : i32, i32
  }
  func.func @transform_11(%arg0: i32) -> (i32, i32) {
    %c0_i32 = arith.constant 0 : i32
    %c0_i32_0 = arith.constant 0 : i32
    return %arg0, %c0_i32 : i32, i32
  }
}

</mosaic_0001>

<llo_original>
// kernel: bird_dqn_forward.1
$region0: #{bird_dqn_forward.1}
  #allocation0 [shape = 'u32[]', space=smem, size = 0x4, offset = 0x4, fixed_abs, tag = 'smem constant byte address 0x4 - core index']
  #allocation1 [shape = 'u32[144,128]{1,0:T(1,128)}', space=vmem, size = 0x12000, scoped, tag = 'internal scratch']
  #allocation2 [shape = 'bf16[2,36,320]{2,1,0:T(8,128)(2,1)}', space=vmem, size = 0xf000, scoped, tag = 'scratch operand']
  #allocation3 [shape = 'bf16[32,288]{1,0:T(16,128)(2,1)}', space=vmem, size = 0x6000, scoped, tag = 'scratch operand']
  %s0 = inlined_call_operand.vmem [shape: bf16[64,1344], index: 0, kind: input, shape index: {}]
  %s1 = inlined_call_operand.vmem [shape: bf16[64,2112], index: 1, kind: input, shape index: {}]
  %s2 = inlined_call_operand.vmem [shape: bf16[1344,128], index: 2, kind: input, shape index: {}]
  %s3 = inlined_call_operand.vmem [shape: bf16[2112,192], index: 3, kind: input, shape index: {}]
  %s4 = inlined_call_operand.vmem [shape: f32[1,320], index: 4, kind: input, shape index: {}]
  %s5 = inlined_call_operand.vmem [shape: bf16[4,320,288], index: 5, kind: input, shape index: {}]
  %s6 = inlined_call_operand.vmem [shape: f32[1,288], index: 6, kind: input, shape index: {}]
  %s7 = inlined_call_operand.vmem [shape: bf16[16,288,128], index: 7, kind: input, shape index: {}]
  %s8 = inlined_call_operand.vmem [shape: f32[1,128], index: 8, kind: input, shape index: {}]
  %s9 = inlined_call_operand.vmem [shape: bf16[128,128], index: 9, kind: input, shape index: {}]
  %s10 = inlined_call_operand.vmem [shape: f32[1,128], index: 10, kind: input, shape index: {}]
  %s11 = inlined_call_operand.hbm [shape: f32[2,128], index: 11, kind: output, shape index: {}]
  %s12 = sld [smem:[#allocation0]]
  $region54: #{bird_dqn_forward.1} parent=0
    _
  %s14 = ssub.s32 1, %s12
  %s15 = scalar_select 0, %s14, %s12
  $region1: #{bird_dqn_forward.1} parent=0
    #allocation4 [shape = 'u8[1024]{0}', space=vmem, size = 0x400, scoped, tag = 'output window, operand 0, single buffered']
    #allocation5 [shape = 's32[1]{0}', space=sflag, size = 0x4, scoped, tag = 'scoped memory for bird_dqn_forward.1']
    %16 = vsyncpa [#allocation5], 0
    // Predicated region
    $region2: #{bird_dqn_forward.1} parent=1 // pred_check
      _
    $region3: #{bird_dqn_forward.1} parent=1 // pred_check_branch
      %18 = sbr.rel (0) target = $region5
    $region4: #{bird_dqn_forward.1} parent=1 // pred_region
      _
    $region5: #{bird_dqn_forward.1} parent=1 // pred_fallthru
      _
    // Predicated region
    $region6: #{bird_dqn_forward.1} parent=1 // pred_check
      _
    $region7: #{bird_dqn_forward.1} parent=1 // pred_check_branch
      %20 = sbr.rel (0) target = $region9
    $region8: #{bird_dqn_forward.1} parent=1 // pred_region
      _
    $region9: #{bird_dqn_forward.1} parent=1 // pred_fallthru
      _
    // Predicated region
    $region10: #{bird_dqn_forward.1} parent=1 // pred_check
      _
    $region11: #{bird_dqn_forward.1} parent=1 // pred_check_branch
      %22 = sbr.rel (0) target = $region13
    $region12: #{bird_dqn_forward.1} parent=1 // pred_region
      _
    $region13: #{bird_dqn_forward.1} parent=1 // pred_fallthru
      _
    // Predicated region
    $region14: #{bird_dqn_forward.1} parent=1 // pred_check
      _
    $region15: #{bird_dqn_forward.1} parent=1 // pred_check_branch
      %24 = sbr.rel (0) target = $region17
    $region16: #{bird_dqn_forward.1} parent=1 // pred_region
      _
    $region17: #{bird_dqn_forward.1} parent=1 // pred_fallthru
      _
    // Predicated region
    $region18: #{bird_dqn_forward.1} parent=1 // pred_check
      _
    $region19: #{bird_dqn_forward.1} parent=1 // pred_check_branch
      %26 = sbr.rel (0) target = $region21
    $region20: #{bird_dqn_forward.1} parent=1 // pred_region
      _
    $region21: #{bird_dqn_forward.1} parent=1 // pred_fallthru
      _
    // Predicated region
    $region22: #{bird_dqn_forward.1} parent=1 // pred_check
      _
    $region23: #{bird_dqn_forward.1} parent=1 // pred_check_branch
      %28 = sbr.rel (0) target = $region25
    $region24: #{bird_dqn_forward.1} parent=1 // pred_region
      _
    $region25: #{bird_dqn_forward.1} parent=1 // pred_fallthru
      _
    // Predicated region
    $region26: #{bird_dqn_forward.1} parent=1 // pred_check
      _
    $region27: #{bird_dqn_forward.1} parent=1 // pred_check_branch
      %30 = sbr.rel (0) target = $region29
    $region28: #{bird_dqn_forward.1} parent=1 // pred_region
      _
    $region29: #{bird_dqn_forward.1} parent=1 // pred_fallthru
      _
    // Predicated region
    $region30: #{bird_dqn_forward.1} parent=1 // pred_check
      _
    $region31: #{bird_dqn_forward.1} parent=1 // pred_check_branch
      %32 = sbr.rel (0) target = $region33
    $region32: #{bird_dqn_forward.1} parent=1 // pred_region
      _
    $region33: #{bird_dqn_forward.1} parent=1 // pred_fallthru
      _
    // Predicated region
    $region34: #{bird_dqn_forward.1} parent=1 // pred_check
      _
    $region35: #{bird_dqn_forward.1} parent=1 // pred_check_branch
      %34 = sbr.rel (0) target = $region37
    $region36: #{bird_dqn_forward.1} parent=1 // pred_region
      _
    $region37: #{bird_dqn_forward.1} parent=1 // pred_fallthru
      _
    // Predicated region
    $region38: #{bird_dqn_forward.1} parent=1 // pred_check
      _
    $region39: #{bird_dqn_forward.1} parent=1 // pred_check_branch
      %36 = sbr.rel (0) target = $region41
    $region40: #{bird_dqn_forward.1} parent=1 // pred_region
      _
    $region41: #{bird_dqn_forward.1} parent=1 // pred_fallthru
      _
    // Predicated region
    $region42: #{bird_dqn_forward.1} parent=1 // pred_check
      _
    $region43: #{bird_dqn_forward.1} parent=1 // pred_check_branch
      %38 = sbr.rel (0) target = $region45
    $region44: #{bird_dqn_forward.1} parent=1 // pred_region
      _
    $region45: #{bird_dqn_forward.1} parent=1 // pred_fallthru
      _
    %40 = vst [vmem:[#allocation2] sm:$0x11] 0
    %vm41 = vcmask 516096
    %42 = vst.msk [vmem:[#allocation2 + $0x8] sm:$0x1] %vm41, 0
    %43 = vst [vmem:[#allocation2 + $0x30] sm:$0x22] 0
    %vm44 = vcmask 517121
    %45 = vst.msk [vmem:[#allocation2 + $0x38] sm:$0x2] %vm44, 0
    %s46 = scalar_lea.vmem [#allocation2], 60
    %47 = vst [vmem:[%s46] sm:$0x11] 0
    %48 = vst.msk [vmem:[%s46 + $0x8] sm:$0x1] %vm41, 0
    %49 = vst [vmem:[%s46 + $0x30] sm:$0x22] 0
    %50 = vst.msk [vmem:[%s46 + $0x38] sm:$0x2] %vm44, 0
    %v51 = vld [vmem:[%s0] sm:$0xff]
    %v52 = vld [vmem:[%s0 + $0x8] sm:$0xff]
    %v53 = vld [vmem:[%s0 + $0x10] sm:$0xff]
    %v54 = vld [vmem:[%s0 + $0x18] sm:$0xff]
    %v55 = vld [vmem:[%s0 + $0x20] sm:$0xff]
    %v56 = vld [vmem:[%s0 + $0x28] sm:$0xf]
    %v57 = vld [vmem:[%s0 + $0x2c] sm:$0xff]
    %v58 = vld [vmem:[%s0 + $0x34] sm:$0xff]
    %v59 = vld [vmem:[%s0 + $0x3c] sm:$0xff]
    %v60 = vld [vmem:[%s0 + $0x44] sm:$0xff]
    %v61 = vld [vmem:[%s0 + $0x4c] sm:$0xff]
    %v62 = vld [vmem:[%s0 + $0x54] sm:$0xf]
    %v63 = vld [vmem:[%s0 + $0x58] sm:$0xff]
    %v64 = vld [vmem:[%s0 + $0x60] sm:$0xff]
    %v65 = vld [vmem:[%s0 + $0x68] sm:$0xff]
    %v66 = vld [vmem:[%s0 + $0x70] sm:$0xff]
    %v67 = vld [vmem:[%s0 + $0x78] sm:$0xff]
    %v68 = vld [vmem:[%s0 + $0x80] sm:$0xf]
    %v69 = vld [vmem:[%s0 + $0x84] sm:$0xff]
    %v70 = vld [vmem:[%s0 + $0x8c] sm:$0xff]
    %v71 = vld [vmem:[%s0 + $0x94] sm:$0xff]
    %v72 = vld [vmem:[%s0 + $0x9c] sm:$0xff]
    %v73 = vld [vmem:[%s0 + $0xa4] sm:$0xff]
    %v74 = vld [vmem:[%s0 + $0xac] sm:$0xf]
    %v75 = vld [vmem:[%s0 + $0xb0] sm:$0xff]
    %v76 = vld [vmem:[%s0 + $0xb8] sm:$0xff]
    %v77 = vld [vmem:[%s0 + $0xc0] sm:$0xff]
    %v78 = vld [vmem:[%s0 + $0xc8] sm:$0xff]
    %v79 = vld [vmem:[%s0 + $0xd0] sm:$0xff]
    %v80 = vld [vmem:[%s0 + $0xd8] sm:$0xf]
    %v81 = vld [vmem:[%s0 + $0xdc] sm:$0xff]
    %v82 = vld [vmem:[%s0 + $0xe4] sm:$0xff]
    %v83 = vld [vmem:[%s0 + $0xec] sm:$0xff]
    %v84 = vld [vmem:[%s0 + $0xf4] sm:$0xff]
    %v85 = vld [vmem:[%s0 + $0xfc] sm:$0xff]
    %v86 = vld [vmem:[%s0 + $0x104] sm:$0xf]
    %v87 = vld [vmem:[%s0 + $0x108] sm:$0xff]
    %v88 = vld [vmem:[%s0 + $0x110] sm:$0xff]
    %v89 = vld [vmem:[%s0 + $0x118] sm:$0xff]
    %v90 = vld [vmem:[%s0 + $0x120] sm:$0xff]
    %v91 = vld [vmem:[%s0 + $0x128] sm:$0xff]
    %v92 = vld [vmem:[%s0 + $0x130] sm:$0xf]
    %v93 = vld [vmem:[%s0 + $0x134] sm:$0xff]
    %v94 = vld [vmem:[%s0 + $0x13c] sm:$0xff]
    %v95 = vld [vmem:[%s0 + $0x144] sm:$0xff]
    %v96 = vld [vmem:[%s0 + $0x14c] sm:$0xff]
    %v97 = vld [vmem:[%s0 + $0x154] sm:$0xff]
    %v98 = vld [vmem:[%s0 + $0x15c] sm:$0xf]
    %v99 = vld [vmem:[%s2] sm:$0xf]
    %v100 = vld [vmem:[%s2 + $0x4] sm:$0xf]
    %v101 = vld [vmem:[%s2 + $0x8] sm:$0xf]
    %v102 = vld [vmem:[%s2 + $0xc] sm:$0xf]
    %v103 = vld [vmem:[%s2 + $0x10] sm:$0xf]
    %v104 = vld [vmem:[%s2 + $0x14] sm:$0xf]
    %v105 = vld [vmem:[%s2 + $0x18] sm:$0xf]
    %v106 = vld [vmem:[%s2 + $0x1c] sm:$0xf]
    %v107 = vld [vmem:[%s2 + $0x20] sm:$0xf]
    %v108 = vld [vmem:[%s2 + $0x24] sm:$0xf]
    %v109 = vld [vmem:[%s2 + $0x28] sm:$0xf]
    %v110 = vld [vmem:[%s2 + $0x2c] sm:$0xf]
    %v111 = vld [vmem:[%s2 + $0x30] sm:$0xf]
    %v112 = vld [vmem:[%s2 + $0x34] sm:$0xf]
    %v113 = vld [vmem:[%s2 + $0x38] sm:$0xf]
    %v114 = vld [vmem:[%s2 + $0x3c] sm:$0xf]
    %v115 = vld [vmem:[%s2 + $0x40] sm:$0xf]
    %v116 = vld [vmem:[%s2 + $0x44] sm:$0xf]
    %v117 = vld [vmem:[%s2 + $0x48] sm:$0xf]
    %v118 = vld [vmem:[%s2 + $0x4c] sm:$0xf]
    %v119 = vld [vmem:[%s2 + $0x50] sm:$0xf]
    %v120 = vld [vmem:[%s2 + $0x54] sm:$0xf]
    %v121 = vld [vmem:[%s2 + $0x58] sm:$0xf]
    %v122 = vld [vmem:[%s2 + $0x5c] sm:$0xf]
    %v123 = vld [vmem:[%s2 + $0x60] sm:$0xf]
    %v124 = vld [vmem:[%s2 + $0x64] sm:$0xf]
    %v125 = vld [vmem:[%s2 + $0x68] sm:$0xf]
    %v126 = vld [vmem:[%s2 + $0x6c] sm:$0xf]
    %v127 = vld [vmem:[%s2 + $0x70] sm:$0xf]
    %v128 = vld [vmem:[%s2 + $0x74] sm:$0xf]
    %v129 = vld [vmem:[%s2 + $0x78] sm:$0xf]
    %v130 = vld [vmem:[%s2 + $0x7c] sm:$0xf]
    %v131 = vld [vmem:[%s2 + $0x80] sm:$0xf]
    %v132 = vld [vmem:[%s2 + $0x84] sm:$0xf]
    %v133 = vld [vmem:[%s2 + $0x88] sm:$0xf]
    %v134 = vld [vmem:[%s2 + $0x8c] sm:$0xf]
    %v135 = vld [vmem:[%s2 + $0x90] sm:$0xf]
    %v136 = vld [vmem:[%s2 + $0x94] sm:$0xf]
    %v137 = vld [vmem:[%s2 + $0x98] sm:$0xf]
    %v138 = vld [vmem:[%s2 + $0x9c] sm:$0xf]
    %v139 = vld [vmem:[%s2 + $0xa0] sm:$0xf]
    %v140 = vld [vmem:[%s2 + $0xa4] sm:$0xf]
    %v141 = vld [vmem:[%s2 + $0xa8] sm:$0xf]
    %v142 = vld [vmem:[%s2 + $0xac] sm:$0xf]
    %v143 = vld [vmem:[%s2 + $0xb0] sm:$0xf]
    %v144 = vld [vmem:[%s2 + $0xb4] sm:$0xf]
    %v145 = vld [vmem:[%s2 + $0xb8] sm:$0xf]
    %v146 = vld [vmem:[%s2 + $0xbc] sm:$0xf]
    %v147 = vld [vmem:[%s2 + $0xc0] sm:$0xf]
    %v148 = vld [vmem:[%s2 + $0xc4] sm:$0xf]
    %v149 = vld [vmem:[%s2 + $0xc8] sm:$0xf]
    %v150 = vld [vmem:[%s2 + $0xcc] sm:$0xf]
    %v151 = vld [vmem:[%s2 + $0xd0] sm:$0xf]
    %v152 = vld [vmem:[%s2 + $0xd4] sm:$0xf]
    %v153 = vld [vmem:[%s2 + $0xd8] sm:$0xf]
    %v154 = vld [vmem:[%s2 + $0xdc] sm:$0xf]
    %v155 = vld [vmem:[%s2 + $0xe0] sm:$0xf]
    %v156 = vld [vmem:[%s2 + $0xe4] sm:$0xf]
    %v157 = vld [vmem:[%s2 + $0xe8] sm:$0xf]
    %v158 = vld [vmem:[%s2 + $0xec] sm:$0xf]
    %v159 = vld [vmem:[%s2 + $0xf0] sm:$0xf]
    %v160 = vld [vmem:[%s2 + $0xf4] sm:$0xf]
    %v161 = vld [vmem:[%s2 + $0xf8] sm:$0xf]
    %v162 = vld [vmem:[%s2 + $0xfc] sm:$0xf]
    %v163 = vld [vmem:[%s2 + $0x100] sm:$0xf]
    %v164 = vld [vmem:[%s2 + $0x104] sm:$0xf]
    %v165 = vld [vmem:[%s2 + $0x108] sm:$0xf]
    %v166 = vld [vmem:[%s2 + $0x10c] sm:$0xf]
    %v167 = vld [vmem:[%s2 + $0x110] sm:$0xf]
    %v168 = vld [vmem:[%s2 + $0x114] sm:$0xf]
    %v169 = vld [vmem:[%s2 + $0x118] sm:$0xf]
    %v170 = vld [vmem:[%s2 + $0x11c] sm:$0xf]
    %v171 = vld [vmem:[%s2 + $0x120] sm:$0xf]
    %v172 = vld [vmem:[%s2 + $0x124] sm:$0xf]
    %v173 = vld [vmem:[%s2 + $0x128] sm:$0xf]
    %v174 = vld [vmem:[%s2 + $0x12c] sm:$0xf]
    %v175 = vld [vmem:[%s2 + $0x130] sm:$0xf]
    %v176 = vld [vmem:[%s2 + $0x134] sm:$0xf]
    %v177 = vld [vmem:[%s2 + $0x138] sm:$0xf]
    %v178 = vld [vmem:[%s2 + $0x13c] sm:$0xf]
    %v179 = vld [vmem:[%s2 + $0x140] sm:$0xf]
    %v180 = vld [vmem:[%s2 + $0x144] sm:$0xf]
    %v181 = vld [vmem:[%s2 + $0x148] sm:$0xf]
    %v182 = vld [vmem:[%s2 + $0x14c] sm:$0xf]
    %v183 = vld [vmem:[%s2 + $0x150] sm:$0xf]
    %v184 = vld [vmem:[%s2 + $0x154] sm:$0xf]
    %v185 = vld [vmem:[%s2 + $0x158] sm:$0xf]
    %v186 = vld [vmem:[%s2 + $0x15c] sm:$0xf]
    %v187 = vld [vmem:[%s2 + $0x160] sm:$0xf]
    %v188 = vld [vmem:[%s2 + $0x164] sm:$0xf]
    %v189 = vld [vmem:[%s2 + $0x168] sm:$0xf]
    %v190 = vld [vmem:[%s2 + $0x16c] sm:$0xf]
    %v191 = vld [vmem:[%s2 + $0x170] sm:$0xf]
    %v192 = vld [vmem:[%s2 + $0x174] sm:$0xf]
    %v193 = vld [vmem:[%s2 + $0x178] sm:$0xf]
    %v194 = vld [vmem:[%s2 + $0x17c] sm:$0xf]
    %v195 = vld [vmem:[%s2 + $0x180] sm:$0xf]
    %v196 = vld [vmem:[%s2 + $0x184] sm:$0xf]
    %v197 = vld [vmem:[%s2 + $0x188] sm:$0xf]
    %v198 = vld [vmem:[%s2 + $0x18c] sm:$0xf]
    %v199 = vld [vmem:[%s2 + $0x190] sm:$0xf]
    %v200 = vld [vmem:[%s2 + $0x194] sm:$0xf]
    %v201 = vld [vmem:[%s2 + $0x198] sm:$0xf]
    %v202 = vld [vmem:[%s2 + $0x19c] sm:$0xf]
    %v203 = vld [vmem:[%s2 + $0x1a0] sm:$0xf]
    %v204 = vld [vmem:[%s2 + $0x1a4] sm:$0xf]
    %v205 = vld [vmem:[%s2 + $0x1a8] sm:$0xf]
    %v206 = vld [vmem:[%s2 + $0x1ac] sm:$0xf]
    %v207 = vld [vmem:[%s2 + $0x1b0] sm:$0xf]
    %v208 = vld [vmem:[%s2 + $0x1b4] sm:$0xf]
    %v209 = vld [vmem:[%s2 + $0x1b8] sm:$0xf]
    %v210 = vld [vmem:[%s2 + $0x1bc] sm:$0xf]
    %v211 = vld [vmem:[%s2 + $0x1c0] sm:$0xf]
    %v212 = vld [vmem:[%s2 + $0x1c4] sm:$0xf]
    %v213 = vld [vmem:[%s2 + $0x1c8] sm:$0xf]
    %v214 = vld [vmem:[%s2 + $0x1cc] sm:$0xf]
    %v215 = vld [vmem:[%s2 + $0x1d0] sm:$0xf]
    %v216 = vld [vmem:[%s2 + $0x1d4] sm:$0xf]
    %v217 = vld [vmem:[%s2 + $0x1d8] sm:$0xf]
    %v218 = vld [vmem:[%s2 + $0x1dc] sm:$0xf]
    %v219 = vld [vmem:[%s2 + $0x1e0] sm:$0xf]
    %v220 = vld [vmem:[%s2 + $0x1e4] sm:$0xf]
    %v221 = vld [vmem:[%s2 + $0x1e8] sm:$0xf]
    %v222 = vld [vmem:[%s2 + $0x1ec] sm:$0xf]
    %v223 = vld [vmem:[%s2 + $0x1f0] sm:$0xf]
    %v224 = vld [vmem:[%s2 + $0x1f4] sm:$0xf]
    %v225 = vld [vmem:[%s2 + $0x1f8] sm:$0xf]
    %v226 = vld [vmem:[%s2 + $0x1fc] sm:$0xf]
    %v227 = vld [vmem:[%s2 + $0x200] sm:$0xf]
    %v228 = vld [vmem:[%s2 + $0x204] sm:$0xf]
    %v229 = vld [vmem:[%s2 + $0x208] sm:$0xf]
    %v230 = vld [vmem:[%s2 + $0x20c] sm:$0xf]
    %v231 = vld [vmem:[%s2 + $0x210] sm:$0xf]
    %v232 = vld [vmem:[%s2 + $0x214] sm:$0xf]
    %v233 = vld [vmem:[%s2 + $0x218] sm:$0xf]
    %v234 = vld [vmem:[%s2 + $0x21c] sm:$0xf]
    %v235 = vld [vmem:[%s2 + $0x220] sm:$0xf]
    %v236 = vld [vmem:[%s2 + $0x224] sm:$0xf]
    %v237 = vld [vmem:[%s2 + $0x228] sm:$0xf]
    %v238 = vld [vmem:[%s2 + $0x22c] sm:$0xf]
    %v239 = vld [vmem:[%s2 + $0x230] sm:$0xf]
    %v240 = vld [vmem:[%s2 + $0x234] sm:$0xf]
    %v241 = vld [vmem:[%s2 + $0x238] sm:$0xf]
    %v242 = vld [vmem:[%s2 + $0x23c] sm:$0xf]
    %v243 = vld [vmem:[%s2 + $0x240] sm:$0xf]
    %v244 = vld [vmem:[%s2 + $0x244] sm:$0xf]
    %v245 = vld [vmem:[%s2 + $0x248] sm:$0xf]
    %v246 = vld [vmem:[%s2 + $0x24c] sm:$0xf]
    %v247 = vld [vmem:[%s2 + $0x250] sm:$0xf]
    %v248 = vld [vmem:[%s2 + $0x254] sm:$0xf]
    %v249 = vld [vmem:[%s2 + $0x258] sm:$0xf]
    %v250 = vld [vmem:[%s2 + $0x25c] sm:$0xf]
    %v251 = vld [vmem:[%s2 + $0x260] sm:$0xf]
    %v252 = vld [vmem:[%s2 + $0x264] sm:$0xf]
    %v253 = vld [vmem:[%s2 + $0x268] sm:$0xf]
    %v254 = vld [vmem:[%s2 + $0x26c] sm:$0xf]
    %v255 = vld [vmem:[%s2 + $0x270] sm:$0xf]
    %v256 = vld [vmem:[%s2 + $0x274] sm:$0xf]
    %v257 = vld [vmem:[%s2 + $0x278] sm:$0xf]
    %v258 = vld [vmem:[%s2 + $0x27c] sm:$0xf]
    %v259 = vld [vmem:[%s2 + $0x280] sm:$0xf]
    %v260 = vld [vmem:[%s2 + $0x284] sm:$0xf]
    %v261 = vld [vmem:[%s2 + $0x288] sm:$0xf]
    %v262 = vld [vmem:[%s2 + $0x28c] sm:$0xf]
    %v263 = vld [vmem:[%s2 + $0x290] sm:$0xf]
    %v264 = vld [vmem:[%s2 + $0x294] sm:$0xf]
    %v265 = vld [vmem:[%s2 + $0x298] sm:$0xf]
    %v266 = vld [vmem:[%s2 + $0x29c] sm:$0xf]
    %v267 = vld [vmem:[%s4] sm:$0x1]
    %v269 = vlaneseq
    %v270 = vshrl.u32 %v269, 7
    %v271 = vsub.s32 0, %v270
    %v272 = vrot.slane %v267, %v271
    %v322 = vunpack.c.l.b16 %v51
    %v323 = vunpack.c.h.b16 %v51
    %v324 = vunpack.c.l.b16 %v52
    %v325 = vunpack.c.h.b16 %v52
    %v326 = vunpack.c.l.b16 %v53
    %v327 = vunpack.c.h.b16 %v53
    %v328 = vunpack.c.l.b16 %v54
    %v329 = vunpack.c.h.b16 %v54
    %v330 = vunpack.c.l.b16 %v55
    %v331 = vunpack.c.h.b16 %v55
    %v332 = vunpack.c.l.b16 %v56
    %v333 = vunpack.c.l.b16 %v57
    %v334 = vunpack.c.h.b16 %v57
    %v335 = vunpack.c.l.b16 %v58
    %v336 = vunpack.c.h.b16 %v58
    %v337 = vunpack.c.l.b16 %v59
    %v338 = vunpack.c.h.b16 %v59
    %v339 = vunpack.c.l.b16 %v60
    %v340 = vunpack.c.h.b16 %v60
    %v341 = vunpack.c.l.b16 %v61
    %v342 = vunpack.c.h.b16 %v61
    %v343 = vunpack.c.l.b16 %v62
    %v344 = vunpack.c.l.b16 %v63
    %v345 = vunpack.c.h.b16 %v63
    %v346 = vunpack.c.l.b16 %v64
    %v347 = vunpack.c.h.b16 %v64
    %v348 = vunpack.c.l.b16 %v65
    %v349 = vunpack.c.h.b16 %v65
    %v350 = vunpack.c.l.b16 %v66
    %v351 = vunpack.c.h.b16 %v66
    %v352 = vunpack.c.l.b16 %v67
    %v353 = vunpack.c.h.b16 %v67
    %v354 = vunpack.c.l.b16 %v68
    %v355 = vunpack.c.l.b16 %v69
    %v356 = vunpack.c.h.b16 %v69
    %v357 = vunpack.c.l.b16 %v70
    %v358 = vunpack.c.h.b16 %v70
    %v359 = vunpack.c.l.b16 %v71
    %v360 = vunpack.c.h.b16 %v71
    %v361 = vunpack.c.l.b16 %v72
    %v362 = vunpack.c.h.b16 %v72
    %v363 = vunpack.c.l.b16 %v73
    %v364 = vunpack.c.h.b16 %v73
    %v365 = vunpack.c.l.b16 %v74
    %v366 = vunpack.c.l.b16 %v75
    %v367 = vunpack.c.h.b16 %v75
    %v368 = vunpack.c.l.b16 %v76
    %v369 = vunpack.c.h.b16 %v76
    %v370 = vunpack.c.l.b16 %v77
    %v371 = vunpack.c.h.b16 %v77
    %v372 = vunpack.c.l.b16 %v78
    %v373 = vunpack.c.h.b16 %v78
    %v374 = vunpack.c.l.b16 %v79
    %v375 = vunpack.c.h.b16 %v79
    %v376 = vunpack.c.l.b16 %v80
    %v377 = vunpack.c.l.b16 %v81
    %v378 = vunpack.c.h.b16 %v81
    %v379 = vunpack.c.l.b16 %v82
    %v380 = vunpack.c.h.b16 %v82
    %v381 = vunpack.c.l.b16 %v83
    %v382 = vunpack.c.h.b16 %v83
    %v383 = vunpack.c.l.b16 %v84
    %v384 = vunpack.c.h.b16 %v84
    %v385 = vunpack.c.l.b16 %v85
    %v386 = vunpack.c.h.b16 %v85
    %v387 = vunpack.c.l.b16 %v86
    %v388 = vunpack.c.l.b16 %v87
    %v389 = vunpack.c.h.b16 %v87
    %v390 = vunpack.c.l.b16 %v88
    %v391 = vunpack.c.h.b16 %v88
    %v392 = vunpack.c.l.b16 %v89
    %v393 = vunpack.c.h.b16 %v89
    %v394 = vunpack.c.l.b16 %v90
    %v395 = vunpack.c.h.b16 %v90
    %v396 = vunpack.c.l.b16 %v91
    %v397 = vunpack.c.h.b16 %v91
    %v398 = vunpack.c.l.b16 %v92
    %v399 = vunpack.c.l.b16 %v93
    %v400 = vunpack.c.h.b16 %v93
    %v401 = vunpack.c.l.b16 %v94
    %v402 = vunpack.c.h.b16 %v94
    %v403 = vunpack.c.l.b16 %v95
    %v404 = vunpack.c.h.b16 %v95
    %v405 = vunpack.c.l.b16 %v96
    %v406 = vunpack.c.h.b16 %v96
    %v407 = vunpack.c.l.b16 %v97
    %v408 = vunpack.c.h.b16 %v97
    %v409 = vunpack.c.l.b16 %v98
    %v410 = vpack.c.b16 %v333, %v322
    %v411 = vpack.c.b16 %v334, %v323
    %v412 = vpack.c.b16 %v335, %v324
    %v413 = vpack.c.b16 %v336, %v325
    %v414 = vpack.c.b16 %v337, %v326
    %v415 = vpack.c.b16 %v338, %v327
    %v416 = vpack.c.b16 %v339, %v328
    %v417 = vpack.c.b16 %v340, %v329
    %v418 = vpack.c.b16 %v341, %v330
    %v419 = vpack.c.b16 %v342, %v331
    %v420 = vpack.c.b16 %v343, %v332
    %v421 = vpack.c.b16 %v355, %v344
    %v422 = vpack.c.b16 %v356, %v345
    %v423 = vpack.c.b16 %v357, %v346
    %v424 = vpack.c.b16 %v358, %v347
    %v425 = vpack.c.b16 %v359, %v348
    %v426 = vpack.c.b16 %v360, %v349
    %v427 = vpack.c.b16 %v361, %v350
    %v428 = vpack.c.b16 %v362, %v351
    %v429 = vpack.c.b16 %v363, %v352
    %v430 = vpack.c.b16 %v364, %v353
    %v431 = vpack.c.b16 %v365, %v354
    %v432 = vpack.c.b16 %v377, %v366
    %v433 = vpack.c.b16 %v378, %v367
    %v434 = vpack.c.b16 %v379, %v368
    %v435 = vpack.c.b16 %v380, %v369
    %v436 = vpack.c.b16 %v381, %v370
    %v437 = vpack.c.b16 %v382, %v371
    %v438 = vpack.c.b16 %v383, %v372
    %v439 = vpack.c.b16 %v384, %v373
    %v440 = vpack.c.b16 %v385, %v374
    %v441 = vpack.c.b16 %v386, %v375
    %v442 = vpack.c.b16 %v387, %v376
    %v443 = vpack.c.b16 %v399, %v388
    %v444 = vpack.c.b16 %v400, %v389
    %v445 = vpack.c.b16 %v401, %v390
    %v446 = vpack.c.b16 %v402, %v391
    %v447 = vpack.c.b16 %v403, %v392
    %v448 = vpack.c.b16 %v404, %v393
    %v449 = vpack.c.b16 %v405, %v394
    %v450 = vpack.c.b16 %v406, %v395
    %v451 = vpack.c.b16 %v407, %v396
    %v452 = vpack.c.b16 %v408, %v397
    %v453 = vpack.c.b16 %v409, %v398
    %v662 = vunpack.c.l.b16 %v99
    %v663 = vunpack.c.l.b16 %v100
    %v664 = vunpack.c.l.b16 %v101
    %v665 = vunpack.c.l.b16 %v102
    %v666 = vunpack.c.l.b16 %v103
    %v667 = vunpack.c.l.b16 %v104
    %v668 = vunpack.c.l.b16 %v105
    %v669 = vunpack.c.l.b16 %v106
    %v670 = vunpack.c.l.b16 %v107
    %v671 = vunpack.c.l.b16 %v108
    %v672 = vunpack.c.l.b16 %v109
    %v673 = vunpack.c.l.b16 %v110
    %v674 = vunpack.c.l.b16 %v111
    %v675 = vunpack.c.l.b16 %v112
    %v676 = vunpack.c.l.b16 %v113
    %v677 = vunpack.c.l.b16 %v114
    %v678 = vunpack.c.l.b16 %v115
    %v679 = vunpack.c.l.b16 %v116
    %v680 = vunpack.c.l.b16 %v117
    %v681 = vunpack.c.l.b16 %v118
    %v682 = vunpack.c.l.b16 %v119
    %v683 = vunpack.c.l.b16 %v120
    %v684 = vunpack.c.l.b16 %v121
    %v685 = vunpack.c.l.b16 %v122
    %v686 = vunpack.c.l.b16 %v123
    %v687 = vunpack.c.l.b16 %v124
    %v688 = vunpack.c.l.b16 %v125
    %v689 = vunpack.c.l.b16 %v126
    %v690 = vunpack.c.l.b16 %v127
    %v691 = vunpack.c.l.b16 %v128
    %v692 = vunpack.c.l.b16 %v129
    %v693 = vunpack.c.l.b16 %v130
    %v694 = vunpack.c.l.b16 %v131
    %v695 = vunpack.c.l.b16 %v132
    %v696 = vunpack.c.l.b16 %v133
    %v697 = vunpack.c.l.b16 %v134
    %v698 = vunpack.c.l.b16 %v135
    %v699 = vunpack.c.l.b16 %v136
    %v700 = vunpack.c.l.b16 %v137
    %v701 = vunpack.c.l.b16 %v138
    %v702 = vunpack.c.l.b16 %v139
    %v703 = vunpack.c.l.b16 %v140
    %v704 = vunpack.c.l.b16 %v141
    %v705 = vunpack.c.l.b16 %v142
    %v706 = vunpack.c.l.b16 %v143
    %v707 = vunpack.c.l.b16 %v144
    %v708 = vunpack.c.l.b16 %v145
    %v709 = vunpack.c.l.b16 %v146
    %v710 = vunpack.c.l.b16 %v147
    %v711 = vunpack.c.l.b16 %v148
    %v712 = vunpack.c.l.b16 %v149
    %v713 = vunpack.c.l.b16 %v150
    %v714 = vunpack.c.l.b16 %v151
    %v715 = vunpack.c.l.b16 %v152
    %v716 = vunpack.c.l.b16 %v153
    %v717 = vunpack.c.l.b16 %v154
    %v718 = vunpack.c.l.b16 %v155
    %v719 = vunpack.c.l.b16 %v156
    %v720 = vunpack.c.l.b16 %v157
    %v721 = vunpack.c.l.b16 %v158
    %v722 = vunpack.c.l.b16 %v159
    %v723 = vunpack.c.l.b16 %v160
    %v724 = vunpack.c.l.b16 %v161
    %v725 = vunpack.c.l.b16 %v162
    %v726 = vunpack.c.l.b16 %v163
    %v727 = vunpack.c.l.b16 %v164
    %v728 = vunpack.c.l.b16 %v165
    %v729 = vunpack.c.l.b16 %v166
    %v730 = vunpack.c.l.b16 %v167
    %v731 = vunpack.c.l.b16 %v168
    %v732 = vunpack.c.l.b16 %v169
    %v733 = vunpack.c.l.b16 %v170
    %v734 = vunpack.c.l.b16 %v171
    %v735 = vunpack.c.l.b16 %v172
    %v736 = vunpack.c.l.b16 %v173
    %v737 = vunpack.c.l.b16 %v174
    %v738 = vunpack.c.l.b16 %v175
    %v739 = vunpack.c.l.b16 %v176
    %v740 = vunpack.c.l.b16 %v177
    %v741 = vunpack.c.l.b16 %v178
    %v742 = vunpack.c.l.b16 %v179
    %v743 = vunpack.c.l.b16 %v180
    %v744 = vunpack.c.l.b16 %v181
    %v745 = vunpack.c.l.b16 %v182
    %v746 = vunpack.c.l.b16 %v183
    %v747 = vunpack.c.l.b16 %v184
    %v748 = vunpack.c.l.b16 %v185
    %v749 = vunpack.c.l.b16 %v186
    %v750 = vunpack.c.l.b16 %v187
    %v751 = vunpack.c.l.b16 %v188
    %v752 = vunpack.c.l.b16 %v189
    %v753 = vunpack.c.l.b16 %v190
    %v754 = vunpack.c.l.b16 %v191
    %v755 = vunpack.c.l.b16 %v192
    %v756 = vunpack.c.l.b16 %v193
    %v757 = vunpack.c.l.b16 %v194
    %v758 = vunpack.c.l.b16 %v195
    %v759 = vunpack.c.l.b16 %v196
    %v760 = vunpack.c.l.b16 %v197
    %v761 = vunpack.c.l.b16 %v198
    %v762 = vunpack.c.l.b16 %v199
    %v763 = vunpack.c.l.b16 %v200
    %v764 = vunpack.c.l.b16 %v201
    %v765 = vunpack.c.l.b16 %v202
    %v766 = vunpack.c.l.b16 %v203
    %v767 = vunpack.c.l.b16 %v204
    %v768 = vunpack.c.l.b16 %v205
    %v769 = vunpack.c.l.b16 %v206
    %v770 = vunpack.c.l.b16 %v207
    %v771 = vunpack.c.l.b16 %v208
    %v772 = vunpack.c.l.b16 %v209
    %v773 = vunpack.c.l.b16 %v210
    %v774 = vunpack.c.l.b16 %v211
    %v775 = vunpack.c.l.b16 %v212
    %v776 = vunpack.c.l.b16 %v213
    %v777 = vunpack.c.l.b16 %v214
    %v778 = vunpack.c.l.b16 %v215
    %v779 = vunpack.c.l.b16 %v216
    %v780 = vunpack.c.l.b16 %v217
    %v781 = vunpack.c.l.b16 %v218
    %v782 = vunpack.c.l.b16 %v219
    %v783 = vunpack.c.l.b16 %v220
    %v784 = vunpack.c.l.b16 %v221
    %v785 = vunpack.c.l.b16 %v222
    %v786 = vunpack.c.l.b16 %v223
    %v787 = vunpack.c.l.b16 %v224
    %v788 = vunpack.c.l.b16 %v225
    %v789 = vunpack.c.l.b16 %v226
    %v790 = vunpack.c.l.b16 %v227
    %v791 = vunpack.c.l.b16 %v228
    %v792 = vunpack.c.l.b16 %v229
    %v793 = vunpack.c.l.b16 %v230
    %v794 = vunpack.c.l.b16 %v231
    %v795 = vunpack.c.l.b16 %v232
    %v796 = vunpack.c.l.b16 %v233
    %v797 = vunpack.c.l.b16 %v234
    %v798 = vunpack.c.l.b16 %v235
    %v799 = vunpack.c.l.b16 %v236
    %v800 = vunpack.c.l.b16 %v237
    %v801 = vunpack.c.l.b16 %v238
    %v802 = vunpack.c.l.b16 %v239
    %v803 = vunpack.c.l.b16 %v240
    %v804 = vunpack.c.l.b16 %v241
    %v805 = vunpack.c.l.b16 %v242
    %v806 = vunpack.c.l.b16 %v243
    %v807 = vunpack.c.l.b16 %v244
    %v808 = vunpack.c.l.b16 %v245
    %v809 = vunpack.c.l.b16 %v246
    %v810 = vunpack.c.l.b16 %v247
    %v811 = vunpack.c.l.b16 %v248
    %v812 = vunpack.c.l.b16 %v249
    %v813 = vunpack.c.l.b16 %v250
    %v814 = vunpack.c.l.b16 %v251
    %v815 = vunpack.c.l.b16 %v252
    %v816 = vunpack.c.l.b16 %v253
    %v817 = vunpack.c.l.b16 %v254
    %v818 = vunpack.c.l.b16 %v255
    %v819 = vunpack.c.l.b16 %v256
    %v820 = vunpack.c.l.b16 %v257
    %v821 = vunpack.c.l.b16 %v258
    %v822 = vunpack.c.l.b16 %v259
    %v823 = vunpack.c.l.b16 %v260
    %v824 = vunpack.c.l.b16 %v261
    %v825 = vunpack.c.l.b16 %v262
    %v826 = vunpack.c.l.b16 %v263
    %v827 = vunpack.c.l.b16 %v264
    %v828 = vunpack.c.l.b16 %v265
    %v829 = vunpack.c.l.b16 %v266
    %v830 = vpack.c.b16 %v663, %v662
    %v831 = vpack.c.b16 %v665, %v664
    %v832 = vpack.c.b16 %v667, %v666
    %v833 = vpack.c.b16 %v669, %v668
    %v834 = vpack.c.b16 %v671, %v670
    %v835 = vpack.c.b16 %v673, %v672
    %v836 = vpack.c.b16 %v675, %v674
    %v837 = vpack.c.b16 %v677, %v676
    %v838 = vpack.c.b16 %v679, %v678
    %v839 = vpack.c.b16 %v681, %v680
    %v840 = vpack.c.b16 %v683, %v682
    %v841 = vpack.c.b16 %v685, %v684
    %v842 = vpack.c.b16 %v687, %v686
    %v843 = vpack.c.b16 %v689, %v688
    %v844 = vpack.c.b16 %v691, %v690
    %v845 = vpack.c.b16 %v693, %v692
    %v846 = vpack.c.b16 %v695, %v694
    %v847 = vpack.c.b16 %v697, %v696
    %v848 = vpack.c.b16 %v699, %v698
    %v849 = vpack.c.b16 %v701, %v700
    %v850 = vpack.c.b16 %v703, %v702
    %v851 = vpack.c.b16 %v705, %v704
    %v852 = vpack.c.b16 %v707, %v706
    %v853 = vpack.c.b16 %v709, %v708
    %v854 = vpack.c.b16 %v711, %v710
    %v855 = vpack.c.b16 %v713, %v712
    %v856 = vpack.c.b16 %v715, %v714
    %v857 = vpack.c.b16 %v717, %v716
    %v858 = vpack.c.b16 %v719, %v718
    %v859 = vpack.c.b16 %v721, %v720
    %v860 = vpack.c.b16 %v723, %v722
    %v861 = vpack.c.b16 %v725, %v724
    %v862 = vpack.c.b16 %v727, %v726
    %v863 = vpack.c.b16 %v729, %v728
    %v864 = vpack.c.b16 %v731, %v730
    %v865 = vpack.c.b16 %v733, %v732
    %v866 = vpack.c.b16 %v735, %v734
    %v867 = vpack.c.b16 %v737, %v736
    %v868 = vpack.c.b16 %v739, %v738
    %v869 = vpack.c.b16 %v741, %v740
    %v870 = vpack.c.b16 %v743, %v742
    %v871 = vpack.c.b16 %v745, %v744
    %v872 = vpack.c.b16 %v747, %v746
    %v873 = vpack.c.b16 %v749, %v748
    %v874 = vpack.c.b16 %v751, %v750
    %v875 = vpack.c.b16 %v753, %v752
    %v876 = vpack.c.b16 %v755, %v754
    %v877 = vpack.c.b16 %v757, %v756
    %v878 = vpack.c.b16 %v759, %v758
    %v879 = vpack.c.b16 %v761, %v760
    %v880 = vpack.c.b16 %v763, %v762
    %v881 = vpack.c.b16 %v765, %v764
    %v882 = vpack.c.b16 %v767, %v766
    %v883 = vpack.c.b16 %v769, %v768
    %v884 = vpack.c.b16 %v771, %v770
    %v885 = vpack.c.b16 %v773, %v772
    %v886 = vpack.c.b16 %v775, %v774
    %v887 = vpack.c.b16 %v777, %v776
    %v888 = vpack.c.b16 %v779, %v778
    %v889 = vpack.c.b16 %v781, %v780
    %v890 = vpack.c.b16 %v783, %v782
    %v891 = vpack.c.b16 %v785, %v784
    %v892 = vpack.c.b16 %v787, %v786
    %v893 = vpack.c.b16 %v789, %v788
    %v894 = vpack.c.b16 %v791, %v790
    %v895 = vpack.c.b16 %v793, %v792
    %v896 = vpack.c.b16 %v795, %v794
    %v897 = vpack.c.b16 %v797, %v796
    %v898 = vpack.c.b16 %v799, %v798
    %v899 = vpack.c.b16 %v801, %v800
    %v900 = vpack.c.b16 %v803, %v802
    %v901 = vpack.c.b16 %v805, %v804
    %v902 = vpack.c.b16 %v807, %v806
    %v903 = vpack.c.b16 %v809, %v808
    %v904 = vpack.c.b16 %v811, %v810
    %v905 = vpack.c.b16 %v813, %v812
    %v906 = vpack.c.b16 %v815, %v814
    %v907 = vpack.c.b16 %v817, %v816
    %v908 = vpack.c.b16 %v819, %v818
    %v909 = vpack.c.b16 %v821, %v820
    %v910 = vpack.c.b16 %v823, %v822
    %v911 = vpack.c.b16 %v825, %v824
    %v912 = vpack.c.b16 %v827, %v826
    %v913 = vpack.c.b16 %v829, %v828
    %vm998 = vcmask 523264
    %v1000 = vsel %vm998, %v420, 0
    %v1003 = vsel %vm998, %v431, 0
    %v1006 = vsel %vm998, %v442, 0
    %v1009 = vsel %vm998, %v453, 0
    %1011 = vmatprep.subr.bf16.mxu0 0
    %1012 = vmatpush1.bf16.msra.mxu0 %v830
    %1013 = vmatprep.subr.bf16.mxu0 0
    %1014 = vmatpush1.bf16.msra.mxu0 %v831
    %1015 = vmatprep.subr.bf16.mxu0 0
    %1016 = vmatpush1.bf16.msra.mxu0 %v832
    %1017 = vmatprep.subr.bf16.mxu0 0
    %1018 = vmatpush1.bf16.msra.mxu0 %v833
    %1019 = vmatprep.subr.bf16.mxu0 0
    %1020 = vmatpush1.bf16.msra.mxu0 %v834
    %1021 = vmatprep.subr.bf16.mxu0 0
    %1022 = vmatpush1.bf16.msra.mxu0 %v835
    %1023 = vmatprep.subr.bf16.mxu0 0
    %1024 = vmatpush1.bf16.msra.mxu0 %v836
    %1025 = vmatprep.subr.bf16.mxu0 0
    %1026 = vmatpush1.bf16.msra.mxu0 %v837
    %1027 = vmatprep.subr.bf16.mxu0 0
    %1028 = vmatpush1.bf16.msra.mxu0 %v838
    %1029 = vmatprep.subr.bf16.mxu0 0
    %1030 = vmatpush1.bf16.msra.mxu0 %v839
    %1031 = vmatprep.subr.bf16.mxu0 0
    %1032 = vmatpush1.bf16.msra.mxu0 %v840
    %1033 = vmatprep.subr.bf16.mxu0 0
    %1034 = vmatpush1.bf16.msra.mxu0 %v841
    %1035 = vmatprep.subr.bf16.mxu0 0
    %1036 = vmatpush1.bf16.msra.mxu0 %v842
    %1037 = vmatprep.subr.bf16.mxu0 0
    %1038 = vmatpush1.bf16.msra.mxu0 %v843
    %1039 = vmatprep.subr.bf16.mxu0 0
    %1040 = vmatpush1.bf16.msra.mxu0 %v844
    %1041 = vmatprep.subr.bf16.mxu0 0
    %1042 = vmatpush1.bf16.msra.mxu0 %v845
    %1043 = vmatprep.mubr.bf16.mxu0 %v411
    %1044 = vmatmul.mubr.bf16.gmra.mrb[0].mxu0 %v410
    %v1045 = vpop.f32.mrb[0].mxu0
    %v1046 = vadd.f32 %v272, %v1045
    %v1047 = vpop.f32.mrb[0].mxu0
    %v1048 = vpop.f32.mrb[0].mxu0
    %v1049 = vadd.f32 %v272, %v1048
    %v1050 = vpop.f32.mrb[0].mxu0
    %1051 = vmatprep.mubr.bf16.mxu0 %v422
    %1052 = vmatmul.mubr.bf16.gmra.mrb[0].mxu0 %v421
    %v1053 = vpop.f32.mrb[0].mxu0
    %v1054 = vadd.f32 %v272, %v1053
    %v1055 = vpop.f32.mrb[0].mxu0
    %v1056 = vpop.f32.mrb[0].mxu0
    %v1057 = vadd.f32 %v272, %v1056
    %v1058 = vpop.f32.mrb[0].mxu0
    %1059 = vmatprep.mubr.bf16.mxu0 %v433
    %1060 = vmatmul.mubr.bf16.gmra.mrb[0].mxu0 %v432
    %v1061 = vpop.f32.mrb[0].mxu0
    %v1062 = vadd.f32 %v272, %v1061
    %v1063 = vpop.f32.mrb[0].mxu0
    %v1064 = vpop.f32.mrb[0].mxu0
    %v1065 = vadd.f32 %v272, %v1064
    %v1066 = vpop.f32.mrb[0].mxu0
    %1067 = vmatprep.mubr.bf16.mxu0 %v444
    %1068 = vmatmul.mubr.bf16.gmra.mrb[0].mxu0 %v443
    %v1069 = vpop.f32.mrb[0].mxu0
    %v1070 = vadd.f32 %v272, %v1069
    %v1071 = vpop.f32.mrb[0].mxu0
    %v1072 = vpop.f32.mrb[0].mxu0
    %v1073 = vadd.f32 %v272, %v1072
    %v1074 = vpop.f32.mrb[0].mxu0
    %1075 = vdwg.mxu0
    %1076 = vmatprep.subr.bf16.mxu0 0
    %1077 = vmatpush1.bf16.msra.mxu0 %v846
    %1078 = vmatprep.subr.bf16.mxu0 0
    %1079 = vmatpush1.bf16.msra.mxu0 %v847
    %1080 = vmatprep.subr.bf16.mxu0 0
    %1081 = vmatpush1.bf16.msra.mxu0 %v848
    %1082 = vmatprep.subr.bf16.mxu0 0
    %1083 = vmatpush1.bf16.msra.mxu0 %v849
    %1084 = vmatprep.subr.bf16.mxu0 0
    %1085 = vmatpush1.bf16.msra.mxu0 %v850
    %1086 = vmatprep.subr.bf16.mxu0 0
    %1087 = vmatpush1.bf16.msra.mxu0 %v851
    %1088 = vmatprep.subr.bf16.mxu0 0
    %1089 = vmatpush1.bf16.msra.mxu0 %v852
    %1090 = vmatprep.subr.bf16.mxu0 0
    %1091 = vmatpush1.bf16.msra.mxu0 %v853
    %1092 = vmatprep.subr.bf16.mxu0 0
    %1093 = vmatpush1.bf16.msra.mxu0 %v854
    %1094 = vmatprep.subr.bf16.mxu0 0
    %1095 = vmatpush1.bf16.msra.mxu0 %v855
    %1096 = vmatprep.subr.bf16.mxu0 0
    %1097 = vmatpush1.bf16.msra.mxu0 %v856
    %1098 = vmatprep.subr.bf16.mxu0 0
    %1099 = vmatpush1.bf16.msra.mxu0 %v857
    %1100 = vmatprep.subr.bf16.mxu0 0
    %1101 = vmatpush1.bf16.msra.mxu0 %v858
    %1102 = vmatprep.subr.bf16.mxu0 0
    %1103 = vmatpush1.bf16.msra.mxu0 %v859
    %1104 = vmatprep.subr.bf16.mxu0 0
    %1105 = vmatpush1.bf16.msra.mxu0 %v860
    %1106 = vmatprep.subr.bf16.mxu0 0
    %1107 = vmatpush1.bf16.msra.mxu0 %v861
    %1108 = vmatprep.mubr.bf16.mxu0 %v413
    %1109 = vmatmul.mubr.bf16.gmra.mrb[0].mxu0 %v412
    %v1110 = vpop.f32.mrb[0].mxu0
    %v1111 = vadd.f32 %v1046, %v1110
    %v1112 = vpop.f32.mrb[0].mxu0
    %v1113 = vpop.f32.mrb[0].mxu0
    %v1114 = vadd.f32 %v1049, %v1113
    %v1115 = vpop.f32.mrb[0].mxu0
    %1116 = vmatprep.mubr.bf16.mxu0 %v424
    %1117 = vmatmul.mubr.bf16.gmra.mrb[0].mxu0 %v423
    %v1118 = vpop.f32.mrb[0].mxu0
    %v1119 = vadd.f32 %v1054, %v1118
    %v1120 = vpop.f32.mrb[0].mxu0
    %v1121 = vpop.f32.mrb[0].mxu0
    %v1122 = vadd.f32 %v1057, %v1121
    %v1123 = vpop.f32.mrb[0].mxu0
    %1124 = vmatprep.mubr.bf16.mxu0 %v435
    %1125 = vmatmul.mubr.bf16.gmra.mrb[0].mxu0 %v434
    %v1126 = vpop.f32.mrb[0].mxu0
    %v1127 = vadd.f32 %v1062, %v1126
    %v1128 = vpop.f32.mrb[0].mxu0
    %v1129 = vpop.f32.mrb[0].mxu0
    %v1130 = vadd.f32 %v1065, %v1129
    %v1131 = vpop.f32.mrb[0].mxu0
    %1132 = vmatprep.mubr.bf16.mxu0 %v446
    %1133 = vmatmul.mubr.bf16.gmra.mrb[0].mxu0 %v445
    %v1134 = vpop.f32.mrb[0].mxu0
    %v1135 = vadd.f32 %v1070, %v1134
    %v1136 = vpop.f32.mrb[0].mxu0
    %v1137 = vpop.f32.mrb[0].mxu0
    %v1138 = vadd.f32 %v1073, %v1137
    %v1139 = vpop.f32.mrb[0].mxu0
    %1140 = vdwg.mxu0
    %1141 = vmatprep.subr.bf16.mxu0 0
    %1142 = vmatpush1.bf16.msra.mxu0 %v862
    %1143 = vmatprep.subr.bf16.mxu0 0
    %1144 = vmatpush1.bf16.msra.mxu0 %v863
    %1145 = vmatprep.subr.bf16.mxu0 0
    %1146 = vmatpush1.bf16.msra.mxu0 %v864
    %1147 = vmatprep.subr.bf16.mxu0 0
    %1148 = vmatpush1.bf16.msra.mxu0 %v865
    %1149 = vmatprep.subr.bf16.mxu0 0
    %1150 = vmatpush1.bf16.msra.mxu0 %v866
    %1151 = vmatprep.subr.bf16.mxu0 0
    %1152 = vmatpush1.bf16.msra.mxu0 %v867
    %1153 = vmatprep.subr.bf16.mxu0 0
    %1154 = vmatpush1.bf16.msra.mxu0 %v868
    %1155 = vmatprep.subr.bf16.mxu0 0
    %1156 = vmatpush1.bf16.msra.mxu0 %v869
    %1157 = vmatprep.subr.bf16.mxu0 0
    %1158 = vmatpush1.bf16.msra.mxu0 %v870
    %1159 = vmatprep.subr.bf16.mxu0 0
    %1160 = vmatpush1.bf16.msra.mxu0 %v871
    %1161 = vmatprep.subr.bf16.mxu0 0
    %1162 = vmatpush1.bf16.msra.mxu0 %v872
    %1163 = vmatprep.subr.bf16.mxu0 0
    %1164 = vmatpush1.bf16.msra.mxu0 %v873
    %1165 = vmatprep.subr.bf16.mxu0 0
    %1166 = vmatpush1.bf16.msra.mxu0 %v874
    %1167 = vmatprep.subr.bf16.mxu0 0
    %1168 = vmatpush1.bf16.msra.mxu0 %v875
    %1169 = vmatprep.subr.bf16.mxu0 0
    %1170 = vmatpush1.bf16.msra.mxu0 %v876
    %1171 = vmatprep.subr.bf16.mxu0 0
    %1172 = vmatpush1.bf16.msra.mxu0 %v877
    %1173 = vmatprep.mubr.bf16.mxu0 %v415
    %1174 = vmatmul.mubr.bf16.gmra.mrb[0].mxu0 %v414
    %v1175 = vpop.f32.mrb[0].mxu0
    %v1176 = vadd.f32 %v1111, %v1175
    %v1177 = vpop.f32.mrb[0].mxu0
    %v1178 = vpop.f32.mrb[0].mxu0
    %v1179 = vadd.f32 %v1114, %v1178
    %v1180 = vpop.f32.mrb[0].mxu0
    %1181 = vmatprep.mubr.bf16.mxu0 %v426
    %1182 = vmatmul.mubr.bf16.gmra.mrb[0].mxu0 %v425
    %v1183 = vpop.f32.mrb[0].mxu0
    %v1184 = vadd.f32 %v1119, %v1183
    %v1185 = vpop.f32.mrb[0].mxu0
    %v1186 = vpop.f32.mrb[0].mxu0
    %v1187 = vadd.f32 %v1122, %v1186
    %v1188 = vpop.f32.mrb[0].mxu0
    %1189 = vmatprep.mubr.bf16.mxu0 %v437
    %1190 = vmatmul.mubr.bf16.gmra.mrb[0].mxu0 %v436
    %v1191 = vpop.f32.mrb[0].mxu0
    %v1192 = vadd.f32 %v1127, %v1191
    %v1193 = vpop.f32.mrb[0].mxu0
    %v1194 = vpop.f32.mrb[0].mxu0
    %v1195 = vadd.f32 %v1130, %v1194
    %v1196 = vpop.f32.mrb[0].mxu0
    %1197 = vmatprep.mubr.bf16.mxu0 %v448
    %1198 = vmatmul.mubr.bf16.gmra.mrb[0].mxu0 %v447
    %v1199 = vpop.f32.mrb[0].mxu0
    %v1200 = vadd.f32 %v1135, %v1199
    %v1201 = vpop.f32.mrb[0].mxu0
    %v1202 = vpop.f32.mrb[0].mxu0
    %v1203 = vadd.f32 %v1138, %v1202
    %v1204 = vpop.f32.mrb[0].mxu0
    %1205 = vdwg.mxu0
    %1206 = vmatprep.subr.bf16.mxu0 0
    %1207 = vmatpush1.bf16.msra.mxu0 %v878
    %1208 = vmatprep.subr.bf16.mxu0 0
    %1209 = vmatpush1.bf16.msra.mxu0 %v879
    %1210 = vmatprep.subr.bf16.mxu0 0
    %1211 = vmatpush1.bf16.msra.mxu0 %v880
    %1212 = vmatprep.subr.bf16.mxu0 0
    %1213 = vmatpush1.bf16.msra.mxu0 %v881
    %1214 = vmatprep.subr.bf16.mxu0 0
    %1215 = vmatpush1.bf16.msra.mxu0 %v882
    %1216 = vmatprep.subr.bf16.mxu0 0
    %1217 = vmatpush1.bf16.msra.mxu0 %v883
    %1218 = vmatprep.subr.bf16.mxu0 0
    %1219 = vmatpush1.bf16.msra.mxu0 %v884
    %1220 = vmatprep.subr.bf16.mxu0 0
    %1221 = vmatpush1.bf16.msra.mxu0 %v885
    %1222 = vmatprep.subr.bf16.mxu0 0
    %1223 = vmatpush1.bf16.msra.mxu0 %v886
    %1224 = vmatprep.subr.bf16.mxu0 0
    %1225 = vmatpush1.bf16.msra.mxu0 %v887
    %1226 = vmatprep.subr.bf16.mxu0 0
    %1227 = vmatpush1.bf16.msra.mxu0 %v888
    %1228 = vmatprep.subr.bf16.mxu0 0
    %1229 = vmatpush1.bf16.msra.mxu0 %v889
    %1230 = vmatprep.subr.bf16.mxu0 0
    %1231 = vmatpush1.bf16.msra.mxu0 %v890
    %1232 = vmatprep.subr.bf16.mxu0 0
    %1233 = vmatpush1.bf16.msra.mxu0 %v891
    %1234 = vmatprep.subr.bf16.mxu0 0
    %1235 = vmatpush1.bf16.msra.mxu0 %v892
    %1236 = vmatprep.subr.bf16.mxu0 0
    %1237 = vmatpush1.bf16.msra.mxu0 %v893
    %1238 = vmatprep.mubr.bf16.mxu0 %v417
    %1239 = vmatmul.mubr.bf16.gmra.mrb[0].mxu0 %v416
    %v1240 = vpop.f32.mrb[0].mxu0
    %v1241 = vadd.f32 %v1176, %v1240
    %v1242 = vpop.f32.mrb[0].mxu0
    %v1243 = vpop.f32.mrb[0].mxu0
    %v1244 = vadd.f32 %v1179, %v1243
    %v1245 = vpop.f32.mrb[0].mxu0
    %1246 = vmatprep.mubr.bf16.mxu0 %v428
    %1247 = vmatmul.mubr.bf16.gmra.mrb[0].mxu0 %v427
    %v1248 = vpop.f32.mrb[0].mxu0
    %v1249 = vadd.f32 %v1184, %v1248
    %v1250 = vpop.f32.mrb[0].mxu0
    %v1251 = vpop.f32.mrb[0].mxu0
    %v1252 = vadd.f32 %v1187, %v1251
    %v1253 = vpop.f32.mrb[0].mxu0
    %1254 = vmatprep.mubr.bf16.mxu0 %v439
    %1255 = vmatmul.mubr.bf16.gmra.mrb[0].mxu0 %v438
    %v1256 = vpop.f32.mrb[0].mxu0
    %v1257 = vadd.f32 %v1192, %v1256
    %v1258 = vpop.f32.mrb[0].mxu0
    %v1259 = vpop.f32.mrb[0].mxu0
    %v1260 = vadd.f32 %v1195, %v1259
    %v1261 = vpop.f32.mrb[0].mxu0
    %1262 = vmatprep.mubr.bf16.mxu0 %v450
    %1263 = vmatmul.mubr.bf16.gmra.mrb[0].mxu0 %v449
    %v1264 = vpop.f32.mrb[0].mxu0
    %v1265 = vadd.f32 %v1200, %v1264
    %v1266 = vpop.f32.mrb[0].mxu0
    %v1267 = vpop.f32.mrb[0].mxu0
    %v1268 = vadd.f32 %v1203, %v1267
    %v1269 = vpop.f32.mrb[0].mxu0
    %1270 = vdwg.mxu0
    %1271 = vmatprep.subr.bf16.mxu0 0
    %1272 = vmatpush1.bf16.msra.mxu0 %v894
    %1273 = vmatprep.subr.bf16.mxu0 0
    %1274 = vmatpush1.bf16.msra.mxu0 %v895
    %1275 = vmatprep.subr.bf16.mxu0 0
    %1276 = vmatpush1.bf16.msra.mxu0 %v896
    %1277 = vmatprep.subr.bf16.mxu0 0
    %1278 = vmatpush1.bf16.msra.mxu0 %v897
    %1279 = vmatprep.subr.bf16.mxu0 0
    %1280 = vmatpush1.bf16.msra.mxu0 %v898
    %1281 = vmatprep.subr.bf16.mxu0 0
    %1282 = vmatpush1.bf16.msra.mxu0 %v899
    %1283 = vmatprep.subr.bf16.mxu0 0
    %1284 = vmatpush1.bf16.msra.mxu0 %v900
    %1285 = vmatprep.subr.bf16.mxu0 0
    %1286 = vmatpush1.bf16.msra.mxu0 %v901
    %1287 = vmatprep.subr.bf16.mxu0 0
    %1288 = vmatpush1.bf16.msra.mxu0 %v902
    %1289 = vmatprep.subr.bf16.mxu0 0
    %1290 = vmatpush1.bf16.msra.mxu0 %v903
    %1291 = vmatprep.subr.bf16.mxu0 0
    %1292 = vmatpush1.bf16.msra.mxu0 %v904
    %1293 = vmatprep.subr.bf16.mxu0 0
    %1294 = vmatpush1.bf16.msra.mxu0 %v905
    %1295 = vmatprep.subr.bf16.mxu0 0
    %1296 = vmatpush1.bf16.msra.mxu0 %v906
    %1297 = vmatprep.subr.bf16.mxu0 0
    %1298 = vmatpush1.bf16.msra.mxu0 %v907
    %1299 = vmatprep.subr.bf16.mxu0 0
    %1300 = vmatpush1.bf16.msra.mxu0 %v908
    %1301 = vmatprep.subr.bf16.mxu0 0
    %1302 = vmatpush1.bf16.msra.mxu0 %v909
    %1303 = vmatprep.mubr.bf16.mxu0 %v419
    %1304 = vmatmul.mubr.bf16.gmra.mrb[0].mxu0 %v418
    %v1305 = vpop.f32.mrb[0].mxu0
    %v1306 = vadd.f32 %v1241, %v1305
    %v1307 = vpop.f32.mrb[0].mxu0
    %v1308 = vpop.f32.mrb[0].mxu0
    %v1309 = vadd.f32 %v1244, %v1308
    %v1310 = vpop.f32.mrb[0].mxu0
    %1311 = vmatprep.mubr.bf16.mxu0 %v430
    %1312 = vmatmul.mubr.bf16.gmra.mrb[0].mxu0 %v429
    %v1313 = vpop.f32.mrb[0].mxu0
    %v1314 = vadd.f32 %v1249, %v1313
    %v1315 = vpop.f32.mrb[0].mxu0
    %v1316 = vpop.f32.mrb[0].mxu0
    %v1317 = vadd.f32 %v1252, %v1316
    %v1318 = vpop.f32.mrb[0].mxu0
    %1319 = vmatprep.mubr.bf16.mxu0 %v441
    %1320 = vmatmul.mubr.bf16.gmra.mrb[0].mxu0 %v440
    %v1321 = vpop.f32.mrb[0].mxu0
    %v1322 = vadd.f32 %v1257, %v1321
    %v1323 = vpop.f32.mrb[0].mxu0
    %v1324 = vpop.f32.mrb[0].mxu0
    %v1325 = vadd.f32 %v1260, %v1324
    %v1326 = vpop.f32.mrb[0].mxu0
    %1327 = vmatprep.mubr.bf16.mxu0 %v452
    %1328 = vmatmul.mubr.bf16.gmra.mrb[0].mxu0 %v451
    %v1329 = vpop.f32.mrb[0].mxu0
    %v1330 = vadd.f32 %v1265, %v1329
    %v1331 = vpop.f32.mrb[0].mxu0
    %v1332 = vpop.f32.mrb[0].mxu0
    %v1333 = vadd.f32 %v1268, %v1332
    %v1334 = vpop.f32.mrb[0].mxu0
    %1335 = vdwg.mxu0
    %1336 = vmatprep.subr.bf16.mxu0 0
    %1337 = vmatpush1.bf16.msra.mxu0 %v910
    %1338 = vmatprep.subr.bf16.mxu0 0
    %1339 = vmatpush1.bf16.msra.mxu0 %v911
    %1340 = vmatprep.subr.bf16.mxu0 0
    %1341 = vmatpush1.bf16.msra.mxu0 %v912
    %1342 = vmatprep.subr.bf16.mxu0 0
    %1343 = vmatpush1.bf16.msra.mxu0 %v913
    %1344 = vmatprep.subr.bf16.mxu0 0
    %1345 = vmatpush1.bf16.msra.mxu0 0
    %1346 = vmatprep.subr.bf16.mxu0 0
    %1347 = vmatpush1.bf16.msra.mxu0 0
    %1348 = vmatprep.subr.bf16.mxu0 0
    %1349 = vmatpush1.bf16.msra.mxu0 0
    %1350 = vmatprep.subr.bf16.mxu0 0
    %1351 = vmatpush1.bf16.msra.mxu0 0
    %1352 = vmatprep.subr.bf16.mxu0 0
    %1353 = vmatpush1.bf16.msra.mxu0 0
    %1354 = vmatprep.subr.bf16.mxu0 0
    %1355 = vmatpush1.bf16.msra.mxu0 0
    %1356 = vmatprep.subr.bf16.mxu0 0
    %1357 = vmatpush1.bf16.msra.mxu0 0
    %1358 = vmatprep.subr.bf16.mxu0 0
    %1359 = vmatpush1.bf16.msra.mxu0 0
    %1360 = vmatprep.subr.bf16.mxu0 0
    %1361 = vmatpush1.bf16.msra.mxu0 0
    %1362 = vmatprep.subr.bf16.mxu0 0
    %1363 = vmatpush1.bf16.msra.mxu0 0
    %1364 = vmatprep.subr.bf16.mxu0 0
    %1365 = vmatpush1.bf16.msra.mxu0 0
    %1366 = vmatprep.subr.bf16.mxu0 0
    %1367 = vmatpush1.bf16.msra.mxu0 0
    %1368 = vmatprep.mubr.bf16.mxu0 0
    %1369 = vmatmul.mubr.bf16.gmra.mrb[0].mxu0 %v1000
    %v1370 = vpop.f32.mrb[0].mxu0
    %v1371 = vadd.f32 %v1306, %v1370
    %v1372 = vpop.f32.mrb[0].mxu0
    %v1373 = vpop.f32.mrb[0].mxu0
    %v1374 = vadd.f32 %v1309, %v1373
    %v1375 = vpop.f32.mrb[0].mxu0
    %1376 = vmatprep.mubr.bf16.mxu0 0
    %1377 = vmatmul.mubr.bf16.gmra.mrb[0].mxu0 %v1003
    %v1378 = vpop.f32.mrb[0].mxu0
    %v1379 = vadd.f32 %v1314, %v1378
    %v1380 = vpop.f32.mrb[0].mxu0
    %v1381 = vpop.f32.mrb[0].mxu0
    %v1382 = vadd.f32 %v1317, %v1381
    %v1383 = vpop.f32.mrb[0].mxu0
    %1384 = vmatprep.mubr.bf16.mxu0 0
    %1385 = vmatmul.mubr.bf16.gmra.mrb[0].mxu0 %v1006
    %v1386 = vpop.f32.mrb[0].mxu0
    %v1387 = vadd.f32 %v1322, %v1386
    %v1388 = vpop.f32.mrb[0].mxu0
    %v1389 = vpop.f32.mrb[0].mxu0
    %v1390 = vadd.f32 %v1325, %v1389
    %v1391 = vpop.f32.mrb[0].mxu0
    %1392 = vmatprep.mubr.bf16.mxu0 0
    %1393 = vmatmul.mubr.bf16.gmra.mrb[0].mxu0 %v1009
    %v1394 = vpop.f32.mrb[0].mxu0
    %v1395 = vadd.f32 %v1330, %v1394
    %v1396 = vpop.f32.mrb[0].mxu0
    %v1397 = vpop.f32.mrb[0].mxu0
    %v1398 = vadd.f32 %v1333, %v1397
    %v1399 = vpop.f32.mrb[0].mxu0
    %1400 = vdwg.mxu0
    %vm1401 = vcmp.ge.f32.partialorder %v1371, 0.0
    %vm1402 = vcmp.ge.f32.partialorder %v1374, 0.0
    %vm1403 = vcmp.ge.f32.partialorder %v1379, 0.0
    %vm1404 = vcmp.ge.f32.partialorder %v1382, 0.0
    %vm1405 = vcmp.ge.f32.partialorder %v1387, 0.0
    %vm1406 = vcmp.ge.f32.partialorder %v1390, 0.0
    %vm1407 = vcmp.ge.f32.partialorder %v1395, 0.0
    %vm1408 = vcmp.ge.f32.partialorder %v1398, 0.0
    %v1409 = vmul.f32 %v1371, 0.01
    %v1410 = vmul.f32 %v1374, 0.01
    %v1411 = vmul.f32 %v1379, 0.01
    %v1412 = vmul.f32 %v1382, 0.01
    %v1413 = vmul.f32 %v1387, 0.01
    %v1414 = vmul.f32 %v1390, 0.01
    %v1415 = vmul.f32 %v1395, 0.01
    %v1416 = vmul.f32 %v1398, 0.01
    %v1417 = vsel %vm1401, %v1371, %v1409
    %v1418 = vsel %vm1402, %v1374, %v1410
    %v1419 = vsel %vm1403, %v1379, %v1411
    %v1420 = vsel %vm1404, %v1382, %v1412
    %v1421 = vsel %vm1405, %v1387, %v1413
    %v1422 = vsel %vm1406, %v1390, %v1414
    %v1423 = vsel %vm1407, %v1395, %v1415
    %v1424 = vsel %vm1408, %v1398, %v1416
    %v1425 = vpack.c.bf16 %v1418, %v1417
    %v1426 = vpack.c.bf16 %v1420, %v1419
    %v1427 = vpack.c.bf16 %v1422, %v1421
    %v1428 = vpack.c.bf16 %v1424, %v1423
    %v1429 = vld [vmem:[%s1] sm:$0xff]
    %v1430 = vld [vmem:[%s1 + $0x8] sm:$0xff]
    %v1431 = vld [vmem:[%s1 + $0x10] sm:$0xff]
    %v1432 = vld [vmem:[%s1 + $0x18] sm:$0xff]
    %v1433 = vld [vmem:[%s1 + $0x20] sm:$0xff]
    %v1434 = vld [vmem:[%s1 + $0x28] sm:$0xff]
    %v1435 = vld [vmem:[%s1 + $0x30] sm:$0xff]
    %v1436 = vld [vmem:[%s1 + $0x38] sm:$0xff]
    %v1437 = vld [vmem:[%s1 + $0x40] sm:$0xf]
    %v1438 = vld [vmem:[%s1 + $0x44] sm:$0xff]
    %v1439 = vld [vmem:[%s1 + $0x4c] sm:$0xff]
    %v1440 = vld [vmem:[%s1 + $0x54] sm:$0xff]
    %v1441 = vld [vmem:[%s1 + $0x5c] sm:$0xff]
    %v1442 = vld [vmem:[%s1 + $0x64] sm:$0xff]
    %v1443 = vld [vmem:[%s1 + $0x6c] sm:$0xff]
    %v1444 = vld [vmem:[%s1 + $0x74] sm:$0xff]
    %v1445 = vld [vmem:[%s1 + $0x7c] sm:$0xff]
    %v1446 = vld [vmem:[%s1 + $0x84] sm:$0xf]
    %v1447 = vld [vmem:[%s1 + $0x88] sm:$0xff]
    %v1448 = vld [vmem:[%s1 + $0x90] sm:$0xff]
    %v1449 = vld [vmem:[%s1 + $0x98] sm:$0xff]
    %v1450 = vld [vmem:[%s1 + $0xa0] sm:$0xff]
    %v1451 = vld [vmem:[%s1 + $0xa8] sm:$0xff]
    %v1452 = vld [vmem:[%s1 + $0xb0] sm:$0xff]
    %v1453 = vld [vmem:[%s1 + $0xb8] sm:$0xff]
    %v1454 = vld [vmem:[%s1 + $0xc0] sm:$0xff]
    %v1455 = vld [vmem:[%s1 + $0xc8] sm:$0xf]
    %v1456 = vld [vmem:[%s1 + $0xcc] sm:$0xff]
    %v1457 = vld [vmem:[%s1 + $0xd4] sm:$0xff]
    %v1458 = vld [vmem:[%s1 + $0xdc] sm:$0xff]
    %v1459 = vld [vmem:[%s1 + $0xe4] sm:$0xff]
    %v1460 = vld [vmem:[%s1 + $0xec] sm:$0xff]
    %v1461 = vld [vmem:[%s1 + $0xf4] sm:$0xff]
    %v1462 = vld [vmem:[%s1 + $0xfc] sm:$0xff]
    %v1463 = vld [vmem:[%s1 + $0x104] sm:$0xff]
    %v1464 = vld [vmem:[%s1 + $0x10c] sm:$0xf]
    %v1465 = vld [vmem:[%s1 + $0x110] sm:$0xff]
    %v1466 = vld [vmem:[%s1 + $0x118] sm:$0xff]
    %v1467 = vld [vmem:[%s1 + $0x120] sm:$0xff]
    %v1468 = vld [vmem:[%s1 + $0x128] sm:$0xff]
    %v1469 = vld [vmem:[%s1 + $0x130] sm:$0xff]
    %v1470 = vld [vmem:[%s1 + $0x138] sm:$0xff]
    %v1471 = vld [vmem:[%s1 + $0x140] sm:$0xff]
    %v1472 = vld [vmem:[%s1 + $0x148] sm:$0xff]
    %v1473 = vld [vmem:[%s1 + $0x150] sm:$0xf]
    %v1474 = vld [vmem:[%s1 + $0x154] sm:$0xff]
    %v1475 = vld [vmem:[%s1 + $0x15c] sm:$0xff]
    %v1476 = vld [vmem:[%s1 + $0x164] sm:$0xff]
    %v1477 = vld [vmem:[%s1 + $0x16c] sm:$0xff]
    %v1478 = vld [vmem:[%s1 + $0x174] sm:$0xff]
    %v1479 = vld [vmem:[%s1 + $0x17c] sm:$0xff]
    %v1480 = vld [vmem:[%s1 + $0x184] sm:$0xff]
    %v1481 = vld [vmem:[%s1 + $0x18c] sm:$0xff]
    %v1482 = vld [vmem:[%s1 + $0x194] sm:$0xf]
    %v1483 = vld [vmem:[%s1 + $0x198] sm:$0xff]
    %v1484 = vld [vmem:[%s1 + $0x1a0] sm:$0xff]
    %v1485 = vld [vmem:[%s1 + $0x1a8] sm:$0xff]
    %v1486 = vld [vmem:[%s1 + $0x1b0] sm:$0xff]
    %v1487 = vld [vmem:[%s1 + $0x1b8] sm:$0xff]
    %v1488 = vld [vmem:[%s1 + $0x1c0] sm:$0xff]
    %v1489 = vld [vmem:[%s1 + $0x1c8] sm:$0xff]
    %v1490 = vld [vmem:[%s1 + $0x1d0] sm:$0xff]
    %v1491 = vld [vmem:[%s1 + $0x1d8] sm:$0xf]
    %v1492 = vld [vmem:[%s1 + $0x1dc] sm:$0xff]
    %v1493 = vld [vmem:[%s1 + $0x1e4] sm:$0xff]
    %v1494 = vld [vmem:[%s1 + $0x1ec] sm:$0xff]
    %v1495 = vld [vmem:[%s1 + $0x1f4] sm:$0xff]
    %v1496 = vld [vmem:[%s1 + $0x1fc] sm:$0xff]
    %v1497 = vld [vmem:[%s1 + $0x204] sm:$0xff]
    %v1498 = vld [vmem:[%s1 + $0x20c] sm:$0xff]
    %v1499 = vld [vmem:[%s1 + $0x214] sm:$0xff]
    %v1500 = vld [vmem:[%s1 + $0x21c] sm:$0xf]
    %v1501 = vld [vmem:[%s3] sm:$0xff]
    %v1502 = vld [vmem:[%s3 + $0x8] sm:$0xff]
    %v1503 = vld [vmem:[%s3 + $0x10] sm:$0xff]
    %v1504 = vld [vmem:[%s3 + $0x18] sm:$0xff]
    %v1505 = vld [vmem:[%s3 + $0x20] sm:$0xff]
    %v1506 = vld [vmem:[%s3 + $0x28] sm:$0xff]
    %v1507 = vld [vmem:[%s3 + $0x30] sm:$0xff]
    %v1508 = vld [vmem:[%s3 + $0x38] sm:$0xff]
    %v1509 = vld [vmem:[%s3 + $0x40] sm:$0xff]
    %v1510 = vld [vmem:[%s3 + $0x48] sm:$0xff]
    %v1511 = vld [vmem:[%s3 + $0x50] sm:$0xff]
    %v1512 = vld [vmem:[%s3 + $0x58] sm:$0xff]
    %v1513 = vld [vmem:[%s3 + $0x60] sm:$0xff]
    %v1514 = vld [vmem:[%s3 + $0x68] sm:$0xff]
    %v1515 = vld [vmem:[%s3 + $0x70] sm:$0xff]
    %v1516 = vld [vmem:[%s3 + $0x78] sm:$0xff]
    %v1517 = vld [vmem:[%s3 + $0x80] sm:$0xff]
    %v1518 = vld [vmem:[%s3 + $0x88] sm:$0xff]
    %v1519 = vld [vmem:[%s3 + $0x90] sm:$0xff]
    %v1520 = vld [vmem:[%s3 + $0x98] sm:$0xff]
    %v1521 = vld [vmem:[%s3 + $0xa0] sm:$0xff]
    %v1522 = vld [vmem:[%s3 + $0xa8] sm:$0xff]
    %v1523 = vld [vmem:[%s3 + $0xb0] sm:$0xff]
    %v1524 = vld [vmem:[%s3 + $0xb8] sm:$0xff]
    %v1525 = vld [vmem:[%s3 + $0xc0] sm:$0xff]
    %v1526 = vld [vmem:[%s3 + $0xc8] sm:$0xff]
    %v1527 = vld [vmem:[%s3 + $0xd0] sm:$0xff]
    %v1528 = vld [vmem:[%s3 + $0xd8] sm:$0xff]
    %v1529 = vld [vmem:[%s3 + $0xe0] sm:$0xff]
    %v1530 = vld [vmem:[%s3 + $0xe8] sm:$0xff]
    %v1531 = vld [vmem:[%s3 + $0xf0] sm:$0xff]
    %v1532 = vld [vmem:[%s3 + $0xf8] sm:$0xff]
    %v1533 = vld [vmem:[%s3 + $0x100] sm:$0xff]
    %v1534 = vld [vmem:[%s3 + $0x108] sm:$0xff]
    %v1535 = vld [vmem:[%s3 + $0x110] sm:$0xff]
    %v1536 = vld [vmem:[%s3 + $0x118] sm:$0xff]
    %v1537 = vld [vmem:[%s3 + $0x120] sm:$0xff]
    %v1538 = vld [vmem:[%s3 + $0x128] sm:$0xff]
    %v1539 = vld [vmem:[%s3 + $0x130] sm:$0xff]
    %v1540 = vld [vmem:[%s3 + $0x138] sm:$0xff]
    %v1541 = vld [vmem:[%s3 + $0x140] sm:$0xff]
    %v1542 = vld [vmem:[%s3 + $0x148] sm:$0xff]
    %v1543 = vld [vmem:[%s3 + $0x150] sm:$0xff]
    %v1544 = vld [vmem:[%s3 + $0x158] sm:$0xff]
    %v1545 = vld [vmem:[%s3 + $0x160] sm:$0xff]
    %v1546 = vld [vmem:[%s3 + $0x168] sm:$0xff]
    %v1547 = vld [vmem:[%s3 + $0x170] sm:$0xff]
    %v1548 = vld [vmem:[%s3 + $0x178] sm:$0xff]
    %v1549 = vld [vmem:[%s3 + $0x180] sm:$0xff]
    %v1550 = vld [vmem:[%s3 + $0x188] sm:$0xff]
    %v1551 = vld [vmem:[%s3 + $0x190] sm:$0xff]
    %v1552 = vld [vmem:[%s3 + $0x198] sm:$0xff]
    %v1553 = vld [vmem:[%s3 + $0x1a0] sm:$0xff]
    %v1554 = vld [vmem:[%s3 + $0x1a8] sm:$0xff]
    %v1555 = vld [vmem:[%s3 + $0x1b0] sm:$0xff]
    %v1556 = vld [vmem:[%s3 + $0x1b8] sm:$0xff]
    %v1557 = vld [vmem:[%s3 + $0x1c0] sm:$0xff]
    %v1558 = vld [vmem:[%s3 + $0x1c8] sm:$0xff]
    %v1559 = vld [vmem:[%s3 + $0x1d0] sm:$0xff]
    %v1560 = vld [vmem:[%s3 + $0x1d8] sm:$0xff]
    %v1561 = vld [vmem:[%s3 + $0x1e0] sm:$0xff]
    %v1562 = vld [vmem:[%s3 + $0x1e8] sm:$0xff]
    %v1563 = vld [vmem:[%s3 + $0x1f0] sm:$0xff]
    %v1564 = vld [vmem:[%s3 + $0x1f8] sm:$0xff]
    %v1565 = vld [vmem:[%s3 + $0x200] sm:$0xff]
    %v1566 = vld [vmem:[%s3 + $0x208] sm:$0xff]
    %v1567 = vld [vmem:[%s3 + $0x210] sm:$0xff]
    %v1568 = vld [vmem:[%s3 + $0x218] sm:$0xff]
    %v1569 = vld [vmem:[%s3 + $0x220] sm:$0xff]
    %v1570 = vld [vmem:[%s3 + $0x228] sm:$0xff]
    %v1571 = vld [vmem:[%s3 + $0x230] sm:$0xff]
    %v1572 = vld [vmem:[%s3 + $0x238] sm:$0xff]
    %v1573 = vld [vmem:[%s3 + $0x240] sm:$0xff]
    %v1574 = vld [vmem:[%s3 + $0x248] sm:$0xff]
    %v1575 = vld [vmem:[%s3 + $0x250] sm:$0xff]
    %v1576 = vld [vmem:[%s3 + $0x258] sm:$0xff]
    %v1577 = vld [vmem:[%s3 + $0x260] sm:$0xff]
    %v1578 = vld [vmem:[%s3 + $0x268] sm:$0xff]
    %v1579 = vld [vmem:[%s3 + $0x270] sm:$0xff]
    %v1580 = vld [vmem:[%s3 + $0x278] sm:$0xff]
    %v1581 = vld [vmem:[%s3 + $0x280] sm:$0xff]
    %v1582 = vld [vmem:[%s3 + $0x288] sm:$0xff]
    %v1583 = vld [vmem:[%s3 + $0x290] sm:$0xff]
    %v1584 = vld [vmem:[%s3 + $0x298] sm:$0xff]
    %v1585 = vld [vmem:[%s3 + $0x2a0] sm:$0xff]
    %v1586 = vld [vmem:[%s3 + $0x2a8] sm:$0xff]
    %v1587 = vld [vmem:[%s3 + $0x2b0] sm:$0xff]
    %v1588 = vld [vmem:[%s3 + $0x2b8] sm:$0xff]
    %v1589 = vld [vmem:[%s3 + $0x2c0] sm:$0xff]
    %v1590 = vld [vmem:[%s3 + $0x2c8] sm:$0xff]
    %v1591 = vld [vmem:[%s3 + $0x2d0] sm:$0xff]
    %v1592 = vld [vmem:[%s3 + $0x2d8] sm:$0xff]
    %v1593 = vld [vmem:[%s3 + $0x2e0] sm:$0xff]
    %v1594 = vld [vmem:[%s3 + $0x2e8] sm:$0xff]
    %v1595 = vld [vmem:[%s3 + $0x2f0] sm:$0xff]
    %v1596 = vld [vmem:[%s3 + $0x2f8] sm:$0xff]
    %v1597 = vld [vmem:[%s3 + $0x300] sm:$0xff]
    %v1598 = vld [vmem:[%s3 + $0x308] sm:$0xff]
    %v1599 = vld [vmem:[%s3 + $0x310] sm:$0xff]
    %v1600 = vld [vmem:[%s3 + $0x318] sm:$0xff]
    %v1601 = vld [vmem:[%s3 + $0x320] sm:$0xff]
    %v1602 = vld [vmem:[%s3 + $0x328] sm:$0xff]
    %v1603 = vld [vmem:[%s3 + $0x330] sm:$0xff]
    %v1604 = vld [vmem:[%s3 + $0x338] sm:$0xff]
    %v1605 = vld [vmem:[%s3 + $0x340] sm:$0xff]
    %v1606 = vld [vmem:[%s3 + $0x348] sm:$0xff]
    %v1607 = vld [vmem:[%s3 + $0x350] sm:$0xff]
    %v1608 = vld [vmem:[%s3 + $0x358] sm:$0xff]
    %v1609 = vld [vmem:[%s3 + $0x360] sm:$0xff]
    %v1610 = vld [vmem:[%s3 + $0x368] sm:$0xff]
    %v1611 = vld [vmem:[%s3 + $0x370] sm:$0xff]
    %v1612 = vld [vmem:[%s3 + $0x378] sm:$0xff]
    %v1613 = vld [vmem:[%s3 + $0x380] sm:$0xff]
    %v1614 = vld [vmem:[%s3 + $0x388] sm:$0xff]
    %v1615 = vld [vmem:[%s3 + $0x390] sm:$0xff]
    %v1616 = vld [vmem:[%s3 + $0x398] sm:$0xff]
    %v1617 = vld [vmem:[%s3 + $0x3a0] sm:$0xff]
    %v1618 = vld [vmem:[%s3 + $0x3a8] sm:$0xff]
    %v1619 = vld [vmem:[%s3 + $0x3b0] sm:$0xff]
    %v1620 = vld [vmem:[%s3 + $0x3b8] sm:$0xff]
    %v1621 = vld [vmem:[%s3 + $0x3c0] sm:$0xff]
    %v1622 = vld [vmem:[%s3 + $0x3c8] sm:$0xff]
    %v1623 = vld [vmem:[%s3 + $0x3d0] sm:$0xff]
    %v1624 = vld [vmem:[%s3 + $0x3d8] sm:$0xff]
    %v1625 = vld [vmem:[%s3 + $0x3e0] sm:$0xff]
    %v1626 = vld [vmem:[%s3 + $0x3e8] sm:$0xff]
    %v1627 = vld [vmem:[%s3 + $0x3f0] sm:$0xff]
    %v1628 = vld [vmem:[%s3 + $0x3f8] sm:$0xff]
    %v1629 = vld [vmem:[%s3 + $0x400] sm:$0xff]
    %v1630 = vld [vmem:[%s3 + $0x408] sm:$0xff]
    %v1631 = vld [vmem:[%s3 + $0x410] sm:$0xff]
    %v1632 = vld [vmem:[%s3 + $0x418] sm:$0xff]
    %v1633 = vld [vmem:[%s3 + $0x420] sm:$0xff]
    %v1634 = vld [vmem:[%s3 + $0x428] sm:$0xff]
    %v1635 = vld [vmem:[%s3 + $0x430] sm:$0xff]
    %v1636 = vld [vmem:[%s3 + $0x438] sm:$0xff]
    %v1637 = vld [vmem:[%s3 + $0x440] sm:$0xff]
    %v1638 = vld [vmem:[%s3 + $0x448] sm:$0xff]
    %v1639 = vld [vmem:[%s3 + $0x450] sm:$0xff]
    %v1640 = vld [vmem:[%s3 + $0x458] sm:$0xff]
    %v1641 = vld [vmem:[%s3 + $0x460] sm:$0xff]
    %v1642 = vld [vmem:[%s3 + $0x468] sm:$0xff]
    %v1643 = vld [vmem:[%s3 + $0x470] sm:$0xff]
    %v1644 = vld [vmem:[%s3 + $0x478] sm:$0xff]
    %v1645 = vld [vmem:[%s3 + $0x480] sm:$0xff]
    %v1646 = vld [vmem:[%s3 + $0x488] sm:$0xff]
    %v1647 = vld [vmem:[%s3 + $0x490] sm:$0xff]
    %v1648 = vld [vmem:[%s3 + $0x498] sm:$0xff]
    %v1649 = vld [vmem:[%s3 + $0x4a0] sm:$0xff]
    %v1650 = vld [vmem:[%s3 + $0x4a8] sm:$0xff]
    %v1651 = vld [vmem:[%s3 + $0x4b0] sm:$0xff]
    %v1652 = vld [vmem:[%s3 + $0x4b8] sm:$0xff]
    %v1653 = vld [vmem:[%s3 + $0x4c0] sm:$0xff]
    %v1654 = vld [vmem:[%s3 + $0x4c8] sm:$0xff]
    %v1655 = vld [vmem:[%s3 + $0x4d0] sm:$0xff]
    %v1656 = vld [vmem:[%s3 + $0x4d8] sm:$0xff]
    %v1657 = vld [vmem:[%s3 + $0x4e0] sm:$0xff]
    %v1658 = vld [vmem:[%s3 + $0x4e8] sm:$0xff]
    %v1659 = vld [vmem:[%s3 + $0x4f0] sm:$0xff]
    %v1660 = vld [vmem:[%s3 + $0x4f8] sm:$0xff]
    %v1661 = vld [vmem:[%s3 + $0x500] sm:$0xff]
    %v1662 = vld [vmem:[%s3 + $0x508] sm:$0xff]
    %v1663 = vld [vmem:[%s3 + $0x510] sm:$0xff]
    %v1664 = vld [vmem:[%s3 + $0x518] sm:$0xff]
    %v1665 = vld [vmem:[%s3 + $0x520] sm:$0xff]
    %v1666 = vld [vmem:[%s3 + $0x528] sm:$0xff]
    %v1667 = vld [vmem:[%s3 + $0x530] sm:$0xff]
    %v1668 = vld [vmem:[%s3 + $0x538] sm:$0xff]
    %v1669 = vld [vmem:[%s3 + $0x540] sm:$0xff]
    %v1670 = vld [vmem:[%s3 + $0x548] sm:$0xff]
    %v1671 = vld [vmem:[%s3 + $0x550] sm:$0xff]
    %v1672 = vld [vmem:[%s3 + $0x558] sm:$0xff]
    %v1673 = vld [vmem:[%s3 + $0x560] sm:$0xff]
    %v1674 = vld [vmem:[%s3 + $0x568] sm:$0xff]
    %v1675 = vld [vmem:[%s3 + $0x570] sm:$0xff]
    %v1676 = vld [vmem:[%s3 + $0x578] sm:$0xff]
    %v1677 = vld [vmem:[%s3 + $0x580] sm:$0xff]
    %v1678 = vld [vmem:[%s3 + $0x588] sm:$0xff]
    %v1679 = vld [vmem:[%s3 + $0x590] sm:$0xff]
    %v1680 = vld [vmem:[%s3 + $0x598] sm:$0xff]
    %v1681 = vld [vmem:[%s3 + $0x5a0] sm:$0xff]
    %v1682 = vld [vmem:[%s3 + $0x5a8] sm:$0xff]
    %v1683 = vld [vmem:[%s3 + $0x5b0] sm:$0xff]
    %v1684 = vld [vmem:[%s3 + $0x5b8] sm:$0xff]
    %v1685 = vld [vmem:[%s3 + $0x5c0] sm:$0xff]
    %v1686 = vld [vmem:[%s3 + $0x5c8] sm:$0xff]
    %v1687 = vld [vmem:[%s3 + $0x5d0] sm:$0xff]
    %v1688 = vld [vmem:[%s3 + $0x5d8] sm:$0xff]
    %v1689 = vld [vmem:[%s3 + $0x5e0] sm:$0xff]
    %v1690 = vld [vmem:[%s3 + $0x5e8] sm:$0xff]
    %v1691 = vld [vmem:[%s3 + $0x5f0] sm:$0xff]
    %v1692 = vld [vmem:[%s3 + $0x5f8] sm:$0xff]
    %v1693 = vld [vmem:[%s3 + $0x600] sm:$0xff]
    %v1694 = vld [vmem:[%s3 + $0x608] sm:$0xff]
    %v1695 = vld [vmem:[%s3 + $0x610] sm:$0xff]
    %v1696 = vld [vmem:[%s3 + $0x618] sm:$0xff]
    %v1697 = vld [vmem:[%s3 + $0x620] sm:$0xff]
    %v1698 = vld [vmem:[%s3 + $0x628] sm:$0xff]
    %v1699 = vld [vmem:[%s3 + $0x630] sm:$0xff]
    %v1700 = vld [vmem:[%s3 + $0x638] sm:$0xff]
    %v1701 = vld [vmem:[%s3 + $0x640] sm:$0xff]
    %v1702 = vld [vmem:[%s3 + $0x648] sm:$0xff]
    %v1703 = vld [vmem:[%s3 + $0x650] sm:$0xff]
    %v1704 = vld [vmem:[%s3 + $0x658] sm:$0xff]
    %v1705 = vld [vmem:[%s3 + $0x660] sm:$0xff]
    %v1706 = vld [vmem:[%s3 + $0x668] sm:$0xff]
    %v1707 = vld [vmem:[%s3 + $0x670] sm:$0xff]
    %v1708 = vld [vmem:[%s3 + $0x678] sm:$0xff]
    %v1709 = vld [vmem:[%s3 + $0x680] sm:$0xff]
    %v1710 = vld [vmem:[%s3 + $0x688] sm:$0xff]
    %v1711 = vld [vmem:[%s3 + $0x690] sm:$0xff]
    %v1712 = vld [vmem:[%s3 + $0x698] sm:$0xff]
    %v1713 = vld [vmem:[%s3 + $0x6a0] sm:$0xff]
    %v1714 = vld [vmem:[%s3 + $0x6a8] sm:$0xff]
    %v1715 = vld [vmem:[%s3 + $0x6b0] sm:$0xff]
    %v1716 = vld [vmem:[%s3 + $0x6b8] sm:$0xff]
    %v1717 = vld [vmem:[%s3 + $0x6c0] sm:$0xff]
    %v1718 = vld [vmem:[%s3 + $0x6c8] sm:$0xff]
    %v1719 = vld [vmem:[%s3 + $0x6d0] sm:$0xff]
    %v1720 = vld [vmem:[%s3 + $0x6d8] sm:$0xff]
    %v1721 = vld [vmem:[%s3 + $0x6e0] sm:$0xff]
    %v1722 = vld [vmem:[%s3 + $0x6e8] sm:$0xff]
    %v1723 = vld [vmem:[%s3 + $0x6f0] sm:$0xff]
    %v1724 = vld [vmem:[%s3 + $0x6f8] sm:$0xff]
    %v1725 = vld [vmem:[%s3 + $0x700] sm:$0xff]
    %v1726 = vld [vmem:[%s3 + $0x708] sm:$0xff]
    %v1727 = vld [vmem:[%s3 + $0x710] sm:$0xff]
    %v1728 = vld [vmem:[%s3 + $0x718] sm:$0xff]
    %v1729 = vld [vmem:[%s3 + $0x720] sm:$0xff]
    %v1730 = vld [vmem:[%s3 + $0x728] sm:$0xff]
    %v1731 = vld [vmem:[%s3 + $0x730] sm:$0xff]
    %v1732 = vld [vmem:[%s3 + $0x738] sm:$0xff]
    %v1733 = vld [vmem:[%s3 + $0x740] sm:$0xff]
    %v1734 = vld [vmem:[%s3 + $0x748] sm:$0xff]
    %v1735 = vld [vmem:[%s3 + $0x750] sm:$0xff]
    %v1736 = vld [vmem:[%s3 + $0x758] sm:$0xff]
    %v1737 = vld [vmem:[%s3 + $0x760] sm:$0xff]
    %v1738 = vld [vmem:[%s3 + $0x768] sm:$0xff]
    %v1739 = vld [vmem:[%s3 + $0x770] sm:$0xff]
    %v1740 = vld [vmem:[%s3 + $0x778] sm:$0xff]
    %v1741 = vld [vmem:[%s3 + $0x780] sm:$0xff]
    %v1742 = vld [vmem:[%s3 + $0x788] sm:$0xff]
    %v1743 = vld [vmem:[%s3 + $0x790] sm:$0xff]
    %v1744 = vld [vmem:[%s3 + $0x798] sm:$0xff]
    %v1745 = vld [vmem:[%s3 + $0x7a0] sm:$0xff]
    %v1746 = vld [vmem:[%s3 + $0x7a8] sm:$0xff]
    %v1747 = vld [vmem:[%s3 + $0x7b0] sm:$0xff]
    %v1748 = vld [vmem:[%s3 + $0x7b8] sm:$0xff]
    %v1749 = vld [vmem:[%s3 + $0x7c0] sm:$0xff]
    %v1750 = vld [vmem:[%s3 + $0x7c8] sm:$0xff]
    %v1751 = vld [vmem:[%s3 + $0x7d0] sm:$0xff]
    %v1752 = vld [vmem:[%s3 + $0x7d8] sm:$0xff]
    %v1753 = vld [vmem:[%s3 + $0x7e0] sm:$0xff]
    %v1754 = vld [vmem:[%s3 + $0x7e8] sm:$0xff]
    %v1755 = vld [vmem:[%s3 + $0x7f0] sm:$0xff]
    %v1756 = vld [vmem:[%s3 + $0x7f8] sm:$0xff]
    %v1757 = vld [vmem:[%s3 + $0x800] sm:$0xff]
    %v1758 = vld [vmem:[%s3 + $0x808] sm:$0xff]
    %v1759 = vld [vmem:[%s3 + $0x810] sm:$0xff]
    %v1760 = vld [vmem:[%s3 + $0x818] sm:$0xff]
    %v1761 = vld [vmem:[%s3 + $0x820] sm:$0xff]
    %v1762 = vld [vmem:[%s3 + $0x828] sm:$0xff]
    %v1763 = vld [vmem:[%s3 + $0x830] sm:$0xff]
    %v1764 = vld [vmem:[%s3 + $0x838] sm:$0xff]
    %v1765 = vld [vmem:[%s4 + $0x1] sm:$0x3]
    %v1767 = vlaneseq
    %v1768 = vshrl.u32 %v1767, 7
    %v1769 = vsub.s32 0, %v1768
    %v1770 = vrot.slane %v1765, %v1769
    %v1771 = vlaneseq
    %v1772 = vshrl.u32 %v1771, 7
    %v1773 = vsub.s32 1, %v1772
    %v1774 = vrot.slane %v1765, %v1773
    %v1849 = vunpack.c.l.b16 %v1429
    %v1850 = vunpack.c.h.b16 %v1429
    %v1851 = vunpack.c.l.b16 %v1430
    %v1852 = vunpack.c.h.b16 %v1430
    %v1853 = vunpack.c.l.b16 %v1431
    %v1854 = vunpack.c.h.b16 %v1431
    %v1855 = vunpack.c.l.b16 %v1432
    %v1856 = vunpack.c.h.b16 %v1432
    %v1857 = vunpack.c.l.b16 %v1433
    %v1858 = vunpack.c.h.b16 %v1433
    %v1859 = vunpack.c.l.b16 %v1434
    %v1860 = vunpack.c.h.b16 %v1434
    %v1861 = vunpack.c.l.b16 %v1435
    %v1862 = vunpack.c.h.b16 %v1435
    %v1863 = vunpack.c.l.b16 %v1436
    %v1864 = vunpack.c.h.b16 %v1436
    %v1865 = vunpack.c.l.b16 %v1437
    %v1866 = vunpack.c.l.b16 %v1438
    %v1867 = vunpack.c.h.b16 %v1438
    %v1868 = vunpack.c.l.b16 %v1439
    %v1869 = vunpack.c.h.b16 %v1439
    %v1870 = vunpack.c.l.b16 %v1440
    %v1871 = vunpack.c.h.b16 %v1440
    %v1872 = vunpack.c.l.b16 %v1441
    %v1873 = vunpack.c.h.b16 %v1441
    %v1874 = vunpack.c.l.b16 %v1442
    %v1875 = vunpack.c.h.b16 %v1442
    %v1876 = vunpack.c.l.b16 %v1443
    %v1877 = vunpack.c.h.b16 %v1443
    %v1878 = vunpack.c.l.b16 %v1444
    %v1879 = vunpack.c.h.b16 %v1444
    %v1880 = vunpack.c.l.b16 %v1445
    %v1881 = vunpack.c.h.b16 %v1445
    %v1882 = vunpack.c.l.b16 %v1446
    %v1883 = vunpack.c.l.b16 %v1447
    %v1884 = vunpack.c.h.b16 %v1447
    %v1885 = vunpack.c.l.b16 %v1448
    %v1886 = vunpack.c.h.b16 %v1448
    %v1887 = vunpack.c.l.b16 %v1449
    %v1888 = vunpack.c.h.b16 %v1449
    %v1889 = vunpack.c.l.b16 %v1450
    %v1890 = vunpack.c.h.b16 %v1450
    %v1891 = vunpack.c.l.b16 %v1451
    %v1892 = vunpack.c.h.b16 %v1451
    %v1893 = vunpack.c.l.b16 %v1452
    %v1894 = vunpack.c.h.b16 %v1452
    %v1895 = vunpack.c.l.b16 %v1453
    %v1896 = vunpack.c.h.b16 %v1453
    %v1897 = vunpack.c.l.b16 %v1454
    %v1898 = vunpack.c.h.b16 %v1454
    %v1899 = vunpack.c.l.b16 %v1455
    %v1900 = vunpack.c.l.b16 %v1456
    %v1901 = vunpack.c.h.b16 %v1456
    %v1902 = vunpack.c.l.b16 %v1457
    %v1903 = vunpack.c.h.b16 %v1457
    %v1904 = vunpack.c.l.b16 %v1458
    %v1905 = vunpack.c.h.b16 %v1458
    %v1906 = vunpack.c.l.b16 %v1459
    %v1907 = vunpack.c.h.b16 %v1459
    %v1908 = vunpack.c.l.b16 %v1460
    %v1909 = vunpack.c.h.b16 %v1460
    %v1910 = vunpack.c.l.b16 %v1461
    %v1911 = vunpack.c.h.b16 %v1461
    %v1912 = vunpack.c.l.b16 %v1462
    %v1913 = vunpack.c.h.b16 %v1462
    %v1914 = vunpack.c.l.b16 %v1463
    %v1915 = vunpack.c.h.b16 %v1463
    %v1916 = vunpack.c.l.b16 %v1464
    %v1917 = vunpack.c.l.b16 %v1465
    %v1918 = vunpack.c.h.b16 %v1465
    %v1919 = vunpack.c.l.b16 %v1466
    %v1920 = vunpack.c.h.b16 %v1466
    %v1921 = vunpack.c.l.b16 %v1467
    %v1922 = vunpack.c.h.b16 %v1467
    %v1923 = vunpack.c.l.b16 %v1468
    %v1924 = vunpack.c.h.b16 %v1468
    %v1925 = vunpack.c.l.b16 %v1469
    %v1926 = vunpack.c.h.b16 %v1469
    %v1927 = vunpack.c.l.b16 %v1470
    %v1928 = vunpack.c.h.b16 %v1470
    %v1929 = vunpack.c.l.b16 %v1471
    %v1930 = vunpack.c.h.b16 %v1471
    %v1931 = vunpack.c.l.b16 %v1472
    %v1932 = vunpack.c.h.b16 %v1472
    %v1933 = vunpack.c.l.b16 %v1473
    %v1934 = vunpack.c.l.b16 %v1474
    %v1935 = vunpack.c.h.b16 %v1474
    %v1936 = vunpack.c.l.b16 %v1475
    %v1937 = vunpack.c.h.b16 %v1475
    %v1938 = vunpack.c.l.b16 %v1476
    %v1939 = vunpack.c.h.b16 %v1476
    %v1940 = vunpack.c.l.b16 %v1477
    %v1941 = vunpack.c.h.b16 %v1477
    %v1942 = vunpack.c.l.b16 %v1478
    %v1943 = vunpack.c.h.b16 %v1478
    %v1944 = vunpack.c.l.b16 %v1479
    %v1945 = vunpack.c.h.b16 %v1479
    %v1946 = vunpack.c.l.b16 %v1480
    %v1947 = vunpack.c.h.b16 %v1480
    %v1948 = vunpack.c.l.b16 %v1481
    %v1949 = vunpack.c.h.b16 %v1481
    %v1950 = vunpack.c.l.b16 %v1482
    %v1951 = vunpack.c.l.b16 %v1483
    %v1952 = vunpack.c.h.b16 %v1483
    %v1953 = vunpack.c.l.b16 %v1484
    %v1954 = vunpack.c.h.b16 %v1484
    %v1955 = vunpack.c.l.b16 %v1485
    %v1956 = vunpack.c.h.b16 %v1485
    %v1957 = vunpack.c.l.b16 %v1486
    %v1958 = vunpack.c.h.b16 %v1486
    %v1959 = vunpack.c.l.b16 %v1487
    %v1960 = vunpack.c.h.b16 %v1487
    %v1961 = vunpack.c.l.b16 %v1488
    %v1962 = vunpack.c.h.b16 %v1488
    %v1963 = vunpack.c.l.b16 %v1489
    %v1964 = vunpack.c.h.b16 %v1489
    %v1965 = vunpack.c.l.b16 %v1490
    %v1966 = vunpack.c.h.b16 %v1490
    %v1967 = vunpack.c.l.b16 %v1491
    %v1968 = vunpack.c.l.b16 %v1492
    %v1969 = vunpack.c.h.b16 %v1492
    %v1970 = vunpack.c.l.b16 %v1493
    %v1971 = vunpack.c.h.b16 %v1493
    %v1972 = vunpack.c.l.b16 %v1494
    %v1973 = vunpack.c.h.b16 %v1494
    %v1974 = vunpack.c.l.b16 %v1495
    %v1975 = vunpack.c.h.b16 %v1495
    %v1976 = vunpack.c.l.b16 %v1496
    %v1977 = vunpack.c.h.b16 %v1496
    %v1978 = vunpack.c.l.b16 %v1497
    %v1979 = vunpack.c.h.b16 %v1497
    %v1980 = vunpack.c.l.b16 %v1498
    %v1981 = vunpack.c.h.b16 %v1498
    %v1982 = vunpack.c.l.b16 %v1499
    %v1983 = vunpack.c.h.b16 %v1499
    %v1984 = vunpack.c.l.b16 %v1500
    %v1985 = vpack.c.b16 %v1866, %v1849
    %v1986 = vpack.c.b16 %v1867, %v1850
    %v1987 = vpack.c.b16 %v1868, %v1851
    %v1988 = vpack.c.b16 %v1869, %v1852
    %v1989 = vpack.c.b16 %v1870, %v1853
    %v1990 = vpack.c.b16 %v1871, %v1854
    %v1991 = vpack.c.b16 %v1872, %v1855
    %v1992 = vpack.c.b16 %v1873, %v1856
    %v1993 = vpack.c.b16 %v1874, %v1857
    %v1994 = vpack.c.b16 %v1875, %v1858
    %v1995 = vpack.c.b16 %v1876, %v1859
    %v1996 = vpack.c.b16 %v1877, %v1860
    %v1997 = vpack.c.b16 %v1878, %v1861
    %v1998 = vpack.c.b16 %v1879, %v1862
    %v1999 = vpack.c.b16 %v1880, %v1863
    %v2000 = vpack.c.b16 %v1881, %v1864
    %v2001 = vpack.c.b16 %v1882, %v1865
    %v2002 = vpack.c.b16 %v1900, %v1883
    %v2003 = vpack.c.b16 %v1901, %v1884
    %v2004 = vpack.c.b16 %v1902, %v1885
    %v2005 = vpack.c.b16 %v1903, %v1886
    %v2006 = vpack.c.b16 %v1904, %v1887
    %v2007 = vpack.c.b16 %v1905, %v1888
    %v2008 = vpack.c.b16 %v1906, %v1889
    %v2009 = vpack.c.b16 %v1907, %v1890
    %v2010 = vpack.c.b16 %v1908, %v1891
    %v2011 = vpack.c.b16 %v1909, %v1892
    %v2012 = vpack.c.b16 %v1910, %v1893
    %v2013 = vpack.c.b16 %v1911, %v1894
    %v2014 = vpack.c.b16 %v1912, %v1895
    %v2015 = vpack.c.b16 %v1913, %v1896
    %v2016 = vpack.c.b16 %v1914, %v1897
    %v2017 = vpack.c.b16 %v1915, %v1898
    %v2018 = vpack.c.b16 %v1916, %v1899
    %v2019 = vpack.c.b16 %v1934, %v1917
    %v2020 = vpack.c.b16 %v1935, %v1918
    %v2021 = vpack.c.b16 %v1936, %v1919
    %v2022 = vpack.c.b16 %v1937, %v1920
    %v2023 = vpack.c.b16 %v1938, %v1921
    %v2024 = vpack.c.b16 %v1939, %v1922
    %v2025 = vpack.c.b16 %v1940, %v1923
    %v2026 = vpack.c.b16 %v1941, %v1924
    %v2027 = vpack.c.b16 %v1942, %v1925
    %v2028 = vpack.c.b16 %v1943, %v1926
    %v2029 = vpack.c.b16 %v1944, %v1927
    %v2030 = vpack.c.b16 %v1945, %v1928
    %v2031 = vpack.c.b16 %v1946, %v1929
    %v2032 = vpack.c.b16 %v1947, %v1930
    %v2033 = vpack.c.b16 %v1948, %v1931
    %v2034 = vpack.c.b16 %v1949, %v1932
    %v2035 = vpack.c.b16 %v1950, %v1933
    %v2036 = vpack.c.b16 %v1968, %v1951
    %v2037 = vpack.c.b16 %v1969, %v1952
    %v2038 = vpack.c.b16 %v1970, %v1953
    %v2039 = vpack.c.b16 %v1971, %v1954
    %v2040 = vpack.c.b16 %v1972, %v1955
    %v2041 = vpack.c.b16 %v1973, %v1956
    %v2042 = vpack.c.b16 %v1974, %v1957
    %v2043 = vpack.c.b16 %v1975, %v1958
    %v2044 = vpack.c.b16 %v1976, %v1959
    %v2045 = vpack.c.b16 %v1977, %v1960
    %v2046 = vpack.c.b16 %v1978, %v1961
    %v2047 = vpack.c.b16 %v1979, %v1962
    %v2048 = vpack.c.b16 %v1980, %v1963
    %v2049 = vpack.c.b16 %v1981, %v1964
    %v2050 = vpack.c.b16 %v1982, %v1965
    %v2051 = vpack.c.b16 %v1983, %v1966
    %v2052 = vpack.c.b16 %v1984, %v1967
    %v2381 = vunpack.c.l.b16 %v1501
    %v2382 = vunpack.c.h.b16 %v1501
    %v2383 = vunpack.c.l.b16 %v1502
    %v2384 = vunpack.c.h.b16 %v1502
    %v2385 = vunpack.c.l.b16 %v1503
    %v2386 = vunpack.c.h.b16 %v1503
    %v2387 = vunpack.c.l.b16 %v1504
    %v2388 = vunpack.c.h.b16 %v1504
    %v2389 = vunpack.c.l.b16 %v1505
    %v2390 = vunpack.c.h.b16 %v1505
    %v2391 = vunpack.c.l.b16 %v1506
    %v2392 = vunpack.c.h.b16 %v1506
    %v2393 = vunpack.c.l.b16 %v1507
    %v2394 = vunpack.c.h.b16 %v1507
    %v2395 = vunpack.c.l.b16 %v1508
    %v2396 = vunpack.c.h.b16 %v1508
    %v2397 = vunpack.c.l.b16 %v1509
    %v2398 = vunpack.c.h.b16 %v1509
    %v2399 = vunpack.c.l.b16 %v1510
    %v2400 = vunpack.c.h.b16 %v1510
    %v2401 = vunpack.c.l.b16 %v1511
    %v2402 = vunpack.c.h.b16 %v1511
    %v2403 = vunpack.c.l.b16 %v1512
    %v2404 = vunpack.c.h.b16 %v1512
    %v2405 = vunpack.c.l.b16 %v1513
    %v2406 = vunpack.c.h.b16 %v1513
    %v2407 = vunpack.c.l.b16 %v1514
    %v2408 = vunpack.c.h.b16 %v1514
    %v2409 = vunpack.c.l.b16 %v1515
    %v2410 = vunpack.c.h.b16 %v1515
    %v2411 = vunpack.c.l.b16 %v1516
    %v2412 = vunpack.c.h.b16 %v1516
    %v2413 = vunpack.c.l.b16 %v1517
    %v2414 = vunpack.c.h.b16 %v1517
    %v2415 = vunpack.c.l.b16 %v1518
    %v2416 = vunpack.c.h.b16 %v1518
    %v2417 = vunpack.c.l.b16 %v1519
    %v2418 = vunpack.c.h.b16 %v1519
    %v2419 = vunpack.c.l.b16 %v1520
    %v2420 = vunpack.c.h.b16 %v1520
    %v2421 = vunpack.c.l.b16 %v1521
    %v2422 = vunpack.c.h.b16 %v1521
    %v2423 = vunpack.c.l.b16 %v1522
    %v2424 = vunpack.c.h.b16 %v1522
    %v2425 = vunpack.c.l.b16 %v1523
    %v2426 = vunpack.c.h.b16 %v1523
    %v2427 = vunpack.c.l.b16 %v1524
    %v2428 = vunpack.c.h.b16 %v1524
    %v2429 = vunpack.c.l.b16 %v1525
    %v2430 = vunpack.c.h.b16 %v1525
    %v2431 = vunpack.c.l.b16 %v1526
    %v2432 = vunpack.c.h.b16 %v1526
    %v2433 = vunpack.c.l.b16 %v1527
    %v2434 = vunpack.c.h.b16 %v1527
    %v2435 = vunpack.c.l.b16 %v1528
    %v2436 = vunpack.c.h.b16 %v1528
    %v2437 = vunpack.c.l.b16 %v1529
    %v2438 = vunpack.c.h.b16 %v1529
    %v2439 = vunpack.c.l.b16 %v1530
    %v2440 = vunpack.c.h.b16 %v1530
    %v2441 = vunpack.c.l.b16 %v1531
    %v2442 = vunpack.c.h.b16 %v1531
    %v2443 = vunpack.c.l.b16 %v1532
    %v2444 = vunpack.c.h.b16 %v1532
    %v2445 = vunpack.c.l.b16 %v1533
    %v2446 = vunpack.c.h.b16 %v1533
    %v2447 = vunpack.c.l.b16 %v1534
    %v2448 = vunpack.c.h.b16 %v1534
    %v2449 = vunpack.c.l.b16 %v1535
    %v2450 = vunpack.c.h.b16 %v1535
    %v2451 = vunpack.c.l.b16 %v1536
    %v2452 = vunpack.c.h.b16 %v1536
    %v2453 = vunpack.c.l.b16 %v1537
    %v2454 = vunpack.c.h.b16 %v1537
    %v2455 = vunpack.c.l.b16 %v1538
    %v2456 = vunpack.c.h.b16 %v1538
    %v2457 = vunpack.c.l.b16 %v1539
    %v2458 = vunpack.c.h.b16 %v1539
    %v2459 = vunpack.c.l.b16 %v1540
    %v2460 = vunpack.c.h.b16 %v1540
    %v2461 = vunpack.c.l.b16 %v1541
    %v2462 = vunpack.c.h.b16 %v1541
    %v2463 = vunpack.c.l.b16 %v1542
    %v2464 = vunpack.c.h.b16 %v1542
    %v2465 = vunpack.c.l.b16 %v1543
    %v2466 = vunpack.c.h.b16 %v1543
    %v2467 = vunpack.c.l.b16 %v1544
    %v2468 = vunpack.c.h.b16 %v1544
    %v2469 = vunpack.c.l.b16 %v1545
    %v2470 = vunpack.c.h.b16 %v1545
    %v2471 = vunpack.c.l.b16 %v1546
    %v2472 = vunpack.c.h.b16 %v1546
    %v2473 = vunpack.c.l.b16 %v1547
    %v2474 = vunpack.c.h.b16 %v1547
    %v2475 = vunpack.c.l.b16 %v1548
    %v2476 = vunpack.c.h.b16 %v1548
    %v2477 = vunpack.c.l.b16 %v1549
    %v2478 = vunpack.c.h.b16 %v1549
    %v2479 = vunpack.c.l.b16 %v1550
    %v2480 = vunpack.c.h.b16 %v1550
    %v2481 = vunpack.c.l.b16 %v1551
    %v2482 = vunpack.c.h.b16 %v1551
    %v2483 = vunpack.c.l.b16 %v1552
    %v2484 = vunpack.c.h.b16 %v1552
    %v2485 = vunpack.c.l.b16 %v1553
    %v2486 = vunpack.c.h.b16 %v1553
    %v2487 = vunpack.c.l.b16 %v1554
    %v2488 = vunpack.c.h.b16 %v1554
    %v2489 = vunpack.c.l.b16 %v1555
    %v2490 = vunpack.c.h.b16 %v1555
    %v2491 = vunpack.c.l.b16 %v1556
    %v2492 = vunpack.c.h.b16 %v1556
    %v2493 = vunpack.c.l.b16 %v1557
    %v2494 = vunpack.c.h.b16 %v1557
    %v2495 = vunpack.c.l.b16 %v1558
    %v2496 = vunpack.c.h.b16 %v1558
    %v2497 = vunpack.c.l.b16 %v1559
    %v2498 = vunpack.c.h.b16 %v1559
    %v2499 = vunpack.c.l.b16 %v1560
    %v2500 = vunpack.c.h.b16 %v1560
    %v2501 = vunpack.c.l.b16 %v1561
    %v2502 = vunpack.c.h.b16 %v1561
    %v2503 = vunpack.c.l.b16 %v1562
    %v2504 = vunpack.c.h.b16 %v1562
    %v2505 = vunpack.c.l.b16 %v1563
    %v2506 = vunpack.c.h.b16 %v1563
    %v2507 = vunpack.c.l.b16 %v1564
    %v2508 = vunpack.c.h.b16 %v1564
    %v2509 = vunpack.c.l.b16 %v1565
    %v2510 = vunpack.c.h.b16 %v1565
    %v2511 = vunpack.c.l.b16 %v1566
    %v2512 = vunpack.c.h.b16 %v1566
    %v2513 = vunpack.c.l.b16 %v1567
    %v2514 = vunpack.c.h.b16 %v1567
    %v2515 = vunpack.c.l.b16 %v1568
    %v2516 = vunpack.c.h.b16 %v1568
    %v2517 = vunpack.c.l.b16 %v1569
    %v2518 = vunpack.c.h.b16 %v1569
    %v2519 = vunpack.c.l.b16 %v1570
    %v2520 = vunpack.c.h.b16 %v1570
    %v2521 = vunpack.c.l.b16 %v1571
    %v2522 = vunpack.c.h.b16 %v1571
    %v2523 = vunpack.c.l.b16 %v1572
    %v2524 = vunpack.c.h.b16 %v1572
    %v2525 = vunpack.c.l.b16 %v1573
    %v2526 = vunpack.c.h.b16 %v1573
    %v2527 = vunpack.c.l.b16 %v1574
    %v2528 = vunpack.c.h.b16 %v1574
    %v2529 = vunpack.c.l.b16 %v1575
    %v2530 = vunpack.c.h.b16 %v1575
    %v2531 = vunpack.c.l.b16 %v1576
    %v2532 = vunpack.c.h.b16 %v1576
    %v2533 = vunpack.c.l.b16 %v1577
    %v2534 = vunpack.c.h.b16 %v1577
    %v2535 = vunpack.c.l.b16 %v1578
    %v2536 = vunpack.c.h.b16 %v1578
    %v2537 = vunpack.c.l.b16 %v1579
    %v2538 = vunpack.c.h.b16 %v1579
    %v2539 = vunpack.c.l.b16 %v1580
    %v2540 = vunpack.c.h.b16 %v1580
    %v2541 = vunpack.c.l.b16 %v1581
    %v2542 = vunpack.c.h.b16 %v1581
    %v2543 = vunpack.c.l.b16 %v1582
    %v2544 = vunpack.c.h.b16 %v1582
    %v2545 = vunpack.c.l.b16 %v1583
    %v2546 = vunpack.c.h.b16 %v1583
    %v2547 = vunpack.c.l.b16 %v1584
    %v2548 = vunpack.c.h.b16 %v1584
    %v2549 = vunpack.c.l.b16 %v1585
    %v2550 = vunpack.c.h.b16 %v1585
    %v2551 = vunpack.c.l.b16 %v1586
    %v2552 = vunpack.c.h.b16 %v1586
    %v2553 = vunpack.c.l.b16 %v1587
    %v2554 = vunpack.c.h.b16 %v1587
    %v2555 = vunpack.c.l.b16 %v1588
    %v2556 = vunpack.c.h.b16 %v1588
    %v2557 = vunpack.c.l.b16 %v1589
    %v2558 = vunpack.c.h.b16 %v1589
    %v2559 = vunpack.c.l.b16 %v1590
    %v2560 = vunpack.c.h.b16 %v1590
    %v2561 = vunpack.c.l.b16 %v1591
    %v2562 = vunpack.c.h.b16 %v1591
    %v2563 = vunpack.c.l.b16 %v1592
    %v2564 = vunpack.c.h.b16 %v1592
    %v2565 = vunpack.c.l.b16 %v1593
    %v2566 = vunpack.c.h.b16 %v1593
    %v2567 = vunpack.c.l.b16 %v1594
    %v2568 = vunpack.c.h.b16 %v1594
    %v2569 = vunpack.c.l.b16 %v1595
    %v2570 = vunpack.c.h.b16 %v1595
    %v2571 = vunpack.c.l.b16 %v1596
    %v2572 = vunpack.c.h.b16 %v1596
    %v2573 = vunpack.c.l.b16 %v1597
    %v2574 = vunpack.c.h.b16 %v1597
    %v2575 = vunpack.c.l.b16 %v1598
    %v2576 = vunpack.c.h.b16 %v1598
    %v2577 = vunpack.c.l.b16 %v1599
    %v2578 = vunpack.c.h.b16 %v1599
    %v2579 = vunpack.c.l.b16 %v1600
    %v2580 = vunpack.c.h.b16 %v1600
    %v2581 = vunpack.c.l.b16 %v1601
    %v2582 = vunpack.c.h.b16 %v1601
    %v2583 = vunpack.c.l.b16 %v1602
    %v2584 = vunpack.c.h.b16 %v1602
    %v2585 = vunpack.c.l.b16 %v1603
    %v2586 = vunpack.c.h.b16 %v1603
    %v2587 = vunpack.c.l.b16 %v1604
    %v2588 = vunpack.c.h.b16 %v1604
    %v2589 = vunpack.c.l.b16 %v1605
    %v2590 = vunpack.c.h.b16 %v1605
    %v2591 = vunpack.c.l.b16 %v1606
    %v2592 = vunpack.c.h.b16 %v1606
    %v2593 = vunpack.c.l.b16 %v1607
    %v2594 = vunpack.c.h.b16 %v1607
    %v2595 = vunpack.c.l.b16 %v1608
    %v2596 = vunpack.c.h.b16 %v1608
    %v2597 = vunpack.c.l.b16 %v1609
    %v2598 = vunpack.c.h.b16 %v1609
    %v2599 = vunpack.c.l.b16 %v1610
    %v2600 = vunpack.c.h.b16 %v1610
    %v2601 = vunpack.c.l.b16 %v1611
    %v2602 = vunpack.c.h.b16 %v1611
    %v2603 = vunpack.c.l.b16 %v1612
    %v2604 = vunpack.c.h.b16 %v1612
    %v2605 = vunpack.c.l.b16 %v1613
    %v2606 = vunpack.c.h.b16 %v1613
    %v2607 = vunpack.c.l.b16 %v1614
    %v2608 = vunpack.c.h.b16 %v1614
    %v2609 = vunpack.c.l.b16 %v1615
    %v2610 = vunpack.c.h.b16 %v1615
    %v2611 = vunpack.c.l.b16 %v1616
    %v2612 = vunpack.c.h.b16 %v1616
    %v2613 = vunpack.c.l.b16 %v1617
    %v2614 = vunpack.c.h.b16 %v1617
    %v2615 = vunpack.c.l.b16 %v1618
    %v2616 = vunpack.c.h.b16 %v1618
    %v2617 = vunpack.c.l.b16 %v1619
    %v2618 = vunpack.c.h.b16 %v1619
    %v2619 = vunpack.c.l.b16 %v1620
    %v2620 = vunpack.c.h.b16 %v1620
    %v2621 = vunpack.c.l.b16 %v1621
    %v2622 = vunpack.c.h.b16 %v1621
    %v2623 = vunpack.c.l.b16 %v1622
    %v2624 = vunpack.c.h.b16 %v1622
    %v2625 = vunpack.c.l.b16 %v1623
    %v2626 = vunpack.c.h.b16 %v1623
    %v2627 = vunpack.c.l.b16 %v1624
    %v2628 = vunpack.c.h.b16 %v1624
    %v2629 = vunpack.c.l.b16 %v1625
    %v2630 = vunpack.c.h.b16 %v1625
    %v2631 = vunpack.c.l.b16 %v1626
    %v2632 = vunpack.c.h.b16 %v1626
    %v2633 = vunpack.c.l.b16 %v1627
    %v2634 = vunpack.c.h.b16 %v1627
    %v2635 = vunpack.c.l.b16 %v1628
    %v2636 = vunpack.c.h.b16 %v1628
    %v2637 = vunpack.c.l.b16 %v1629
    %v2638 = vunpack.c.h.b16 %v1629
    %v2639 = vunpack.c.l.b16 %v1630
    %v2640 = vunpack.c.h.b16 %v1630
    %v2641 = vunpack.c.l.b16 %v1631
    %v2642 = vunpack.c.h.b16 %v1631
    %v2643 = vunpack.c.l.b16 %v1632
    %v2644 = vunpack.c.h.b16 %v1632
    %v2645 = vunpack.c.l.b16 %v1633
    %v2646 = vunpack.c.h.b16 %v1633
    %v2647 = vunpack.c.l.b16 %v1634
    %v2648 = vunpack.c.h.b16 %v1634
    %v2649 = vunpack.c.l.b16 %v1635
    %v2650 = vunpack.c.h.b16 %v1635
    %v2651 = vunpack.c.l.b16 %v1636
    %v2652 = vunpack.c.h.b16 %v1636
    %v2653 = vunpack.c.l.b16 %v1637
    %v2654 = vunpack.c.h.b16 %v1637
    %v2655 = vunpack.c.l.b16 %v1638
    %v2656 = vunpack.c.h.b16 %v1638
    %v2657 = vunpack.c.l.b16 %v1639
    %v2658 = vunpack.c.h.b16 %v1639
    %v2659 = vunpack.c.l.b16 %v1640
    %v2660 = vunpack.c.h.b16 %v1640
    %v2661 = vunpack.c.l.b16 %v1641
    %v2662 = vunpack.c.h.b16 %v1641
    %v2663 = vunpack.c.l.b16 %v1642
    %v2664 = vunpack.c.h.b16 %v1642
    %v2665 = vunpack.c.l.b16 %v1643
    %v2666 = vunpack.c.h.b16 %v1643
    %v2667 = vunpack.c.l.b16 %v1644
    %v2668 = vunpack.c.h.b16 %v1644
    %v2669 = vunpack.c.l.b16 %v1645
    %v2670 = vunpack.c.h.b16 %v1645
    %v2671 = vunpack.c.l.b16 %v1646
    %v2672 = vunpack.c.h.b16 %v1646
    %v2673 = vunpack.c.l.b16 %v1647
    %v2674 = vunpack.c.h.b16 %v1647
    %v2675 = vunpack.c.l.b16 %v1648
    %v2676 = vunpack.c.h.b16 %v1648
    %v2677 = vunpack.c.l.b16 %v1649
    %v2678 = vunpack.c.h.b16 %v1649
    %v2679 = vunpack.c.l.b16 %v1650
    %v2680 = vunpack.c.h.b16 %v1650
    %v2681 = vunpack.c.l.b16 %v1651
    %v2682 = vunpack.c.h.b16 %v1651
    %v2683 = vunpack.c.l.b16 %v1652
    %v2684 = vunpack.c.h.b16 %v1652
    %v2685 = vunpack.c.l.b16 %v1653
    %v2686 = vunpack.c.h.b16 %v1653
    %v2687 = vunpack.c.l.b16 %v1654
    %v2688 = vunpack.c.h.b16 %v1654
    %v2689 = vunpack.c.l.b16 %v1655
    %v2690 = vunpack.c.h.b16 %v1655
    %v2691 = vunpack.c.l.b16 %v1656
    %v2692 = vunpack.c.h.b16 %v1656
    %v2693 = vunpack.c.l.b16 %v1657
    %v2694 = vunpack.c.h.b16 %v1657
    %v2695 = vunpack.c.l.b16 %v1658
    %v2696 = vunpack.c.h.b16 %v1658
    %v2697 = vunpack.c.l.b16 %v1659
    %v2698 = vunpack.c.h.b16 %v1659
    %v2699 = vunpack.c.l.b16 %v1660
    %v2700 = vunpack.c.h.b16 %v1660
    %v2701 = vunpack.c.l.b16 %v1661
    %v2702 = vunpack.c.h.b16 %v1661
    %v2703 = vunpack.c.l.b16 %v1662
    %v2704 = vunpack.c.h.b16 %v1662
    %v2705 = vunpack.c.l.b16 %v1663
    %v2706 = vunpack.c.h.b16 %v1663
    %v2707 = vunpack.c.l.b16 %v1664
    %v2708 = vunpack.c.h.b16 %v1664
    %v2709 = vunpack.c.l.b16 %v1665
    %v2710 = vunpack.c.h.b16 %v1665
    %v2711 = vunpack.c.l.b16 %v1666
    %v2712 = vunpack.c.h.b16 %v1666
    %v2713 = vunpack.c.l.b16 %v1667
    %v2714 = vunpack.c.h.b16 %v1667
    %v2715 = vunpack.c.l.b16 %v1668
    %v2716 = vunpack.c.h.b16 %v1668
    %v2717 = vunpack.c.l.b16 %v1669
    %v2718 = vunpack.c.h.b16 %v1669
    %v2719 = vunpack.c.l.b16 %v1670
    %v2720 = vunpack.c.h.b16 %v1670
    %v2721 = vunpack.c.l.b16 %v1671
    %v2722 = vunpack.c.h.b16 %v1671
    %v2723 = vunpack.c.l.b16 %v1672
    %v2724 = vunpack.c.h.b16 %v1672
    %v2725 = vunpack.c.l.b16 %v1673
    %v2726 = vunpack.c.h.b16 %v1673
    %v2727 = vunpack.c.l.b16 %v1674
    %v2728 = vunpack.c.h.b16 %v1674
    %v2729 = vunpack.c.l.b16 %v1675
    %v2730 = vunpack.c.h.b16 %v1675
    %v2731 = vunpack.c.l.b16 %v1676
    %v2732 = vunpack.c.h.b16 %v1676
    %v2733 = vunpack.c.l.b16 %v1677
    %v2734 = vunpack.c.h.b16 %v1677
    %v2735 = vunpack.c.l.b16 %v1678
    %v2736 = vunpack.c.h.b16 %v1678
    %v2737 = vunpack.c.l.b16 %v1679
    %v2738 = vunpack.c.h.b16 %v1679
    %v2739 = vunpack.c.l.b16 %v1680
    %v2740 = vunpack.c.h.b16 %v1680
    %v2741 = vunpack.c.l.b16 %v1681
    %v2742 = vunpack.c.h.b16 %v1681
    %v2743 = vunpack.c.l.b16 %v1682
    %v2744 = vunpack.c.h.b16 %v1682
    %v2745 = vunpack.c.l.b16 %v1683
    %v2746 = vunpack.c.h.b16 %v1683
    %v2747 = vunpack.c.l.b16 %v1684
    %v2748 = vunpack.c.h.b16 %v1684
    %v2749 = vunpack.c.l.b16 %v1685
    %v2750 = vunpack.c.h.b16 %v1685
    %v2751 = vunpack.c.l.b16 %v1686
    %v2752 = vunpack.c.h.b16 %v1686
    %v2753 = vunpack.c.l.b16 %v1687
    %v2754 = vunpack.c.h.b16 %v1687
    %v2755 = vunpack.c.l.b16 %v1688
    %v2756 = vunpack.c.h.b16 %v1688
    %v2757 = vunpack.c.l.b16 %v1689
    %v2758 = vunpack.c.h.b16 %v1689
    %v2759 = vunpack.c.l.b16 %v1690
    %v2760 = vunpack.c.h.b16 %v1690
    %v2761 = vunpack.c.l.b16 %v1691
    %v2762 = vunpack.c.h.b16 %v1691
    %v2763 = vunpack.c.l.b16 %v1692
    %v2764 = vunpack.c.h.b16 %v1692
    %v2765 = vunpack.c.l.b16 %v1693
    %v2766 = vunpack.c.h.b16 %v1693
    %v2767 = vunpack.c.l.b16 %v1694
    %v2768 = vunpack.c.h.b16 %v1694
    %v2769 = vunpack.c.l.b16 %v1695
    %v2770 = vunpack.c.h.b16 %v1695
    %v2771 = vunpack.c.l.b16 %v1696
    %v2772 = vunpack.c.h.b16 %v1696
    %v2773 = vunpack.c.l.b16 %v1697
    %v2774 = vunpack.c.h.b16 %v1697
    %v2775 = vunpack.c.l.b16 %v1698
    %v2776 = vunpack.c.h.b16 %v1698
    %v2777 = vunpack.c.l.b16 %v1699
    %v2778 = vunpack.c.h.b16 %v1699
    %v2779 = vunpack.c.l.b16 %v1700
    %v2780 = vunpack.c.h.b16 %v1700
    %v2781 = vunpack.c.l.b16 %v1701
    %v2782 = vunpack.c.h.b16 %v1701
    %v2783 = vunpack.c.l.b16 %v1702
    %v2784 = vunpack.c.h.b16 %v1702
    %v2785 = vunpack.c.l.b16 %v1703
    %v2786 = vunpack.c.h.b16 %v1703
    %v2787 = vunpack.c.l.b16 %v1704
    %v2788 = vunpack.c.h.b16 %v1704
    %v2789 = vunpack.c.l.b16 %v1705
    %v2790 = vunpack.c.h.b16 %v1705
    %v2791 = vunpack.c.l.b16 %v1706
    %v2792 = vunpack.c.h.b16 %v1706
    %v2793 = vunpack.c.l.b16 %v1707
    %v2794 = vunpack.c.h.b16 %v1707
    %v2795 = vunpack.c.l.b16 %v1708
    %v2796 = vunpack.c.h.b16 %v1708
    %v2797 = vunpack.c.l.b16 %v1709
    %v2798 = vunpack.c.h.b16 %v1709
    %v2799 = vunpack.c.l.b16 %v1710
    %v2800 = vunpack.c.h.b16 %v1710
    %v2801 = vunpack.c.l.b16 %v1711
    %v2802 = vunpack.c.h.b16 %v1711
    %v2803 = vunpack.c.l.b16 %v1712
    %v2804 = vunpack.c.h.b16 %v1712
    %v2805 = vunpack.c.l.b16 %v1713
    %v2806 = vunpack.c.h.b16 %v1713
    %v2807 = vunpack.c.l.b16 %v1714
    %v2808 = vunpack.c.h.b16 %v1714
    %v2809 = vunpack.c.l.b16 %v1715
    %v2810 = vunpack.c.h.b16 %v1715
    %v2811 = vunpack.c.l.b16 %v1716
    %v2812 = vunpack.c.h.b16 %v1716
    %v2813 = vunpack.c.l.b16 %v1717
    %v2814 = vunpack.c.h.b16 %v1717
    %v2815 = vunpack.c.l.b16 %v1718
    %v2816 = vunpack.c.h.b16 %v1718
    %v2817 = vunpack.c.l.b16 %v1719
    %v2818 = vunpack.c.h.b16 %v1719
    %v2819 = vunpack.c.l.b16 %v1720
    %v2820 = vunpack.c.h.b16 %v1720
    %v2821 = vunpack.c.l.b16 %v1721
    %v2822 = vunpack.c.h.b16 %v1721
    %v2823 = vunpack.c.l.b16 %v1722
    %v2824 = vunpack.c.h.b16 %v1722
    %v2825 = vunpack.c.l.b16 %v1723
    %v2826 = vunpack.c.h.b16 %v1723
    %v2827 = vunpack.c.l.b16 %v1724
    %v2828 = vunpack.c.h.b16 %v1724
    %v2829 = vunpack.c.l.b16 %v1725
    %v2830 = vunpack.c.h.b16 %v1725
    %v2831 = vunpack.c.l.b16 %v1726
    %v2832 = vunpack.c.h.b16 %v1726
    %v2833 = vunpack.c.l.b16 %v1727
    %v2834 = vunpack.c.h.b16 %v1727
    %v2835 = vunpack.c.l.b16 %v1728
    %v2836 = vunpack.c.h.b16 %v1728
    %v2837 = vunpack.c.l.b16 %v1729
    %v2838 = vunpack.c.h.b16 %v1729
    %v2839 = vunpack.c.l.b16 %v1730
    %v2840 = vunpack.c.h.b16 %v1730
    %v2841 = vunpack.c.l.b16 %v1731
    %v2842 = vunpack.c.h.b16 %v1731
    %v2843 = vunpack.c.l.b16 %v1732
    %v2844 = vunpack.c.h.b16 %v1732
    %v2845 = vunpack.c.l.b16 %v1733
    %v2846 = vunpack.c.h.b16 %v1733
    %v2847 = vunpack.c.l.b16 %v1734
    %v2848 = vunpack.c.h.b16 %v1734
    %v2849 = vunpack.c.l.b16 %v1735
    %v2850 = vunpack.c.h.b16 %v1735
    %v2851 = vunpack.c.l.b16 %v1736
    %v2852 = vunpack.c.h.b16 %v1736
    %v2853 = vunpack.c.l.b16 %v1737
    %v2854 = vunpack.c.h.b16 %v1737
    %v2855 = vunpack.c.l.b16 %v1738
    %v2856 = vunpack.c.h.b16 %v1738
    %v2857 = vunpack.c.l.b16 %v1739
    %v2858 = vunpack.c.h.b16 %v1739
    %v2859 = vunpack.c.l.b16 %v1740
    %v2860 = vunpack.c.h.b16 %v1740
    %v2861 = vunpack.c.l.b16 %v1741
    %v2862 = vunpack.c.h.b16 %v1741
    %v2863 = vunpack.c.l.b16 %v1742
    %v2864 = vunpack.c.h.b16 %v1742
    %v2865 = vunpack.c.l.b16 %v1743
    %v2866 = vunpack.c.h.b16 %v1743
    %v2867 = vunpack.c.l.b16 %v1744
    %v2868 = vunpack.c.h.b16 %v1744
    %v2869 = vunpack.c.l.b16 %v1745
    %v2870 = vunpack.c.h.b16 %v1745
    %v2871 = vunpack.c.l.b16 %v1746
    %v2872 = vunpack.c.h.b16 %v1746
    %v2873 = vunpack.c.l.b16 %v1747
    %v2874 = vunpack.c.h.b16 %v1747
    %v2875 = vunpack.c.l.b16 %v1748
    %v2876 = vunpack.c.h.b16 %v1748
    %v2877 = vunpack.c.l.b16 %v1749
    %v2878 = vunpack.c.h.b16 %v1749
    %v2879 = vunpack.c.l.b16 %v1750
    %v2880 = vunpack.c.h.b16 %v1750
    %v2881 = vunpack.c.l.b16 %v1751
    %v2882 = vunpack.c.h.b16 %v1751
    %v2883 = vunpack.c.l.b16 %v1752
    %v2884 = vunpack.c.h.b16 %v1752
    %v2885 = vunpack.c.l.b16 %v1753
    %v2886 = vunpack.c.h.b16 %v1753
    %v2887 = vunpack.c.l.b16 %v1754
    %v2888 = vunpack.c.h.b16 %v1754
    %v2889 = vunpack.c.l.b16 %v1755
    %v2890 = vunpack.c.h.b16 %v1755
    %v2891 = vunpack.c.l.b16 %v1756
    %v2892 = vunpack.c.h.b16 %v1756
    %v2893 = vunpack.c.l.b16 %v1757
    %v2894 = vunpack.c.h.b16 %v1757
    %v2895 = vunpack.c.l.b16 %v1758
    %v2896 = vunpack.c.h.b16 %v1758
    %v2897 = vunpack.c.l.b16 %v1759
    %v2898 = vunpack.c.h.b16 %v1759
    %v2899 = vunpack.c.l.b16 %v1760
    %v2900 = vunpack.c.h.b16 %v1760
    %v2901 = vunpack.c.l.b16 %v1761
    %v2902 = vunpack.c.h.b16 %v1761
    %v2903 = vunpack.c.l.b16 %v1762
    %v2904 = vunpack.c.h.b16 %v1762
    %v2905 = vunpack.c.l.b16 %v1763
    %v2906 = vunpack.c.h.b16 %v1763
    %v2907 = vunpack.c.l.b16 %v1764
    %v2908 = vunpack.c.h.b16 %v1764
    %v2909 = vpack.c.b16 %v2383, %v2381
    %v2910 = vpack.c.b16 %v2384, %v2382
    %v2911 = vpack.c.b16 %v2387, %v2385
    %v2912 = vpack.c.b16 %v2388, %v2386
    %v2913 = vpack.c.b16 %v2391, %v2389
    %v2914 = vpack.c.b16 %v2392, %v2390
    %v2915 = vpack.c.b16 %v2395, %v2393
    %v2916 = vpack.c.b16 %v2396, %v2394
    %v2917 = vpack.c.b16 %v2399, %v2397
    %v2918 = vpack.c.b16 %v2400, %v2398
    %v2919 = vpack.c.b16 %v2403, %v2401
    %v2920 = vpack.c.b16 %v2404, %v2402
    %v2921 = vpack.c.b16 %v2407, %v2405
    %v2922 = vpack.c.b16 %v2408, %v2406
    %v2923 = vpack.c.b16 %v2411, %v2409
    %v2924 = vpack.c.b16 %v2412, %v2410
    %v2925 = vpack.c.b16 %v2415, %v2413
    %v2926 = vpack.c.b16 %v2416, %v2414
    %v2927 = vpack.c.b16 %v2419, %v2417
    %v2928 = vpack.c.b16 %v2420, %v2418
    %v2929 = vpack.c.b16 %v2423, %v2421
    %v2930 = vpack.c.b16 %v2424, %v2422
    %v2931 = vpack.c.b16 %v2427, %v2425
    %v2932 = vpack.c.b16 %v2428, %v2426
    %v2933 = vpack.c.b16 %v2431, %v2429
    %v2934 = vpack.c.b16 %v2432, %v2430
    %v2935 = vpack.c.b16 %v2435, %v2433
    %v2936 = vpack.c.b16 %v2436, %v2434
    %v2937 = vpack.c.b16 %v2439, %v2437
    %v2938 = vpack.c.b16 %v2440, %v2438
    %v2939 = vpack.c.b16 %v2443, %v2441
    %v2940 = vpack.c.b16 %v2444, %v2442
    %v2941 = vpack.c.b16 %v2447, %v2445
    %v2942 = vpack.c.b16 %v2448, %v2446
    %v2943 = vpack.c.b16 %v2451, %v2449
    %v2944 = vpack.c.b16 %v2452, %v2450
    %v2945 = vpack.c.b16 %v2455, %v2453
    %v2946 = vpack.c.b16 %v2456, %v2454
    %v2947 = vpack.c.b16 %v2459, %v2457
    %v2948 = vpack.c.b16 %v2460, %v2458
    %v2949 = vpack.c.b16 %v2463, %v2461
    %v2950 = vpack.c.b16 %v2464, %v2462
    %v2951 = vpack.c.b16 %v2467, %v2465
    %v2952 = vpack.c.b16 %v2468, %v2466
    %v2953 = vpack.c.b16 %v2471, %v2469
    %v2954 = vpack.c.b16 %v2472, %v2470
    %v2955 = vpack.c.b16 %v2475, %v2473
    %v2956 = vpack.c.b16 %v2476, %v2474
    %v2957 = vpack.c.b16 %v2479, %v2477
    %v2958 = vpack.c.b16 %v2480, %v2478
    %v2959 = vpack.c.b16 %v2483, %v2481
    %v2960 = vpack.c.b16 %v2484, %v2482
    %v2961 = vpack.c.b16 %v2487, %v2485
    %v2962 = vpack.c.b16 %v2488, %v2486
    %v2963 = vpack.c.b16 %v2491, %v2489
    %v2964 = vpack.c.b16 %v2492, %v2490
    %v2965 = vpack.c.b16 %v2495, %v2493
    %v2966 = vpack.c.b16 %v2496, %v2494
    %v2967 = vpack.c.b16 %v2499, %v2497
    %v2968 = vpack.c.b16 %v2500, %v2498
    %v2969 = vpack.c.b16 %v2503, %v2501
    %v2970 = vpack.c.b16 %v2504, %v2502
    %v2971 = vpack.c.b16 %v2507, %v2505
    %v2972 = vpack.c.b16 %v2508, %v2506
    %v2973 = vpack.c.b16 %v2511, %v2509
    %v2974 = vpack.c.b16 %v2512, %v2510
    %v2975 = vpack.c.b16 %v2515, %v2513
    %v2976 = vpack.c.b16 %v2516, %v2514
    %v2977 = vpack.c.b16 %v2519, %v2517
    %v2978 = vpack.c.b16 %v2520, %v2518
    %v2979 = vpack.c.b16 %v2523, %v2521
    %v2980 = vpack.c.b16 %v2524, %v2522
    %v2981 = vpack.c.b16 %v2527, %v2525
    %v2982 = vpack.c.b16 %v2528, %v2526
    %v2983 = vpack.c.b16 %v2531, %v2529
    %v2984 = vpack.c.b16 %v2532, %v2530
    %v2985 = vpack.c.b16 %v2535, %v2533
    %v2986 = vpack.c.b16 %v2536, %v2534
    %v2987 = vpack.c.b16 %v2539, %v2537
    %v2988 = vpack.c.b16 %v2540, %v2538
    %v2989 = vpack.c.b16 %v2543, %v2541
    %v2990 = vpack.c.b16 %v2544, %v2542
    %v2991 = vpack.c.b16 %v2547, %v2545
    %v2992 = vpack.c.b16 %v2548, %v2546
    %v2993 = vpack.c.b16 %v2551, %v2549
    %v2994 = vpack.c.b16 %v2552, %v2550
    %v2995 = vpack.c.b16 %v2555, %v2553
    %v2996 = vpack.c.b16 %v2556, %v2554
    %v2997 = vpack.c.b16 %v2559, %v2557
    %v2998 = vpack.c.b16 %v2560, %v2558
    %v2999 = vpack.c.b16 %v2563, %v2561
    %v3000 = vpack.c.b16 %v2564, %v2562
    %v3001 = vpack.c.b16 %v2567, %v2565
    %v3002 = vpack.c.b16 %v2568, %v2566
    %v3003 = vpack.c.b16 %v2571, %v2569
    %v3004 = vpack.c.b16 %v2572, %v2570
    %v3005 = vpack.c.b16 %v2575, %v2573
    %v3006 = vpack.c.b16 %v2576, %v2574
    %v3007 = vpack.c.b16 %v2579, %v2577
    %v3008 = vpack.c.b16 %v2580, %v2578
    %v3009 = vpack.c.b16 %v2583, %v2581
    %v3010 = vpack.c.b16 %v2584, %v2582
    %v3011 = vpack.c.b16 %v2587, %v2585
    %v3012 = vpack.c.b16 %v2588, %v2586
    %v3013 = vpack.c.b16 %v2591, %v2589
    %v3014 = vpack.c.b16 %v2592, %v2590
    %v3015 = vpack.c.b16 %v2595, %v2593
    %v3016 = vpack.c.b16 %v2596, %v2594
    %v3017 = vpack.c.b16 %v2599, %v2597
    %v3018 = vpack.c.b16 %v2600, %v2598
    %v3019 = vpack.c.b16 %v2603, %v2601
    %v3020 = vpack.c.b16 %v2604, %v2602
    %v3021 = vpack.c.b16 %v2607, %v2605
    %v3022 = vpack.c.b16 %v2608, %v2606
    %v3023 = vpack.c.b16 %v2611, %v2609
    %v3024 = vpack.c.b16 %v2612, %v2610
    %v3025 = vpack.c.b16 %v2615, %v2613
    %v3026 = vpack.c.b16 %v2616, %v2614
    %v3027 = vpack.c.b16 %v2619, %v2617
    %v3028 = vpack.c.b16 %v2620, %v2618
    %v3029 = vpack.c.b16 %v2623, %v2621
    %v3030 = vpack.c.b16 %v2624, %v2622
    %v3031 = vpack.c.b16 %v2627, %v2625
    %v3032 = vpack.c.b16 %v2628, %v2626
    %v3033 = vpack.c.b16 %v2631, %v2629
    %v3034 = vpack.c.b16 %v2632, %v2630
    %v3035 = vpack.c.b16 %v2635, %v2633
    %v3036 = vpack.c.b16 %v2636, %v2634
    %v3037 = vpack.c.b16 %v2639, %v2637
    %v3038 = vpack.c.b16 %v2640, %v2638
    %v3039 = vpack.c.b16 %v2643, %v2641
    %v3040 = vpack.c.b16 %v2644, %v2642
    %v3041 = vpack.c.b16 %v2647, %v2645
    %v3042 = vpack.c.b16 %v2648, %v2646
    %v3043 = vpack.c.b16 %v2651, %v2649
    %v3044 = vpack.c.b16 %v2652, %v2650
    %v3045 = vpack.c.b16 %v2655, %v2653
    %v3046 = vpack.c.b16 %v2656, %v2654
    %v3047 = vpack.c.b16 %v2659, %v2657
    %v3048 = vpack.c.b16 %v2660, %v2658
    %v3049 = vpack.c.b16 %v2663, %v2661
    %v3050 = vpack.c.b16 %v2664, %v2662
    %v3051 = vpack.c.b16 %v2667, %v2665
    %v3052 = vpack.c.b16 %v2668, %v2666
    %v3053 = vpack.c.b16 %v2671, %v2669
    %v3054 = vpack.c.b16 %v2672, %v2670
    %v3055 = vpack.c.b16 %v2675, %v2673
    %v3056 = vpack.c.b16 %v2676, %v2674
    %v3057 = vpack.c.b16 %v2679, %v2677
    %v3058 = vpack.c.b16 %v2680, %v2678
    %v3059 = vpack.c.b16 %v2683, %v2681
    %v3060 = vpack.c.b16 %v2684, %v2682
    %v3061 = vpack.c.b16 %v2687, %v2685
    %v3062 = vpack.c.b16 %v2688, %v2686
    %v3063 = vpack.c.b16 %v2691, %v2689
    %v3064 = vpack.c.b16 %v2692, %v2690
    %v3065 = vpack.c.b16 %v2695, %v2693
    %v3066 = vpack.c.b16 %v2696, %v2694
    %v3067 = vpack.c.b16 %v2699, %v2697
    %v3068 = vpack.c.b16 %v2700, %v2698
    %v3069 = vpack.c.b16 %v2703, %v2701
    %v3070 = vpack.c.b16 %v2704, %v2702
    %v3071 = vpack.c.b16 %v2707, %v2705
    %v3072 = vpack.c.b16 %v2708, %v2706
    %v3073 = vpack.c.b16 %v2711, %v2709
    %v3074 = vpack.c.b16 %v2712, %v2710
    %v3075 = vpack.c.b16 %v2715, %v2713
    %v3076 = vpack.c.b16 %v2716, %v2714
    %v3077 = vpack.c.b16 %v2719, %v2717
    %v3078 = vpack.c.b16 %v2720, %v2718
    %v3079 = vpack.c.b16 %v2723, %v2721
    %v3080 = vpack.c.b16 %v2724, %v2722
    %v3081 = vpack.c.b16 %v2727, %v2725
    %v3082 = vpack.c.b16 %v2728, %v2726
    %v3083 = vpack.c.b16 %v2731, %v2729
    %v3084 = vpack.c.b16 %v2732, %v2730
    %v3085 = vpack.c.b16 %v2735, %v2733
    %v3086 = vpack.c.b16 %v2736, %v2734
    %v3087 = vpack.c.b16 %v2739, %v2737
    %v3088 = vpack.c.b16 %v2740, %v2738
    %v3089 = vpack.c.b16 %v2743, %v2741
    %v3090 = vpack.c.b16 %v2744, %v2742
    %v3091 = vpack.c.b16 %v2747, %v2745
    %v3092 = vpack.c.b16 %v2748, %v2746
    %v3093 = vpack.c.b16 %v2751, %v2749
    %v3094 = vpack.c.b16 %v2752, %v2750
    %v3095 = vpack.c.b16 %v2755, %v2753
    %v3096 = vpack.c.b16 %v2756, %v2754
    %v3097 = vpack.c.b16 %v2759, %v2757
    %v3098 = vpack.c.b16 %v2760, %v2758
    %v3099 = vpack.c.b16 %v2763, %v2761
    %v3100 = vpack.c.b16 %v2764, %v2762
    %v3101 = vpack.c.b16 %v2767, %v2765
    %v3102 = vpack.c.b16 %v2768, %v2766
    %v3103 = vpack.c.b16 %v2771, %v2769
    %v3104 = vpack.c.b16 %v2772, %v2770
    %v3105 = vpack.c.b16 %v2775, %v2773
    %v3106 = vpack.c.b16 %v2776, %v2774
    %v3107 = vpack.c.b16 %v2779, %v2777
    %v3108 = vpack.c.b16 %v2780, %v2778
    %v3109 = vpack.c.b16 %v2783, %v2781
    %v3110 = vpack.c.b16 %v2784, %v2782
    %v3111 = vpack.c.b16 %v2787, %v2785
    %v3112 = vpack.c.b16 %v2788, %v2786
    %v3113 = vpack.c.b16 %v2791, %v2789
    %v3114 = vpack.c.b16 %v2792, %v2790
    %v3115 = vpack.c.b16 %v2795, %v2793
    %v3116 = vpack.c.b16 %v2796, %v2794
    %v3117 = vpack.c.b16 %v2799, %v2797
    %v3118 = vpack.c.b16 %v2800, %v2798
    %v3119 = vpack.c.b16 %v2803, %v2801
    %v3120 = vpack.c.b16 %v2804, %v2802
    %v3121 = vpack.c.b16 %v2807, %v2805
    %v3122 = vpack.c.b16 %v2808, %v2806
    %v3123 = vpack.c.b16 %v2811, %v2809
    %v3124 = vpack.c.b16 %v2812, %v2810
    %v3125 = vpack.c.b16 %v2815, %v2813
    %v3126 = vpack.c.b16 %v2816, %v2814
    %v3127 = vpack.c.b16 %v2819, %v2817
    %v3128 = vpack.c.b16 %v2820, %v2818
    %v3129 = vpack.c.b16 %v2823, %v2821
    %v3130 = vpack.c.b16 %v2824, %v2822
    %v3131 = vpack.c.b16 %v2827, %v2825
    %v3132 = vpack.c.b16 %v2828, %v2826
    %v3133 = vpack.c.b16 %v2831, %v2829
    %v3134 = vpack.c.b16 %v2832, %v2830
    %v3135 = vpack.c.b16 %v2835, %v2833
    %v3136 = vpack.c.b16 %v2836, %v2834
    %v3137 = vpack.c.b16 %v2839, %v2837
    %v3138 = vpack.c.b16 %v2840, %v2838
    %v3139 = vpack.c.b16 %v2843, %v2841
    %v3140 = vpack.c.b16 %v2844, %v2842
    %v3141 = vpack.c.b16 %v2847, %v2845
    %v3142 = vpack.c.b16 %v2848, %v2846
    %v3143 = vpack.c.b16 %v2851, %v2849
    %v3144 = vpack.c.b16 %v2852, %v2850
    %v3145 = vpack.c.b16 %v2855, %v2853
    %v3146 = vpack.c.b16 %v2856, %v2854
    %v3147 = vpack.c.b16 %v2859, %v2857
    %v3148 = vpack.c.b16 %v2860, %v2858
    %v3149 = vpack.c.b16 %v2863, %v2861
    %v3150 = vpack.c.b16 %v2864, %v2862
    %v3151 = vpack.c.b16 %v2867, %v2865
    %v3152 = vpack.c.b16 %v2868, %v2866
    %v3153 = vpack.c.b16 %v2871, %v2869
    %v3154 = vpack.c.b16 %v2872, %v2870
    %v3155 = vpack.c.b16 %v2875, %v2873
    %v3156 = vpack.c.b16 %v2876, %v2874
    %v3157 = vpack.c.b16 %v2879, %v2877
    %v3158 = vpack.c.b16 %v2880, %v2878
    %v3159 = vpack.c.b16 %v2883, %v2881
    %v3160 = vpack.c.b16 %v2884, %v2882
    %v3161 = vpack.c.b16 %v2887, %v2885
    %v3162 = vpack.c.b16 %v2888, %v2886
    %v3163 = vpack.c.b16 %v2891, %v2889
    %v3164 = vpack.c.b16 %v2892, %v2890
    %v3165 = vpack.c.b16 %v2895, %v2893
    %v3166 = vpack.c.b16 %v2896, %v2894
    %v3167 = vpack.c.b16 %v2899, %v2897
    %v3168 = vpack.c.b16 %v2900, %v2898
    %v3169 = vpack.c.b16 %v2903, %v2901
    %v3170 = vpack.c.b16 %v2904, %v2902
    %v3171 = vpack.c.b16 %v2907, %v2905
    %v3172 = vpack.c.b16 %v2908, %v2906
    %v3438 = vsel %vm998, %v2001, 0
    %v3441 = vsel %vm998, %v2018, 0
    %v3444 = vsel %vm998, %v2035, 0
    %v3447 = vsel %vm998, %v2052, 0
    %3449 = vmatprep.subr.bf16.mxu0 %v2910
    %3450 = vmatpush1.bf16.msra.mxu0 %v2909
    %3451 = vmatprep.subr.bf16.mxu0 %v2912
    %3452 = vmatpush1.bf16.msra.mxu0 %v2911
    %3453 = vmatprep.subr.bf16.mxu0 %v2914
    %3454 = vmatpush1.bf16.msra.mxu0 %v2913
    %3455 = vmatprep.subr.bf16.mxu0 %v2916
    %3456 = vmatpush1.bf16.msra.mxu0 %v2915
    %3457 = vmatprep.subr.bf16.mxu0 %v2918
    %3458 = vmatpush1.bf16.msra.mxu0 %v2917
    %3459 = vmatprep.subr.bf16.mxu0 %v2920
    %3460 = vmatpush1.bf16.msra.mxu0 %v2919
    %3461 = vmatprep.subr.bf16.mxu0 %v2922
    %3462 = vmatpush1.bf16.msra.mxu0 %v2921
    %3463 = vmatprep.subr.bf16.mxu0 %v2924
    %3464 = vmatpush1.bf16.msra.mxu0 %v2923
    %3465 = vmatprep.subr.bf16.mxu0 %v2926
    %3466 = vmatpush1.bf16.msra.mxu0 %v2925
    %3467 = vmatprep.subr.bf16.mxu0 %v2928
    %3468 = vmatpush1.bf16.msra.mxu0 %v2927
    %3469 = vmatprep.subr.bf16.mxu0 %v2930
    %3470 = vmatpush1.bf16.msra.mxu0 %v2929
    %3471 = vmatprep.subr.bf16.mxu0 %v2932
    %3472 = vmatpush1.bf16.msra.mxu0 %v2931
    %3473 = vmatprep.subr.bf16.mxu0 %v2934
    %3474 = vmatpush1.bf16.msra.mxu0 %v2933
    %3475 = vmatprep.subr.bf16.mxu0 %v2936
    %3476 = vmatpush1.bf16.msra.mxu0 %v2935
    %3477 = vmatprep.subr.bf16.mxu0 %v2938
    %3478 = vmatpush1.bf16.msra.mxu0 %v2937
    %3479 = vmatprep.subr.bf16.mxu0 %v2940
    %3480 = vmatpush1.bf16.msra.mxu0 %v2939
    %3481 = vmatprep.mubr.bf16.mxu0 %v1986
    %3482 = vmatmul.mubr.bf16.gmra.mrb[0].mxu0 %v1985
    %v3483 = vpop.f32.mrb[0].mxu0
    %v3484 = vadd.f32 %v1770, %v3483
    %v3485 = vpop.f32.mrb[0].mxu0
    %v3486 = vadd.f32 %v1774, %v3485
    %v3487 = vpop.f32.mrb[0].mxu0
    %v3488 = vadd.f32 %v1770, %v3487
    %v3489 = vpop.f32.mrb[0].mxu0
    %v3490 = vadd.f32 %v1774, %v3489
    %3491 = vmatprep.mubr.bf16.mxu0 %v2003
    %3492 = vmatmul.mubr.bf16.gmra.mrb[0].mxu0 %v2002
    %v3493 = vpop.f32.mrb[0].mxu0
    %v3494 = vadd.f32 %v1770, %v3493
    %v3495 = vpop.f32.mrb[0].mxu0
    %v3496 = vadd.f32 %v1774, %v3495
    %v3497 = vpop.f32.mrb[0].mxu0
    %v3498 = vadd.f32 %v1770, %v3497
    %v3499 = vpop.f32.mrb[0].mxu0
    %v3500 = vadd.f32 %v1774, %v3499
    %3501 = vmatprep.mubr.bf16.mxu0 %v2020
    %3502 = vmatmul.mubr.bf16.gmra.mrb[0].mxu0 %v2019
    %v3503 = vpop.f32.mrb[0].mxu0
    %v3504 = vadd.f32 %v1770, %v3503
    %v3505 = vpop.f32.mrb[0].mxu0
    %v3506 = vadd.f32 %v1774, %v3505
    %v3507 = vpop.f32.mrb[0].mxu0
    %v3508 = vadd.f32 %v1770, %v3507
    %v3509 = vpop.f32.mrb[0].mxu0
    %v3510 = vadd.f32 %v1774, %v3509
    %3511 = vmatprep.mubr.bf16.mxu0 %v2037
    %3512 = vmatmul.mubr.bf16.gmra.mrb[0].mxu0 %v2036
    %v3513 = vpop.f32.mrb[0].mxu0
    %v3514 = vadd.f32 %v1770, %v3513
    %v3515 = vpop.f32.mrb[0].mxu0
    %v3516 = vadd.f32 %v1774, %v3515
    %v3517 = vpop.f32.mrb[0].mxu0
    %v3518 = vadd.f32 %v1770, %v3517
    %v3519 = vpop.f32.mrb[0].mxu0
    %v3520 = vadd.f32 %v1774, %v3519
    %3521 = vdwg.mxu0
    %3522 = vmatprep.subr.bf16.mxu0 %v2942
    %3523 = vmatpush1.bf16.msra.mxu0 %v2941
    %3524 = vmatprep.subr.bf16.mxu0 %v2944
    %3525 = vmatpush1.bf16.msra.mxu0 %v2943
    %3526 = vmatprep.subr.bf16.mxu0 %v2946
    %3527 = vmatpush1.bf16.msra.mxu0 %v2945
    %3528 = vmatprep.subr.bf16.mxu0 %v2948
    %3529 = vmatpush1.bf16.msra.mxu0 %v2947
    %3530 = vmatprep.subr.bf16.mxu0 %v2950
    %3531 = vmatpush1.bf16.msra.mxu0 %v2949
    %3532 = vmatprep.subr.bf16.mxu0 %v2952
    %3533 = vmatpush1.bf16.msra.mxu0 %v2951
    %3534 = vmatprep.subr.bf16.mxu0 %v2954
    %3535 = vmatpush1.bf16.msra.mxu0 %v2953
    %3536 = vmatprep.subr.bf16.mxu0 %v2956
    %3537 = vmatpush1.bf16.msra.mxu0 %v2955
    %3538 = vmatprep.subr.bf16.mxu0 %v2958
    %3539 = vmatpush1.bf16.msra.mxu0 %v2957
    %3540 = vmatprep.subr.bf16.mxu0 %v2960
    %3541 = vmatpush1.bf16.msra.mxu0 %v2959
    %3542 = vmatprep.subr.bf16.mxu0 %v2962
    %3543 = vmatpush1.bf16.msra.mxu0 %v2961
    %3544 = vmatprep.subr.bf16.mxu0 %v2964
    %3545 = vmatpush1.bf16.msra.mxu0 %v2963
    %3546 = vmatprep.subr.bf16.mxu0 %v2966
    %3547 = vmatpush1.bf16.msra.mxu0 %v2965
    %3548 = vmatprep.subr.bf16.mxu0 %v2968
    %3549 = vmatpush1.bf16.msra.mxu0 %v2967
    %3550 = vmatprep.subr.bf16.mxu0 %v2970
    %3551 = vmatpush1.bf16.msra.mxu0 %v2969
    %3552 = vmatprep.subr.bf16.mxu0 %v2972
    %3553 = vmatpush1.bf16.msra.mxu0 %v2971
    %3554 = vmatprep.mubr.bf16.mxu0 %v1988
    %3555 = vmatmul.mubr.bf16.gmra.mrb[0].mxu0 %v1987
    %v3556 = vpop.f32.mrb[0].mxu0
    %v3557 = vadd.f32 %v3484, %v3556
    %v3558 = vpop.f32.mrb[0].mxu0
    %v3559 = vadd.f32 %v3486, %v3558
    %v3560 = vpop.f32.mrb[0].mxu0
    %v3561 = vadd.f32 %v3488, %v3560
    %v3562 = vpop.f32.mrb[0].mxu0
    %v3563 = vadd.f32 %v3490, %v3562
    %3564 = vmatprep.mubr.bf16.mxu0 %v2005
    %3565 = vmatmul.mubr.bf16.gmra.mrb[0].mxu0 %v2004
    %v3566 = vpop.f32.mrb[0].mxu0
    %v3567 = vadd.f32 %v3494, %v3566
    %v3568 = vpop.f32.mrb[0].mxu0
    %v3569 = vadd.f32 %v3496, %v3568
    %v3570 = vpop.f32.mrb[0].mxu0
    %v3571 = vadd.f32 %v3498, %v3570
    %v3572 = vpop.f32.mrb[0].mxu0
    %v3573 = vadd.f32 %v3500, %v3572
    %3574 = vmatprep.mubr.bf16.mxu0 %v2022
    %3575 = vmatmul.mubr.bf16.gmra.mrb[0].mxu0 %v2021
    %v3576 = vpop.f32.mrb[0].mxu0
    %v3577 = vadd.f32 %v3504, %v3576
    %v3578 = vpop.f32.mrb[0].mxu0
    %v3579 = vadd.f32 %v3506, %v3578
    %v3580 = vpop.f32.mrb[0].mxu0
    %v3581 = vadd.f32 %v3508, %v3580
    %v3582 = vpop.f32.mrb[0].mxu0
    %v3583 = vadd.f32 %v3510, %v3582
    %3584 = vmatprep.mubr.bf16.mxu0 %v2039
    %3585 = vmatmul.mubr.bf16.gmra.mrb[0].mxu0 %v2038
    %v3586 = vpop.f32.mrb[0].mxu0
    %v3587 = vadd.f32 %v3514, %v3586
    %v3588 = vpop.f32.mrb[0].mxu0
    %v3589 = vadd.f32 %v3516, %v3588
    %v3590 = vpop.f32.mrb[0].mxu0
    %v3591 = vadd.f32 %v3518, %v3590
    %v3592 = vpop.f32.mrb[0].mxu0
    %v3593 = vadd.f32 %v3520, %v3592
    %3594 = vdwg.mxu0
    %3595 = vmatprep.subr.bf16.mxu0 %v2974
    %3596 = vmatpush1.bf16.msra.mxu0 %v2973
    %3597 = vmatprep.subr.bf16.mxu0 %v2976
    %3598 = vmatpush1.bf16.msra.mxu0 %v2975
    %3599 = vmatprep.subr.bf16.mxu0 %v2978
    %3600 = vmatpush1.bf16.msra.mxu0 %v2977
    %3601 = vmatprep.subr.bf16.mxu0 %v2980
    %3602 = vmatpush1.bf16.msra.mxu0 %v2979
    %3603 = vmatprep.subr.bf16.mxu0 %v2982
    %3604 = vmatpush1.bf16.msra.mxu0 %v2981
    %3605 = vmatprep.subr.bf16.mxu0 %v2984
    %3606 = vmatpush1.bf16.msra.mxu0 %v2983
    %3607 = vmatprep.subr.bf16.mxu0 %v2986
    %3608 = vmatpush1.bf16.msra.mxu0 %v2985
    %3609 = vmatprep.subr.bf16.mxu0 %v2988
    %3610 = vmatpush1.bf16.msra.mxu0 %v2987
    %3611 = vmatprep.subr.bf16.mxu0 %v2990
    %3612 = vmatpush1.bf16.msra.mxu0 %v2989
    %3613 = vmatprep.subr.bf16.mxu0 %v2992
    %3614 = vmatpush1.bf16.msra.mxu0 %v2991
    %3615 = vmatprep.subr.bf16.mxu0 %v2994
    %3616 = vmatpush1.bf16.msra.mxu0 %v2993
    %3617 = vmatprep.subr.bf16.mxu0 %v2996
    %3618 = vmatpush1.bf16.msra.mxu0 %v2995
    %3619 = vmatprep.subr.bf16.mxu0 %v2998
    %3620 = vmatpush1.bf16.msra.mxu0 %v2997
    %3621 = vmatprep.subr.bf16.mxu0 %v3000
    %3622 = vmatpush1.bf16.msra.mxu0 %v2999
    %3623 = vmatprep.subr.bf16.mxu0 %v3002
    %3624 = vmatpush1.bf16.msra.mxu0 %v3001
    %3625 = vmatprep.subr.bf16.mxu0 %v3004
    %3626 = vmatpush1.bf16.msra.mxu0 %v3003
    %3627 = vmatprep.mubr.bf16.mxu0 %v1990
    %3628 = vmatmul.mubr.bf16.gmra.mrb[0].mxu0 %v1989
    %v3629 = vpop.f32.mrb[0].mxu0
    %v3630 = vadd.f32 %v3557, %v3629
    %v3631 = vpop.f32.mrb[0].mxu0
    %v3632 = vadd.f32 %v3559, %v3631
    %v3633 = vpop.f32.mrb[0].mxu0
    %v3634 = vadd.f32 %v3561, %v3633
    %v3635 = vpop.f32.mrb[0].mxu0
    %v3636 = vadd.f32 %v3563, %v3635
    %3637 = vmatprep.mubr.bf16.mxu0 %v2007
    %3638 = vmatmul.mubr.bf16.gmra.mrb[0].mxu0 %v2006
    %v3639 = vpop.f32.mrb[0].mxu0
    %v3640 = vadd.f32 %v3567, %v3639
    %v3641 = vpop.f32.mrb[0].mxu0
    %v3642 = vadd.f32 %v3569, %v3641
    %v3643 = vpop.f32.mrb[0].mxu0
    %v3644 = vadd.f32 %v3571, %v3643
    %v3645 = vpop.f32.mrb[0].mxu0
    %v3646 = vadd.f32 %v3573, %v3645
    %3647 = vmatprep.mubr.bf16.mxu0 %v2024
    %3648 = vmatmul.mubr.bf16.gmra.mrb[0].mxu0 %v2023
    %v3649 = vpop.f32.mrb[0].mxu0
    %v3650 = vadd.f32 %v3577, %v3649
    %v3651 = vpop.f32.mrb[0].mxu0
    %v3652 = vadd.f32 %v3579, %v3651
    %v3653 = vpop.f32.mrb[0].mxu0
    %v3654 = vadd.f32 %v3581, %v3653
    %v3655 = vpop.f32.mrb[0].mxu0
    %v3656 = vadd.f32 %v3583, %v3655
    %3657 = vmatprep.mubr.bf16.mxu0 %v2041
    %3658 = vmatmul.mubr.bf16.gmra.mrb[0].mxu0 %v2040
    %v3659 = vpop.f32.mrb[0].mxu0
    %v3660 = vadd.f32 %v3587, %v3659
    %v3661 = vpop.f32.mrb[0].mxu0
    %v3662 = vadd.f32 %v3589, %v3661
    %v3663 = vpop.f32.mrb[0].mxu0
    %v3664 = vadd.f32 %v3591, %v3663
    %v3665 = vpop.f32.mrb[0].mxu0
    %v3666 = vadd.f32 %v3593, %v3665
    %3667 = vdwg.mxu0
    %3668 = vmatprep.subr.bf16.mxu0 %v3006
    %3669 = vmatpush1.bf16.msra.mxu0 %v3005
    %3670 = vmatprep.subr.bf16.mxu0 %v3008
    %3671 = vmatpush1.bf16.msra.mxu0 %v3007
    %3672 = vmatprep.subr.bf16.mxu0 %v3010
    %3673 = vmatpush1.bf16.msra.mxu0 %v3009
    %3674 = vmatprep.subr.bf16.mxu0 %v3012
    %3675 = vmatpush1.bf16.msra.mxu0 %v3011
    %3676 = vmatprep.subr.bf16.mxu0 %v3014
    %3677 = vmatpush1.bf16.msra.mxu0 %v3013
    %3678 = vmatprep.subr.bf16.mxu0 %v3016
    %3679 = vmatpush1.bf16.msra.mxu0 %v3015
    %3680 = vmatprep.subr.bf16.mxu0 %v3018
    %3681 = vmatpush1.bf16.msra.mxu0 %v3017
    %3682 = vmatprep.subr.bf16.mxu0 %v3020
    %3683 = vmatpush1.bf16.msra.mxu0 %v3019
    %3684 = vmatprep.subr.bf16.mxu0 %v3022
    %3685 = vmatpush1.bf16.msra.mxu0 %v3021
    %3686 = vmatprep.subr.bf16.mxu0 %v3024
    %3687 = vmatpush1.bf16.msra.mxu0 %v3023
    %3688 = vmatprep.subr.bf16.mxu0 %v3026
    %3689 = vmatpush1.bf16.msra.mxu0 %v3025
    %3690 = vmatprep.subr.bf16.mxu0 %v3028
    %3691 = vmatpush1.bf16.msra.mxu0 %v3027
    %3692 = vmatprep.subr.bf16.mxu0 %v3030
    %3693 = vmatpush1.bf16.msra.mxu0 %v3029
    %3694 = vmatprep.subr.bf16.mxu0 %v3032
    %3695 = vmatpush1.bf16.msra.mxu0 %v3031
    %3696 = vmatprep.subr.bf16.mxu0 %v3034
    %3697 = vmatpush1.bf16.msra.mxu0 %v3033
    %3698 = vmatprep.subr.bf16.mxu0 %v3036
    %3699 = vmatpush1.bf16.msra.mxu0 %v3035
    %3700 = vmatprep.mubr.bf16.mxu0 %v1992
    %3701 = vmatmul.mubr.bf16.gmra.mrb[0].mxu0 %v1991
    %v3702 = vpop.f32.mrb[0].mxu0
    %v3703 = vadd.f32 %v3630, %v3702
    %v3704 = vpop.f32.mrb[0].mxu0
    %v3705 = vadd.f32 %v3632, %v3704
    %v3706 = vpop.f32.mrb[0].mxu0
    %v3707 = vadd.f32 %v3634, %v3706
    %v3708 = vpop.f32.mrb[0].mxu0
    %v3709 = vadd.f32 %v3636, %v3708
    %3710 = vmatprep.mubr.bf16.mxu0 %v2009
    %3711 = vmatmul.mubr.bf16.gmra.mrb[0].mxu0 %v2008
    %v3712 = vpop.f32.mrb[0].mxu0
    %v3713 = vadd.f32 %v3640, %v3712
    %v3714 = vpop.f32.mrb[0].mxu0
    %v3715 = vadd.f32 %v3642, %v3714
    %v3716 = vpop.f32.mrb[0].mxu0
    %v3717 = vadd.f32 %v3644, %v3716
    %v3718 = vpop.f32.mrb[0].mxu0
    %v3719 = vadd.f32 %v3646, %v3718
    %3720 = vmatprep.mubr.bf16.mxu0 %v2026
    %3721 = vmatmul.mubr.bf16.gmra.mrb[0].mxu0 %v2025
    %v3722 = vpop.f32.mrb[0].mxu0
    %v3723 = vadd.f32 %v3650, %v3722
    %v3724 = vpop.f32.mrb[0].mxu0
    %v3725 = vadd.f32 %v3652, %v3724
    %v3726 = vpop.f32.mrb[0].mxu0
    %v3727 = vadd.f32 %v3654, %v3726
    %v3728 = vpop.f32.mrb[0].mxu0
    %v3729 = vadd.f32 %v3656, %v3728
    %3730 = vmatprep.mubr.bf16.mxu0 %v2043
    %3731 = vmatmul.mubr.bf16.gmra.mrb[0].mxu0 %v2042
    %v3732 = vpop.f32.mrb[0].mxu0
    %v3733 = vadd.f32 %v3660, %v3732
    %v3734 = vpop.f32.mrb[0].mxu0
    %v3735 = vadd.f32 %v3662, %v3734
    %v3736 = vpop.f32.mrb[0].mxu0
    %v3737 = vadd.f32 %v3664, %v3736
    %v3738 = vpop.f32.mrb[0].mxu0
    %v3739 = vadd.f32 %v3666, %v3738
    %3740 = vdwg.mxu0
    %3741 = vmatprep.subr.bf16.mxu0 %v3038
    %3742 = vmatpush1.bf16.msra.mxu0 %v3037
    %3743 = vmatprep.subr.bf16.mxu0 %v3040
    %3744 = vmatpush1.bf16.msra.mxu0 %v3039
    %3745 = vmatprep.subr.bf16.mxu0 %v3042
    %3746 = vmatpush1.bf16.msra.mxu0 %v3041
    %3747 = vmatprep.subr.bf16.mxu0 %v3044
    %3748 = vmatpush1.bf16.msra.mxu0 %v3043
    %3749 = vmatprep.subr.bf16.mxu0 %v3046
    %3750 = vmatpush1.bf16.msra.mxu0 %v3045
    %3751 = vmatprep.subr.bf16.mxu0 %v3048
    %3752 = vmatpush1.bf16.msra.mxu0 %v3047
    %3753 = vmatprep.subr.bf16.mxu0 %v3050
    %3754 = vmatpush1.bf16.msra.mxu0 %v3049
    %3755 = vmatprep.subr.bf16.mxu0 %v3052
    %3756 = vmatpush1.bf16.msra.mxu0 %v3051
    %3757 = vmatprep.subr.bf16.mxu0 %v3054
    %3758 = vmatpush1.bf16.msra.mxu0 %v3053
    %3759 = vmatprep.subr.bf16.mxu0 %v3056
    %3760 = vmatpush1.bf16.msra.mxu0 %v3055
    %3761 = vmatprep.subr.bf16.mxu0 %v3058
    %3762 = vmatpush1.bf16.msra.mxu0 %v3057
    %3763 = vmatprep.subr.bf16.mxu0 %v3060
    %3764 = vmatpush1.bf16.msra.mxu0 %v3059
    %3765 = vmatprep.subr.bf16.mxu0 %v3062
    %3766 = vmatpush1.bf16.msra.mxu0 %v3061
    %3767 = vmatprep.subr.bf16.mxu0 %v3064
    %3768 = vmatpush1.bf16.msra.mxu0 %v3063
    %3769 = vmatprep.subr.bf16.mxu0 %v3066
    %3770 = vmatpush1.bf16.msra.mxu0 %v3065
    %3771 = vmatprep.subr.bf16.mxu0 %v3068
    %3772 = vmatpush1.bf16.msra.mxu0 %v3067
    %3773 = vmatprep.mubr.bf16.mxu0 %v1994
    %3774 = vmatmul.mubr.bf16.gmra.mrb[0].mxu0 %v1993
    %v3775 = vpop.f32.mrb[0].mxu0
    %v3776 = vadd.f32 %v3703, %v3775
    %v3777 = vpop.f32.mrb[0].mxu0
    %v3778 = vadd.f32 %v3705, %v3777
    %v3779 = vpop.f32.mrb[0].mxu0
    %v3780 = vadd.f32 %v3707, %v3779
    %v3781 = vpop.f32.mrb[0].mxu0
    %v3782 = vadd.f32 %v3709, %v3781
    %3783 = vmatprep.mubr.bf16.mxu0 %v2011
    %3784 = vmatmul.mubr.bf16.gmra.mrb[0].mxu0 %v2010
    %v3785 = vpop.f32.mrb[0].mxu0
    %v3786 = vadd.f32 %v3713, %v3785
    %v3787 = vpop.f32.mrb[0].mxu0
    %v3788 = vadd.f32 %v3715, %v3787
    %v3789 = vpop.f32.mrb[0].mxu0
    %v3790 = vadd.f32 %v3717, %v3789
    %v3791 = vpop.f32.mrb[0].mxu0
    %v3792 = vadd.f32 %v3719, %v3791
    %3793 = vmatprep.mubr.bf16.mxu0 %v2028
    %3794 = vmatmul.mubr.bf16.gmra.mrb[0].mxu0 %v2027
    %v3795 = vpop.f32.mrb[0].mxu0
    %v3796 = vadd.f32 %v3723, %v3795
    %v3797 = vpop.f32.mrb[0].mxu0
    %v3798 = vadd.f32 %v3725, %v3797
    %v3799 = vpop.f32.mrb[0].mxu0
    %v3800 = vadd.f32 %v3727, %v3799
    %v3801 = vpop.f32.mrb[0].mxu0
    %v3802 = vadd.f32 %v3729, %v3801
    %3803 = vmatprep.mubr.bf16.mxu0 %v2045
    %3804 = vmatmul.mubr.bf16.gmra.mrb[0].mxu0 %v2044
    %v3805 = vpop.f32.mrb[0].mxu0
    %v3806 = vadd.f32 %v3733, %v3805
    %v3807 = vpop.f32.mrb[0].mxu0
    %v3808 = vadd.f32 %v3735, %v3807
    %v3809 = vpop.f32.mrb[0].mxu0
    %v3810 = vadd.f32 %v3737, %v3809
    %v3811 = vpop.f32.mrb[0].mxu0
    %v3812 = vadd.f32 %v3739, %v3811
    %3813 = vdwg.mxu0
    %3814 = vmatprep.subr.bf16.mxu0 %v3070
    %3815 = vmatpush1.bf16.msra.mxu0 %v3069
    %3816 = vmatprep.subr.bf16.mxu0 %v3072
    %3817 = vmatpush1.bf16.msra.mxu0 %v3071
    %3818 = vmatprep.subr.bf16.mxu0 %v3074
    %3819 = vmatpush1.bf16.msra.mxu0 %v3073
    %3820 = vmatprep.subr.bf16.mxu0 %v3076
    %3821 = vmatpush1.bf16.msra.mxu0 %v3075
    %3822 = vmatprep.subr.bf16.mxu0 %v3078
    %3823 = vmatpush1.bf16.msra.mxu0 %v3077
    %3824 = vmatprep.subr.bf16.mxu0 %v3080
    %3825 = vmatpush1.bf16.msra.mxu0 %v3079
    %3826 = vmatprep.subr.bf16.mxu0 %v3082
    %3827 = vmatpush1.bf16.msra.mxu0 %v3081
    %3828 = vmatprep.subr.bf16.mxu0 %v3084
    %3829 = vmatpush1.bf16.msra.mxu0 %v3083
    %3830 = vmatprep.subr.bf16.mxu0 %v3086
    %3831 = vmatpush1.bf16.msra.mxu0 %v3085
    %3832 = vmatprep.subr.bf16.mxu0 %v3088
    %3833 = vmatpush1.bf16.msra.mxu0 %v3087
    %3834 = vmatprep.subr.bf16.mxu0 %v3090
    %3835 = vmatpush1.bf16.msra.mxu0 %v3089
    %3836 = vmatprep.subr.bf16.mxu0 %v3092
    %3837 = vmatpush1.bf16.msra.mxu0 %v3091
    %3838 = vmatprep.subr.bf16.mxu0 %v3094
    %3839 = vmatpush1.bf16.msra.mxu0 %v3093
    %3840 = vmatprep.subr.bf16.mxu0 %v3096
    %3841 = vmatpush1.bf16.msra.mxu0 %v3095
    %3842 = vmatprep.subr.bf16.mxu0 %v3098
    %3843 = vmatpush1.bf16.msra.mxu0 %v3097
    %3844 = vmatprep.subr.bf16.mxu0 %v3100
    %3845 = vmatpush1.bf16.msra.mxu0 %v3099
    %3846 = vmatprep.mubr.bf16.mxu0 %v1996
    %3847 = vmatmul.mubr.bf16.gmra.mrb[0].mxu0 %v1995
    %v3848 = vpop.f32.mrb[0].mxu0
    %v3849 = vadd.f32 %v3776, %v3848
    %v3850 = vpop.f32.mrb[0].mxu0
    %v3851 = vadd.f32 %v3778, %v3850
    %v3852 = vpop.f32.mrb[0].mxu0
    %v3853 = vadd.f32 %v3780, %v3852
    %v3854 = vpop.f32.mrb[0].mxu0
    %v3855 = vadd.f32 %v3782, %v3854
    %3856 = vmatprep.mubr.bf16.mxu0 %v2013
    %3857 = vmatmul.mubr.bf16.gmra.mrb[0].mxu0 %v2012
    %v3858 = vpop.f32.mrb[0].mxu0
    %v3859 = vadd.f32 %v3786, %v3858
    %v3860 = vpop.f32.mrb[0].mxu0
    %v3861 = vadd.f32 %v3788, %v3860
    %v3862 = vpop.f32.mrb[0].mxu0
    %v3863 = vadd.f32 %v3790, %v3862
    %v3864 = vpop.f32.mrb[0].mxu0
    %v3865 = vadd.f32 %v3792, %v3864
    %3866 = vmatprep.mubr.bf16.mxu0 %v2030
    %3867 = vmatmul.mubr.bf16.gmra.mrb[0].mxu0 %v2029
    %v3868 = vpop.f32.mrb[0].mxu0
    %v3869 = vadd.f32 %v3796, %v3868
    %v3870 = vpop.f32.mrb[0].mxu0
    %v3871 = vadd.f32 %v3798, %v3870
    %v3872 = vpop.f32.mrb[0].mxu0
    %v3873 = vadd.f32 %v3800, %v3872
    %v3874 = vpop.f32.mrb[0].mxu0
    %v3875 = vadd.f32 %v3802, %v3874
    %3876 = vmatprep.mubr.bf16.mxu0 %v2047
    %3877 = vmatmul.mubr.bf16.gmra.mrb[0].mxu0 %v2046
    %v3878 = vpop.f32.mrb[0].mxu0
    %v3879 = vadd.f32 %v3806, %v3878
    %v3880 = vpop.f32.mrb[0].mxu0
    %v3881 = vadd.f32 %v3808, %v3880
    %v3882 = vpop.f32.mrb[0].mxu0
    %v3883 = vadd.f32 %v3810, %v3882
    %v3884 = vpop.f32.mrb[0].mxu0
    %v3885 = vadd.f32 %v3812, %v3884
    %3886 = vdwg.mxu0
    %3887 = vmatprep.subr.bf16.mxu0 %v3102
    %3888 = vmatpush1.bf16.msra.mxu0 %v3101
    %3889 = vmatprep.subr.bf16.mxu0 %v3104
    %3890 = vmatpush1.bf16.msra.mxu0 %v3103
    %3891 = vmatprep.subr.bf16.mxu0 %v3106
    %3892 = vmatpush1.bf16.msra.mxu0 %v3105
    %3893 = vmatprep.subr.bf16.mxu0 %v3108
    %3894 = vmatpush1.bf16.msra.mxu0 %v3107
    %3895 = vmatprep.subr.bf16.mxu0 %v3110
    %3896 = vmatpush1.bf16.msra.mxu0 %v3109
    %3897 = vmatprep.subr.bf16.mxu0 %v3112
    %3898 = vmatpush1.bf16.msra.mxu0 %v3111
    %3899 = vmatprep.subr.bf16.mxu0 %v3114
    %3900 = vmatpush1.bf16.msra.mxu0 %v3113
    %3901 = vmatprep.subr.bf16.mxu0 %v3116
    %3902 = vmatpush1.bf16.msra.mxu0 %v3115
    %3903 = vmatprep.subr.bf16.mxu0 %v3118
    %3904 = vmatpush1.bf16.msra.mxu0 %v3117
    %3905 = vmatprep.subr.bf16.mxu0 %v3120
    %3906 = vmatpush1.bf16.msra.mxu0 %v3119
    %3907 = vmatprep.subr.bf16.mxu0 %v3122
    %3908 = vmatpush1.bf16.msra.mxu0 %v3121
    %3909 = vmatprep.subr.bf16.mxu0 %v3124
    %3910 = vmatpush1.bf16.msra.mxu0 %v3123
    %3911 = vmatprep.subr.bf16.mxu0 %v3126
    %3912 = vmatpush1.bf16.msra.mxu0 %v3125
    %3913 = vmatprep.subr.bf16.mxu0 %v3128
    %3914 = vmatpush1.bf16.msra.mxu0 %v3127
    %3915 = vmatprep.subr.bf16.mxu0 %v3130
    %3916 = vmatpush1.bf16.msra.mxu0 %v3129
    %3917 = vmatprep.subr.bf16.mxu0 %v3132
    %3918 = vmatpush1.bf16.msra.mxu0 %v3131
    %3919 = vmatprep.mubr.bf16.mxu0 %v1998
    %3920 = vmatmul.mubr.bf16.gmra.mrb[0].mxu0 %v1997
    %v3921 = vpop.f32.mrb[0].mxu0
    %v3922 = vadd.f32 %v3849, %v3921
    %v3923 = vpop.f32.mrb[0].mxu0
    %v3924 = vadd.f32 %v3851, %v3923
    %v3925 = vpop.f32.mrb[0].mxu0
    %v3926 = vadd.f32 %v3853, %v3925
    %v3927 = vpop.f32.mrb[0].mxu0
    %v3928 = vadd.f32 %v3855, %v3927
    %3929 = vmatprep.mubr.bf16.mxu0 %v2015
    %3930 = vmatmul.mubr.bf16.gmra.mrb[0].mxu0 %v2014
    %v3931 = vpop.f32.mrb[0].mxu0
    %v3932 = vadd.f32 %v3859, %v3931
    %v3933 = vpop.f32.mrb[0].mxu0
    %v3934 = vadd.f32 %v3861, %v3933
    %v3935 = vpop.f32.mrb[0].mxu0
    %v3936 = vadd.f32 %v3863, %v3935
    %v3937 = vpop.f32.mrb[0].mxu0
    %v3938 = vadd.f32 %v3865, %v3937
    %3939 = vmatprep.mubr.bf16.mxu0 %v2032
    %3940 = vmatmul.mubr.bf16.gmra.mrb[0].mxu0 %v2031
    %v3941 = vpop.f32.mrb[0].mxu0
    %v3942 = vadd.f32 %v3869, %v3941
    %v3943 = vpop.f32.mrb[0].mxu0
    %v3944 = vadd.f32 %v3871, %v3943
    %v3945 = vpop.f32.mrb[0].mxu0
    %v3946 = vadd.f32 %v3873, %v3945
    %v3947 = vpop.f32.mrb[0].mxu0
    %v3948 = vadd.f32 %v3875, %v3947
    %3949 = vmatprep.mubr.bf16.mxu0 %v2049
    %3950 = vmatmul.mubr.bf16.gmra.mrb[0].mxu0 %v2048
    %v3951 = vpop.f32.mrb[0].mxu0
    %v3952 = vadd.f32 %v3879, %v3951
    %v3953 = vpop.f32.mrb[0].mxu0
    %v3954 = vadd.f32 %v3881, %v3953
    %v3955 = vpop.f32.mrb[0].mxu0
    %v3956 = vadd.f32 %v3883, %v3955
    %v3957 = vpop.f32.mrb[0].mxu0
    %v3958 = vadd.f32 %v3885, %v3957
    %3959 = vdwg.mxu0
    %3960 = vmatprep.subr.bf16.mxu0 %v3134
    %3961 = vmatpush1.bf16.msra.mxu0 %v3133
    %3962 = vmatprep.subr.bf16.mxu0 %v3136
    %3963 = vmatpush1.bf16.msra.mxu0 %v3135
    %3964 = vmatprep.subr.bf16.mxu0 %v3138
    %3965 = vmatpush1.bf16.msra.mxu0 %v3137
    %3966 = vmatprep.subr.bf16.mxu0 %v3140
    %3967 = vmatpush1.bf16.msra.mxu0 %v3139
    %3968 = vmatprep.subr.bf16.mxu0 %v3142
    %3969 = vmatpush1.bf16.msra.mxu0 %v3141
    %3970 = vmatprep.subr.bf16.mxu0 %v3144
    %3971 = vmatpush1.bf16.msra.mxu0 %v3143
    %3972 = vmatprep.subr.bf16.mxu0 %v3146
    %3973 = vmatpush1.bf16.msra.mxu0 %v3145
    %3974 = vmatprep.subr.bf16.mxu0 %v3148
    %3975 = vmatpush1.bf16.msra.mxu0 %v3147
    %3976 = vmatprep.subr.bf16.mxu0 %v3150
    %3977 = vmatpush1.bf16.msra.mxu0 %v3149
    %3978 = vmatprep.subr.bf16.mxu0 %v3152
    %3979 = vmatpush1.bf16.msra.mxu0 %v3151
    %3980 = vmatprep.subr.bf16.mxu0 %v3154
    %3981 = vmatpush1.bf16.msra.mxu0 %v3153
    %3982 = vmatprep.subr.bf16.mxu0 %v3156
    %3983 = vmatpush1.bf16.msra.mxu0 %v3155
    %3984 = vmatprep.subr.bf16.mxu0 %v3158
    %3985 = vmatpush1.bf16.msra.mxu0 %v3157
    %3986 = vmatprep.subr.bf16.mxu0 %v3160
    %3987 = vmatpush1.bf16.msra.mxu0 %v3159
    %3988 = vmatprep.subr.bf16.mxu0 %v3162
    %3989 = vmatpush1.bf16.msra.mxu0 %v3161
    %3990 = vmatprep.subr.bf16.mxu0 %v3164
    %3991 = vmatpush1.bf16.msra.mxu0 %v3163
    %3992 = vmatprep.mubr.bf16.mxu0 %v2000
    %3993 = vmatmul.mubr.bf16.gmra.mrb[0].mxu0 %v1999
    %v3994 = vpop.f32.mrb[0].mxu0
    %v3995 = vadd.f32 %v3922, %v3994
    %v3996 = vpop.f32.mrb[0].mxu0
    %v3997 = vadd.f32 %v3924, %v3996
    %v3998 = vpop.f32.mrb[0].mxu0
    %v3999 = vadd.f32 %v3926, %v3998
    %v4000 = vpop.f32.mrb[0].mxu0
    %v4001 = vadd.f32 %v3928, %v4000
    %4002 = vmatprep.mubr.bf16.mxu0 %v2017
    %4003 = vmatmul.mubr.bf16.gmra.mrb[0].mxu0 %v2016
    %v4004 = vpop.f32.mrb[0].mxu0
    %v4005 = vadd.f32 %v3932, %v4004
    %v4006 = vpop.f32.mrb[0].mxu0
    %v4007 = vadd.f32 %v3934, %v4006
    %v4008 = vpop.f32.mrb[0].mxu0
    %v4009 = vadd.f32 %v3936, %v4008
    %v4010 = vpop.f32.mrb[0].mxu0
    %v4011 = vadd.f32 %v3938, %v4010
    %4012 = vmatprep.mubr.bf16.mxu0 %v2034
    %4013 = vmatmul.mubr.bf16.gmra.mrb[0].mxu0 %v2033
    %v4014 = vpop.f32.mrb[0].mxu0
    %v4015 = vadd.f32 %v3942, %v4014
    %v4016 = vpop.f32.mrb[0].mxu0
    %v4017 = vadd.f32 %v3944, %v4016
    %v4018 = vpop.f32.mrb[0].mxu0
    %v4019 = vadd.f32 %v3946, %v4018
    %v4020 = vpop.f32.mrb[0].mxu0
    %v4021 = vadd.f32 %v3948, %v4020
    %4022 = vmatprep.mubr.bf16.mxu0 %v2051
    %4023 = vmatmul.mubr.bf16.gmra.mrb[0].mxu0 %v2050
    %v4024 = vpop.f32.mrb[0].mxu0
    %v4025 = vadd.f32 %v3952, %v4024
    %v4026 = vpop.f32.mrb[0].mxu0
    %v4027 = vadd.f32 %v3954, %v4026
    %v4028 = vpop.f32.mrb[0].mxu0
    %v4029 = vadd.f32 %v3956, %v4028
    %v4030 = vpop.f32.mrb[0].mxu0
    %v4031 = vadd.f32 %v3958, %v4030
    %4032 = vdwg.mxu0
    %4033 = vmatprep.subr.bf16.mxu0 %v3166
    %4034 = vmatpush1.bf16.msra.mxu0 %v3165
    %4035 = vmatprep.subr.bf16.mxu0 %v3168
    %4036 = vmatpush1.bf16.msra.mxu0 %v3167
    %4037 = vmatprep.subr.bf16.mxu0 %v3170
    %4038 = vmatpush1.bf16.msra.mxu0 %v3169
    %4039 = vmatprep.subr.bf16.mxu0 %v3172
    %4040 = vmatpush1.bf16.msra.mxu0 %v3171
    %4041 = vmatprep.subr.bf16.mxu0 0
    %4042 = vmatpush1.bf16.msra.mxu0 0
    %4043 = vmatprep.subr.bf16.mxu0 0
    %4044 = vmatpush1.bf16.msra.mxu0 0
    %4045 = vmatprep.subr.bf16.mxu0 0
    %4046 = vmatpush1.bf16.msra.mxu0 0
    %4047 = vmatprep.subr.bf16.mxu0 0
    %4048 = vmatpush1.bf16.msra.mxu0 0
    %4049 = vmatprep.subr.bf16.mxu0 0
    %4050 = vmatpush1.bf16.msra.mxu0 0
    %4051 = vmatprep.subr.bf16.mxu0 0
    %4052 = vmatpush1.bf16.msra.mxu0 0
    %4053 = vmatprep.subr.bf16.mxu0 0
    %4054 = vmatpush1.bf16.msra.mxu0 0
    %4055 = vmatprep.subr.bf16.mxu0 0
    %4056 = vmatpush1.bf16.msra.mxu0 0
    %4057 = vmatprep.subr.bf16.mxu0 0
    %4058 = vmatpush1.bf16.msra.mxu0 0
    %4059 = vmatprep.subr.bf16.mxu0 0
    %4060 = vmatpush1.bf16.msra.mxu0 0
    %4061 = vmatprep.subr.bf16.mxu0 0
    %4062 = vmatpush1.bf16.msra.mxu0 0
    %4063 = vmatprep.subr.bf16.mxu0 0
    %4064 = vmatpush1.bf16.msra.mxu0 0
    %4065 = vmatprep.mubr.bf16.mxu0 0
    %4066 = vmatmul.mubr.bf16.gmra.mrb[0].mxu0 %v3438
    %v4067 = vpop.f32.mrb[0].mxu0
    %v4068 = vadd.f32 %v3995, %v4067
    %v4069 = vpop.f32.mrb[0].mxu0
    %v4070 = vadd.f32 %v3997, %v4069
    %v4071 = vpop.f32.mrb[0].mxu0
    %v4072 = vadd.f32 %v3999, %v4071
    %v4073 = vpop.f32.mrb[0].mxu0
    %v4074 = vadd.f32 %v4001, %v4073
    %4075 = vmatprep.mubr.bf16.mxu0 0
    %4076 = vmatmul.mubr.bf16.gmra.mrb[0].mxu0 %v3441
    %v4077 = vpop.f32.mrb[0].mxu0
    %v4078 = vadd.f32 %v4005, %v4077
    %v4079 = vpop.f32.mrb[0].mxu0
    %v4080 = vadd.f32 %v4007, %v4079
    %v4081 = vpop.f32.mrb[0].mxu0
    %v4082 = vadd.f32 %v4009, %v4081
    %v4083 = vpop.f32.mrb[0].mxu0
    %v4084 = vadd.f32 %v4011, %v4083
    %4085 = vmatprep.mubr.bf16.mxu0 0
    %4086 = vmatmul.mubr.bf16.gmra.mrb[0].mxu0 %v3444
    %v4087 = vpop.f32.mrb[0].mxu0
    %v4088 = vadd.f32 %v4015, %v4087
    %v4089 = vpop.f32.mrb[0].mxu0
    %v4090 = vadd.f32 %v4017, %v4089
    %v4091 = vpop.f32.mrb[0].mxu0
    %v4092 = vadd.f32 %v4019, %v4091
    %v4093 = vpop.f32.mrb[0].mxu0
    %v4094 = vadd.f32 %v4021, %v4093
    %4095 = vmatprep.mubr.bf16.mxu0 0
    %4096 = vmatmul.mubr.bf16.gmra.mrb[0].mxu0 %v3447
    %v4097 = vpop.f32.mrb[0].mxu0
    %v4098 = vadd.f32 %v4025, %v4097
    %v4099 = vpop.f32.mrb[0].mxu0
    %v4100 = vadd.f32 %v4027, %v4099
    %v4101 = vpop.f32.mrb[0].mxu0
    %v4102 = vadd.f32 %v4029, %v4101
    %v4103 = vpop.f32.mrb[0].mxu0
    %v4104 = vadd.f32 %v4031, %v4103
    %4105 = vdwg.mxu0
    %vm4106 = vcmp.ge.f32.partialorder %v4068, 0.0
    %vm4107 = vcmp.ge.f32.partialorder %v4070, 0.0
    %vm4108 = vcmp.ge.f32.partialorder %v4072, 0.0
    %vm4109 = vcmp.ge.f32.partialorder %v4074, 0.0
    %vm4110 = vcmp.ge.f32.partialorder %v4078, 0.0
    %vm4111 = vcmp.ge.f32.partialorder %v4080, 0.0
    %vm4112 = vcmp.ge.f32.partialorder %v4082, 0.0
    %vm4113 = vcmp.ge.f32.partialorder %v4084, 0.0
    %vm4114 = vcmp.ge.f32.partialorder %v4088, 0.0
    %vm4115 = vcmp.ge.f32.partialorder %v4090, 0.0
    %vm4116 = vcmp.ge.f32.partialorder %v4092, 0.0
    %vm4117 = vcmp.ge.f32.partialorder %v4094, 0.0
    %vm4118 = vcmp.ge.f32.partialorder %v4098, 0.0
    %vm4119 = vcmp.ge.f32.partialorder %v4100, 0.0
    %vm4120 = vcmp.ge.f32.partialorder %v4102, 0.0
    %vm4121 = vcmp.ge.f32.partialorder %v4104, 0.0
    %v4122 = vmul.f32 %v4068, 0.01
    %v4123 = vmul.f32 %v4070, 0.01
    %v4124 = vmul.f32 %v4072, 0.01
    %v4125 = vmul.f32 %v4074, 0.01
    %v4126 = vmul.f32 %v4078, 0.01
    %v4127 = vmul.f32 %v4080, 0.01
    %v4128 = vmul.f32 %v4082, 0.01
    %v4129 = vmul.f32 %v4084, 0.01
    %v4130 = vmul.f32 %v4088, 0.01
    %v4131 = vmul.f32 %v4090, 0.01
    %v4132 = vmul.f32 %v4092, 0.01
    %v4133 = vmul.f32 %v4094, 0.01
    %v4134 = vmul.f32 %v4098, 0.01
    %v4135 = vmul.f32 %v4100, 0.01
    %v4136 = vmul.f32 %v4102, 0.01
    %v4137 = vmul.f32 %v4104, 0.01
    %v4138 = vsel %vm4106, %v4068, %v4122
    %v4139 = vsel %vm4107, %v4070, %v4123
    %v4140 = vsel %vm4108, %v4072, %v4124
    %v4141 = vsel %vm4109, %v4074, %v4125
    %v4142 = vsel %vm4110, %v4078, %v4126
    %v4143 = vsel %vm4111, %v4080, %v4127
    %v4144 = vsel %vm4112, %v4082, %v4128
    %v4145 = vsel %vm4113, %v4084, %v4129
    %v4146 = vsel %vm4114, %v4088, %v4130
    %v4147 = vsel %vm4115, %v4090, %v4131
    %v4148 = vsel %vm4116, %v4092, %v4132
    %v4149 = vsel %vm4117, %v4094, %v4133
    %v4150 = vsel %vm4118, %v4098, %v4134
    %v4151 = vsel %vm4119, %v4100, %v4135
    %v4152 = vsel %vm4120, %v4102, %v4136
    %v4153 = vsel %vm4121, %v4104, %v4137
    %v4154 = vpack.c.bf16 %v4140, %v4138
    %v4155 = vpack.c.bf16 %v4141, %v4139
    %v4156 = vpack.c.bf16 %v4144, %v4142
    %v4157 = vpack.c.bf16 %v4145, %v4143
    %v4158 = vpack.c.bf16 %v4148, %v4146
    %v4159 = vpack.c.bf16 %v4149, %v4147
    %v4160 = vpack.c.bf16 %v4152, %v4150
    %v4161 = vpack.c.bf16 %v4153, %v4151
    %v4164 = vunpack.c.l.b16 %v1425
    %v4165 = vunpack.c.h.b16 %v1425
    %v4166 = vunpack.c.l.b16 %v1426
    %v4167 = vunpack.c.h.b16 %v1426
    %v4168 = vpack.c.b16 %v4164, %v4164
    %v4169 = vpack.c.b16 %v4165, %v4165
    %v4170 = vpack.c.b16 %v4166, %v4166
    %v4171 = vpack.c.b16 %v4167, %v4167
    %vm4172 = vcmask 1040384
    %vm4173 = vcmask 1044484
    %vm4174 = vmor %vm4172, %vm4173
    %v4175 = vrot.slane %v4168, 7
    %v4176 = vrot.slane %v4175, 4
    %v4177 = vrot.slane %v4169, 7
    %v4178 = vsel %vm4174, %v4176, %v4177
    %v4179 = vrot.slane %v4177, 4
    %v4180 = vrot.slane %v4170, 7
    %v4181 = vsel %vm4174, %v4179, %v4180
    %v4182 = vrot.slane %v4180, 4
    %v4183 = vrot.slane %v4171, 7
    %v4184 = vsel %vm4174, %v4182, %v4183
    %v4185 = vrot.slane %v4183, 4
    %4191 = vst [vmem:[#allocation2] sm:$0xe] %v4175
    %4192 = vst [vmem:[#allocation2 + $0xc] sm:$0xf] %v4178
    %4193 = vst [vmem:[#allocation2 + $0x18] sm:$0xf] %v4181
    %4194 = vst [vmem:[#allocation2 + $0x24] sm:$0xf] %v4184
    %4195 = vst [vmem:[#allocation2 + $0x30] sm:$0x1] %v4185
    %v4200 = vunpack.c.l.b16 %v4154
    %v4201 = vunpack.c.l.b16 %v4155
    %v4202 = vunpack.c.h.b16 %v4154
    %v4203 = vunpack.c.h.b16 %v4155
    %v4204 = vunpack.c.l.b16 %v4156
    %v4205 = vunpack.c.l.b16 %v4157
    %v4206 = vunpack.c.h.b16 %v4156
    %v4207 = vunpack.c.h.b16 %v4157
    %v4208 = vpack.c.b16 %v4201, %v4200
    %v4209 = vpack.c.b16 %v4203, %v4202
    %v4210 = vpack.c.b16 %v4205, %v4204
    %v4211 = vpack.c.b16 %v4207, %v4206
    %v4212 = vrot.slane %v4208, 7
    %v4213 = vrot.slane %v4212, 4
    %v4214 = vrot.slane %v4209, 7
    %v4215 = vsel %vm4174, %v4213, %v4214
    %v4216 = vrot.slane %v4214, 4
    %v4217 = vrot.slane %v4210, 7
    %v4218 = vsel %vm4174, %v4216, %v4217
    %v4219 = vrot.slane %v4217, 4
    %v4220 = vrot.slane %v4211, 7
    %v4221 = vsel %vm4174, %v4219, %v4220
    %v4222 = vrot.slane %v4220, 4
    %vm4228 = vcmask 1043457
    %vm4229 = vcmask 523269
    %vm4230 = vmor %vm4229, %vm4228
    %4231 = vst.msk [vmem:[#allocation2 + $0x4] sm:$0xee] %vm4230, %v4212
    %vm4232 = vcmask 1043456
    %vm4233 = vcmask 523268
    %vm4234 = vmor %vm4233, %vm4232
    %4235 = vst.msk [vmem:[#allocation2 + $0x10] sm:$0xff] %vm4234, %v4215
    %4236 = vst.msk [vmem:[#allocation2 + $0x1c] sm:$0xff] %vm4234, %v4218
    %4237 = vst.msk [vmem:[#allocation2 + $0x28] sm:$0xff] %vm4234, %v4221
    %vm4238 = vcmask 1040384
    %vm4239 = vcmask 520196
    %vm4240 = vmor %vm4239, %vm4238
    %4241 = vst.msk [vmem:[#allocation2 + $0x34] sm:$0x11] %vm4240, %v4222
    %v4244 = vunpack.c.l.b16 %v1427
    %v4245 = vunpack.c.h.b16 %v1427
    %v4246 = vunpack.c.l.b16 %v1428
    %v4247 = vunpack.c.h.b16 %v1428
    %v4248 = vpack.c.b16 %v4244, %v4244
    %v4249 = vpack.c.b16 %v4245, %v4245
    %v4250 = vpack.c.b16 %v4246, %v4246
    %v4251 = vpack.c.b16 %v4247, %v4247
    %v4252 = vrot.slane %v4248, 7
    %v4253 = vrot.slane %v4252, 4
    %v4254 = vrot.slane %v4249, 7
    %v4255 = vsel %vm4174, %v4253, %v4254
    %v4256 = vrot.slane %v4254, 4
    %v4257 = vrot.slane %v4250, 7
    %v4258 = vsel %vm4174, %v4256, %v4257
    %v4259 = vrot.slane %v4257, 4
    %v4260 = vrot.slane %v4251, 7
    %v4261 = vsel %vm4174, %v4259, %v4260
    %v4262 = vrot.slane %v4260, 4
    %4268 = vst [vmem:[%s46] sm:$0xe] %v4252
    %4269 = vst [vmem:[%s46 + $0xc] sm:$0xf] %v4255
    %4270 = vst [vmem:[%s46 + $0x18] sm:$0xf] %v4258
    %4271 = vst [vmem:[%s46 + $0x24] sm:$0xf] %v4261
    %4272 = vst [vmem:[%s46 + $0x30] sm:$0x1] %v4262
    %v4277 = vunpack.c.l.b16 %v4158
    %v4278 = vunpack.c.l.b16 %v4159
    %v4279 = vunpack.c.h.b16 %v4158
    %v4280 = vunpack.c.h.b16 %v4159
    %v4281 = vunpack.c.l.b16 %v4160
    %v4282 = vunpack.c.l.b16 %v4161
    %v4283 = vunpack.c.h.b16 %v4160
    %v4284 = vunpack.c.h.b16 %v4161
    %v4285 = vpack.c.b16 %v4278, %v4277
    %v4286 = vpack.c.b16 %v4280, %v4279
    %v4287 = vpack.c.b16 %v4282, %v4281
    %v4288 = vpack.c.b16 %v4284, %v4283
    %v4289 = vrot.slane %v4285, 7
    %v4290 = vrot.slane %v4289, 4
    %v4291 = vrot.slane %v4286, 7
    %v4292 = vsel %vm4174, %v4290, %v4291
    %v4293 = vrot.slane %v4291, 4
    %v4294 = vrot.slane %v4287, 7
    %v4295 = vsel %vm4174, %v4293, %v4294
    %v4296 = vrot.slane %v4294, 4
    %v4297 = vrot.slane %v4288, 7
    %v4298 = vsel %vm4174, %v4296, %v4297
    %v4299 = vrot.slane %v4297, 4
    %4305 = vst.msk [vmem:[%s46 + $0x4] sm:$0xee] %vm4230, %v4289
    %4306 = vst.msk [vmem:[%s46 + $0x10] sm:$0xff] %vm4234, %v4292
    %4307 = vst.msk [vmem:[%s46 + $0x1c] sm:$0xff] %vm4234, %v4295
    %4308 = vst.msk [vmem:[%s46 + $0x28] sm:$0xff] %vm4234, %v4298
    %4309 = vst.msk [vmem:[%s46 + $0x34] sm:$0x11] %vm4240, %v4299
    %v4310 = vld [vmem:[%s46] sm:$0xff]
    %v4311 = vld [vmem:[%s46 + $0x8] sm:$0xf]
    %v4312 = vld [vmem:[%s46 + $0xc] sm:$0xff]
    %v4313 = vld [vmem:[%s46 + $0x14] sm:$0xf]
    %v4314 = vld [vmem:[%s46 + $0x18] sm:$0xff]
    %v4315 = vld [vmem:[%s46 + $0x20] sm:$0xf]
    %v4316 = vld [vmem:[%s46 + $0x24] sm:$0xff]
    %v4317 = vld [vmem:[%s46 + $0x2c] sm:$0xf]
    %v4318 = vld [vmem:[%s5] sm:$0xff]
    %v4319 = vld [vmem:[%s5 + $0x8] sm:$0xf]
    %v4320 = vld [vmem:[%s5 + $0xc] sm:$0xff]
    %v4321 = vld [vmem:[%s5 + $0x14] sm:$0xf]
    %v4322 = vld [vmem:[%s5 + $0x18] sm:$0xff]
    %v4323 = vld [vmem:[%s5 + $0x20] sm:$0xf]
    %v4324 = vld [vmem:[%s5 + $0x24] sm:$0xff]
    %v4325 = vld [vmem:[%s5 + $0x2c] sm:$0xf]
    %v4326 = vld [vmem:[%s5 + $0x30] sm:$0xff]
    %v4327 = vld [vmem:[%s5 + $0x38] sm:$0xf]
    %v4328 = vld [vmem:[%s5 + $0x3c] sm:$0xff]
    %v4329 = vld [vmem:[%s5 + $0x44] sm:$0xf]
    %v4330 = vld [vmem:[%s5 + $0x48] sm:$0xff]
    %v4331 = vld [vmem:[%s5 + $0x50] sm:$0xf]
    %v4332 = vld [vmem:[%s5 + $0x54] sm:$0xff]
    %v4333 = vld [vmem:[%s5 + $0x5c] sm:$0xf]
    %v4334 = vld [vmem:[%s5 + $0x60] sm:$0xff]
    %v4335 = vld [vmem:[%s5 + $0x68] sm:$0xf]
    %v4336 = vld [vmem:[%s5 + $0x6c] sm:$0xff]
    %v4337 = vld [vmem:[%s5 + $0x74] sm:$0xf]
    %v4338 = vld [vmem:[%s5 + $0x78] sm:$0xff]
    %v4339 = vld [vmem:[%s5 + $0x80] sm:$0xf]
    %v4340 = vld [vmem:[%s5 + $0x84] sm:$0xff]
    %v4341 = vld [vmem:[%s5 + $0x8c] sm:$0xf]
    %v4342 = vld [vmem:[%s5 + $0x90] sm:$0xff]
    %v4343 = vld [vmem:[%s5 + $0x98] sm:$0xf]
    %v4344 = vld [vmem:[%s5 + $0x9c] sm:$0xff]
    %v4345 = vld [vmem:[%s5 + $0xa4] sm:$0xf]
    %v4346 = vld [vmem:[%s5 + $0xa8] sm:$0xff]
    %v4347 = vld [vmem:[%s5 + $0xb0] sm:$0xf]
    %v4348 = vld [vmem:[%s5 + $0xb4] sm:$0xff]
    %v4349 = vld [vmem:[%s5 + $0xbc] sm:$0xf]
    %v4350 = vld [vmem:[%s5 + $0xc0] sm:$0xff]
    %v4351 = vld [vmem:[%s5 + $0xc8] sm:$0xf]
    %v4352 = vld [vmem:[%s5 + $0xcc] sm:$0xff]
    %v4353 = vld [vmem:[%s5 + $0xd4] sm:$0xf]
    %v4354 = vld [vmem:[%s5 + $0xd8] sm:$0xff]
    %v4355 = vld [vmem:[%s5 + $0xe0] sm:$0xf]
    %v4356 = vld [vmem:[%s5 + $0xe4] sm:$0xff]
    %v4357 = vld [vmem:[%s5 + $0xec] sm:$0xf]
    %v4358 = vld [vmem:[%s5 + $0xf0] sm:$0xff]
    %v4359 = vld [vmem:[%s5 + $0xf8] sm:$0xf]
    %v4360 = vld [vmem:[%s5 + $0xfc] sm:$0xff]
    %v4361 = vld [vmem:[%s5 + $0x104] sm:$0xf]
    %v4362 = vld [vmem:[%s5 + $0x108] sm:$0xff]
    %v4363 = vld [vmem:[%s5 + $0x110] sm:$0xf]
    %v4364 = vld [vmem:[%s5 + $0x114] sm:$0xff]
    %v4365 = vld [vmem:[%s5 + $0x11c] sm:$0xf]
    %v4366 = vld [vmem:[%s5 + $0x120] sm:$0xff]
    %v4367 = vld [vmem:[%s5 + $0x128] sm:$0xf]
    %v4368 = vld [vmem:[%s5 + $0x12c] sm:$0xff]
    %v4369 = vld [vmem:[%s5 + $0x134] sm:$0xf]
    %v4370 = vld [vmem:[%s5 + $0x138] sm:$0xff]
    %v4371 = vld [vmem:[%s5 + $0x140] sm:$0xf]
    %v4372 = vld [vmem:[%s5 + $0x144] sm:$0xff]
    %v4373 = vld [vmem:[%s5 + $0x14c] sm:$0xf]
    %v4374 = vld [vmem:[%s5 + $0x150] sm:$0xff]
    %v4375 = vld [vmem:[%s5 + $0x158] sm:$0xf]
    %v4376 = vld [vmem:[%s5 + $0x15c] sm:$0xff]
    %v4377 = vld [vmem:[%s5 + $0x164] sm:$0xf]
    %v4378 = vld [vmem:[%s5 + $0x168] sm:$0xff]
    %v4379 = vld [vmem:[%s5 + $0x170] sm:$0xf]
    %v4380 = vld [vmem:[%s5 + $0x174] sm:$0xff]
    %v4381 = vld [vmem:[%s5 + $0x17c] sm:$0xf]
    %v4382 = vld [vmem:[%s5 + $0x180] sm:$0xff]
    %v4383 = vld [vmem:[%s5 + $0x188] sm:$0xf]
    %v4384 = vld [vmem:[%s5 + $0x18c] sm:$0xff]
    %v4385 = vld [vmem:[%s5 + $0x194] sm:$0xf]
    %v4386 = vld [vmem:[%s5 + $0x198] sm:$0xff]
    %v4387 = vld [vmem:[%s5 + $0x1a0] sm:$0xf]
    %v4388 = vld [vmem:[%s5 + $0x1a4] sm:$0xff]
    %v4389 = vld [vmem:[%s5 + $0x1ac] sm:$0xf]
    %v4390 = vld [vmem:[%s5 + $0x1b0] sm:$0xff]
    %v4391 = vld [vmem:[%s5 + $0x1b8] sm:$0xf]
    %v4392 = vld [vmem:[%s5 + $0x1bc] sm:$0xff]
    %v4393 = vld [vmem:[%s5 + $0x1c4] sm:$0xf]
    %v4394 = vld [vmem:[%s5 + $0x1c8] sm:$0xff]
    %v4395 = vld [vmem:[%s5 + $0x1d0] sm:$0xf]
    %v4396 = vld [vmem:[%s5 + $0x1d4] sm:$0xff]
    %v4397 = vld [vmem:[%s5 + $0x1dc] sm:$0xf]
    %v4398 = vld [vmem:[#allocation2] sm:$0xee]
    %v4399 = vld [vmem:[#allocation2 + $0x8] sm:$0xe]
    %v4400 = vld [vmem:[#allocation2 + $0xc] sm:$0xff]
    %v4401 = vld [vmem:[#allocation2 + $0x14] sm:$0xf]
    %v4402 = vld [vmem:[#allocation2 + $0x18] sm:$0xff]
    %v4403 = vld [vmem:[#allocation2 + $0x20] sm:$0xf]
    %v4404 = vld [vmem:[#allocation2 + $0x24] sm:$0xff]
    %v4405 = vld [vmem:[#allocation2 + $0x2c] sm:$0xf]
    %v4406 = vld [vmem:[#allocation2 + $0x30] sm:$0x11]
    %v4407 = vld [vmem:[#allocation2 + $0x38] sm:$0x1]
    %s4408 = scalar_lea.vmem %s5, 480
    %v4409 = vld [vmem:[%s4408] sm:$0xff]
    %v4410 = vld [vmem:[%s4408 + $0x8] sm:$0xf]
    %v4411 = vld [vmem:[%s4408 + $0xc] sm:$0xff]
    %v4412 = vld [vmem:[%s4408 + $0x14] sm:$0xf]
    %v4413 = vld [vmem:[%s4408 + $0x18] sm:$0xff]
    %v4414 = vld [vmem:[%s4408 + $0x20] sm:$0xf]
    %v4415 = vld [vmem:[%s4408 + $0x24] sm:$0xff]
    %v4416 = vld [vmem:[%s4408 + $0x2c] sm:$0xf]
    %v4417 = vld [vmem:[%s4408 + $0x30] sm:$0xff]
    %v4418 = vld [vmem:[%s4408 + $0x38] sm:$0xf]
    %v4419 = vld [vmem:[%s4408 + $0x3c] sm:$0xff]
    %v4420 = vld [vmem:[%s4408 + $0x44] sm:$0xf]
    %v4421 = vld [vmem:[%s4408 + $0x48] sm:$0xff]
    %v4422 = vld [vmem:[%s4408 + $0x50] sm:$0xf]
    %v4423 = vld [vmem:[%s4408 + $0x54] sm:$0xff]
    %v4424 = vld [vmem:[%s4408 + $0x5c] sm:$0xf]
    %v4425 = vld [vmem:[%s4408 + $0x60] sm:$0xff]
    %v4426 = vld [vmem:[%s4408 + $0x68] sm:$0xf]
    %v4427 = vld [vmem:[%s4408 + $0x6c] sm:$0xff]
    %v4428 = vld [vmem:[%s4408 + $0x74] sm:$0xf]
    %v4429 = vld [vmem:[%s4408 + $0x78] sm:$0xff]
    %v4430 = vld [vmem:[%s4408 + $0x80] sm:$0xf]
    %v4431 = vld [vmem:[%s4408 + $0x84] sm:$0xff]
    %v4432 = vld [vmem:[%s4408 + $0x8c] sm:$0xf]
    %v4433 = vld [vmem:[%s4408 + $0x90] sm:$0xff]
    %v4434 = vld [vmem:[%s4408 + $0x98] sm:$0xf]
    %v4435 = vld [vmem:[%s4408 + $0x9c] sm:$0xff]
    %v4436 = vld [vmem:[%s4408 + $0xa4] sm:$0xf]
    %v4437 = vld [vmem:[%s4408 + $0xa8] sm:$0xff]
    %v4438 = vld [vmem:[%s4408 + $0xb0] sm:$0xf]
    %v4439 = vld [vmem:[%s4408 + $0xb4] sm:$0xff]
    %v4440 = vld [vmem:[%s4408 + $0xbc] sm:$0xf]
    %v4441 = vld [vmem:[%s4408 + $0xc0] sm:$0xff]
    %v4442 = vld [vmem:[%s4408 + $0xc8] sm:$0xf]
    %v4443 = vld [vmem:[%s4408 + $0xcc] sm:$0xff]
    %v4444 = vld [vmem:[%s4408 + $0xd4] sm:$0xf]
    %v4445 = vld [vmem:[%s4408 + $0xd8] sm:$0xff]
    %v4446 = vld [vmem:[%s4408 + $0xe0] sm:$0xf]
    %v4447 = vld [vmem:[%s4408 + $0xe4] sm:$0xff]
    %v4448 = vld [vmem:[%s4408 + $0xec] sm:$0xf]
    %v4449 = vld [vmem:[%s4408 + $0xf0] sm:$0xff]
    %v4450 = vld [vmem:[%s4408 + $0xf8] sm:$0xf]
    %v4451 = vld [vmem:[%s4408 + $0xfc] sm:$0xff]
    %v4452 = vld [vmem:[%s4408 + $0x104] sm:$0xf]
    %v4453 = vld [vmem:[%s4408 + $0x108] sm:$0xff]
    %v4454 = vld [vmem:[%s4408 + $0x110] sm:$0xf]
    %v4455 = vld [vmem:[%s4408 + $0x114] sm:$0xff]
    %v4456 = vld [vmem:[%s4408 + $0x11c] sm:$0xf]
    %v4457 = vld [vmem:[%s4408 + $0x120] sm:$0xff]
    %v4458 = vld [vmem:[%s4408 + $0x128] sm:$0xf]
    %v4459 = vld [vmem:[%s4408 + $0x12c] sm:$0xff]
    %v4460 = vld [vmem:[%s4408 + $0x134] sm:$0xf]
    %v4461 = vld [vmem:[%s4408 + $0x138] sm:$0xff]
    %v4462 = vld [vmem:[%s4408 + $0x140] sm:$0xf]
    %v4463 = vld [vmem:[%s4408 + $0x144] sm:$0xff]
    %v4464 = vld [vmem:[%s4408 + $0x14c] sm:$0xf]
    %v4465 = vld [vmem:[%s4408 + $0x150] sm:$0xff]
    %v4466 = vld [vmem:[%s4408 + $0x158] sm:$0xf]
    %v4467 = vld [vmem:[%s4408 + $0x15c] sm:$0xff]
    %v4468 = vld [vmem:[%s4408 + $0x164] sm:$0xf]
    %v4469 = vld [vmem:[%s4408 + $0x168] sm:$0xff]
    %v4470 = vld [vmem:[%s4408 + $0x170] sm:$0xf]
    %v4471 = vld [vmem:[%s4408 + $0x174] sm:$0xff]
    %v4472 = vld [vmem:[%s4408 + $0x17c] sm:$0xf]
    %v4473 = vld [vmem:[%s4408 + $0x180] sm:$0xff]
    %v4474 = vld [vmem:[%s4408 + $0x188] sm:$0xf]
    %v4475 = vld [vmem:[%s4408 + $0x18c] sm:$0xff]
    %v4476 = vld [vmem:[%s4408 + $0x194] sm:$0xf]
    %v4477 = vld [vmem:[%s4408 + $0x198] sm:$0xff]
    %v4478 = vld [vmem:[%s4408 + $0x1a0] sm:$0xf]
    %v4479 = vld [vmem:[%s4408 + $0x1a4] sm:$0xff]
    %v4480 = vld [vmem:[%s4408 + $0x1ac] sm:$0xf]
    %v4481 = vld [vmem:[%s4408 + $0x1b0] sm:$0xff]
    %v4482 = vld [vmem:[%s4408 + $0x1b8] sm:$0xf]
    %v4483 = vld [vmem:[%s4408 + $0x1bc] sm:$0xff]
    %v4484 = vld [vmem:[%s4408 + $0x1c4] sm:$0xf]
    %v4485 = vld [vmem:[%s4408 + $0x1c8] sm:$0xff]
    %v4486 = vld [vmem:[%s4408 + $0x1d0] sm:$0xf]
    %v4487 = vld [vmem:[%s4408 + $0x1d4] sm:$0xff]
    %v4488 = vld [vmem:[%s4408 + $0x1dc] sm:$0xf]
    %v4499 = vunpack.c.l.b16 %v4398
    %v4500 = vunpack.c.h.b16 %v4398
    %v4501 = vunpack.c.l.b16 %v4399
    %v4502 = vunpack.c.l.b16 %v4400
    %v4503 = vunpack.c.h.b16 %v4400
    %v4504 = vunpack.c.l.b16 %v4401
    %v4505 = vunpack.c.l.b16 %v4402
    %v4506 = vunpack.c.h.b16 %v4402
    %v4507 = vunpack.c.l.b16 %v4403
    %v4508 = vunpack.c.l.b16 %v4404
    %v4509 = vunpack.c.h.b16 %v4404
    %v4510 = vunpack.c.l.b16 %v4405
    %v4511 = vunpack.c.l.b16 %v4406
    %v4512 = vunpack.c.h.b16 %v4406
    %v4513 = vunpack.c.l.b16 %v4407
    %v4514 = vpack.c.b16 %v4502, %v4499
    %v4515 = vpack.c.b16 %v4503, %v4500
    %v4516 = vpack.c.b16 %v4504, %v4501
    %v4517 = vpack.c.b16 %v4508, %v4505
    %v4518 = vpack.c.b16 %v4509, %v4506
    %v4519 = vpack.c.b16 %v4510, %v4507
    %v4520 = vpack.c.b16 %v4511, %v4511
    %v4521 = vpack.c.b16 %v4512, %v4512
    %v4522 = vpack.c.b16 %v4513, %v4513
    %vm4523 = vcmask 1046528
    %v4524 = vrot.slane %v4514, 1
    %v4525 = vrot.slane %v4517, 1
    %v4526 = vsel %vm4523, %v4524, %v4525
    %v4527 = vrot.slane %v4515, 1
    %v4528 = vrot.slane %v4518, 1
    %v4529 = vsel %vm4523, %v4527, %v4528
    %v4530 = vrot.slane %v4516, 1
    %v4531 = vrot.slane %v4519, 1
    %v4532 = vsel %vm4523, %v4530, %v4531
    %v4533 = vrot.slane %v4520, 1
    %v4534 = vsel %vm4523, %v4525, %v4533
    %v4535 = vrot.slane %v4521, 1
    %v4536 = vsel %vm4523, %v4528, %v4535
    %v4537 = vrot.slane %v4522, 1
    %v4538 = vsel %vm4523, %v4531, %v4537
    %v4623 = vunpack.c.l.b16 %v4409
    %v4624 = vunpack.c.h.b16 %v4409
    %v4625 = vunpack.c.l.b16 %v4410
    %v4626 = vunpack.c.l.b16 %v4411
    %v4627 = vunpack.c.h.b16 %v4411
    %v4628 = vunpack.c.l.b16 %v4412
    %v4629 = vunpack.c.l.b16 %v4413
    %v4630 = vunpack.c.h.b16 %v4413
    %v4631 = vunpack.c.l.b16 %v4414
    %v4632 = vunpack.c.l.b16 %v4415
    %v4633 = vunpack.c.h.b16 %v4415
    %v4634 = vunpack.c.l.b16 %v4416
    %v4635 = vunpack.c.l.b16 %v4417
    %v4636 = vunpack.c.h.b16 %v4417
    %v4637 = vunpack.c.l.b16 %v4418
    %v4638 = vunpack.c.l.b16 %v4419
    %v4639 = vunpack.c.h.b16 %v4419
    %v4640 = vunpack.c.l.b16 %v4420
    %v4641 = vunpack.c.l.b16 %v4421
    %v4642 = vunpack.c.h.b16 %v4421
    %v4643 = vunpack.c.l.b16 %v4422
    %v4644 = vunpack.c.l.b16 %v4423
    %v4645 = vunpack.c.h.b16 %v4423
    %v4646 = vunpack.c.l.b16 %v4424
    %v4647 = vunpack.c.l.b16 %v4425
    %v4648 = vunpack.c.h.b16 %v4425
    %v4649 = vunpack.c.l.b16 %v4426
    %v4650 = vunpack.c.l.b16 %v4427
    %v4651 = vunpack.c.h.b16 %v4427
    %v4652 = vunpack.c.l.b16 %v4428
    %v4653 = vunpack.c.l.b16 %v4429
    %v4654 = vunpack.c.h.b16 %v4429
    %v4655 = vunpack.c.l.b16 %v4430
    %v4656 = vunpack.c.l.b16 %v4431
    %v4657 = vunpack.c.h.b16 %v4431
    %v4658 = vunpack.c.l.b16 %v4432
    %v4659 = vunpack.c.l.b16 %v4433
    %v4660 = vunpack.c.h.b16 %v4433
    %v4661 = vunpack.c.l.b16 %v4434
    %v4662 = vunpack.c.l.b16 %v4435
    %v4663 = vunpack.c.h.b16 %v4435
    %v4664 = vunpack.c.l.b16 %v4436
    %v4665 = vunpack.c.l.b16 %v4437
    %v4666 = vunpack.c.h.b16 %v4437
    %v4667 = vunpack.c.l.b16 %v4438
    %v4668 = vunpack.c.l.b16 %v4439
    %v4669 = vunpack.c.h.b16 %v4439
    %v4670 = vunpack.c.l.b16 %v4440
    %v4671 = vunpack.c.l.b16 %v4441
    %v4672 = vunpack.c.h.b16 %v4441
    %v4673 = vunpack.c.l.b16 %v4442
    %v4674 = vunpack.c.l.b16 %v4443
    %v4675 = vunpack.c.h.b16 %v4443
    %v4676 = vunpack.c.l.b16 %v4444
    %v4677 = vunpack.c.l.b16 %v4445
    %v4678 = vunpack.c.h.b16 %v4445
    %v4679 = vunpack.c.l.b16 %v4446
    %v4680 = vunpack.c.l.b16 %v4447
    %v4681 = vunpack.c.h.b16 %v4447
    %v4682 = vunpack.c.l.b16 %v4448
    %v4683 = vunpack.c.l.b16 %v4449
    %v4684 = vunpack.c.h.b16 %v4449
    %v4685 = vunpack.c.l.b16 %v4450
    %v4686 = vunpack.c.l.b16 %v4451
    %v4687 = vunpack.c.h.b16 %v4451
    %v4688 = vunpack.c.l.b16 %v4452
    %v4689 = vunpack.c.l.b16 %v4453
    %v4690 = vunpack.c.h.b16 %v4453
    %v4691 = vunpack.c.l.b16 %v4454
    %v4692 = vunpack.c.l.b16 %v4455
    %v4693 = vunpack.c.h.b16 %v4455
    %v4694 = vunpack.c.l.b16 %v4456
    %v4695 = vunpack.c.l.b16 %v4457
    %v4696 = vunpack.c.h.b16 %v4457
    %v4697 = vunpack.c.l.b16 %v4458
    %v4698 = vunpack.c.l.b16 %v4459
    %v4699 = vunpack.c.h.b16 %v4459
    %v4700 = vunpack.c.l.b16 %v4460
    %v4701 = vunpack.c.l.b16 %v4461
    %v4702 = vunpack.c.h.b16 %v4461
    %v4703 = vunpack.c.l.b16 %v4462
    %v4704 = vunpack.c.l.b16 %v4463
    %v4705 = vunpack.c.h.b16 %v4463
    %v4706 = vunpack.c.l.b16 %v4464
    %v4707 = vunpack.c.l.b16 %v4465
    %v4708 = vunpack.c.h.b16 %v4465
    %v4709 = vunpack.c.l.b16 %v4466
    %v4710 = vunpack.c.l.b16 %v4467
    %v4711 = vunpack.c.h.b16 %v4467
    %v4712 = vunpack.c.l.b16 %v4468
    %v4713 = vunpack.c.l.b16 %v4469
    %v4714 = vunpack.c.h.b16 %v4469
    %v4715 = vunpack.c.l.b16 %v4470
    %v4716 = vunpack.c.l.b16 %v4471
    %v4717 = vunpack.c.h.b16 %v4471
    %v4718 = vunpack.c.l.b16 %v4472
    %v4719 = vunpack.c.l.b16 %v4473
    %v4720 = vunpack.c.h.b16 %v4473
    %v4721 = vunpack.c.l.b16 %v4474
    %v4722 = vunpack.c.l.b16 %v4475
    %v4723 = vunpack.c.h.b16 %v4475
    %v4724 = vunpack.c.l.b16 %v4476
    %v4725 = vunpack.c.l.b16 %v4477
    %v4726 = vunpack.c.h.b16 %v4477
    %v4727 = vunpack.c.l.b16 %v4478
    %v4728 = vunpack.c.l.b16 %v4479
    %v4729 = vunpack.c.h.b16 %v4479
    %v4730 = vunpack.c.l.b16 %v4480
    %v4731 = vunpack.c.l.b16 %v4481
    %v4732 = vunpack.c.h.b16 %v4481
    %v4733 = vunpack.c.l.b16 %v4482
    %v4734 = vunpack.c.l.b16 %v4483
    %v4735 = vunpack.c.h.b16 %v4483
    %v4736 = vunpack.c.l.b16 %v4484
    %v4737 = vunpack.c.l.b16 %v4485
    %v4738 = vunpack.c.h.b16 %v4485
    %v4739 = vunpack.c.l.b16 %v4486
    %v4740 = vunpack.c.l.b16 %v4487
    %v4741 = vunpack.c.h.b16 %v4487
    %v4742 = vunpack.c.l.b16 %v4488
    %v4743 = vpack.c.b16 %v4626, %v4623
    %v4744 = vpack.c.b16 %v4627, %v4624
    %v4745 = vpack.c.b16 %v4628, %v4625
    %v4746 = vpack.c.b16 %v4632, %v4629
    %v4747 = vpack.c.b16 %v4633, %v4630
    %v4748 = vpack.c.b16 %v4634, %v4631
    %v4749 = vpack.c.b16 %v4638, %v4635
    %v4750 = vpack.c.b16 %v4639, %v4636
    %v4751 = vpack.c.b16 %v4640, %v4637
    %v4752 = vpack.c.b16 %v4644, %v4641
    %v4753 = vpack.c.b16 %v4645, %v4642
    %v4754 = vpack.c.b16 %v4646, %v4643
    %v4755 = vpack.c.b16 %v4650, %v4647
    %v4756 = vpack.c.b16 %v4651, %v4648
    %v4757 = vpack.c.b16 %v4652, %v4649
    %v4758 = vpack.c.b16 %v4656, %v4653
    %v4759 = vpack.c.b16 %v4657, %v4654
    %v4760 = vpack.c.b16 %v4658, %v4655
    %v4761 = vpack.c.b16 %v4662, %v4659
    %v4762 = vpack.c.b16 %v4663, %v4660
    %v4763 = vpack.c.b16 %v4664, %v4661
    %v4764 = vpack.c.b16 %v4668, %v4665
    %v4765 = vpack.c.b16 %v4669, %v4666
    %v4766 = vpack.c.b16 %v4670, %v4667
    %v4767 = vpack.c.b16 %v4674, %v4671
    %v4768 = vpack.c.b16 %v4675, %v4672
    %v4769 = vpack.c.b16 %v4676, %v4673
    %v4770 = vpack.c.b16 %v4680, %v4677
    %v4771 = vpack.c.b16 %v4681, %v4678
    %v4772 = vpack.c.b16 %v4682, %v4679
    %v4773 = vpack.c.b16 %v4686, %v4683
    %v4774 = vpack.c.b16 %v4687, %v4684
    %v4775 = vpack.c.b16 %v4688, %v4685
    %v4776 = vpack.c.b16 %v4692, %v4689
    %v4777 = vpack.c.b16 %v4693, %v4690
    %v4778 = vpack.c.b16 %v4694, %v4691
    %v4779 = vpack.c.b16 %v4698, %v4695
    %v4780 = vpack.c.b16 %v4699, %v4696
    %v4781 = vpack.c.b16 %v4700, %v4697
    %v4782 = vpack.c.b16 %v4704, %v4701
    %v4783 = vpack.c.b16 %v4705, %v4702
    %v4784 = vpack.c.b16 %v4706, %v4703
    %v4785 = vpack.c.b16 %v4710, %v4707
    %v4786 = vpack.c.b16 %v4711, %v4708
    %v4787 = vpack.c.b16 %v4712, %v4709
    %v4788 = vpack.c.b16 %v4716, %v4713
    %v4789 = vpack.c.b16 %v4717, %v4714
    %v4790 = vpack.c.b16 %v4718, %v4715
    %v4791 = vpack.c.b16 %v4722, %v4719
    %v4792 = vpack.c.b16 %v4723, %v4720
    %v4793 = vpack.c.b16 %v4724, %v4721
    %v4794 = vpack.c.b16 %v4728, %v4725
    %v4795 = vpack.c.b16 %v4729, %v4726
    %v4796 = vpack.c.b16 %v4730, %v4727
    %v4797 = vpack.c.b16 %v4734, %v4731
    %v4798 = vpack.c.b16 %v4735, %v4732
    %v4799 = vpack.c.b16 %v4736, %v4733
    %v4800 = vpack.c.b16 %v4740, %v4737
    %v4801 = vpack.c.b16 %v4741, %v4738
    %v4802 = vpack.c.b16 %v4742, %v4739
    %v4864 = vsel %vm998, %v4532, 0
    %v4867 = vsel %vm998, %v4538, 0
    %4869 = vmatprep.subr.bf16.mxu0 %v4744
    %4870 = vmatpush1.bf16.msra.mxu0 %v4743
    %4871 = vmatprep.subr.bf16.mxu0 %v4747
    %4872 = vmatpush1.bf16.msra.mxu0 %v4746
    %4873 = vmatprep.subr.bf16.mxu0 %v4750
    %4874 = vmatpush1.bf16.msra.mxu0 %v4749
    %4875 = vmatprep.subr.bf16.mxu0 %v4753
    %4876 = vmatpush1.bf16.msra.mxu0 %v4752
    %4877 = vmatprep.subr.bf16.mxu0 %v4756
    %4878 = vmatpush1.bf16.msra.mxu0 %v4755
    %4879 = vmatprep.subr.bf16.mxu0 %v4759
    %4880 = vmatpush1.bf16.msra.mxu0 %v4758
    %4881 = vmatprep.subr.bf16.mxu0 %v4762
    %4882 = vmatpush1.bf16.msra.mxu0 %v4761
    %4883 = vmatprep.subr.bf16.mxu0 %v4765
    %4884 = vmatpush1.bf16.msra.mxu0 %v4764
    %4885 = vmatprep.subr.bf16.mxu0 %v4768
    %4886 = vmatpush1.bf16.msra.mxu0 %v4767
    %4887 = vmatprep.subr.bf16.mxu0 %v4771
    %4888 = vmatpush1.bf16.msra.mxu0 %v4770
    %4889 = vmatprep.subr.bf16.mxu0 %v4774
    %4890 = vmatpush1.bf16.msra.mxu0 %v4773
    %4891 = vmatprep.subr.bf16.mxu0 %v4777
    %4892 = vmatpush1.bf16.msra.mxu0 %v4776
    %4893 = vmatprep.subr.bf16.mxu0 %v4780
    %4894 = vmatpush1.bf16.msra.mxu0 %v4779
    %4895 = vmatprep.subr.bf16.mxu0 %v4783
    %4896 = vmatpush1.bf16.msra.mxu0 %v4782
    %4897 = vmatprep.subr.bf16.mxu0 %v4786
    %4898 = vmatpush1.bf16.msra.mxu0 %v4785
    %4899 = vmatprep.subr.bf16.mxu0 %v4789
    %4900 = vmatpush1.bf16.msra.mxu0 %v4788
    %4901 = vmatprep.mubr.bf16.mxu0 %v4529
    %4902 = vmatmul.mubr.bf16.gmra.mrb[0].mxu0 %v4526
    %v4903 = vpop.f32.mrb[0].mxu0
    %v4904 = vadd.f32 0.0, %v4903
    %v4905 = vpop.f32.mrb[0].mxu0
    %v4906 = vadd.f32 0.0, %v4905
    %v4907 = vpop.f32.mrb[0].mxu0
    %v4908 = vadd.f32 0.0, %v4907
    %v4909 = vpop.f32.mrb[0].mxu0
    %v4910 = vadd.f32 0.0, %v4909
    %4911 = vmatprep.mubr.bf16.mxu0 %v4536
    %4912 = vmatmul.mubr.bf16.gmra.mrb[0].mxu0 %v4534
    %v4913 = vpop.f32.mrb[0].mxu0
    %v4914 = vadd.f32 0.0, %v4913
    %v4915 = vpop.f32.mrb[0].mxu0
    %v4916 = vadd.f32 0.0, %v4915
    %v4917 = vpop.f32.mrb[0].mxu0
    %v4918 = vadd.f32 0.0, %v4917
    %v4919 = vpop.f32.mrb[0].mxu0
    %v4920 = vadd.f32 0.0, %v4919
    %4921 = vdwg.mxu0
    %4922 = vmatprep.subr.bf16.mxu0 %v4792
    %4923 = vmatpush1.bf16.msra.mxu0 %v4791
    %4924 = vmatprep.subr.bf16.mxu0 %v4795
    %4925 = vmatpush1.bf16.msra.mxu0 %v4794
    %4926 = vmatprep.subr.bf16.mxu0 %v4798
    %4927 = vmatpush1.bf16.msra.mxu0 %v4797
    %4928 = vmatprep.subr.bf16.mxu0 %v4801
    %4929 = vmatpush1.bf16.msra.mxu0 %v4800
    %4930 = vmatprep.subr.bf16.mxu0 0
    %4931 = vmatpush1.bf16.msra.mxu0 0
    %4932 = vmatprep.subr.bf16.mxu0 0
    %4933 = vmatpush1.bf16.msra.mxu0 0
    %4934 = vmatprep.subr.bf16.mxu0 0
    %4935 = vmatpush1.bf16.msra.mxu0 0
    %4936 = vmatprep.subr.bf16.mxu0 0
    %4937 = vmatpush1.bf16.msra.mxu0 0
    %4938 = vmatprep.subr.bf16.mxu0 0
    %4939 = vmatpush1.bf16.msra.mxu0 0
    %4940 = vmatprep.subr.bf16.mxu0 0
    %4941 = vmatpush1.bf16.msra.mxu0 0
    %4942 = vmatprep.subr.bf16.mxu0 0
    %4943 = vmatpush1.bf16.msra.mxu0 0
    %4944 = vmatprep.subr.bf16.mxu0 0
    %4945 = vmatpush1.bf16.msra.mxu0 0
    %4946 = vmatprep.subr.bf16.mxu0 0
    %4947 = vmatpush1.bf16.msra.mxu0 0
    %4948 = vmatprep.subr.bf16.mxu0 0
    %4949 = vmatpush1.bf16.msra.mxu0 0
    %4950 = vmatprep.subr.bf16.mxu0 0
    %4951 = vmatpush1.bf16.msra.mxu0 0
    %4952 = vmatprep.subr.bf16.mxu0 0
    %4953 = vmatpush1.bf16.msra.mxu0 0
    %4954 = vmatprep.mubr.bf16.mxu0 0
    %4955 = vmatmul.mubr.bf16.gmra.mrb[0].mxu0 %v4864
    %v4956 = vpop.f32.mrb[0].mxu0
    %v4957 = vadd.f32 %v4904, %v4956
    %v4958 = vpop.f32.mrb[0].mxu0
    %v4959 = vadd.f32 %v4906, %v4958
    %v4960 = vpop.f32.mrb[0].mxu0
    %v4961 = vadd.f32 %v4908, %v4960
    %v4962 = vpop.f32.mrb[0].mxu0
    %v4963 = vadd.f32 %v4910, %v4962
    %4964 = vmatprep.mubr.bf16.mxu0 0
    %4965 = vmatmul.mubr.bf16.gmra.mrb[0].mxu0 %v4867
    %v4966 = vpop.f32.mrb[0].mxu0
    %v4967 = vadd.f32 %v4914, %v4966
    %v4968 = vpop.f32.mrb[0].mxu0
    %v4969 = vadd.f32 %v4916, %v4968
    %v4970 = vpop.f32.mrb[0].mxu0
    %v4971 = vadd.f32 %v4918, %v4970
    %v4972 = vpop.f32.mrb[0].mxu0
    %v4973 = vadd.f32 %v4920, %v4972
    %4974 = vdwg.mxu0
    %4975 = vmatprep.subr.bf16.mxu0 0
    %4976 = vmatpush1.bf16.msra.mxu0 %v4745
    %4977 = vmatprep.subr.bf16.mxu0 0
    %4978 = vmatpush1.bf16.msra.mxu0 %v4748
    %4979 = vmatprep.subr.bf16.mxu0 0
    %4980 = vmatpush1.bf16.msra.mxu0 %v4751
    %4981 = vmatprep.subr.bf16.mxu0 0
    %4982 = vmatpush1.bf16.msra.mxu0 %v4754
    %4983 = vmatprep.subr.bf16.mxu0 0
    %4984 = vmatpush1.bf16.msra.mxu0 %v4757
    %4985 = vmatprep.subr.bf16.mxu0 0
    %4986 = vmatpush1.bf16.msra.mxu0 %v4760
    %4987 = vmatprep.subr.bf16.mxu0 0
    %4988 = vmatpush1.bf16.msra.mxu0 %v4763
    %4989 = vmatprep.subr.bf16.mxu0 0
    %4990 = vmatpush1.bf16.msra.mxu0 %v4766
    %4991 = vmatprep.subr.bf16.mxu0 0
    %4992 = vmatpush1.bf16.msra.mxu0 %v4769
    %4993 = vmatprep.subr.bf16.mxu0 0
    %4994 = vmatpush1.bf16.msra.mxu0 %v4772
    %4995 = vmatprep.subr.bf16.mxu0 0
    %4996 = vmatpush1.bf16.msra.mxu0 %v4775
    %4997 = vmatprep.subr.bf16.mxu0 0
    %4998 = vmatpush1.bf16.msra.mxu0 %v4778
    %4999 = vmatprep.subr.bf16.mxu0 0
    %5000 = vmatpush1.bf16.msra.mxu0 %v4781
    %5001 = vmatprep.subr.bf16.mxu0 0
    %5002 = vmatpush1.bf16.msra.mxu0 %v4784
    %5003 = vmatprep.subr.bf16.mxu0 0
    %5004 = vmatpush1.bf16.msra.mxu0 %v4787
    %5005 = vmatprep.subr.bf16.mxu0 0
    %5006 = vmatpush1.bf16.msra.mxu0 %v4790
    %5007 = vmatprep.mubr.bf16.mxu0 %v4529
    %5008 = vmatmul.mubr.bf16.gmra.mrb[0].mxu0 %v4526
    %v5009 = vpop.f32.mrb[0].mxu0
    %v5010 = vadd.f32 0.0, %v5009
    %v5011 = vpop.f32.mrb[0].mxu0
    %v5012 = vpop.f32.mrb[0].mxu0
    %v5013 = vadd.f32 0.0, %v5012
    %v5014 = vpop.f32.mrb[0].mxu0
    %5015 = vmatprep.mubr.bf16.mxu0 %v4536
    %5016 = vmatmul.mubr.bf16.gmra.mrb[0].mxu0 %v4534
    %v5017 = vpop.f32.mrb[0].mxu0
    %v5018 = vadd.f32 0.0, %v5017
    %v5019 = vpop.f32.mrb[0].mxu0
    %v5020 = vpop.f32.mrb[0].mxu0
    %v5021 = vadd.f32 0.0, %v5020
    %v5022 = vpop.f32.mrb[0].mxu0
    %5023 = vdwg.mxu0
    %5024 = vmatprep.subr.bf16.mxu0 0
    %5025 = vmatpush1.bf16.msra.mxu0 %v4793
    %5026 = vmatprep.subr.bf16.mxu0 0
    %5027 = vmatpush1.bf16.msra.mxu0 %v4796
    %5028 = vmatprep.subr.bf16.mxu0 0
    %5029 = vmatpush1.bf16.msra.mxu0 %v4799
    %5030 = vmatprep.subr.bf16.mxu0 0
    %5031 = vmatpush1.bf16.msra.mxu0 %v4802
    %5032 = vmatprep.subr.bf16.mxu0 0
    %5033 = vmatpush1.bf16.msra.mxu0 0
    %5034 = vmatprep.subr.bf16.mxu0 0
    %5035 = vmatpush1.bf16.msra.mxu0 0
    %5036 = vmatprep.subr.bf16.mxu0 0
    %5037 = vmatpush1.bf16.msra.mxu0 0
    %5038 = vmatprep.subr.bf16.mxu0 0
    %5039 = vmatpush1.bf16.msra.mxu0 0
    %5040 = vmatprep.subr.bf16.mxu0 0
    %5041 = vmatpush1.bf16.msra.mxu0 0
    %5042 = vmatprep.subr.bf16.mxu0 0
    %5043 = vmatpush1.bf16.msra.mxu0 0
    %5044 = vmatprep.subr.bf16.mxu0 0
    %5045 = vmatpush1.bf16.msra.mxu0 0
    %5046 = vmatprep.subr.bf16.mxu0 0
    %5047 = vmatpush1.bf16.msra.mxu0 0
    %5048 = vmatprep.subr.bf16.mxu0 0
    %5049 = vmatpush1.bf16.msra.mxu0 0
    %5050 = vmatprep.subr.bf16.mxu0 0
    %5051 = vmatpush1.bf16.msra.mxu0 0
    %5052 = vmatprep.subr.bf16.mxu0 0
    %5053 = vmatpush1.bf16.msra.mxu0 0
    %5054 = vmatprep.subr.bf16.mxu0 0
    %5055 = vmatpush1.bf16.msra.mxu0 0
    %5056 = vmatprep.mubr.bf16.mxu0 0
    %5057 = vmatmul.mubr.bf16.gmra.mrb[0].mxu0 %v4864
    %v5058 = vpop.f32.mrb[0].mxu0
    %v5059 = vadd.f32 %v5010, %v5058
    %v5060 = vpop.f32.mrb[0].mxu0
    %v5061 = vpop.f32.mrb[0].mxu0
    %v5062 = vadd.f32 %v5013, %v5061
    %v5063 = vpop.f32.mrb[0].mxu0
    %5064 = vmatprep.mubr.bf16.mxu0 0
    %5065 = vmatmul.mubr.bf16.gmra.mrb[0].mxu0 %v4867
    %v5066 = vpop.f32.mrb[0].mxu0
    %v5067 = vadd.f32 %v5018, %v5066
    %v5068 = vpop.f32.mrb[0].mxu0
    %v5069 = vpop.f32.mrb[0].mxu0
    %v5070 = vadd.f32 %v5021, %v5069
    %v5071 = vpop.f32.mrb[0].mxu0
    %5072 = vdwg.mxu0
    %v5081 = vunpack.c.l.b16 %v4310
    %v5082 = vunpack.c.h.b16 %v4310
    %v5083 = vunpack.c.l.b16 %v4311
    %v5084 = vunpack.c.l.b16 %v4312
    %v5085 = vunpack.c.h.b16 %v4312
    %v5086 = vunpack.c.l.b16 %v4313
    %v5087 = vunpack.c.l.b16 %v4314
    %v5088 = vunpack.c.h.b16 %v4314
    %v5089 = vunpack.c.l.b16 %v4315
    %v5090 = vunpack.c.l.b16 %v4316
    %v5091 = vunpack.c.h.b16 %v4316
    %v5092 = vunpack.c.l.b16 %v4317
    %v5093 = vpack.c.b16 %v5084, %v5081
    %v5094 = vpack.c.b16 %v5085, %v5082
    %v5095 = vpack.c.b16 %v5086, %v5083
    %v5096 = vpack.c.b16 %v5090, %v5087
    %v5097 = vpack.c.b16 %v5091, %v5088
    %v5098 = vpack.c.b16 %v5092, %v5089
    %v5183 = vunpack.c.l.b16 %v4318
    %v5184 = vunpack.c.h.b16 %v4318
    %v5185 = vunpack.c.l.b16 %v4319
    %v5186 = vunpack.c.l.b16 %v4320
    %v5187 = vunpack.c.h.b16 %v4320
    %v5188 = vunpack.c.l.b16 %v4321
    %v5189 = vunpack.c.l.b16 %v4322
    %v5190 = vunpack.c.h.b16 %v4322
    %v5191 = vunpack.c.l.b16 %v4323
    %v5192 = vunpack.c.l.b16 %v4324
    %v5193 = vunpack.c.h.b16 %v4324
    %v5194 = vunpack.c.l.b16 %v4325
    %v5195 = vunpack.c.l.b16 %v4326
    %v5196 = vunpack.c.h.b16 %v4326
    %v5197 = vunpack.c.l.b16 %v4327
    %v5198 = vunpack.c.l.b16 %v4328
    %v5199 = vunpack.c.h.b16 %v4328
    %v5200 = vunpack.c.l.b16 %v4329
    %v5201 = vunpack.c.l.b16 %v4330
    %v5202 = vunpack.c.h.b16 %v4330
    %v5203 = vunpack.c.l.b16 %v4331
    %v5204 = vunpack.c.l.b16 %v4332
    %v5205 = vunpack.c.h.b16 %v4332
    %v5206 = vunpack.c.l.b16 %v4333
    %v5207 = vunpack.c.l.b16 %v4334
    %v5208 = vunpack.c.h.b16 %v4334
    %v5209 = vunpack.c.l.b16 %v4335
    %v5210 = vunpack.c.l.b16 %v4336
    %v5211 = vunpack.c.h.b16 %v4336
    %v5212 = vunpack.c.l.b16 %v4337
    %v5213 = vunpack.c.l.b16 %v4338
    %v5214 = vunpack.c.h.b16 %v4338
    %v5215 = vunpack.c.l.b16 %v4339
    %v5216 = vunpack.c.l.b16 %v4340
    %v5217 = vunpack.c.h.b16 %v4340
    %v5218 = vunpack.c.l.b16 %v4341
    %v5219 = vunpack.c.l.b16 %v4342
    %v5220 = vunpack.c.h.b16 %v4342
    %v5221 = vunpack.c.l.b16 %v4343
    %v5222 = vunpack.c.l.b16 %v4344
    %v5223 = vunpack.c.h.b16 %v4344
    %v5224 = vunpack.c.l.b16 %v4345
    %v5225 = vunpack.c.l.b16 %v4346
    %v5226 = vunpack.c.h.b16 %v4346
    %v5227 = vunpack.c.l.b16 %v4347
    %v5228 = vunpack.c.l.b16 %v4348
    %v5229 = vunpack.c.h.b16 %v4348
    %v5230 = vunpack.c.l.b16 %v4349
    %v5231 = vunpack.c.l.b16 %v4350
    %v5232 = vunpack.c.h.b16 %v4350
    %v5233 = vunpack.c.l.b16 %v4351
    %v5234 = vunpack.c.l.b16 %v4352
    %v5235 = vunpack.c.h.b16 %v4352
    %v5236 = vunpack.c.l.b16 %v4353
    %v5237 = vunpack.c.l.b16 %v4354
    %v5238 = vunpack.c.h.b16 %v4354
    %v5239 = vunpack.c.l.b16 %v4355
    %v5240 = vunpack.c.l.b16 %v4356
    %v5241 = vunpack.c.h.b16 %v4356
    %v5242 = vunpack.c.l.b16 %v4357
    %v5243 = vunpack.c.l.b16 %v4358
    %v5244 = vunpack.c.h.b16 %v4358
    %v5245 = vunpack.c.l.b16 %v4359
    %v5246 = vunpack.c.l.b16 %v4360
    %v5247 = vunpack.c.h.b16 %v4360
    %v5248 = vunpack.c.l.b16 %v4361
    %v5249 = vunpack.c.l.b16 %v4362
    %v5250 = vunpack.c.h.b16 %v4362
    %v5251 = vunpack.c.l.b16 %v4363
    %v5252 = vunpack.c.l.b16 %v4364
    %v5253 = vunpack.c.h.b16 %v4364
    %v5254 = vunpack.c.l.b16 %v4365
    %v5255 = vunpack.c.l.b16 %v4366
    %v5256 = vunpack.c.h.b16 %v4366
    %v5257 = vunpack.c.l.b16 %v4367
    %v5258 = vunpack.c.l.b16 %v4368
    %v5259 = vunpack.c.h.b16 %v4368
    %v5260 = vunpack.c.l.b16 %v4369
    %v5261 = vunpack.c.l.b16 %v4370
    %v5262 = vunpack.c.h.b16 %v4370
    %v5263 = vunpack.c.l.b16 %v4371
    %v5264 = vunpack.c.l.b16 %v4372
    %v5265 = vunpack.c.h.b16 %v4372
    %v5266 = vunpack.c.l.b16 %v4373
    %v5267 = vunpack.c.l.b16 %v4374
    %v5268 = vunpack.c.h.b16 %v4374
    %v5269 = vunpack.c.l.b16 %v4375
    %v5270 = vunpack.c.l.b16 %v4376
    %v5271 = vunpack.c.h.b16 %v4376
    %v5272 = vunpack.c.l.b16 %v4377
    %v5273 = vunpack.c.l.b16 %v4378
    %v5274 = vunpack.c.h.b16 %v4378
    %v5275 = vunpack.c.l.b16 %v4379
    %v5276 = vunpack.c.l.b16 %v4380
    %v5277 = vunpack.c.h.b16 %v4380
    %v5278 = vunpack.c.l.b16 %v4381
    %v5279 = vunpack.c.l.b16 %v4382
    %v5280 = vunpack.c.h.b16 %v4382
    %v5281 = vunpack.c.l.b16 %v4383
    %v5282 = vunpack.c.l.b16 %v4384
    %v5283 = vunpack.c.h.b16 %v4384
    %v5284 = vunpack.c.l.b16 %v4385
    %v5285 = vunpack.c.l.b16 %v4386
    %v5286 = vunpack.c.h.b16 %v4386
    %v5287 = vunpack.c.l.b16 %v4387
    %v5288 = vunpack.c.l.b16 %v4388
    %v5289 = vunpack.c.h.b16 %v4388
    %v5290 = vunpack.c.l.b16 %v4389
    %v5291 = vunpack.c.l.b16 %v4390
    %v5292 = vunpack.c.h.b16 %v4390
    %v5293 = vunpack.c.l.b16 %v4391
    %v5294 = vunpack.c.l.b16 %v4392
    %v5295 = vunpack.c.h.b16 %v4392
    %v5296 = vunpack.c.l.b16 %v4393
    %v5297 = vunpack.c.l.b16 %v4394
    %v5298 = vunpack.c.h.b16 %v4394
    %v5299 = vunpack.c.l.b16 %v4395
    %v5300 = vunpack.c.l.b16 %v4396
    %v5301 = vunpack.c.h.b16 %v4396
    %v5302 = vunpack.c.l.b16 %v4397
    %v5303 = vpack.c.b16 %v5186, %v5183
    %v5304 = vpack.c.b16 %v5187, %v5184
    %v5305 = vpack.c.b16 %v5188, %v5185
    %v5306 = vpack.c.b16 %v5192, %v5189
    %v5307 = vpack.c.b16 %v5193, %v5190
    %v5308 = vpack.c.b16 %v5194, %v5191
    %v5309 = vpack.c.b16 %v5198, %v5195
    %v5310 = vpack.c.b16 %v5199, %v5196
    %v5311 = vpack.c.b16 %v5200, %v5197
    %v5312 = vpack.c.b16 %v5204, %v5201
    %v5313 = vpack.c.b16 %v5205, %v5202
    %v5314 = vpack.c.b16 %v5206, %v5203
    %v5315 = vpack.c.b16 %v5210, %v5207
    %v5316 = vpack.c.b16 %v5211, %v5208
    %v5317 = vpack.c.b16 %v5212, %v5209
    %v5318 = vpack.c.b16 %v5216, %v5213
    %v5319 = vpack.c.b16 %v5217, %v5214
    %v5320 = vpack.c.b16 %v5218, %v5215
    %v5321 = vpack.c.b16 %v5222, %v5219
    %v5322 = vpack.c.b16 %v5223, %v5220
    %v5323 = vpack.c.b16 %v5224, %v5221
    %v5324 = vpack.c.b16 %v5228, %v5225
    %v5325 = vpack.c.b16 %v5229, %v5226
    %v5326 = vpack.c.b16 %v5230, %v5227
    %v5327 = vpack.c.b16 %v5234, %v5231
    %v5328 = vpack.c.b16 %v5235, %v5232
    %v5329 = vpack.c.b16 %v5236, %v5233
    %v5330 = vpack.c.b16 %v5240, %v5237
    %v5331 = vpack.c.b16 %v5241, %v5238
    %v5332 = vpack.c.b16 %v5242, %v5239
    %v5333 = vpack.c.b16 %v5246, %v5243
    %v5334 = vpack.c.b16 %v5247, %v5244
    %v5335 = vpack.c.b16 %v5248, %v5245
    %v5336 = vpack.c.b16 %v5252, %v5249
    %v5337 = vpack.c.b16 %v5253, %v5250
    %v5338 = vpack.c.b16 %v5254, %v5251
    %v5339 = vpack.c.b16 %v5258, %v5255
    %v5340 = vpack.c.b16 %v5259, %v5256
    %v5341 = vpack.c.b16 %v5260, %v5257
    %v5342 = vpack.c.b16 %v5264, %v5261
    %v5343 = vpack.c.b16 %v5265, %v5262
    %v5344 = vpack.c.b16 %v5266, %v5263
    %v5345 = vpack.c.b16 %v5270, %v5267
    %v5346 = vpack.c.b16 %v5271, %v5268
    %v5347 = vpack.c.b16 %v5272, %v5269
    %v5348 = vpack.c.b16 %v5276, %v5273
    %v5349 = vpack.c.b16 %v5277, %v5274
    %v5350 = vpack.c.b16 %v5278, %v5275
    %v5351 = vpack.c.b16 %v5282, %v5279
    %v5352 = vpack.c.b16 %v5283, %v5280
    %v5353 = vpack.c.b16 %v5284, %v5281
    %v5354 = vpack.c.b16 %v5288, %v5285
    %v5355 = vpack.c.b16 %v5289, %v5286
    %v5356 = vpack.c.b16 %v5290, %v5287
    %v5357 = vpack.c.b16 %v5294, %v5291
    %v5358 = vpack.c.b16 %v5295, %v5292
    %v5359 = vpack.c.b16 %v5296, %v5293
    %v5360 = vpack.c.b16 %v5300, %v5297
    %v5361 = vpack.c.b16 %v5301, %v5298
    %v5362 = vpack.c.b16 %v5302, %v5299
    %v5424 = vsel %vm998, %v5095, 0
    %v5427 = vsel %vm998, %v5098, 0
    %5429 = vmatprep.subr.bf16.mxu0 %v5304
    %5430 = vmatpush1.bf16.msra.mxu0 %v5303
    %5431 = vmatprep.subr.bf16.mxu0 %v5307
    %5432 = vmatpush1.bf16.msra.mxu0 %v5306
    %5433 = vmatprep.subr.bf16.mxu0 %v5310
    %5434 = vmatpush1.bf16.msra.mxu0 %v5309
    %5435 = vmatprep.subr.bf16.mxu0 %v5313
    %5436 = vmatpush1.bf16.msra.mxu0 %v5312
    %5437 = vmatprep.subr.bf16.mxu0 %v5316
    %5438 = vmatpush1.bf16.msra.mxu0 %v5315
    %5439 = vmatprep.subr.bf16.mxu0 %v5319
    %5440 = vmatpush1.bf16.msra.mxu0 %v5318
    %5441 = vmatprep.subr.bf16.mxu0 %v5322
    %5442 = vmatpush1.bf16.msra.mxu0 %v5321
    %5443 = vmatprep.subr.bf16.mxu0 %v5325
    %5444 = vmatpush1.bf16.msra.mxu0 %v5324
    %5445 = vmatprep.subr.bf16.mxu0 %v5328
    %5446 = vmatpush1.bf16.msra.mxu0 %v5327
    %5447 = vmatprep.subr.bf16.mxu0 %v5331
    %5448 = vmatpush1.bf16.msra.mxu0 %v5330
    %5449 = vmatprep.subr.bf16.mxu0 %v5334
    %5450 = vmatpush1.bf16.msra.mxu0 %v5333
    %5451 = vmatprep.subr.bf16.mxu0 %v5337
    %5452 = vmatpush1.bf16.msra.mxu0 %v5336
    %5453 = vmatprep.subr.bf16.mxu0 %v5340
    %5454 = vmatpush1.bf16.msra.mxu0 %v5339
    %5455 = vmatprep.subr.bf16.mxu0 %v5343
    %5456 = vmatpush1.bf16.msra.mxu0 %v5342
    %5457 = vmatprep.subr.bf16.mxu0 %v5346
    %5458 = vmatpush1.bf16.msra.mxu0 %v5345
    %5459 = vmatprep.subr.bf16.mxu0 %v5349
    %5460 = vmatpush1.bf16.msra.mxu0 %v5348
    %5461 = vmatprep.mubr.bf16.mxu0 %v5094
    %5462 = vmatmul.mubr.bf16.gmra.mrb[0].mxu0 %v5093
    %v5463 = vpop.f32.mrb[0].mxu0
    %v5464 = vadd.f32 %v4957, %v5463
    %v5465 = vpop.f32.mrb[0].mxu0
    %v5466 = vadd.f32 %v4959, %v5465
    %v5467 = vpop.f32.mrb[0].mxu0
    %v5468 = vadd.f32 %v4961, %v5467
    %v5469 = vpop.f32.mrb[0].mxu0
    %v5470 = vadd.f32 %v4963, %v5469
    %5471 = vmatprep.mubr.bf16.mxu0 %v5097
    %5472 = vmatmul.mubr.bf16.gmra.mrb[0].mxu0 %v5096
    %v5473 = vpop.f32.mrb[0].mxu0
    %v5474 = vadd.f32 %v4967, %v5473
    %v5475 = vpop.f32.mrb[0].mxu0
    %v5476 = vadd.f32 %v4969, %v5475
    %v5477 = vpop.f32.mrb[0].mxu0
    %v5478 = vadd.f32 %v4971, %v5477
    %v5479 = vpop.f32.mrb[0].mxu0
    %v5480 = vadd.f32 %v4973, %v5479
    %5481 = vdwg.mxu0
    %5482 = vmatprep.subr.bf16.mxu0 %v5352
    %5483 = vmatpush1.bf16.msra.mxu0 %v5351
    %5484 = vmatprep.subr.bf16.mxu0 %v5355
    %5485 = vmatpush1.bf16.msra.mxu0 %v5354
    %5486 = vmatprep.subr.bf16.mxu0 %v5358
    %5487 = vmatpush1.bf16.msra.mxu0 %v5357
    %5488 = vmatprep.subr.bf16.mxu0 %v5361
    %5489 = vmatpush1.bf16.msra.mxu0 %v5360
    %5490 = vmatprep.subr.bf16.mxu0 0
    %5491 = vmatpush1.bf16.msra.mxu0 0
    %5492 = vmatprep.subr.bf16.mxu0 0
    %5493 = vmatpush1.bf16.msra.mxu0 0
    %5494 = vmatprep.subr.bf16.mxu0 0
    %5495 = vmatpush1.bf16.msra.mxu0 0
    %5496 = vmatprep.subr.bf16.mxu0 0
    %5497 = vmatpush1.bf16.msra.mxu0 0
    %5498 = vmatprep.subr.bf16.mxu0 0
    %5499 = vmatpush1.bf16.msra.mxu0 0
    %5500 = vmatprep.subr.bf16.mxu0 0
    %5501 = vmatpush1.bf16.msra.mxu0 0
    %5502 = vmatprep.subr.bf16.mxu0 0
    %5503 = vmatpush1.bf16.msra.mxu0 0
    %5504 = vmatprep.subr.bf16.mxu0 0
    %5505 = vmatpush1.bf16.msra.mxu0 0
    %5506 = vmatprep.subr.bf16.mxu0 0
    %5507 = vmatpush1.bf16.msra.mxu0 0
    %5508 = vmatprep.subr.bf16.mxu0 0
    %5509 = vmatpush1.bf16.msra.mxu0 0
    %5510 = vmatprep.subr.bf16.mxu0 0
    %5511 = vmatpush1.bf16.msra.mxu0 0
    %5512 = vmatprep.subr.bf16.mxu0 0
    %5513 = vmatpush1.bf16.msra.mxu0 0
    %5514 = vmatprep.mubr.bf16.mxu0 0
    %5515 = vmatmul.mubr.bf16.gmra.mrb[0].mxu0 %v5424
    %v5516 = vpop.f32.mrb[0].mxu0
    %v5517 = vadd.f32 %v5464, %v5516
    %v5518 = vpop.f32.mrb[0].mxu0
    %v5519 = vadd.f32 %v5466, %v5518
    %v5520 = vpop.f32.mrb[0].mxu0
    %v5521 = vadd.f32 %v5468, %v5520
    %v5522 = vpop.f32.mrb[0].mxu0
    %v5523 = vadd.f32 %v5470, %v5522
    %5524 = vmatprep.mubr.bf16.mxu0 0
    %5525 = vmatmul.mubr.bf16.gmra.mrb[0].mxu0 %v5427
    %v5526 = vpop.f32.mrb[0].mxu0
    %v5527 = vadd.f32 %v5474, %v5526
    %v5528 = vpop.f32.mrb[0].mxu0
    %v5529 = vadd.f32 %v5476, %v5528
    %v5530 = vpop.f32.mrb[0].mxu0
    %v5531 = vadd.f32 %v5478, %v5530
    %v5532 = vpop.f32.mrb[0].mxu0
    %v5533 = vadd.f32 %v5480, %v5532
    %5534 = vdwg.mxu0
    %5535 = vmatprep.subr.bf16.mxu0 0
    %5536 = vmatpush1.bf16.msra.mxu0 %v5305
    %5537 = vmatprep.subr.bf16.mxu0 0
    %5538 = vmatpush1.bf16.msra.mxu0 %v5308
    %5539 = vmatprep.subr.bf16.mxu0 0
    %5540 = vmatpush1.bf16.msra.mxu0 %v5311
    %5541 = vmatprep.subr.bf16.mxu0 0
    %5542 = vmatpush1.bf16.msra.mxu0 %v5314
    %5543 = vmatprep.subr.bf16.mxu0 0
    %5544 = vmatpush1.bf16.msra.mxu0 %v5317
    %5545 = vmatprep.subr.bf16.mxu0 0
    %5546 = vmatpush1.bf16.msra.mxu0 %v5320
    %5547 = vmatprep.subr.bf16.mxu0 0
    %5548 = vmatpush1.bf16.msra.mxu0 %v5323
    %5549 = vmatprep.subr.bf16.mxu0 0
    %5550 = vmatpush1.bf16.msra.mxu0 %v5326
    %5551 = vmatprep.subr.bf16.mxu0 0
    %5552 = vmatpush1.bf16.msra.mxu0 %v5329
    %5553 = vmatprep.subr.bf16.mxu0 0
    %5554 = vmatpush1.bf16.msra.mxu0 %v5332
    %5555 = vmatprep.subr.bf16.mxu0 0
    %5556 = vmatpush1.bf16.msra.mxu0 %v5335
    %5557 = vmatprep.subr.bf16.mxu0 0
    %5558 = vmatpush1.bf16.msra.mxu0 %v5338
    %5559 = vmatprep.subr.bf16.mxu0 0
    %5560 = vmatpush1.bf16.msra.mxu0 %v5341
    %5561 = vmatprep.subr.bf16.mxu0 0
    %5562 = vmatpush1.bf16.msra.mxu0 %v5344
    %5563 = vmatprep.subr.bf16.mxu0 0
    %5564 = vmatpush1.bf16.msra.mxu0 %v5347
    %5565 = vmatprep.subr.bf16.mxu0 0
    %5566 = vmatpush1.bf16.msra.mxu0 %v5350
    %5567 = vmatprep.mubr.bf16.mxu0 %v5094
    %5568 = vmatmul.mubr.bf16.gmra.mrb[0].mxu0 %v5093
    %v5569 = vpop.f32.mrb[0].mxu0
    %v5570 = vadd.f32 %v5059, %v5569
    %v5571 = vpop.f32.mrb[0].mxu0
    %v5572 = vpop.f32.mrb[0].mxu0
    %v5573 = vadd.f32 %v5062, %v5572
    %v5574 = vpop.f32.mrb[0].mxu0
    %5575 = vmatprep.mubr.bf16.mxu0 %v5097
    %5576 = vmatmul.mubr.bf16.gmra.mrb[0].mxu0 %v5096
    %v5577 = vpop.f32.mrb[0].mxu0
    %v5578 = vadd.f32 %v5067, %v5577
    %v5579 = vpop.f32.mrb[0].mxu0
    %v5580 = vpop.f32.mrb[0].mxu0
    %v5581 = vadd.f32 %v5070, %v5580
    %v5582 = vpop.f32.mrb[0].mxu0
    %5583 = vdwg.mxu0
    %5584 = vmatprep.subr.bf16.mxu0 0
    %5585 = vmatpush1.bf16.msra.mxu0 %v5353
    %5586 = vmatprep.subr.bf16.mxu0 0
    %5587 = vmatpush1.bf16.msra.mxu0 %v5356
    %5588 = vmatprep.subr.bf16.mxu0 0
    %5589 = vmatpush1.bf16.msra.mxu0 %v5359
    %5590 = vmatprep.subr.bf16.mxu0 0
    %5591 = vmatpush1.bf16.msra.mxu0 %v5362
    %5592 = vmatprep.subr.bf16.mxu0 0
    %5593 = vmatpush1.bf16.msra.mxu0 0
    %5594 = vmatprep.subr.bf16.mxu0 0
    %5595 = vmatpush1.bf16.msra.mxu0 0
    %5596 = vmatprep.subr.bf16.mxu0 0
    %5597 = vmatpush1.bf16.msra.mxu0 0
    %5598 = vmatprep.subr.bf16.mxu0 0
    %5599 = vmatpush1.bf16.msra.mxu0 0
    %5600 = vmatprep.subr.bf16.mxu0 0
    %5601 = vmatpush1.bf16.msra.mxu0 0
    %5602 = vmatprep.subr.bf16.mxu0 0
    %5603 = vmatpush1.bf16.msra.mxu0 0
    %5604 = vmatprep.subr.bf16.mxu0 0
    %5605 = vmatpush1.bf16.msra.mxu0 0
    %5606 = vmatprep.subr.bf16.mxu0 0
    %5607 = vmatpush1.bf16.msra.mxu0 0
    %5608 = vmatprep.subr.bf16.mxu0 0
    %5609 = vmatpush1.bf16.msra.mxu0 0
    %5610 = vmatprep.subr.bf16.mxu0 0
    %5611 = vmatpush1.bf16.msra.mxu0 0
    %5612 = vmatprep.subr.bf16.mxu0 0
    %5613 = vmatpush1.bf16.msra.mxu0 0
    %5614 = vmatprep.subr.bf16.mxu0 0
    %5615 = vmatpush1.bf16.msra.mxu0 0
    %5616 = vmatprep.mubr.bf16.mxu0 0
    %5617 = vmatmul.mubr.bf16.gmra.mrb[0].mxu0 %v5424
    %v5618 = vpop.f32.mrb[0].mxu0
    %v5619 = vadd.f32 %v5570, %v5618
    %v5620 = vpop.f32.mrb[0].mxu0
    %v5621 = vpop.f32.mrb[0].mxu0
    %v5622 = vadd.f32 %v5573, %v5621
    %v5623 = vpop.f32.mrb[0].mxu0
    %5624 = vmatprep.mubr.bf16.mxu0 0
    %5625 = vmatmul.mubr.bf16.gmra.mrb[0].mxu0 %v5427
    %v5626 = vpop.f32.mrb[0].mxu0
    %v5627 = vadd.f32 %v5578, %v5626
    %v5628 = vpop.f32.mrb[0].mxu0
    %v5629 = vpop.f32.mrb[0].mxu0
    %v5630 = vadd.f32 %v5581, %v5629
    %v5631 = vpop.f32.mrb[0].mxu0
    %5632 = vdwg.mxu0
    %v5633 = vld [vmem:[%s46] sm:$0xee]
    %v5634 = vld [vmem:[%s46 + $0x8] sm:$0xe]
    %v5635 = vld [vmem:[%s46 + $0xc] sm:$0xff]
    %v5636 = vld [vmem:[%s46 + $0x14] sm:$0xf]
    %v5637 = vld [vmem:[%s46 + $0x18] sm:$0xff]
    %v5638 = vld [vmem:[%s46 + $0x20] sm:$0xf]
    %v5639 = vld [vmem:[%s46 + $0x24] sm:$0xff]
    %v5640 = vld [vmem:[%s46 + $0x2c] sm:$0xf]
    %v5641 = vld [vmem:[%s46 + $0x30] sm:$0x11]
    %v5642 = vld [vmem:[%s46 + $0x38] sm:$0x1]
    %s5643 = scalar_lea.vmem %s5, 960
    %v5644 = vld [vmem:[%s5643] sm:$0xff]
    %v5645 = vld [vmem:[%s5643 + $0x8] sm:$0xf]
    %v5646 = vld [vmem:[%s5643 + $0xc] sm:$0xff]
    %v5647 = vld [vmem:[%s5643 + $0x14] sm:$0xf]
    %v5648 = vld [vmem:[%s5643 + $0x18] sm:$0xff]
    %v5649 = vld [vmem:[%s5643 + $0x20] sm:$0xf]
    %v5650 = vld [vmem:[%s5643 + $0x24] sm:$0xff]
    %v5651 = vld [vmem:[%s5643 + $0x2c] sm:$0xf]
    %v5652 = vld [vmem:[%s5643 + $0x30] sm:$0xff]
    %v5653 = vld [vmem:[%s5643 + $0x38] sm:$0xf]
    %v5654 = vld [vmem:[%s5643 + $0x3c] sm:$0xff]
    %v5655 = vld [vmem:[%s5643 + $0x44] sm:$0xf]
    %v5656 = vld [vmem:[%s5643 + $0x48] sm:$0xff]
    %v5657 = vld [vmem:[%s5643 + $0x50] sm:$0xf]
    %v5658 = vld [vmem:[%s5643 + $0x54] sm:$0xff]
    %v5659 = vld [vmem:[%s5643 + $0x5c] sm:$0xf]
    %v5660 = vld [vmem:[%s5643 + $0x60] sm:$0xff]
    %v5661 = vld [vmem:[%s5643 + $0x68] sm:$0xf]
    %v5662 = vld [vmem:[%s5643 + $0x6c] sm:$0xff]
    %v5663 = vld [vmem:[%s5643 + $0x74] sm:$0xf]
    %v5664 = vld [vmem:[%s5643 + $0x78] sm:$0xff]
    %v5665 = vld [vmem:[%s5643 + $0x80] sm:$0xf]
    %v5666 = vld [vmem:[%s5643 + $0x84] sm:$0xff]
    %v5667 = vld [vmem:[%s5643 + $0x8c] sm:$0xf]
    %v5668 = vld [vmem:[%s5643 + $0x90] sm:$0xff]
    %v5669 = vld [vmem:[%s5643 + $0x98] sm:$0xf]
    %v5670 = vld [vmem:[%s5643 + $0x9c] sm:$0xff]
    %v5671 = vld [vmem:[%s5643 + $0xa4] sm:$0xf]
    %v5672 = vld [vmem:[%s5643 + $0xa8] sm:$0xff]
    %v5673 = vld [vmem:[%s5643 + $0xb0] sm:$0xf]
    %v5674 = vld [vmem:[%s5643 + $0xb4] sm:$0xff]
    %v5675 = vld [vmem:[%s5643 + $0xbc] sm:$0xf]
    %v5676 = vld [vmem:[%s5643 + $0xc0] sm:$0xff]
    %v5677 = vld [vmem:[%s5643 + $0xc8] sm:$0xf]
    %v5678 = vld [vmem:[%s5643 + $0xcc] sm:$0xff]
    %v5679 = vld [vmem:[%s5643 + $0xd4] sm:$0xf]
    %v5680 = vld [vmem:[%s5643 + $0xd8] sm:$0xff]
    %v5681 = vld [vmem:[%s5643 + $0xe0] sm:$0xf]
    %v5682 = vld [vmem:[%s5643 + $0xe4] sm:$0xff]
    %v5683 = vld [vmem:[%s5643 + $0xec] sm:$0xf]
    %v5684 = vld [vmem:[%s5643 + $0xf0] sm:$0xff]
    %v5685 = vld [vmem:[%s5643 + $0xf8] sm:$0xf]
    %v5686 = vld [vmem:[%s5643 + $0xfc] sm:$0xff]
    %v5687 = vld [vmem:[%s5643 + $0x104] sm:$0xf]
    %v5688 = vld [vmem:[%s5643 + $0x108] sm:$0xff]
    %v5689 = vld [vmem:[%s5643 + $0x110] sm:$0xf]
    %v5690 = vld [vmem:[%s5643 + $0x114] sm:$0xff]
    %v5691 = vld [vmem:[%s5643 + $0x11c] sm:$0xf]
    %v5692 = vld [vmem:[%s5643 + $0x120] sm:$0xff]
    %v5693 = vld [vmem:[%s5643 + $0x128] sm:$0xf]
    %v5694 = vld [vmem:[%s5643 + $0x12c] sm:$0xff]
    %v5695 = vld [vmem:[%s5643 + $0x134] sm:$0xf]
    %v5696 = vld [vmem:[%s5643 + $0x138] sm:$0xff]
    %v5697 = vld [vmem:[%s5643 + $0x140] sm:$0xf]
    %v5698 = vld [vmem:[%s5643 + $0x144] sm:$0xff]
    %v5699 = vld [vmem:[%s5643 + $0x14c] sm:$0xf]
    %v5700 = vld [vmem:[%s5643 + $0x150] sm:$0xff]
    %v5701 = vld [vmem:[%s5643 + $0x158] sm:$0xf]
    %v5702 = vld [vmem:[%s5643 + $0x15c] sm:$0xff]
    %v5703 = vld [vmem:[%s5643 + $0x164] sm:$0xf]
    %v5704 = vld [vmem:[%s5643 + $0x168] sm:$0xff]
    %v5705 = vld [vmem:[%s5643 + $0x170] sm:$0xf]
    %v5706 = vld [vmem:[%s5643 + $0x174] sm:$0xff]
    %v5707 = vld [vmem:[%s5643 + $0x17c] sm:$0xf]
    %v5708 = vld [vmem:[%s5643 + $0x180] sm:$0xff]
    %v5709 = vld [vmem:[%s5643 + $0x188] sm:$0xf]
    %v5710 = vld [vmem:[%s5643 + $0x18c] sm:$0xff]
    %v5711 = vld [vmem:[%s5643 + $0x194] sm:$0xf]
    %v5712 = vld [vmem:[%s5643 + $0x198] sm:$0xff]
    %v5713 = vld [vmem:[%s5643 + $0x1a0] sm:$0xf]
    %v5714 = vld [vmem:[%s5643 + $0x1a4] sm:$0xff]
    %v5715 = vld [vmem:[%s5643 + $0x1ac] sm:$0xf]
    %v5716 = vld [vmem:[%s5643 + $0x1b0] sm:$0xff]
    %v5717 = vld [vmem:[%s5643 + $0x1b8] sm:$0xf]
    %v5718 = vld [vmem:[%s5643 + $0x1bc] sm:$0xff]
    %v5719 = vld [vmem:[%s5643 + $0x1c4] sm:$0xf]
    %v5720 = vld [vmem:[%s5643 + $0x1c8] sm:$0xff]
    %v5721 = vld [vmem:[%s5643 + $0x1d0] sm:$0xf]
    %v5722 = vld [vmem:[%s5643 + $0x1d4] sm:$0xff]
    %v5723 = vld [vmem:[%s5643 + $0x1dc] sm:$0xf]
    %v5734 = vunpack.c.l.b16 %v5633
    %v5735 = vunpack.c.h.b16 %v5633
    %v5736 = vunpack.c.l.b16 %v5634
    %v5737 = vunpack.c.l.b16 %v5635
    %v5738 = vunpack.c.h.b16 %v5635
    %v5739 = vunpack.c.l.b16 %v5636
    %v5740 = vunpack.c.l.b16 %v5637
    %v5741 = vunpack.c.h.b16 %v5637
    %v5742 = vunpack.c.l.b16 %v5638
    %v5743 = vunpack.c.l.b16 %v5639
    %v5744 = vunpack.c.h.b16 %v5639
    %v5745 = vunpack.c.l.b16 %v5640
    %v5746 = vunpack.c.l.b16 %v5641
    %v5747 = vunpack.c.h.b16 %v5641
    %v5748 = vunpack.c.l.b16 %v5642
    %v5749 = vpack.c.b16 %v5737, %v5734
    %v5750 = vpack.c.b16 %v5738, %v5735
    %v5751 = vpack.c.b16 %v5739, %v5736
    %v5752 = vpack.c.b16 %v5743, %v5740
    %v5753 = vpack.c.b16 %v5744, %v5741
    %v5754 = vpack.c.b16 %v5745, %v5742
    %v5755 = vpack.c.b16 %v5746, %v5746
    %v5756 = vpack.c.b16 %v5747, %v5747
    %v5757 = vpack.c.b16 %v5748, %v5748
    %v5758 = vrot.slane %v5749, 1
    %v5759 = vrot.slane %v5752, 1
    %v5760 = vsel %vm4523, %v5758, %v5759
    %v5761 = vrot.slane %v5750, 1
    %v5762 = vrot.slane %v5753, 1
    %v5763 = vsel %vm4523, %v5761, %v5762
    %v5764 = vrot.slane %v5751, 1
    %v5765 = vrot.slane %v5754, 1
    %v5766 = vsel %vm4523, %v5764, %v5765
    %v5767 = vrot.slane %v5755, 1
    %v5768 = vsel %vm4523, %v5759, %v5767
    %v5769 = vrot.slane %v5756, 1
    %v5770 = vsel %vm4523, %v5762, %v5769
    %v5771 = vrot.slane %v5757, 1
    %v5772 = vsel %vm4523, %v5765, %v5771
    %v5857 = vunpack.c.l.b16 %v5644
    %v5858 = vunpack.c.h.b16 %v5644
    %v5859 = vunpack.c.l.b16 %v5645
    %v5860 = vunpack.c.l.b16 %v5646
    %v5861 = vunpack.c.h.b16 %v5646
    %v5862 = vunpack.c.l.b16 %v5647
    %v5863 = vunpack.c.l.b16 %v5648
    %v5864 = vunpack.c.h.b16 %v5648
    %v5865 = vunpack.c.l.b16 %v5649
    %v5866 = vunpack.c.l.b16 %v5650
    %v5867 = vunpack.c.h.b16 %v5650
    %v5868 = vunpack.c.l.b16 %v5651
    %v5869 = vunpack.c.l.b16 %v5652
    %v5870 = vunpack.c.h.b16 %v5652
    %v5871 = vunpack.c.l.b16 %v5653
    %v5872 = vunpack.c.l.b16 %v5654
    %v5873 = vunpack.c.h.b16 %v5654
    %v5874 = vunpack.c.l.b16 %v5655
    %v5875 = vunpack.c.l.b16 %v5656
    %v5876 = vunpack.c.h.b16 %v5656
    %v5877 = vunpack.c.l.b16 %v5657
    %v5878 = vunpack.c.l.b16 %v5658
    %v5879 = vunpack.c.h.b16 %v5658
    %v5880 = vunpack.c.l.b16 %v5659
    %v5881 = vunpack.c.l.b16 %v5660
    %v5882 = vunpack.c.h.b16 %v5660
    %v5883 = vunpack.c.l.b16 %v5661
    %v5884 = vunpack.c.l.b16 %v5662
    %v5885 = vunpack.c.h.b16 %v5662
    %v5886 = vunpack.c.l.b16 %v5663
    %v5887 = vunpack.c.l.b16 %v5664
    %v5888 = vunpack.c.h.b16 %v5664
    %v5889 = vunpack.c.l.b16 %v5665
    %v5890 = vunpack.c.l.b16 %v5666
    %v5891 = vunpack.c.h.b16 %v5666
    %v5892 = vunpack.c.l.b16 %v5667
    %v5893 = vunpack.c.l.b16 %v5668
    %v5894 = vunpack.c.h.b16 %v5668
    %v5895 = vunpack.c.l.b16 %v5669
    %v5896 = vunpack.c.l.b16 %v5670
    %v5897 = vunpack.c.h.b16 %v5670
    %v5898 = vunpack.c.l.b16 %v5671
    %v5899 = vunpack.c.l.b16 %v5672
    %v5900 = vunpack.c.h.b16 %v5672
    %v5901 = vunpack.c.l.b16 %v5673
    %v5902 = vunpack.c.l.b16 %v5674
    %v5903 = vunpack.c.h.b16 %v5674
    %v5904 = vunpack.c.l.b16 %v5675
    %v5905 = vunpack.c.l.b16 %v5676
    %v5906 = vunpack.c.h.b16 %v5676
    %v5907 = vunpack.c.l.b16 %v5677
    %v5908 = vunpack.c.l.b16 %v5678
    %v5909 = vunpack.c.h.b16 %v5678
    %v5910 = vunpack.c.l.b16 %v5679
    %v5911 = vunpack.c.l.b16 %v5680
    %v5912 = vunpack.c.h.b16 %v5680
    %v5913 = vunpack.c.l.b16 %v5681
    %v5914 = vunpack.c.l.b16 %v5682
    %v5915 = vunpack.c.h.b16 %v5682
    %v5916 = vunpack.c.l.b16 %v5683
    %v5917 = vunpack.c.l.b16 %v5684
    %v5918 = vunpack.c.h.b16 %v5684
    %v5919 = vunpack.c.l.b16 %v5685
    %v5920 = vunpack.c.l.b16 %v5686
    %v5921 = vunpack.c.h.b16 %v5686
    %v5922 = vunpack.c.l.b16 %v5687
    %v5923 = vunpack.c.l.b16 %v5688
    %v5924 = vunpack.c.h.b16 %v5688
    %v5925 = vunpack.c.l.b16 %v5689
    %v5926 = vunpack.c.l.b16 %v5690
    %v5927 = vunpack.c.h.b16 %v5690
    %v5928 = vunpack.c.l.b16 %v5691
    %v5929 = vunpack.c.l.b16 %v5692
    %v5930 = vunpack.c.h.b16 %v5692
    %v5931 = vunpack.c.l.b16 %v5693
    %v5932 = vunpack.c.l.b16 %v5694
    %v5933 = vunpack.c.h.b16 %v5694
    %v5934 = vunpack.c.l.b16 %v5695
    %v5935 = vunpack.c.l.b16 %v5696
    %v5936 = vunpack.c.h.b16 %v5696
    %v5937 = vunpack.c.l.b16 %v5697
    %v5938 = vunpack.c.l.b16 %v5698
    %v5939 = vunpack.c.h.b16 %v5698
    %v5940 = vunpack.c.l.b16 %v5699
    %v5941 = vunpack.c.l.b16 %v5700
    %v5942 = vunpack.c.h.b16 %v5700
    %v5943 = vunpack.c.l.b16 %v5701
    %v5944 = vunpack.c.l.b16 %v5702
    %v5945 = vunpack.c.h.b16 %v5702
    %v5946 = vunpack.c.l.b16 %v5703
    %v5947 = vunpack.c.l.b16 %v5704
    %v5948 = vunpack.c.h.b16 %v5704
    %v5949 = vunpack.c.l.b16 %v5705
    %v5950 = vunpack.c.l.b16 %v5706
    %v5951 = vunpack.c.h.b16 %v5706
    %v5952 = vunpack.c.l.b16 %v5707
    %v5953 = vunpack.c.l.b16 %v5708
    %v5954 = vunpack.c.h.b16 %v5708
    %v5955 = vunpack.c.l.b16 %v5709
    %v5956 = vunpack.c.l.b16 %v5710
    %v5957 = vunpack.c.h.b16 %v5710
    %v5958 = vunpack.c.l.b16 %v5711
    %v5959 = vunpack.c.l.b16 %v5712
    %v5960 = vunpack.c.h.b16 %v5712
    %v5961 = vunpack.c.l.b16 %v5713
    %v5962 = vunpack.c.l.b16 %v5714
    %v5963 = vunpack.c.h.b16 %v5714
    %v5964 = vunpack.c.l.b16 %v5715
    %v5965 = vunpack.c.l.b16 %v5716
    %v5966 = vunpack.c.h.b16 %v5716
    %v5967 = vunpack.c.l.b16 %v5717
    %v5968 = vunpack.c.l.b16 %v5718
    %v5969 = vunpack.c.h.b16 %v5718
    %v5970 = vunpack.c.l.b16 %v5719
    %v5971 = vunpack.c.l.b16 %v5720
    %v5972 = vunpack.c.h.b16 %v5720
    %v5973 = vunpack.c.l.b16 %v5721
    %v5974 = vunpack.c.l.b16 %v5722
    %v5975 = vunpack.c.h.b16 %v5722
    %v5976 = vunpack.c.l.b16 %v5723
    %v5977 = vpack.c.b16 %v5860, %v5857
    %v5978 = vpack.c.b16 %v5861, %v5858
    %v5979 = vpack.c.b16 %v5862, %v5859
    %v5980 = vpack.c.b16 %v5866, %v5863
    %v5981 = vpack.c.b16 %v5867, %v5864
    %v5982 = vpack.c.b16 %v5868, %v5865
    %v5983 = vpack.c.b16 %v5872, %v5869
    %v5984 = vpack.c.b16 %v5873, %v5870
    %v5985 = vpack.c.b16 %v5874, %v5871
    %v5986 = vpack.c.b16 %v5878, %v5875
    %v5987 = vpack.c.b16 %v5879, %v5876
    %v5988 = vpack.c.b16 %v5880, %v5877
    %v5989 = vpack.c.b16 %v5884, %v5881
    %v5990 = vpack.c.b16 %v5885, %v5882
    %v5991 = vpack.c.b16 %v5886, %v5883
    %v5992 = vpack.c.b16 %v5890, %v5887
    %v5993 = vpack.c.b16 %v5891, %v5888
    %v5994 = vpack.c.b16 %v5892, %v5889
    %v5995 = vpack.c.b16 %v5896, %v5893
    %v5996 = vpack.c.b16 %v5897, %v5894
    %v5997 = vpack.c.b16 %v5898, %v5895
    %v5998 = vpack.c.b16 %v5902, %v5899
    %v5999 = vpack.c.b16 %v5903, %v5900
    %v6000 = vpack.c.b16 %v5904, %v5901
    %v6001 = vpack.c.b16 %v5908, %v5905
    %v6002 = vpack.c.b16 %v5909, %v5906
    %v6003 = vpack.c.b16 %v5910, %v5907
    %v6004 = vpack.c.b16 %v5914, %v5911
    %v6005 = vpack.c.b16 %v5915, %v5912
    %v6006 = vpack.c.b16 %v5916, %v5913
    %v6007 = vpack.c.b16 %v5920, %v5917
    %v6008 = vpack.c.b16 %v5921, %v5918
    %v6009 = vpack.c.b16 %v5922, %v5919
    %v6010 = vpack.c.b16 %v5926, %v5923
    %v6011 = vpack.c.b16 %v5927, %v5924
    %v6012 = vpack.c.b16 %v5928, %v5925
    %v6013 = vpack.c.b16 %v5932, %v5929
    %v6014 = vpack.c.b16 %v5933, %v5930
    %v6015 = vpack.c.b16 %v5934, %v5931
    %v6016 = vpack.c.b16 %v5938, %v5935
    %v6017 = vpack.c.b16 %v5939, %v5936
    %v6018 = vpack.c.b16 %v5940, %v5937
    %v6019 = vpack.c.b16 %v5944, %v5941
    %v6020 = vpack.c.b16 %v5945, %v5942
    %v6021 = vpack.c.b16 %v5946, %v5943
    %v6022 = vpack.c.b16 %v5950, %v5947
    %v6023 = vpack.c.b16 %v5951, %v5948
    %v6024 = vpack.c.b16 %v5952, %v5949
    %v6025 = vpack.c.b16 %v5956, %v5953
    %v6026 = vpack.c.b16 %v5957, %v5954
    %v6027 = vpack.c.b16 %v5958, %v5955
    %v6028 = vpack.c.b16 %v5962, %v5959
    %v6029 = vpack.c.b16 %v5963, %v5960
    %v6030 = vpack.c.b16 %v5964, %v5961
    %v6031 = vpack.c.b16 %v5968, %v5965
    %v6032 = vpack.c.b16 %v5969, %v5966
    %v6033 = vpack.c.b16 %v5970, %v5967
    %v6034 = vpack.c.b16 %v5974, %v5971
    %v6035 = vpack.c.b16 %v5975, %v5972
    %v6036 = vpack.c.b16 %v5976, %v5973
    %v6098 = vsel %vm998, %v5766, 0
    %v6101 = vsel %vm998, %v5772, 0
    %6103 = vmatprep.subr.bf16.mxu0 %v5978
    %6104 = vmatpush1.bf16.msra.mxu0 %v5977
    %6105 = vmatprep.subr.bf16.mxu0 %v5981
    %6106 = vmatpush1.bf16.msra.mxu0 %v5980
    %6107 = vmatprep.subr.bf16.mxu0 %v5984
    %6108 = vmatpush1.bf16.msra.mxu0 %v5983
    %6109 = vmatprep.subr.bf16.mxu0 %v5987
    %6110 = vmatpush1.bf16.msra.mxu0 %v5986
    %6111 = vmatprep.subr.bf16.mxu0 %v5990
    %6112 = vmatpush1.bf16.msra.mxu0 %v5989
    %6113 = vmatprep.subr.bf16.mxu0 %v5993
    %6114 = vmatpush1.bf16.msra.mxu0 %v5992
    %6115 = vmatprep.subr.bf16.mxu0 %v5996
    %6116 = vmatpush1.bf16.msra.mxu0 %v5995
    %6117 = vmatprep.subr.bf16.mxu0 %v5999
    %6118 = vmatpush1.bf16.msra.mxu0 %v5998
    %6119 = vmatprep.subr.bf16.mxu0 %v6002
    %6120 = vmatpush1.bf16.msra.mxu0 %v6001
    %6121 = vmatprep.subr.bf16.mxu0 %v6005
    %6122 = vmatpush1.bf16.msra.mxu0 %v6004
    %6123 = vmatprep.subr.bf16.mxu0 %v6008
    %6124 = vmatpush1.bf16.msra.mxu0 %v6007
    %6125 = vmatprep.subr.bf16.mxu0 %v6011
    %6126 = vmatpush1.bf16.msra.mxu0 %v6010
    %6127 = vmatprep.subr.bf16.mxu0 %v6014
    %6128 = vmatpush1.bf16.msra.mxu0 %v6013
    %6129 = vmatprep.subr.bf16.mxu0 %v6017
    %6130 = vmatpush1.bf16.msra.mxu0 %v6016
    %6131 = vmatprep.subr.bf16.mxu0 %v6020
    %6132 = vmatpush1.bf16.msra.mxu0 %v6019
    %6133 = vmatprep.subr.bf16.mxu0 %v6023
    %6134 = vmatpush1.bf16.msra.mxu0 %v6022
    %6135 = vmatprep.mubr.bf16.mxu0 %v5763
    %6136 = vmatmul.mubr.bf16.gmra.mrb[0].mxu0 %v5760
    %v6137 = vpop.f32.mrb[0].mxu0
    %v6138 = vadd.f32 0.0, %v6137
    %v6139 = vpop.f32.mrb[0].mxu0
    %v6140 = vadd.f32 0.0, %v6139
    %v6141 = vpop.f32.mrb[0].mxu0
    %v6142 = vadd.f32 0.0, %v6141
    %v6143 = vpop.f32.mrb[0].mxu0
    %v6144 = vadd.f32 0.0, %v6143
    %6145 = vmatprep.mubr.bf16.mxu0 %v5770
    %6146 = vmatmul.mubr.bf16.gmra.mrb[0].mxu0 %v5768
    %v6147 = vpop.f32.mrb[0].mxu0
    %v6148 = vadd.f32 0.0, %v6147
    %v6149 = vpop.f32.mrb[0].mxu0
    %v6150 = vadd.f32 0.0, %v6149
    %v6151 = vpop.f32.mrb[0].mxu0
    %v6152 = vadd.f32 0.0, %v6151
    %v6153 = vpop.f32.mrb[0].mxu0
    %v6154 = vadd.f32 0.0, %v6153
    %6155 = vdwg.mxu0
    %6156 = vmatprep.subr.bf16.mxu0 %v6026
    %6157 = vmatpush1.bf16.msra.mxu0 %v6025
    %6158 = vmatprep.subr.bf16.mxu0 %v6029
    %6159 = vmatpush1.bf16.msra.mxu0 %v6028
    %6160 = vmatprep.subr.bf16.mxu0 %v6032
    %6161 = vmatpush1.bf16.msra.mxu0 %v6031
    %6162 = vmatprep.subr.bf16.mxu0 %v6035
    %6163 = vmatpush1.bf16.msra.mxu0 %v6034
    %6164 = vmatprep.subr.bf16.mxu0 0
    %6165 = vmatpush1.bf16.msra.mxu0 0
    %6166 = vmatprep.subr.bf16.mxu0 0
    %6167 = vmatpush1.bf16.msra.mxu0 0
    %6168 = vmatprep.subr.bf16.mxu0 0
    %6169 = vmatpush1.bf16.msra.mxu0 0
    %6170 = vmatprep.subr.bf16.mxu0 0
    %6171 = vmatpush1.bf16.msra.mxu0 0
    %6172 = vmatprep.subr.bf16.mxu0 0
    %6173 = vmatpush1.bf16.msra.mxu0 0
    %6174 = vmatprep.subr.bf16.mxu0 0
    %6175 = vmatpush1.bf16.msra.mxu0 0
    %6176 = vmatprep.subr.bf16.mxu0 0
    %6177 = vmatpush1.bf16.msra.mxu0 0
    %6178 = vmatprep.subr.bf16.mxu0 0
    %6179 = vmatpush1.bf16.msra.mxu0 0
    %6180 = vmatprep.subr.bf16.mxu0 0
    %6181 = vmatpush1.bf16.msra.mxu0 0
    %6182 = vmatprep.subr.bf16.mxu0 0
    %6183 = vmatpush1.bf16.msra.mxu0 0
    %6184 = vmatprep.subr.bf16.mxu0 0
    %6185 = vmatpush1.bf16.msra.mxu0 0
    %6186 = vmatprep.subr.bf16.mxu0 0
    %6187 = vmatpush1.bf16.msra.mxu0 0
    %6188 = vmatprep.mubr.bf16.mxu0 0
    %6189 = vmatmul.mubr.bf16.gmra.mrb[0].mxu0 %v6098
    %v6190 = vpop.f32.mrb[0].mxu0
    %v6191 = vadd.f32 %v6138, %v6190
    %v6192 = vpop.f32.mrb[0].mxu0
    %v6193 = vadd.f32 %v6140, %v6192
    %v6194 = vpop.f32.mrb[0].mxu0
    %v6195 = vadd.f32 %v6142, %v6194
    %v6196 = vpop.f32.mrb[0].mxu0
    %v6197 = vadd.f32 %v6144, %v6196
    %6198 = vmatprep.mubr.bf16.mxu0 0
    %6199 = vmatmul.mubr.bf16.gmra.mrb[0].mxu0 %v6101
    %v6200 = vpop.f32.mrb[0].mxu0
    %v6201 = vadd.f32 %v6148, %v6200
    %v6202 = vpop.f32.mrb[0].mxu0
    %v6203 = vadd.f32 %v6150, %v6202
    %v6204 = vpop.f32.mrb[0].mxu0
    %v6205 = vadd.f32 %v6152, %v6204
    %v6206 = vpop.f32.mrb[0].mxu0
    %v6207 = vadd.f32 %v6154, %v6206
    %6208 = vdwg.mxu0
    %6209 = vmatprep.subr.bf16.mxu0 0
    %6210 = vmatpush1.bf16.msra.mxu0 %v5979
    %6211 = vmatprep.subr.bf16.mxu0 0
    %6212 = vmatpush1.bf16.msra.mxu0 %v5982
    %6213 = vmatprep.subr.bf16.mxu0 0
    %6214 = vmatpush1.bf16.msra.mxu0 %v5985
    %6215 = vmatprep.subr.bf16.mxu0 0
    %6216 = vmatpush1.bf16.msra.mxu0 %v5988
    %6217 = vmatprep.subr.bf16.mxu0 0
    %6218 = vmatpush1.bf16.msra.mxu0 %v5991
    %6219 = vmatprep.subr.bf16.mxu0 0
    %6220 = vmatpush1.bf16.msra.mxu0 %v5994
    %6221 = vmatprep.subr.bf16.mxu0 0
    %6222 = vmatpush1.bf16.msra.mxu0 %v5997
    %6223 = vmatprep.subr.bf16.mxu0 0
    %6224 = vmatpush1.bf16.msra.mxu0 %v6000
    %6225 = vmatprep.subr.bf16.mxu0 0
    %6226 = vmatpush1.bf16.msra.mxu0 %v6003
    %6227 = vmatprep.subr.bf16.mxu0 0
    %6228 = vmatpush1.bf16.msra.mxu0 %v6006
    %6229 = vmatprep.subr.bf16.mxu0 0
    %6230 = vmatpush1.bf16.msra.mxu0 %v6009
    %6231 = vmatprep.subr.bf16.mxu0 0
    %6232 = vmatpush1.bf16.msra.mxu0 %v6012
    %6233 = vmatprep.subr.bf16.mxu0 0
    %6234 = vmatpush1.bf16.msra.mxu0 %v6015
    %6235 = vmatprep.subr.bf16.mxu0 0
    %6236 = vmatpush1.bf16.msra.mxu0 %v6018
    %6237 = vmatprep.subr.bf16.mxu0 0
    %6238 = vmatpush1.bf16.msra.mxu0 %v6021
    %6239 = vmatprep.subr.bf16.mxu0 0
    %6240 = vmatpush1.bf16.msra.mxu0 %v6024
    %6241 = vmatprep.mubr.bf16.mxu0 %v5763
    %6242 = vmatmul.mubr.bf16.gmra.mrb[0].mxu0 %v5760
    %v6243 = vpop.f32.mrb[0].mxu0
    %v6244 = vadd.f32 0.0, %v6243
    %v6245 = vpop.f32.mrb[0].mxu0
    %v6246 = vpop.f32.mrb[0].mxu0
    %v6247 = vadd.f32 0.0, %v6246
    %v6248 = vpop.f32.mrb[0].mxu0
    %6249 = vmatprep.mubr.bf16.mxu0 %v5770
    %6250 = vmatmul.mubr.bf16.gmra.mrb[0].mxu0 %v5768
    %v6251 = vpop.f32.mrb[0].mxu0
    %v6252 = vadd.f32 0.0, %v6251
    %v6253 = vpop.f32.mrb[0].mxu0
    %v6254 = vpop.f32.mrb[0].mxu0
    %v6255 = vadd.f32 0.0, %v6254
    %v6256 = vpop.f32.mrb[0].mxu0
    %6257 = vdwg.mxu0
    %6258 = vmatprep.subr.bf16.mxu0 0
    %6259 = vmatpush1.bf16.msra.mxu0 %v6027
    %6260 = vmatprep.subr.bf16.mxu0 0
    %6261 = vmatpush1.bf16.msra.mxu0 %v6030
    %6262 = vmatprep.subr.bf16.mxu0 0
    %6263 = vmatpush1.bf16.msra.mxu0 %v6033
    %6264 = vmatprep.subr.bf16.mxu0 0
    %6265 = vmatpush1.bf16.msra.mxu0 %v6036
    %6266 = vmatprep.subr.bf16.mxu0 0
    %6267 = vmatpush1.bf16.msra.mxu0 0
    %6268 = vmatprep.subr.bf16.mxu0 0
    %6269 = vmatpush1.bf16.msra.mxu0 0
    %6270 = vmatprep.subr.bf16.mxu0 0
    %6271 = vmatpush1.bf16.msra.mxu0 0
    %6272 = vmatprep.subr.bf16.mxu0 0
    %6273 = vmatpush1.bf16.msra.mxu0 0
    %6274 = vmatprep.subr.bf16.mxu0 0
    %6275 = vmatpush1.bf16.msra.mxu0 0
    %6276 = vmatprep.subr.bf16.mxu0 0
    %6277 = vmatpush1.bf16.msra.mxu0 0
    %6278 = vmatprep.subr.bf16.mxu0 0
    %6279 = vmatpush1.bf16.msra.mxu0 0
    %6280 = vmatprep.subr.bf16.mxu0 0
    %6281 = vmatpush1.bf16.msra.mxu0 0
    %6282 = vmatprep.subr.bf16.mxu0 0
    %6283 = vmatpush1.bf16.msra.mxu0 0
    %6284 = vmatprep.subr.bf16.mxu0 0
    %6285 = vmatpush1.bf16.msra.mxu0 0
    %6286 = vmatprep.subr.bf16.mxu0 0
    %6287 = vmatpush1.bf16.msra.mxu0 0
    %6288 = vmatprep.subr.bf16.mxu0 0
    %6289 = vmatpush1.bf16.msra.mxu0 0
    %6290 = vmatprep.mubr.bf16.mxu0 0
    %6291 = vmatmul.mubr.bf16.gmra.mrb[0].mxu0 %v6098
    %v6292 = vpop.f32.mrb[0].mxu0
    %v6293 = vadd.f32 %v6244, %v6292
    %v6294 = vpop.f32.mrb[0].mxu0
    %v6295 = vpop.f32.mrb[0].mxu0
    %v6296 = vadd.f32 %v6247, %v6295
    %v6297 = vpop.f32.mrb[0].mxu0
    %6298 = vmatprep.mubr.bf16.mxu0 0
    %6299 = vmatmul.mubr.bf16.gmra.mrb[0].mxu0 %v6101
    %v6300 = vpop.f32.mrb[0].mxu0
    %v6301 = vadd.f32 %v6252, %v6300
    %v6302 = vpop.f32.mrb[0].mxu0
    %v6303 = vpop.f32.mrb[0].mxu0
    %v6304 = vadd.f32 %v6255, %v6303
    %v6305 = vpop.f32.mrb[0].mxu0
    %6306 = vdwg.mxu0
    %v6307 = vadd.f32 %v5517, %v6191
    %v6308 = vadd.f32 %v5519, %v6193
    %v6309 = vadd.f32 %v5619, %v6293
    %v6310 = vadd.f32 %v5521, %v6195
    %v6311 = vadd.f32 %v5523, %v6197
    %v6312 = vadd.f32 %v5622, %v6296
    %v6313 = vadd.f32 %v5527, %v6201
    %v6314 = vadd.f32 %v5529, %v6203
    %v6315 = vadd.f32 %v5627, %v6301
    %v6316 = vadd.f32 %v5531, %v6205
    %v6317 = vadd.f32 %v5533, %v6207
    %v6318 = vadd.f32 %v5630, %v6304
    %v6319 = vld [vmem:[#allocation2] sm:$0xcc]
    %v6320 = vld [vmem:[#allocation2 + $0x8] sm:$0xc]
    %v6321 = vld [vmem:[#allocation2 + $0x30] sm:$0x33]
    %v6322 = vld [vmem:[#allocation2 + $0x38] sm:$0x3]
    %s6323 = scalar_lea.vmem %s5, 1440
    %v6324 = vld [vmem:[%s6323] sm:$0xff]
    %v6325 = vld [vmem:[%s6323 + $0x8] sm:$0xf]
    %v6326 = vld [vmem:[%s6323 + $0xc] sm:$0xff]
    %v6327 = vld [vmem:[%s6323 + $0x14] sm:$0xf]
    %v6328 = vld [vmem:[%s6323 + $0x18] sm:$0xff]
    %v6329 = vld [vmem:[%s6323 + $0x20] sm:$0xf]
    %v6330 = vld [vmem:[%s6323 + $0x24] sm:$0xff]
    %v6331 = vld [vmem:[%s6323 + $0x2c] sm:$0xf]
    %v6332 = vld [vmem:[%s6323 + $0x30] sm:$0xff]
    %v6333 = vld [vmem:[%s6323 + $0x38] sm:$0xf]
    %v6334 = vld [vmem:[%s6323 + $0x3c] sm:$0xff]
    %v6335 = vld [vmem:[%s6323 + $0x44] sm:$0xf]
    %v6336 = vld [vmem:[%s6323 + $0x48] sm:$0xff]
    %v6337 = vld [vmem:[%s6323 + $0x50] sm:$0xf]
    %v6338 = vld [vmem:[%s6323 + $0x54] sm:$0xff]
    %v6339 = vld [vmem:[%s6323 + $0x5c] sm:$0xf]
    %v6340 = vld [vmem:[%s6323 + $0x60] sm:$0xff]
    %v6341 = vld [vmem:[%s6323 + $0x68] sm:$0xf]
    %v6342 = vld [vmem:[%s6323 + $0x6c] sm:$0xff]
    %v6343 = vld [vmem:[%s6323 + $0x74] sm:$0xf]
    %v6344 = vld [vmem:[%s6323 + $0x78] sm:$0xff]
    %v6345 = vld [vmem:[%s6323 + $0x80] sm:$0xf]
    %v6346 = vld [vmem:[%s6323 + $0x84] sm:$0xff]
    %v6347 = vld [vmem:[%s6323 + $0x8c] sm:$0xf]
    %v6348 = vld [vmem:[%s6323 + $0x90] sm:$0xff]
    %v6349 = vld [vmem:[%s6323 + $0x98] sm:$0xf]
    %v6350 = vld [vmem:[%s6323 + $0x9c] sm:$0xff]
    %v6351 = vld [vmem:[%s6323 + $0xa4] sm:$0xf]
    %v6352 = vld [vmem:[%s6323 + $0xa8] sm:$0xff]
    %v6353 = vld [vmem:[%s6323 + $0xb0] sm:$0xf]
    %v6354 = vld [vmem:[%s6323 + $0xb4] sm:$0xff]
    %v6355 = vld [vmem:[%s6323 + $0xbc] sm:$0xf]
    %v6356 = vld [vmem:[%s6323 + $0xc0] sm:$0xff]
    %v6357 = vld [vmem:[%s6323 + $0xc8] sm:$0xf]
    %v6358 = vld [vmem:[%s6323 + $0xcc] sm:$0xff]
    %v6359 = vld [vmem:[%s6323 + $0xd4] sm:$0xf]
    %v6360 = vld [vmem:[%s6323 + $0xd8] sm:$0xff]
    %v6361 = vld [vmem:[%s6323 + $0xe0] sm:$0xf]
    %v6362 = vld [vmem:[%s6323 + $0xe4] sm:$0xff]
    %v6363 = vld [vmem:[%s6323 + $0xec] sm:$0xf]
    %v6364 = vld [vmem:[%s6323 + $0xf0] sm:$0xff]
    %v6365 = vld [vmem:[%s6323 + $0xf8] sm:$0xf]
    %v6366 = vld [vmem:[%s6323 + $0xfc] sm:$0xff]
    %v6367 = vld [vmem:[%s6323 + $0x104] sm:$0xf]
    %v6368 = vld [vmem:[%s6323 + $0x108] sm:$0xff]
    %v6369 = vld [vmem:[%s6323 + $0x110] sm:$0xf]
    %v6370 = vld [vmem:[%s6323 + $0x114] sm:$0xff]
    %v6371 = vld [vmem:[%s6323 + $0x11c] sm:$0xf]
    %v6372 = vld [vmem:[%s6323 + $0x120] sm:$0xff]
    %v6373 = vld [vmem:[%s6323 + $0x128] sm:$0xf]
    %v6374 = vld [vmem:[%s6323 + $0x12c] sm:$0xff]
    %v6375 = vld [vmem:[%s6323 + $0x134] sm:$0xf]
    %v6376 = vld [vmem:[%s6323 + $0x138] sm:$0xff]
    %v6377 = vld [vmem:[%s6323 + $0x140] sm:$0xf]
    %v6378 = vld [vmem:[%s6323 + $0x144] sm:$0xff]
    %v6379 = vld [vmem:[%s6323 + $0x14c] sm:$0xf]
    %v6380 = vld [vmem:[%s6323 + $0x150] sm:$0xff]
    %v6381 = vld [vmem:[%s6323 + $0x158] sm:$0xf]
    %v6382 = vld [vmem:[%s6323 + $0x15c] sm:$0xff]
    %v6383 = vld [vmem:[%s6323 + $0x164] sm:$0xf]
    %v6384 = vld [vmem:[%s6323 + $0x168] sm:$0xff]
    %v6385 = vld [vmem:[%s6323 + $0x170] sm:$0xf]
    %v6386 = vld [vmem:[%s6323 + $0x174] sm:$0xff]
    %v6387 = vld [vmem:[%s6323 + $0x17c] sm:$0xf]
    %v6388 = vld [vmem:[%s6323 + $0x180] sm:$0xff]
    %v6389 = vld [vmem:[%s6323 + $0x188] sm:$0xf]
    %v6390 = vld [vmem:[%s6323 + $0x18c] sm:$0xff]
    %v6391 = vld [vmem:[%s6323 + $0x194] sm:$0xf]
    %v6392 = vld [vmem:[%s6323 + $0x198] sm:$0xff]
    %v6393 = vld [vmem:[%s6323 + $0x1a0] sm:$0xf]
    %v6394 = vld [vmem:[%s6323 + $0x1a4] sm:$0xff]
    %v6395 = vld [vmem:[%s6323 + $0x1ac] sm:$0xf]
    %v6396 = vld [vmem:[%s6323 + $0x1b0] sm:$0xff]
    %v6397 = vld [vmem:[%s6323 + $0x1b8] sm:$0xf]
    %v6398 = vld [vmem:[%s6323 + $0x1bc] sm:$0xff]
    %v6399 = vld [vmem:[%s6323 + $0x1c4] sm:$0xf]
    %v6400 = vld [vmem:[%s6323 + $0x1c8] sm:$0xff]
    %v6401 = vld [vmem:[%s6323 + $0x1d0] sm:$0xf]
    %v6402 = vld [vmem:[%s6323 + $0x1d4] sm:$0xff]
    %v6403 = vld [vmem:[%s6323 + $0x1dc] sm:$0xf]
    %v6408 = vunpack.c.l.b16 %v6319
    %v6409 = vunpack.c.h.b16 %v6319
    %v6410 = vunpack.c.l.b16 %v6320
    %v6411 = vunpack.c.l.b16 %v6321
    %v6412 = vunpack.c.h.b16 %v6321
    %v6413 = vunpack.c.l.b16 %v6322
    %v6414 = vpack.c.b16 %v4502, %v6408
    %v6415 = vpack.c.b16 %v4503, %v6409
    %v6416 = vpack.c.b16 %v4504, %v6410
    %v6417 = vpack.c.b16 %v6411, %v6411
    %v6418 = vpack.c.b16 %v6412, %v6412
    %v6419 = vpack.c.b16 %v6413, %v6413
    %vm6420 = vcmask 1045504
    %v6421 = vrot.slane %v6414, 2
    %v6422 = vrot.slane %v4517, 2
    %v6423 = vsel %vm6420, %v6421, %v6422
    %v6424 = vrot.slane %v6415, 2
    %v6425 = vrot.slane %v4518, 2
    %v6426 = vsel %vm6420, %v6424, %v6425
    %v6427 = vrot.slane %v6416, 2
    %v6428 = vrot.slane %v4519, 2
    %v6429 = vsel %vm6420, %v6427, %v6428
    %v6430 = vrot.slane %v6417, 2
    %v6431 = vsel %vm6420, %v6422, %v6430
    %v6432 = vrot.slane %v6418, 2
    %v6433 = vsel %vm6420, %v6425, %v6432
    %v6434 = vrot.slane %v6419, 2
    %v6435 = vsel %vm6420, %v6428, %v6434
    %v6520 = vunpack.c.l.b16 %v6324
    %v6521 = vunpack.c.h.b16 %v6324
    %v6522 = vunpack.c.l.b16 %v6325
    %v6523 = vunpack.c.l.b16 %v6326
    %v6524 = vunpack.c.h.b16 %v6326
    %v6525 = vunpack.c.l.b16 %v6327
    %v6526 = vunpack.c.l.b16 %v6328
    %v6527 = vunpack.c.h.b16 %v6328
    %v6528 = vunpack.c.l.b16 %v6329
    %v6529 = vunpack.c.l.b16 %v6330
    %v6530 = vunpack.c.h.b16 %v6330
    %v6531 = vunpack.c.l.b16 %v6331
    %v6532 = vunpack.c.l.b16 %v6332
    %v6533 = vunpack.c.h.b16 %v6332
    %v6534 = vunpack.c.l.b16 %v6333
    %v6535 = vunpack.c.l.b16 %v6334
    %v6536 = vunpack.c.h.b16 %v6334
    %v6537 = vunpack.c.l.b16 %v6335
    %v6538 = vunpack.c.l.b16 %v6336
    %v6539 = vunpack.c.h.b16 %v6336
    %v6540 = vunpack.c.l.b16 %v6337
    %v6541 = vunpack.c.l.b16 %v6338
    %v6542 = vunpack.c.h.b16 %v6338
    %v6543 = vunpack.c.l.b16 %v6339
    %v6544 = vunpack.c.l.b16 %v6340
    %v6545 = vunpack.c.h.b16 %v6340
    %v6546 = vunpack.c.l.b16 %v6341
    %v6547 = vunpack.c.l.b16 %v6342
    %v6548 = vunpack.c.h.b16 %v6342
    %v6549 = vunpack.c.l.b16 %v6343
    %v6550 = vunpack.c.l.b16 %v6344
    %v6551 = vunpack.c.h.b16 %v6344
    %v6552 = vunpack.c.l.b16 %v6345
    %v6553 = vunpack.c.l.b16 %v6346
    %v6554 = vunpack.c.h.b16 %v6346
    %v6555 = vunpack.c.l.b16 %v6347
    %v6556 = vunpack.c.l.b16 %v6348
    %v6557 = vunpack.c.h.b16 %v6348
    %v6558 = vunpack.c.l.b16 %v6349
    %v6559 = vunpack.c.l.b16 %v6350
    %v6560 = vunpack.c.h.b16 %v6350
    %v6561 = vunpack.c.l.b16 %v6351
    %v6562 = vunpack.c.l.b16 %v6352
    %v6563 = vunpack.c.h.b16 %v6352
    %v6564 = vunpack.c.l.b16 %v6353
    %v6565 = vunpack.c.l.b16 %v6354
    %v6566 = vunpack.c.h.b16 %v6354
    %v6567 = vunpack.c.l.b16 %v6355
    %v6568 = vunpack.c.l.b16 %v6356
    %v6569 = vunpack.c.h.b16 %v6356
    %v6570 = vunpack.c.l.b16 %v6357
    %v6571 = vunpack.c.l.b16 %v6358
    %v6572 = vunpack.c.h.b16 %v6358
    %v6573 = vunpack.c.l.b16 %v6359
    %v6574 = vunpack.c.l.b16 %v6360
    %v6575 = vunpack.c.h.b16 %v6360
    %v6576 = vunpack.c.l.b16 %v6361
    %v6577 = vunpack.c.l.b16 %v6362
    %v6578 = vunpack.c.h.b16 %v6362
    %v6579 = vunpack.c.l.b16 %v6363
    %v6580 = vunpack.c.l.b16 %v6364
    %v6581 = vunpack.c.h.b16 %v6364
    %v6582 = vunpack.c.l.b16 %v6365
    %v6583 = vunpack.c.l.b16 %v6366
    %v6584 = vunpack.c.h.b16 %v6366
    %v6585 = vunpack.c.l.b16 %v6367
    %v6586 = vunpack.c.l.b16 %v6368
    %v6587 = vunpack.c.h.b16 %v6368
    %v6588 = vunpack.c.l.b16 %v6369
    %v6589 = vunpack.c.l.b16 %v6370
    %v6590 = vunpack.c.h.b16 %v6370
    %v6591 = vunpack.c.l.b16 %v6371
    %v6592 = vunpack.c.l.b16 %v6372
    %v6593 = vunpack.c.h.b16 %v6372
    %v6594 = vunpack.c.l.b16 %v6373
    %v6595 = vunpack.c.l.b16 %v6374
    %v6596 = vunpack.c.h.b16 %v6374
    %v6597 = vunpack.c.l.b16 %v6375
    %v6598 = vunpack.c.l.b16 %v6376
    %v6599 = vunpack.c.h.b16 %v6376
    %v6600 = vunpack.c.l.b16 %v6377
    %v6601 = vunpack.c.l.b16 %v6378
    %v6602 = vunpack.c.h.b16 %v6378
    %v6603 = vunpack.c.l.b16 %v6379
    %v6604 = vunpack.c.l.b16 %v6380
    %v6605 = vunpack.c.h.b16 %v6380
    %v6606 = vunpack.c.l.b16 %v6381
    %v6607 = vunpack.c.l.b16 %v6382
    %v6608 = vunpack.c.h.b16 %v6382
    %v6609 = vunpack.c.l.b16 %v6383
    %v6610 = vunpack.c.l.b16 %v6384
    %v6611 = vunpack.c.h.b16 %v6384
    %v6612 = vunpack.c.l.b16 %v6385
    %v6613 = vunpack.c.l.b16 %v6386
    %v6614 = vunpack.c.h.b16 %v6386
    %v6615 = vunpack.c.l.b16 %v6387
    %v6616 = vunpack.c.l.b16 %v6388
    %v6617 = vunpack.c.h.b16 %v6388
    %v6618 = vunpack.c.l.b16 %v6389
    %v6619 = vunpack.c.l.b16 %v6390
    %v6620 = vunpack.c.h.b16 %v6390
    %v6621 = vunpack.c.l.b16 %v6391
    %v6622 = vunpack.c.l.b16 %v6392
    %v6623 = vunpack.c.h.b16 %v6392
    %v6624 = vunpack.c.l.b16 %v6393
    %v6625 = vunpack.c.l.b16 %v6394
    %v6626 = vunpack.c.h.b16 %v6394
    %v6627 = vunpack.c.l.b16 %v6395
    %v6628 = vunpack.c.l.b16 %v6396
    %v6629 = vunpack.c.h.b16 %v6396
    %v6630 = vunpack.c.l.b16 %v6397
    %v6631 = vunpack.c.l.b16 %v6398
    %v6632 = vunpack.c.h.b16 %v6398
    %v6633 = vunpack.c.l.b16 %v6399
    %v6634 = vunpack.c.l.b16 %v6400
    %v6635 = vunpack.c.h.b16 %v6400
    %v6636 = vunpack.c.l.b16 %v6401
    %v6637 = vunpack.c.l.b16 %v6402
    %v6638 = vunpack.c.h.b16 %v6402
    %v6639 = vunpack.c.l.b16 %v6403
    %v6640 = vpack.c.b16 %v6523, %v6520
    %v6641 = vpack.c.b16 %v6524, %v6521
    %v6642 = vpack.c.b16 %v6525, %v6522
    %v6643 = vpack.c.b16 %v6529, %v6526
    %v6644 = vpack.c.b16 %v6530, %v6527
    %v6645 = vpack.c.b16 %v6531, %v6528
    %v6646 = vpack.c.b16 %v6535, %v6532
    %v6647 = vpack.c.b16 %v6536, %v6533
    %v6648 = vpack.c.b16 %v6537, %v6534
    %v6649 = vpack.c.b16 %v6541, %v6538
    %v6650 = vpack.c.b16 %v6542, %v6539
    %v6651 = vpack.c.b16 %v6543, %v6540
    %v6652 = vpack.c.b16 %v6547, %v6544
    %v6653 = vpack.c.b16 %v6548, %v6545
    %v6654 = vpack.c.b16 %v6549, %v6546
    %v6655 = vpack.c.b16 %v6553, %v6550
    %v6656 = vpack.c.b16 %v6554, %v6551
    %v6657 = vpack.c.b16 %v6555, %v6552
    %v6658 = vpack.c.b16 %v6559, %v6556
    %v6659 = vpack.c.b16 %v6560, %v6557
    %v6660 = vpack.c.b16 %v6561, %v6558
    %v6661 = vpack.c.b16 %v6565, %v6562
    %v6662 = vpack.c.b16 %v6566, %v6563
    %v6663 = vpack.c.b16 %v6567, %v6564
    %v6664 = vpack.c.b16 %v6571, %v6568
    %v6665 = vpack.c.b16 %v6572, %v6569
    %v6666 = vpack.c.b16 %v6573, %v6570
    %v6667 = vpack.c.b16 %v6577, %v6574
    %v6668 = vpack.c.b16 %v6578, %v6575
    %v6669 = vpack.c.b16 %v6579, %v6576
    %v6670 = vpack.c.b16 %v6583, %v6580
    %v6671 = vpack.c.b16 %v6584, %v6581
    %v6672 = vpack.c.b16 %v6585, %v6582
    %v6673 = vpack.c.b16 %v6589, %v6586
    %v6674 = vpack.c.b16 %v6590, %v6587
    %v6675 = vpack.c.b16 %v6591, %v6588
    %v6676 = vpack.c.b16 %v6595, %v6592
    %v6677 = vpack.c.b16 %v6596, %v6593
    %v6678 = vpack.c.b16 %v6597, %v6594
    %v6679 = vpack.c.b16 %v6601, %v6598
    %v6680 = vpack.c.b16 %v6602, %v6599
    %v6681 = vpack.c.b16 %v6603, %v6600
    %v6682 = vpack.c.b16 %v6607, %v6604
    %v6683 = vpack.c.b16 %v6608, %v6605
    %v6684 = vpack.c.b16 %v6609, %v6606
    %v6685 = vpack.c.b16 %v6613, %v6610
    %v6686 = vpack.c.b16 %v6614, %v6611
    %v6687 = vpack.c.b16 %v6615, %v6612
    %v6688 = vpack.c.b16 %v6619, %v6616
    %v6689 = vpack.c.b16 %v6620, %v6617
    %v6690 = vpack.c.b16 %v6621, %v6618
    %v6691 = vpack.c.b16 %v6625, %v6622
    %v6692 = vpack.c.b16 %v6626, %v6623
    %v6693 = vpack.c.b16 %v6627, %v6624
    %v6694 = vpack.c.b16 %v6631, %v6628
    %v6695 = vpack.c.b16 %v6632, %v6629
    %v6696 = vpack.c.b16 %v6633, %v6630
    %v6697 = vpack.c.b16 %v6637, %v6634
    %v6698 = vpack.c.b16 %v6638, %v6635
    %v6699 = vpack.c.b16 %v6639, %v6636
    %v6761 = vsel %vm998, %v6429, 0
    %v6764 = vsel %vm998, %v6435, 0
    %6766 = vmatprep.subr.bf16.mxu0 %v6641
    %6767 = vmatpush1.bf16.msra.mxu0 %v6640
    %6768 = vmatprep.subr.bf16.mxu0 %v6644
    %6769 = vmatpush1.bf16.msra.mxu0 %v6643
    %6770 = vmatprep.subr.bf16.mxu0 %v6647
    %6771 = vmatpush1.bf16.msra.mxu0 %v6646
    %6772 = vmatprep.subr.bf16.mxu0 %v6650
    %6773 = vmatpush1.bf16.msra.mxu0 %v6649
    %6774 = vmatprep.subr.bf16.mxu0 %v6653
    %6775 = vmatpush1.bf16.msra.mxu0 %v6652
    %6776 = vmatprep.subr.bf16.mxu0 %v6656
    %6777 = vmatpush1.bf16.msra.mxu0 %v6655
    %6778 = vmatprep.subr.bf16.mxu0 %v6659
    %6779 = vmatpush1.bf16.msra.mxu0 %v6658
    %6780 = vmatprep.subr.bf16.mxu0 %v6662
    %6781 = vmatpush1.bf16.msra.mxu0 %v6661
    %6782 = vmatprep.subr.bf16.mxu0 %v6665
    %6783 = vmatpush1.bf16.msra.mxu0 %v6664
    %6784 = vmatprep.subr.bf16.mxu0 %v6668
    %6785 = vmatpush1.bf16.msra.mxu0 %v6667
    %6786 = vmatprep.subr.bf16.mxu0 %v6671
    %6787 = vmatpush1.bf16.msra.mxu0 %v6670
    %6788 = vmatprep.subr.bf16.mxu0 %v6674
    %6789 = vmatpush1.bf16.msra.mxu0 %v6673
    %6790 = vmatprep.subr.bf16.mxu0 %v6677
    %6791 = vmatpush1.bf16.msra.mxu0 %v6676
    %6792 = vmatprep.subr.bf16.mxu0 %v6680
    %6793 = vmatpush1.bf16.msra.mxu0 %v6679
    %6794 = vmatprep.subr.bf16.mxu0 %v6683
    %6795 = vmatpush1.bf16.msra.mxu0 %v6682
    %6796 = vmatprep.subr.bf16.mxu0 %v6686
    %6797 = vmatpush1.bf16.msra.mxu0 %v6685
    %6798 = vmatprep.mubr.bf16.mxu0 %v6426
    %6799 = vmatmul.mubr.bf16.gmra.mrb[0].mxu0 %v6423
    %v6800 = vpop.f32.mrb[0].mxu0
    %v6801 = vadd.f32 0.0, %v6800
    %v6802 = vpop.f32.mrb[0].mxu0
    %v6803 = vadd.f32 0.0, %v6802
    %v6804 = vpop.f32.mrb[0].mxu0
    %v6805 = vadd.f32 0.0, %v6804
    %v6806 = vpop.f32.mrb[0].mxu0
    %v6807 = vadd.f32 0.0, %v6806
    %6808 = vmatprep.mubr.bf16.mxu0 %v6433
    %6809 = vmatmul.mubr.bf16.gmra.mrb[0].mxu0 %v6431
    %v6810 = vpop.f32.mrb[0].mxu0
    %v6811 = vadd.f32 0.0, %v6810
    %v6812 = vpop.f32.mrb[0].mxu0
    %v6813 = vadd.f32 0.0, %v6812
    %v6814 = vpop.f32.mrb[0].mxu0
    %v6815 = vadd.f32 0.0, %v6814
    %v6816 = vpop.f32.mrb[0].mxu0
    %v6817 = vadd.f32 0.0, %v6816
    %6818 = vdwg.mxu0
    %6819 = vmatprep.subr.bf16.mxu0 %v6689
    %6820 = vmatpush1.bf16.msra.mxu0 %v6688
    %6821 = vmatprep.subr.bf16.mxu0 %v6692
    %6822 = vmatpush1.bf16.msra.mxu0 %v6691
    %6823 = vmatprep.subr.bf16.mxu0 %v6695
    %6824 = vmatpush1.bf16.msra.mxu0 %v6694
    %6825 = vmatprep.subr.bf16.mxu0 %v6698
    %6826 = vmatpush1.bf16.msra.mxu0 %v6697
    %6827 = vmatprep.subr.bf16.mxu0 0
    %6828 = vmatpush1.bf16.msra.mxu0 0
    %6829 = vmatprep.subr.bf16.mxu0 0
    %6830 = vmatpush1.bf16.msra.mxu0 0
    %6831 = vmatprep.subr.bf16.mxu0 0
    %6832 = vmatpush1.bf16.msra.mxu0 0
    %6833 = vmatprep.subr.bf16.mxu0 0
    %6834 = vmatpush1.bf16.msra.mxu0 0
    %6835 = vmatprep.subr.bf16.mxu0 0
    %6836 = vmatpush1.bf16.msra.mxu0 0
    %6837 = vmatprep.subr.bf16.mxu0 0
    %6838 = vmatpush1.bf16.msra.mxu0 0
    %6839 = vmatprep.subr.bf16.mxu0 0
    %6840 = vmatpush1.bf16.msra.mxu0 0
    %6841 = vmatprep.subr.bf16.mxu0 0
    %6842 = vmatpush1.bf16.msra.mxu0 0
    %6843 = vmatprep.subr.bf16.mxu0 0
    %6844 = vmatpush1.bf16.msra.mxu0 0
    %6845 = vmatprep.subr.bf16.mxu0 0
    %6846 = vmatpush1.bf16.msra.mxu0 0
    %6847 = vmatprep.subr.bf16.mxu0 0
    %6848 = vmatpush1.bf16.msra.mxu0 0
    %6849 = vmatprep.subr.bf16.mxu0 0
    %6850 = vmatpush1.bf16.msra.mxu0 0
    %6851 = vmatprep.mubr.bf16.mxu0 0
    %6852 = vmatmul.mubr.bf16.gmra.mrb[0].mxu0 %v6761
    %v6853 = vpop.f32.mrb[0].mxu0
    %v6854 = vadd.f32 %v6801, %v6853
    %v6855 = vpop.f32.mrb[0].mxu0
    %v6856 = vadd.f32 %v6803, %v6855
    %v6857 = vpop.f32.mrb[0].mxu0
    %v6858 = vadd.f32 %v6805, %v6857
    %v6859 = vpop.f32.mrb[0].mxu0
    %v6860 = vadd.f32 %v6807, %v6859
    %6861 = vmatprep.mubr.bf16.mxu0 0
    %6862 = vmatmul.mubr.bf16.gmra.mrb[0].mxu0 %v6764
    %v6863 = vpop.f32.mrb[0].mxu0
    %v6864 = vadd.f32 %v6811, %v6863
    %v6865 = vpop.f32.mrb[0].mxu0
    %v6866 = vadd.f32 %v6813, %v6865
    %v6867 = vpop.f32.mrb[0].mxu0
    %v6868 = vadd.f32 %v6815, %v6867
    %v6869 = vpop.f32.mrb[0].mxu0
    %v6870 = vadd.f32 %v6817, %v6869
    %6871 = vdwg.mxu0
    %6872 = vmatprep.subr.bf16.mxu0 0
    %6873 = vmatpush1.bf16.msra.mxu0 %v6642
    %6874 = vmatprep.subr.bf16.mxu0 0
    %6875 = vmatpush1.bf16.msra.mxu0 %v6645
    %6876 = vmatprep.subr.bf16.mxu0 0
    %6877 = vmatpush1.bf16.msra.mxu0 %v6648
    %6878 = vmatprep.subr.bf16.mxu0 0
    %6879 = vmatpush1.bf16.msra.mxu0 %v6651
    %6880 = vmatprep.subr.bf16.mxu0 0
    %6881 = vmatpush1.bf16.msra.mxu0 %v6654
    %6882 = vmatprep.subr.bf16.mxu0 0
    %6883 = vmatpush1.bf16.msra.mxu0 %v6657
    %6884 = vmatprep.subr.bf16.mxu0 0
    %6885 = vmatpush1.bf16.msra.mxu0 %v6660
    %6886 = vmatprep.subr.bf16.mxu0 0
    %6887 = vmatpush1.bf16.msra.mxu0 %v6663
    %6888 = vmatprep.subr.bf16.mxu0 0
    %6889 = vmatpush1.bf16.msra.mxu0 %v6666
    %6890 = vmatprep.subr.bf16.mxu0 0
    %6891 = vmatpush1.bf16.msra.mxu0 %v6669
    %6892 = vmatprep.subr.bf16.mxu0 0
    %6893 = vmatpush1.bf16.msra.mxu0 %v6672
    %6894 = vmatprep.subr.bf16.mxu0 0
    %6895 = vmatpush1.bf16.msra.mxu0 %v6675
    %6896 = vmatprep.subr.bf16.mxu0 0
    %6897 = vmatpush1.bf16.msra.mxu0 %v6678
    %6898 = vmatprep.subr.bf16.mxu0 0
    %6899 = vmatpush1.bf16.msra.mxu0 %v6681
    %6900 = vmatprep.subr.bf16.mxu0 0
    %6901 = vmatpush1.bf16.msra.mxu0 %v6684
    %6902 = vmatprep.subr.bf16.mxu0 0
    %6903 = vmatpush1.bf16.msra.mxu0 %v6687
    %6904 = vmatprep.mubr.bf16.mxu0 %v6426
    %6905 = vmatmul.mubr.bf16.gmra.mrb[0].mxu0 %v6423
    %v6906 = vpop.f32.mrb[0].mxu0
    %v6907 = vadd.f32 0.0, %v6906
    %v6908 = vpop.f32.mrb[0].mxu0
    %v6909 = vpop.f32.mrb[0].mxu0
    %v6910 = vadd.f32 0.0, %v6909
    %v6911 = vpop.f32.mrb[0].mxu0
    %6912 = vmatprep.mubr.bf16.mxu0 %v6433
    %6913 = vmatmul.mubr.bf16.gmra.mrb[0].mxu0 %v6431
    %v6914 = vpop.f32.mrb[0].mxu0
    %v6915 = vadd.f32 0.0, %v6914
    %v6916 = vpop.f32.mrb[0].mxu0
    %v6917 = vpop.f32.mrb[0].mxu0
    %v6918 = vadd.f32 0.0, %v6917
    %v6919 = vpop.f32.mrb[0].mxu0
    %6920 = vdwg.mxu0
    %6921 = vmatprep.subr.bf16.mxu0 0
    %6922 = vmatpush1.bf16.msra.mxu0 %v6690
    %6923 = vmatprep.subr.bf16.mxu0 0
    %6924 = vmatpush1.bf16.msra.mxu0 %v6693
    %6925 = vmatprep.subr.bf16.mxu0 0
    %6926 = vmatpush1.bf16.msra.mxu0 %v6696
    %6927 = vmatprep.subr.bf16.mxu0 0
    %6928 = vmatpush1.bf16.msra.mxu0 %v6699
    %6929 = vmatprep.subr.bf16.mxu0 0
    %6930 = vmatpush1.bf16.msra.mxu0 0
    %6931 = vmatprep.subr.bf16.mxu0 0
    %6932 = vmatpush1.bf16.msra.mxu0 0
    %6933 = vmatprep.subr.bf16.mxu0 0
    %6934 = vmatpush1.bf16.msra.mxu0 0
    %6935 = vmatprep.subr.bf16.mxu0 0
    %6936 = vmatpush1.bf16.msra.mxu0 0
    %6937 = vmatprep.subr.bf16.mxu0 0
    %6938 = vmatpush1.bf16.msra.mxu0 0
    %6939 = vmatprep.subr.bf16.mxu0 0
    %6940 = vmatpush1.bf16.msra.mxu0 0
    %6941 = vmatprep.subr.bf16.mxu0 0
    %6942 = vmatpush1.bf16.msra.mxu0 0
    %6943 = vmatprep.subr.bf16.mxu0 0
    %6944 = vmatpush1.bf16.msra.mxu0 0
    %6945 = vmatprep.subr.bf16.mxu0 0
    %6946 = vmatpush1.bf16.msra.mxu0 0
    %6947 = vmatprep.subr.bf16.mxu0 0
    %6948 = vmatpush1.bf16.msra.mxu0 0
    %6949 = vmatprep.subr.bf16.mxu0 0
    %6950 = vmatpush1.bf16.msra.mxu0 0
    %6951 = vmatprep.subr.bf16.mxu0 0
    %6952 = vmatpush1.bf16.msra.mxu0 0
    %6953 = vmatprep.mubr.bf16.mxu0 0
    %6954 = vmatmul.mubr.bf16.gmra.mrb[0].mxu0 %v6761
    %v6955 = vpop.f32.mrb[0].mxu0
    %v6956 = vadd.f32 %v6907, %v6955
    %v6957 = vpop.f32.mrb[0].mxu0
    %v6958 = vpop.f32.mrb[0].mxu0
    %v6959 = vadd.f32 %v6910, %v6958
    %v6960 = vpop.f32.mrb[0].mxu0
    %6961 = vmatprep.mubr.bf16.mxu0 0
    %6962 = vmatmul.mubr.bf16.gmra.mrb[0].mxu0 %v6764
    %v6963 = vpop.f32.mrb[0].mxu0
    %v6964 = vadd.f32 %v6915, %v6963
    %v6965 = vpop.f32.mrb[0].mxu0
    %v6966 = vpop.f32.mrb[0].mxu0
    %v6967 = vadd.f32 %v6918, %v6966
    %v6968 = vpop.f32.mrb[0].mxu0
    %6969 = vdwg.mxu0
    %v6970 = vadd.f32 %v6307, %v6854
    %v6971 = vadd.f32 %v6308, %v6856
    %v6972 = vadd.f32 %v6309, %v6956
    %v6973 = vadd.f32 %v6310, %v6858
    %v6974 = vadd.f32 %v6311, %v6860
    %v6975 = vadd.f32 %v6312, %v6959
    %v6976 = vadd.f32 %v6313, %v6864
    %v6977 = vadd.f32 %v6314, %v6866
    %v6978 = vadd.f32 %v6315, %v6964
    %v6979 = vadd.f32 %v6316, %v6868
    %v6980 = vadd.f32 %v6317, %v6870
    %v6981 = vadd.f32 %v6318, %v6967
    %v6982 = vld [vmem:[%s6] sm:$0x7]
    %v6984 = vlaneseq
    %v6985 = vshrl.u32 %v6984, 7
    %v6986 = vsub.s32 0, %v6985
    %v6987 = vrot.slane %v6982, %v6986
    %v6988 = vlaneseq
    %v6989 = vshrl.u32 %v6988, 7
    %v6990 = vsub.s32 1, %v6989
    %v6991 = vrot.slane %v6982, %v6990
    %v6992 = vlaneseq
    %v6993 = vshrl.u32 %v6992, 7
    %v6994 = vsub.s32 2, %v6993
    %v6995 = vrot.slane %v6982, %v6994
    %v6999 = vadd.f32 %v6970, %v6987
    %v7000 = vadd.f32 %v6971, %v6991
    %v7001 = vadd.f32 %v6972, %v6995
    %v7002 = vadd.f32 %v6973, %v6987
    %v7003 = vadd.f32 %v6974, %v6991
    %v7004 = vadd.f32 %v6975, %v6995
    %v7005 = vadd.f32 %v6976, %v6987
    %v7006 = vadd.f32 %v6977, %v6991
    %v7007 = vadd.f32 %v6978, %v6995
    %v7008 = vadd.f32 %v6979, %v6987
    %v7009 = vadd.f32 %v6980, %v6991
    %v7010 = vadd.f32 %v6981, %v6995
    %vm7011 = vcmp.ge.f32.partialorder %v6999, 0.0
    %vm7012 = vcmp.ge.f32.partialorder %v7000, 0.0
    %vm7013 = vcmp.ge.f32.partialorder %v7001, 0.0
    %vm7014 = vcmp.ge.f32.partialorder %v7002, 0.0
    %vm7015 = vcmp.ge.f32.partialorder %v7003, 0.0
    %vm7016 = vcmp.ge.f32.partialorder %v7004, 0.0
    %vm7017 = vcmp.ge.f32.partialorder %v7005, 0.0
    %vm7018 = vcmp.ge.f32.partialorder %v7006, 0.0
    %vm7019 = vcmp.ge.f32.partialorder %v7007, 0.0
    %vm7020 = vcmp.ge.f32.partialorder %v7008, 0.0
    %vm7021 = vcmp.ge.f32.partialorder %v7009, 0.0
    %vm7022 = vcmp.ge.f32.partialorder %v7010, 0.0
    %v7023 = vmul.f32 %v6999, 0.01
    %v7024 = vmul.f32 %v7000, 0.01
    %v7025 = vmul.f32 %v7001, 0.01
    %v7026 = vmul.f32 %v7002, 0.01
    %v7027 = vmul.f32 %v7003, 0.01
    %v7028 = vmul.f32 %v7004, 0.01
    %v7029 = vmul.f32 %v7005, 0.01
    %v7030 = vmul.f32 %v7006, 0.01
    %v7031 = vmul.f32 %v7007, 0.01
    %v7032 = vmul.f32 %v7008, 0.01
    %v7033 = vmul.f32 %v7009, 0.01
    %v7034 = vmul.f32 %v7010, 0.01
    %v7035 = vsel %vm7011, %v6999, %v7023
    %v7036 = vsel %vm7012, %v7000, %v7024
    %v7037 = vsel %vm7013, %v7001, %v7025
    %v7038 = vsel %vm7014, %v7002, %v7026
    %v7039 = vsel %vm7015, %v7003, %v7027
    %v7040 = vsel %vm7016, %v7004, %v7028
    %v7041 = vsel %vm7017, %v7005, %v7029
    %v7042 = vsel %vm7018, %v7006, %v7030
    %v7043 = vsel %vm7019, %v7007, %v7031
    %v7044 = vsel %vm7020, %v7008, %v7032
    %v7045 = vsel %vm7021, %v7009, %v7033
    %v7046 = vsel %vm7022, %v7010, %v7034
    %v7047 = vpack.c.bf16 %v7038, %v7035
    %v7048 = vpack.c.bf16 %v7039, %v7036
    %v7049 = vpack.c.bf16 %v7040, %v7037
    %v7050 = vpack.c.bf16 %v7044, %v7041
    %v7051 = vpack.c.bf16 %v7045, %v7042
    %v7052 = vpack.c.bf16 %v7046, %v7043
    %7053 = vst [vmem:[#allocation3] sm:$0xff] %v7047
    %7054 = vst [vmem:[#allocation3 + $0x8] sm:$0xff] %v7048
    %vm7055 = vcmask 261120
    %7056 = vst.msk [vmem:[#allocation3 + $0x10] sm:$0xff] %vm7055, %v7049
    %7057 = vst [vmem:[#allocation3 + $0x18] sm:$0xff] %v7050
    %7058 = vst [vmem:[#allocation3 + $0x20] sm:$0xff] %v7051
    %7059 = vst.msk [vmem:[#allocation3 + $0x28] sm:$0xff] %vm7055, %v7052
    %v7060 = vld [vmem:[#allocation3] sm:$0x1]
    %v7061 = vld [vmem:[#allocation3 + $0x8] sm:$0x1]
    %v7062 = vld [vmem:[#allocation3 + $0x10] sm:$0x1]
    %v7063 = vld [vmem:[%s7] sm:$0xf]
    %v7064 = vld [vmem:[%s7 + $0x4] sm:$0xf]
    %v7065 = vld [vmem:[%s7 + $0x8] sm:$0xf]
    %v7066 = vld [vmem:[%s7 + $0xc] sm:$0xf]
    %v7067 = vld [vmem:[%s7 + $0x10] sm:$0xf]
    %v7068 = vld [vmem:[%s7 + $0x14] sm:$0xf]
    %v7069 = vld [vmem:[%s7 + $0x18] sm:$0xf]
    %v7070 = vld [vmem:[%s7 + $0x1c] sm:$0xf]
    %v7071 = vld [vmem:[%s7 + $0x20] sm:$0xf]
    %v7072 = vld [vmem:[%s7 + $0x24] sm:$0xf]
    %v7073 = vld [vmem:[%s7 + $0x28] sm:$0xf]
    %v7074 = vld [vmem:[%s7 + $0x2c] sm:$0xf]
    %v7075 = vld [vmem:[%s7 + $0x30] sm:$0xf]
    %v7076 = vld [vmem:[%s7 + $0x34] sm:$0xf]
    %v7077 = vld [vmem:[%s7 + $0x38] sm:$0xf]
    %v7078 = vld [vmem:[%s7 + $0x3c] sm:$0xf]
    %v7079 = vld [vmem:[%s7 + $0x40] sm:$0xf]
    %v7080 = vld [vmem:[%s7 + $0x44] sm:$0xf]
    %v7081 = vld [vmem:[%s7 + $0x48] sm:$0xf]
    %v7082 = vld [vmem:[%s7 + $0x4c] sm:$0xf]
    %v7083 = vld [vmem:[%s7 + $0x50] sm:$0xf]
    %v7084 = vld [vmem:[%s7 + $0x54] sm:$0xf]
    %v7085 = vld [vmem:[%s7 + $0x58] sm:$0xf]
    %v7086 = vld [vmem:[%s7 + $0x5c] sm:$0xf]
    %v7087 = vld [vmem:[%s7 + $0x60] sm:$0xf]
    %v7088 = vld [vmem:[%s7 + $0x64] sm:$0xf]
    %v7089 = vld [vmem:[%s7 + $0x68] sm:$0xf]
    %v7090 = vld [vmem:[%s7 + $0x6c] sm:$0xf]
    %v7091 = vld [vmem:[%s7 + $0x70] sm:$0xf]
    %v7092 = vld [vmem:[%s7 + $0x74] sm:$0xf]
    %v7093 = vld [vmem:[%s7 + $0x78] sm:$0xf]
    %v7094 = vld [vmem:[%s7 + $0x7c] sm:$0xf]
    %v7095 = vld [vmem:[%s7 + $0x80] sm:$0xf]
    %v7096 = vld [vmem:[%s7 + $0x84] sm:$0xf]
    %v7097 = vld [vmem:[%s7 + $0x88] sm:$0xf]
    %v7098 = vld [vmem:[%s7 + $0x8c] sm:$0xf]
    %v7099 = vld [vmem:[#allocation3] sm:$0x2]
    %v7100 = vld [vmem:[#allocation3 + $0x8] sm:$0x2]
    %v7101 = vld [vmem:[#allocation3 + $0x10] sm:$0x2]
    %s7102 = scalar_lea.vmem %s7, 144
    %v7103 = vld [vmem:[%s7102] sm:$0xf]
    %v7104 = vld [vmem:[%s7102 + $0x4] sm:$0xf]
    %v7105 = vld [vmem:[%s7102 + $0x8] sm:$0xf]
    %v7106 = vld [vmem:[%s7102 + $0xc] sm:$0xf]
    %v7107 = vld [vmem:[%s7102 + $0x10] sm:$0xf]
    %v7108 = vld [vmem:[%s7102 + $0x14] sm:$0xf]
    %v7109 = vld [vmem:[%s7102 + $0x18] sm:$0xf]
    %v7110 = vld [vmem:[%s7102 + $0x1c] sm:$0xf]
    %v7111 = vld [vmem:[%s7102 + $0x20] sm:$0xf]
    %v7112 = vld [vmem:[%s7102 + $0x24] sm:$0xf]
    %v7113 = vld [vmem:[%s7102 + $0x28] sm:$0xf]
    %v7114 = vld [vmem:[%s7102 + $0x2c] sm:$0xf]
    %v7115 = vld [vmem:[%s7102 + $0x30] sm:$0xf]
    %v7116 = vld [vmem:[%s7102 + $0x34] sm:$0xf]
    %v7117 = vld [vmem:[%s7102 + $0x38] sm:$0xf]
    %v7118 = vld [vmem:[%s7102 + $0x3c] sm:$0xf]
    %v7119 = vld [vmem:[%s7102 + $0x40] sm:$0xf]
    %v7120 = vld [vmem:[%s7102 + $0x44] sm:$0xf]
    %v7121 = vld [vmem:[%s7102 + $0x48] sm:$0xf]
    %v7122 = vld [vmem:[%s7102 + $0x4c] sm:$0xf]
    %v7123 = vld [vmem:[%s7102 + $0x50] sm:$0xf]
    %v7124 = vld [vmem:[%s7102 + $0x54] sm:$0xf]
    %v7125 = vld [vmem:[%s7102 + $0x58] sm:$0xf]
    %v7126 = vld [vmem:[%s7102 + $0x5c] sm:$0xf]
    %v7127 = vld [vmem:[%s7102 + $0x60] sm:$0xf]
    %v7128 = vld [vmem:[%s7102 + $0x64] sm:$0xf]
    %v7129 = vld [vmem:[%s7102 + $0x68] sm:$0xf]
    %v7130 = vld [vmem:[%s7102 + $0x6c] sm:$0xf]
    %v7131 = vld [vmem:[%s7102 + $0x70] sm:$0xf]
    %v7132 = vld [vmem:[%s7102 + $0x74] sm:$0xf]
    %v7133 = vld [vmem:[%s7102 + $0x78] sm:$0xf]
    %v7134 = vld [vmem:[%s7102 + $0x7c] sm:$0xf]
    %v7135 = vld [vmem:[%s7102 + $0x80] sm:$0xf]
    %v7136 = vld [vmem:[%s7102 + $0x84] sm:$0xf]
    %v7137 = vld [vmem:[%s7102 + $0x88] sm:$0xf]
    %v7138 = vld [vmem:[%s7102 + $0x8c] sm:$0xf]
    %v7142 = vrot.slane %v7099, 1
    %v7143 = vrot.slane %v7100, 1
    %v7144 = vrot.slane %v7101, 1
    %v7183 = vunpack.c.l.b16 %v7103
    %v7184 = vunpack.c.l.b16 %v7104
    %v7185 = vunpack.c.l.b16 %v7105
    %v7186 = vunpack.c.l.b16 %v7106
    %v7187 = vunpack.c.l.b16 %v7107
    %v7188 = vunpack.c.l.b16 %v7108
    %v7189 = vunpack.c.l.b16 %v7109
    %v7190 = vunpack.c.l.b16 %v7110
    %v7191 = vunpack.c.l.b16 %v7111
    %v7192 = vunpack.c.l.b16 %v7112
    %v7193 = vunpack.c.l.b16 %v7113
    %v7194 = vunpack.c.l.b16 %v7114
    %v7195 = vunpack.c.l.b16 %v7115
    %v7196 = vunpack.c.l.b16 %v7116
    %v7197 = vunpack.c.l.b16 %v7117
    %v7198 = vunpack.c.l.b16 %v7118
    %v7199 = vunpack.c.l.b16 %v7119
    %v7200 = vunpack.c.l.b16 %v7120
    %v7201 = vunpack.c.l.b16 %v7121
    %v7202 = vunpack.c.l.b16 %v7122
    %v7203 = vunpack.c.l.b16 %v7123
    %v7204 = vunpack.c.l.b16 %v7124
    %v7205 = vunpack.c.l.b16 %v7125
    %v7206 = vunpack.c.l.b16 %v7126
    %v7207 = vunpack.c.l.b16 %v7127
    %v7208 = vunpack.c.l.b16 %v7128
    %v7209 = vunpack.c.l.b16 %v7129
    %v7210 = vunpack.c.l.b16 %v7130
    %v7211 = vunpack.c.l.b16 %v7131
    %v7212 = vunpack.c.l.b16 %v7132
    %v7213 = vunpack.c.l.b16 %v7133
    %v7214 = vunpack.c.l.b16 %v7134
    %v7215 = vunpack.c.l.b16 %v7135
    %v7216 = vunpack.c.l.b16 %v7136
    %v7217 = vunpack.c.l.b16 %v7137
    %v7218 = vunpack.c.l.b16 %v7138
    %v7219 = vpack.c.b16 %v7184, %v7183
    %v7220 = vpack.c.b16 %v7186, %v7185
    %v7221 = vpack.c.b16 %v7188, %v7187
    %v7222 = vpack.c.b16 %v7190, %v7189
    %v7223 = vpack.c.b16 %v7192, %v7191
    %v7224 = vpack.c.b16 %v7194, %v7193
    %v7225 = vpack.c.b16 %v7196, %v7195
    %v7226 = vpack.c.b16 %v7198, %v7197
    %v7227 = vpack.c.b16 %v7200, %v7199
    %v7228 = vpack.c.b16 %v7202, %v7201
    %v7229 = vpack.c.b16 %v7204, %v7203
    %v7230 = vpack.c.b16 %v7206, %v7205
    %v7231 = vpack.c.b16 %v7208, %v7207
    %v7232 = vpack.c.b16 %v7210, %v7209
    %v7233 = vpack.c.b16 %v7212, %v7211
    %v7234 = vpack.c.b16 %v7214, %v7213
    %v7235 = vpack.c.b16 %v7216, %v7215
    %v7236 = vpack.c.b16 %v7218, %v7217
    %v7256 = vsel %vm7055, %v7144, 0
    %7258 = vmatprep.subr.bf16.mxu0 0
    %7259 = vmatpush1.bf16.msra.mxu0 %v7219
    %7260 = vmatprep.subr.bf16.mxu0 0
    %7261 = vmatpush1.bf16.msra.mxu0 %v7220
    %7262 = vmatprep.subr.bf16.mxu0 0
    %7263 = vmatpush1.bf16.msra.mxu0 %v7221
    %7264 = vmatprep.subr.bf16.mxu0 0
    %7265 = vmatpush1.bf16.msra.mxu0 %v7222
    %7266 = vmatprep.subr.bf16.mxu0 0
    %7267 = vmatpush1.bf16.msra.mxu0 %v7223
    %7268 = vmatprep.subr.bf16.mxu0 0
    %7269 = vmatpush1.bf16.msra.mxu0 %v7224
    %7270 = vmatprep.subr.bf16.mxu0 0
    %7271 = vmatpush1.bf16.msra.mxu0 %v7225
    %7272 = vmatprep.subr.bf16.mxu0 0
    %7273 = vmatpush1.bf16.msra.mxu0 %v7226
    %7274 = vmatprep.subr.bf16.mxu0 0
    %7275 = vmatpush1.bf16.msra.mxu0 %v7227
    %7276 = vmatprep.subr.bf16.mxu0 0
    %7277 = vmatpush1.bf16.msra.mxu0 %v7228
    %7278 = vmatprep.subr.bf16.mxu0 0
    %7279 = vmatpush1.bf16.msra.mxu0 %v7229
    %7280 = vmatprep.subr.bf16.mxu0 0
    %7281 = vmatpush1.bf16.msra.mxu0 %v7230
    %7282 = vmatprep.subr.bf16.mxu0 0
    %7283 = vmatpush1.bf16.msra.mxu0 %v7231
    %7284 = vmatprep.subr.bf16.mxu0 0
    %7285 = vmatpush1.bf16.msra.mxu0 %v7232
    %7286 = vmatprep.subr.bf16.mxu0 0
    %7287 = vmatpush1.bf16.msra.mxu0 %v7233
    %7288 = vmatprep.subr.bf16.mxu0 0
    %7289 = vmatpush1.bf16.msra.mxu0 %v7234
    %7290 = vmatprep.mubr.bf16.mxu0 %v7143
    %7291 = vmatmul.mubr.bf16.gmra.mrb[0].mxu0 %v7142
    %v7292 = vpop.f32.mrb[0].mxu0
    %v7293 = vadd.f32 0.0, %v7292
    %v7294 = vpop.f32.mrb[0].mxu0
    %v7295 = vpop.f32.mrb[0].mxu0
    %v7296 = vpop.f32.mrb[0].mxu0
    %7297 = vdwg.mxu0
    %7298 = vmatprep.subr.bf16.mxu0 0
    %7299 = vmatpush1.bf16.msra.mxu0 %v7235
    %7300 = vmatprep.subr.bf16.mxu0 0
    %7301 = vmatpush1.bf16.msra.mxu0 %v7236
    %7302 = vmatprep.subr.bf16.mxu0 0
    %7303 = vmatpush1.bf16.msra.mxu0 0
    %7304 = vmatprep.subr.bf16.mxu0 0
    %7305 = vmatpush1.bf16.msra.mxu0 0
    %7306 = vmatprep.subr.bf16.mxu0 0
    %7307 = vmatpush1.bf16.msra.mxu0 0
    %7308 = vmatprep.subr.bf16.mxu0 0
    %7309 = vmatpush1.bf16.msra.mxu0 0
    %7310 = vmatprep.subr.bf16.mxu0 0
    %7311 = vmatpush1.bf16.msra.mxu0 0
    %7312 = vmatprep.subr.bf16.mxu0 0
    %7313 = vmatpush1.bf16.msra.mxu0 0
    %7314 = vmatprep.subr.bf16.mxu0 0
    %7315 = vmatpush1.bf16.msra.mxu0 0
    %7316 = vmatprep.subr.bf16.mxu0 0
    %7317 = vmatpush1.bf16.msra.mxu0 0
    %7318 = vmatprep.subr.bf16.mxu0 0
    %7319 = vmatpush1.bf16.msra.mxu0 0
    %7320 = vmatprep.subr.bf16.mxu0 0
    %7321 = vmatpush1.bf16.msra.mxu0 0
    %7322 = vmatprep.subr.bf16.mxu0 0
    %7323 = vmatpush1.bf16.msra.mxu0 0
    %7324 = vmatprep.subr.bf16.mxu0 0
    %7325 = vmatpush1.bf16.msra.mxu0 0
    %7326 = vmatprep.subr.bf16.mxu0 0
    %7327 = vmatpush1.bf16.msra.mxu0 0
    %7328 = vmatprep.subr.bf16.mxu0 0
    %7329 = vmatpush1.bf16.msra.mxu0 0
    %7330 = vmatprep.mubr.bf16.mxu0 0
    %7331 = vmatmul.mubr.bf16.gmra.mrb[0].mxu0 %v7256
    %v7332 = vpop.f32.mrb[0].mxu0
    %v7333 = vadd.f32 %v7293, %v7332
    %v7334 = vpop.f32.mrb[0].mxu0
    %v7335 = vpop.f32.mrb[0].mxu0
    %v7336 = vpop.f32.mrb[0].mxu0
    %7337 = vdwg.mxu0
    %v7374 = vunpack.c.l.b16 %v7063
    %v7375 = vunpack.c.l.b16 %v7064
    %v7376 = vunpack.c.l.b16 %v7065
    %v7377 = vunpack.c.l.b16 %v7066
    %v7378 = vunpack.c.l.b16 %v7067
    %v7379 = vunpack.c.l.b16 %v7068
    %v7380 = vunpack.c.l.b16 %v7069
    %v7381 = vunpack.c.l.b16 %v7070
    %v7382 = vunpack.c.l.b16 %v7071
    %v7383 = vunpack.c.l.b16 %v7072
    %v7384 = vunpack.c.l.b16 %v7073
    %v7385 = vunpack.c.l.b16 %v7074
    %v7386 = vunpack.c.l.b16 %v7075
    %v7387 = vunpack.c.l.b16 %v7076
    %v7388 = vunpack.c.l.b16 %v7077
    %v7389 = vunpack.c.l.b16 %v7078
    %v7390 = vunpack.c.l.b16 %v7079
    %v7391 = vunpack.c.l.b16 %v7080
    %v7392 = vunpack.c.l.b16 %v7081
    %v7393 = vunpack.c.l.b16 %v7082
    %v7394 = vunpack.c.l.b16 %v7083
    %v7395 = vunpack.c.l.b16 %v7084
    %v7396 = vunpack.c.l.b16 %v7085
    %v7397 = vunpack.c.l.b16 %v7086
    %v7398 = vunpack.c.l.b16 %v7087
    %v7399 = vunpack.c.l.b16 %v7088
    %v7400 = vunpack.c.l.b16 %v7089
    %v7401 = vunpack.c.l.b16 %v7090
    %v7402 = vunpack.c.l.b16 %v7091
    %v7403 = vunpack.c.l.b16 %v7092
    %v7404 = vunpack.c.l.b16 %v7093
    %v7405 = vunpack.c.l.b16 %v7094
    %v7406 = vunpack.c.l.b16 %v7095
    %v7407 = vunpack.c.l.b16 %v7096
    %v7408 = vunpack.c.l.b16 %v7097
    %v7409 = vunpack.c.l.b16 %v7098
    %v7410 = vpack.c.b16 %v7375, %v7374
    %v7411 = vpack.c.b16 %v7377, %v7376
    %v7412 = vpack.c.b16 %v7379, %v7378
    %v7413 = vpack.c.b16 %v7381, %v7380
    %v7414 = vpack.c.b16 %v7383, %v7382
    %v7415 = vpack.c.b16 %v7385, %v7384
    %v7416 = vpack.c.b16 %v7387, %v7386
    %v7417 = vpack.c.b16 %v7389, %v7388
    %v7418 = vpack.c.b16 %v7391, %v7390
    %v7419 = vpack.c.b16 %v7393, %v7392
    %v7420 = vpack.c.b16 %v7395, %v7394
    %v7421 = vpack.c.b16 %v7397, %v7396
    %v7422 = vpack.c.b16 %v7399, %v7398
    %v7423 = vpack.c.b16 %v7401, %v7400
    %v7424 = vpack.c.b16 %v7403, %v7402
    %v7425 = vpack.c.b16 %v7405, %v7404
    %v7426 = vpack.c.b16 %v7407, %v7406
    %v7427 = vpack.c.b16 %v7409, %v7408
    %v7447 = vsel %vm7055, %v7062, 0
    %7449 = vmatprep.subr.bf16.mxu0 0
    %7450 = vmatpush1.bf16.msra.mxu0 %v7410
    %7451 = vmatprep.subr.bf16.mxu0 0
    %7452 = vmatpush1.bf16.msra.mxu0 %v7411
    %7453 = vmatprep.subr.bf16.mxu0 0
    %7454 = vmatpush1.bf16.msra.mxu0 %v7412
    %7455 = vmatprep.subr.bf16.mxu0 0
    %7456 = vmatpush1.bf16.msra.mxu0 %v7413
    %7457 = vmatprep.subr.bf16.mxu0 0
    %7458 = vmatpush1.bf16.msra.mxu0 %v7414
    %7459 = vmatprep.subr.bf16.mxu0 0
    %7460 = vmatpush1.bf16.msra.mxu0 %v7415
    %7461 = vmatprep.subr.bf16.mxu0 0
    %7462 = vmatpush1.bf16.msra.mxu0 %v7416
    %7463 = vmatprep.subr.bf16.mxu0 0
    %7464 = vmatpush1.bf16.msra.mxu0 %v7417
    %7465 = vmatprep.subr.bf16.mxu0 0
    %7466 = vmatpush1.bf16.msra.mxu0 %v7418
    %7467 = vmatprep.subr.bf16.mxu0 0
    %7468 = vmatpush1.bf16.msra.mxu0 %v7419
    %7469 = vmatprep.subr.bf16.mxu0 0
    %7470 = vmatpush1.bf16.msra.mxu0 %v7420
    %7471 = vmatprep.subr.bf16.mxu0 0
    %7472 = vmatpush1.bf16.msra.mxu0 %v7421
    %7473 = vmatprep.subr.bf16.mxu0 0
    %7474 = vmatpush1.bf16.msra.mxu0 %v7422
    %7475 = vmatprep.subr.bf16.mxu0 0
    %7476 = vmatpush1.bf16.msra.mxu0 %v7423
    %7477 = vmatprep.subr.bf16.mxu0 0
    %7478 = vmatpush1.bf16.msra.mxu0 %v7424
    %7479 = vmatprep.subr.bf16.mxu0 0
    %7480 = vmatpush1.bf16.msra.mxu0 %v7425
    %7481 = vmatprep.mubr.bf16.mxu0 %v7061
    %7482 = vmatmul.mubr.bf16.gmra.mrb[0].mxu0 %v7060
    %v7483 = vpop.f32.mrb[0].mxu0
    %v7484 = vadd.f32 %v7333, %v7483
    %v7485 = vpop.f32.mrb[0].mxu0
    %v7486 = vpop.f32.mrb[0].mxu0
    %v7487 = vpop.f32.mrb[0].mxu0
    %7488 = vdwg.mxu0
    %7489 = vmatprep.subr.bf16.mxu0 0
    %7490 = vmatpush1.bf16.msra.mxu0 %v7426
    %7491 = vmatprep.subr.bf16.mxu0 0
    %7492 = vmatpush1.bf16.msra.mxu0 %v7427
    %7493 = vmatprep.subr.bf16.mxu0 0
    %7494 = vmatpush1.bf16.msra.mxu0 0
    %7495 = vmatprep.subr.bf16.mxu0 0
    %7496 = vmatpush1.bf16.msra.mxu0 0
    %7497 = vmatprep.subr.bf16.mxu0 0
    %7498 = vmatpush1.bf16.msra.mxu0 0
    %7499 = vmatprep.subr.bf16.mxu0 0
    %7500 = vmatpush1.bf16.msra.mxu0 0
    %7501 = vmatprep.subr.bf16.mxu0 0
    %7502 = vmatpush1.bf16.msra.mxu0 0
    %7503 = vmatprep.subr.bf16.mxu0 0
    %7504 = vmatpush1.bf16.msra.mxu0 0
    %7505 = vmatprep.subr.bf16.mxu0 0
    %7506 = vmatpush1.bf16.msra.mxu0 0
    %7507 = vmatprep.subr.bf16.mxu0 0
    %7508 = vmatpush1.bf16.msra.mxu0 0
    %7509 = vmatprep.subr.bf16.mxu0 0
    %7510 = vmatpush1.bf16.msra.mxu0 0
    %7511 = vmatprep.subr.bf16.mxu0 0
    %7512 = vmatpush1.bf16.msra.mxu0 0
    %7513 = vmatprep.subr.bf16.mxu0 0
    %7514 = vmatpush1.bf16.msra.mxu0 0
    %7515 = vmatprep.subr.bf16.mxu0 0
    %7516 = vmatpush1.bf16.msra.mxu0 0
    %7517 = vmatprep.subr.bf16.mxu0 0
    %7518 = vmatpush1.bf16.msra.mxu0 0
    %7519 = vmatprep.subr.bf16.mxu0 0
    %7520 = vmatpush1.bf16.msra.mxu0 0
    %7521 = vmatprep.mubr.bf16.mxu0 0
    %7522 = vmatmul.mubr.bf16.gmra.mrb[0].mxu0 %v7447
    %v7523 = vpop.f32.mrb[0].mxu0
    %v7524 = vadd.f32 %v7484, %v7523
    %v7525 = vpop.f32.mrb[0].mxu0
    %v7526 = vpop.f32.mrb[0].mxu0
    %v7527 = vpop.f32.mrb[0].mxu0
    %7528 = vdwg.mxu0
    %v7529 = vld [vmem:[#allocation3] sm:$0x4]
    %v7530 = vld [vmem:[#allocation3 + $0x8] sm:$0x4]
    %v7531 = vld [vmem:[#allocation3 + $0x10] sm:$0x4]
    %s7532 = scalar_lea.vmem %s7, 288
    %v7533 = vld [vmem:[%s7532] sm:$0xf]
    %v7534 = vld [vmem:[%s7532 + $0x4] sm:$0xf]
    %v7535 = vld [vmem:[%s7532 + $0x8] sm:$0xf]
    %v7536 = vld [vmem:[%s7532 + $0xc] sm:$0xf]
    %v7537 = vld [vmem:[%s7532 + $0x10] sm:$0xf]
    %v7538 = vld [vmem:[%s7532 + $0x14] sm:$0xf]
    %v7539 = vld [vmem:[%s7532 + $0x18] sm:$0xf]
    %v7540 = vld [vmem:[%s7532 + $0x1c] sm:$0xf]
    %v7541 = vld [vmem:[%s7532 + $0x20] sm:$0xf]
    %v7542 = vld [vmem:[%s7532 + $0x24] sm:$0xf]
    %v7543 = vld [vmem:[%s7532 + $0x28] sm:$0xf]
    %v7544 = vld [vmem:[%s7532 + $0x2c] sm:$0xf]
    %v7545 = vld [vmem:[%s7532 + $0x30] sm:$0xf]
    %v7546 = vld [vmem:[%s7532 + $0x34] sm:$0xf]
    %v7547 = vld [vmem:[%s7532 + $0x38] sm:$0xf]
    %v7548 = vld [vmem:[%s7532 + $0x3c] sm:$0xf]
    %v7549 = vld [vmem:[%s7532 + $0x40] sm:$0xf]
    %v7550 = vld [vmem:[%s7532 + $0x44] sm:$0xf]
    %v7551 = vld [vmem:[%s7532 + $0x48] sm:$0xf]
    %v7552 = vld [vmem:[%s7532 + $0x4c] sm:$0xf]
    %v7553 = vld [vmem:[%s7532 + $0x50] sm:$0xf]
    %v7554 = vld [vmem:[%s7532 + $0x54] sm:$0xf]
    %v7555 = vld [vmem:[%s7532 + $0x58] sm:$0xf]
    %v7556 = vld [vmem:[%s7532 + $0x5c] sm:$0xf]
    %v7557 = vld [vmem:[%s7532 + $0x60] sm:$0xf]
    %v7558 = vld [vmem:[%s7532 + $0x64] sm:$0xf]
    %v7559 = vld [vmem:[%s7532 + $0x68] sm:$0xf]
    %v7560 = vld [vmem:[%s7532 + $0x6c] sm:$0xf]
    %v7561 = vld [vmem:[%s7532 + $0x70] sm:$0xf]
    %v7562 = vld [vmem:[%s7532 + $0x74] sm:$0xf]
    %v7563 = vld [vmem:[%s7532 + $0x78] sm:$0xf]
    %v7564 = vld [vmem:[%s7532 + $0x7c] sm:$0xf]
    %v7565 = vld [vmem:[%s7532 + $0x80] sm:$0xf]
    %v7566 = vld [vmem:[%s7532 + $0x84] sm:$0xf]
    %v7567 = vld [vmem:[%s7532 + $0x88] sm:$0xf]
    %v7568 = vld [vmem:[%s7532 + $0x8c] sm:$0xf]
    %v7572 = vrot.slane %v7529, 2
    %v7573 = vrot.slane %v7530, 2
    %v7574 = vrot.slane %v7531, 2
    %v7613 = vunpack.c.l.b16 %v7533
    %v7614 = vunpack.c.l.b16 %v7534
    %v7615 = vunpack.c.l.b16 %v7535
    %v7616 = vunpack.c.l.b16 %v7536
    %v7617 = vunpack.c.l.b16 %v7537
    %v7618 = vunpack.c.l.b16 %v7538
    %v7619 = vunpack.c.l.b16 %v7539
    %v7620 = vunpack.c.l.b16 %v7540
    %v7621 = vunpack.c.l.b16 %v7541
    %v7622 = vunpack.c.l.b16 %v7542
    %v7623 = vunpack.c.l.b16 %v7543
    %v7624 = vunpack.c.l.b16 %v7544
    %v7625 = vunpack.c.l.b16 %v7545
    %v7626 = vunpack.c.l.b16 %v7546
    %v7627 = vunpack.c.l.b16 %v7547
    %v7628 = vunpack.c.l.b16 %v7548
    %v7629 = vunpack.c.l.b16 %v7549
    %v7630 = vunpack.c.l.b16 %v7550
    %v7631 = vunpack.c.l.b16 %v7551
    %v7632 = vunpack.c.l.b16 %v7552
    %v7633 = vunpack.c.l.b16 %v7553
    %v7634 = vunpack.c.l.b16 %v7554
    %v7635 = vunpack.c.l.b16 %v7555
    %v7636 = vunpack.c.l.b16 %v7556
    %v7637 = vunpack.c.l.b16 %v7557
    %v7638 = vunpack.c.l.b16 %v7558
    %v7639 = vunpack.c.l.b16 %v7559
    %v7640 = vunpack.c.l.b16 %v7560
    %v7641 = vunpack.c.l.b16 %v7561
    %v7642 = vunpack.c.l.b16 %v7562
    %v7643 = vunpack.c.l.b16 %v7563
    %v7644 = vunpack.c.l.b16 %v7564
    %v7645 = vunpack.c.l.b16 %v7565
    %v7646 = vunpack.c.l.b16 %v7566
    %v7647 = vunpack.c.l.b16 %v7567
    %v7648 = vunpack.c.l.b16 %v7568
    %v7649 = vpack.c.b16 %v7614, %v7613
    %v7650 = vpack.c.b16 %v7616, %v7615
    %v7651 = vpack.c.b16 %v7618, %v7617
    %v7652 = vpack.c.b16 %v7620, %v7619
    %v7653 = vpack.c.b16 %v7622, %v7621
    %v7654 = vpack.c.b16 %v7624, %v7623
    %v7655 = vpack.c.b16 %v7626, %v7625
    %v7656 = vpack.c.b16 %v7628, %v7627
    %v7657 = vpack.c.b16 %v7630, %v7629
    %v7658 = vpack.c.b16 %v7632, %v7631
    %v7659 = vpack.c.b16 %v7634, %v7633
    %v7660 = vpack.c.b16 %v7636, %v7635
    %v7661 = vpack.c.b16 %v7638, %v7637
    %v7662 = vpack.c.b16 %v7640, %v7639
    %v7663 = vpack.c.b16 %v7642, %v7641
    %v7664 = vpack.c.b16 %v7644, %v7643
    %v7665 = vpack.c.b16 %v7646, %v7645
    %v7666 = vpack.c.b16 %v7648, %v7647
    %v7686 = vsel %vm7055, %v7574, 0
    %7688 = vmatprep.subr.bf16.mxu0 0
    %7689 = vmatpush1.bf16.msra.mxu0 %v7649
    %7690 = vmatprep.subr.bf16.mxu0 0
    %7691 = vmatpush1.bf16.msra.mxu0 %v7650
    %7692 = vmatprep.subr.bf16.mxu0 0
    %7693 = vmatpush1.bf16.msra.mxu0 %v7651
    %7694 = vmatprep.subr.bf16.mxu0 0
    %7695 = vmatpush1.bf16.msra.mxu0 %v7652
    %7696 = vmatprep.subr.bf16.mxu0 0
    %7697 = vmatpush1.bf16.msra.mxu0 %v7653
    %7698 = vmatprep.subr.bf16.mxu0 0
    %7699 = vmatpush1.bf16.msra.mxu0 %v7654
    %7700 = vmatprep.subr.bf16.mxu0 0
    %7701 = vmatpush1.bf16.msra.mxu0 %v7655
    %7702 = vmatprep.subr.bf16.mxu0 0
    %7703 = vmatpush1.bf16.msra.mxu0 %v7656
    %7704 = vmatprep.subr.bf16.mxu0 0
    %7705 = vmatpush1.bf16.msra.mxu0 %v7657
    %7706 = vmatprep.subr.bf16.mxu0 0
    %7707 = vmatpush1.bf16.msra.mxu0 %v7658
    %7708 = vmatprep.subr.bf16.mxu0 0
    %7709 = vmatpush1.bf16.msra.mxu0 %v7659
    %7710 = vmatprep.subr.bf16.mxu0 0
    %7711 = vmatpush1.bf16.msra.mxu0 %v7660
    %7712 = vmatprep.subr.bf16.mxu0 0
    %7713 = vmatpush1.bf16.msra.mxu0 %v7661
    %7714 = vmatprep.subr.bf16.mxu0 0
    %7715 = vmatpush1.bf16.msra.mxu0 %v7662
    %7716 = vmatprep.subr.bf16.mxu0 0
    %7717 = vmatpush1.bf16.msra.mxu0 %v7663
    %7718 = vmatprep.subr.bf16.mxu0 0
    %7719 = vmatpush1.bf16.msra.mxu0 %v7664
    %7720 = vmatprep.mubr.bf16.mxu0 %v7573
    %7721 = vmatmul.mubr.bf16.gmra.mrb[0].mxu0 %v7572
    %v7722 = vpop.f32.mrb[0].mxu0
    %v7723 = vadd.f32 0.0, %v7722
    %v7724 = vpop.f32.mrb[0].mxu0
    %v7725 = vpop.f32.mrb[0].mxu0
    %v7726 = vpop.f32.mrb[0].mxu0
    %7727 = vdwg.mxu0
    %7728 = vmatprep.subr.bf16.mxu0 0
    %7729 = vmatpush1.bf16.msra.mxu0 %v7665
    %7730 = vmatprep.subr.bf16.mxu0 0
    %7731 = vmatpush1.bf16.msra.mxu0 %v7666
    %7732 = vmatprep.subr.bf16.mxu0 0
    %7733 = vmatpush1.bf16.msra.mxu0 0
    %7734 = vmatprep.subr.bf16.mxu0 0
    %7735 = vmatpush1.bf16.msra.mxu0 0
    %7736 = vmatprep.subr.bf16.mxu0 0
    %7737 = vmatpush1.bf16.msra.mxu0 0
    %7738 = vmatprep.subr.bf16.mxu0 0
    %7739 = vmatpush1.bf16.msra.mxu0 0
    %7740 = vmatprep.subr.bf16.mxu0 0
    %7741 = vmatpush1.bf16.msra.mxu0 0
    %7742 = vmatprep.subr.bf16.mxu0 0
    %7743 = vmatpush1.bf16.msra.mxu0 0
    %7744 = vmatprep.subr.bf16.mxu0 0
    %7745 = vmatpush1.bf16.msra.mxu0 0
    %7746 = vmatprep.subr.bf16.mxu0 0
    %7747 = vmatpush1.bf16.msra.mxu0 0
    %7748 = vmatprep.subr.bf16.mxu0 0
    %7749 = vmatpush1.bf16.msra.mxu0 0
    %7750 = vmatprep.subr.bf16.mxu0 0
    %7751 = vmatpush1.bf16.msra.mxu0 0
    %7752 = vmatprep.subr.bf16.mxu0 0
    %7753 = vmatpush1.bf16.msra.mxu0 0
    %7754 = vmatprep.subr.bf16.mxu0 0
    %7755 = vmatpush1.bf16.msra.mxu0 0
    %7756 = vmatprep.subr.bf16.mxu0 0
    %7757 = vmatpush1.bf16.msra.mxu0 0
    %7758 = vmatprep.subr.bf16.mxu0 0
    %7759 = vmatpush1.bf16.msra.mxu0 0
    %7760 = vmatprep.mubr.bf16.mxu0 0
    %7761 = vmatmul.mubr.bf16.gmra.mrb[0].mxu0 %v7686
    %v7762 = vpop.f32.mrb[0].mxu0
    %v7763 = vadd.f32 %v7723, %v7762
    %v7764 = vpop.f32.mrb[0].mxu0
    %v7765 = vpop.f32.mrb[0].mxu0
    %v7766 = vpop.f32.mrb[0].mxu0
    %7767 = vdwg.mxu0
    %v7768 = vadd.f32 %v7524, %v7763
    %v7769 = vld [vmem:[#allocation3] sm:$0x8]
    %v7770 = vld [vmem:[#allocation3 + $0x8] sm:$0x8]
    %v7771 = vld [vmem:[#allocation3 + $0x10] sm:$0x8]
    %s7772 = scalar_lea.vmem %s7, 432
    %v7773 = vld [vmem:[%s7772] sm:$0xf]
    %v7774 = vld [vmem:[%s7772 + $0x4] sm:$0xf]
    %v7775 = vld [vmem:[%s7772 + $0x8] sm:$0xf]
    %v7776 = vld [vmem:[%s7772 + $0xc] sm:$0xf]
    %v7777 = vld [vmem:[%s7772 + $0x10] sm:$0xf]
    %v7778 = vld [vmem:[%s7772 + $0x14] sm:$0xf]
    %v7779 = vld [vmem:[%s7772 + $0x18] sm:$0xf]
    %v7780 = vld [vmem:[%s7772 + $0x1c] sm:$0xf]
    %v7781 = vld [vmem:[%s7772 + $0x20] sm:$0xf]
    %v7782 = vld [vmem:[%s7772 + $0x24] sm:$0xf]
    %v7783 = vld [vmem:[%s7772 + $0x28] sm:$0xf]
    %v7784 = vld [vmem:[%s7772 + $0x2c] sm:$0xf]
    %v7785 = vld [vmem:[%s7772 + $0x30] sm:$0xf]
    %v7786 = vld [vmem:[%s7772 + $0x34] sm:$0xf]
    %v7787 = vld [vmem:[%s7772 + $0x38] sm:$0xf]
    %v7788 = vld [vmem:[%s7772 + $0x3c] sm:$0xf]
    %v7789 = vld [vmem:[%s7772 + $0x40] sm:$0xf]
    %v7790 = vld [vmem:[%s7772 + $0x44] sm:$0xf]
    %v7791 = vld [vmem:[%s7772 + $0x48] sm:$0xf]
    %v7792 = vld [vmem:[%s7772 + $0x4c] sm:$0xf]
    %v7793 = vld [vmem:[%s7772 + $0x50] sm:$0xf]
    %v7794 = vld [vmem:[%s7772 + $0x54] sm:$0xf]
    %v7795 = vld [vmem:[%s7772 + $0x58] sm:$0xf]
    %v7796 = vld [vmem:[%s7772 + $0x5c] sm:$0xf]
    %v7797 = vld [vmem:[%s7772 + $0x60] sm:$0xf]
    %v7798 = vld [vmem:[%s7772 + $0x64] sm:$0xf]
    %v7799 = vld [vmem:[%s7772 + $0x68] sm:$0xf]
    %v7800 = vld [vmem:[%s7772 + $0x6c] sm:$0xf]
    %v7801 = vld [vmem:[%s7772 + $0x70] sm:$0xf]
    %v7802 = vld [vmem:[%s7772 + $0x74] sm:$0xf]
    %v7803 = vld [vmem:[%s7772 + $0x78] sm:$0xf]
    %v7804 = vld [vmem:[%s7772 + $0x7c] sm:$0xf]
    %v7805 = vld [vmem:[%s7772 + $0x80] sm:$0xf]
    %v7806 = vld [vmem:[%s7772 + $0x84] sm:$0xf]
    %v7807 = vld [vmem:[%s7772 + $0x88] sm:$0xf]
    %v7808 = vld [vmem:[%s7772 + $0x8c] sm:$0xf]
    %v7812 = vrot.slane %v7769, 3
    %v7813 = vrot.slane %v7770, 3
    %v7814 = vrot.slane %v7771, 3
    %v7853 = vunpack.c.l.b16 %v7773
    %v7854 = vunpack.c.l.b16 %v7774
    %v7855 = vunpack.c.l.b16 %v7775
    %v7856 = vunpack.c.l.b16 %v7776
    %v7857 = vunpack.c.l.b16 %v7777
    %v7858 = vunpack.c.l.b16 %v7778
    %v7859 = vunpack.c.l.b16 %v7779
    %v7860 = vunpack.c.l.b16 %v7780
    %v7861 = vunpack.c.l.b16 %v7781
    %v7862 = vunpack.c.l.b16 %v7782
    %v7863 = vunpack.c.l.b16 %v7783
    %v7864 = vunpack.c.l.b16 %v7784
    %v7865 = vunpack.c.l.b16 %v7785
    %v7866 = vunpack.c.l.b16 %v7786
    %v7867 = vunpack.c.l.b16 %v7787
    %v7868 = vunpack.c.l.b16 %v7788
    %v7869 = vunpack.c.l.b16 %v7789
    %v7870 = vunpack.c.l.b16 %v7790
    %v7871 = vunpack.c.l.b16 %v7791
    %v7872 = vunpack.c.l.b16 %v7792
    %v7873 = vunpack.c.l.b16 %v7793
    %v7874 = vunpack.c.l.b16 %v7794
    %v7875 = vunpack.c.l.b16 %v7795
    %v7876 = vunpack.c.l.b16 %v7796
    %v7877 = vunpack.c.l.b16 %v7797
    %v7878 = vunpack.c.l.b16 %v7798
    %v7879 = vunpack.c.l.b16 %v7799
    %v7880 = vunpack.c.l.b16 %v7800
    %v7881 = vunpack.c.l.b16 %v7801
    %v7882 = vunpack.c.l.b16 %v7802
    %v7883 = vunpack.c.l.b16 %v7803
    %v7884 = vunpack.c.l.b16 %v7804
    %v7885 = vunpack.c.l.b16 %v7805
    %v7886 = vunpack.c.l.b16 %v7806
    %v7887 = vunpack.c.l.b16 %v7807
    %v7888 = vunpack.c.l.b16 %v7808
    %v7889 = vpack.c.b16 %v7854, %v7853
    %v7890 = vpack.c.b16 %v7856, %v7855
    %v7891 = vpack.c.b16 %v7858, %v7857
    %v7892 = vpack.c.b16 %v7860, %v7859
    %v7893 = vpack.c.b16 %v7862, %v7861
    %v7894 = vpack.c.b16 %v7864, %v7863
    %v7895 = vpack.c.b16 %v7866, %v7865
    %v7896 = vpack.c.b16 %v7868, %v7867
    %v7897 = vpack.c.b16 %v7870, %v7869
    %v7898 = vpack.c.b16 %v7872, %v7871
    %v7899 = vpack.c.b16 %v7874, %v7873
    %v7900 = vpack.c.b16 %v7876, %v7875
    %v7901 = vpack.c.b16 %v7878, %v7877
    %v7902 = vpack.c.b16 %v7880, %v7879
    %v7903 = vpack.c.b16 %v7882, %v7881
    %v7904 = vpack.c.b16 %v7884, %v7883
    %v7905 = vpack.c.b16 %v7886, %v7885
    %v7906 = vpack.c.b16 %v7888, %v7887
    %v7926 = vsel %vm7055, %v7814, 0
    %7928 = vmatprep.subr.bf16.mxu0 0
    %7929 = vmatpush1.bf16.msra.mxu0 %v7889
    %7930 = vmatprep.subr.bf16.mxu0 0
    %7931 = vmatpush1.bf16.msra.mxu0 %v7890
    %7932 = vmatprep.subr.bf16.mxu0 0
    %7933 = vmatpush1.bf16.msra.mxu0 %v7891
    %7934 = vmatprep.subr.bf16.mxu0 0
    %7935 = vmatpush1.bf16.msra.mxu0 %v7892
    %7936 = vmatprep.subr.bf16.mxu0 0
    %7937 = vmatpush1.bf16.msra.mxu0 %v7893
    %7938 = vmatprep.subr.bf16.mxu0 0
    %7939 = vmatpush1.bf16.msra.mxu0 %v7894
    %7940 = vmatprep.subr.bf16.mxu0 0
    %7941 = vmatpush1.bf16.msra.mxu0 %v7895
    %7942 = vmatprep.subr.bf16.mxu0 0
    %7943 = vmatpush1.bf16.msra.mxu0 %v7896
    %7944 = vmatprep.subr.bf16.mxu0 0
    %7945 = vmatpush1.bf16.msra.mxu0 %v7897
    %7946 = vmatprep.subr.bf16.mxu0 0
    %7947 = vmatpush1.bf16.msra.mxu0 %v7898
    %7948 = vmatprep.subr.bf16.mxu0 0
    %7949 = vmatpush1.bf16.msra.mxu0 %v7899
    %7950 = vmatprep.subr.bf16.mxu0 0
    %7951 = vmatpush1.bf16.msra.mxu0 %v7900
    %7952 = vmatprep.subr.bf16.mxu0 0
    %7953 = vmatpush1.bf16.msra.mxu0 %v7901
    %7954 = vmatprep.subr.bf16.mxu0 0
    %7955 = vmatpush1.bf16.msra.mxu0 %v7902
    %7956 = vmatprep.subr.bf16.mxu0 0
    %7957 = vmatpush1.bf16.msra.mxu0 %v7903
    %7958 = vmatprep.subr.bf16.mxu0 0
    %7959 = vmatpush1.bf16.msra.mxu0 %v7904
    %7960 = vmatprep.mubr.bf16.mxu0 %v7813
    %7961 = vmatmul.mubr.bf16.gmra.mrb[0].mxu0 %v7812
    %v7962 = vpop.f32.mrb[0].mxu0
    %v7963 = vadd.f32 0.0, %v7962
    %v7964 = vpop.f32.mrb[0].mxu0
    %v7965 = vpop.f32.mrb[0].mxu0
    %v7966 = vpop.f32.mrb[0].mxu0
    %7967 = vdwg.mxu0
    %7968 = vmatprep.subr.bf16.mxu0 0
    %7969 = vmatpush1.bf16.msra.mxu0 %v7905
    %7970 = vmatprep.subr.bf16.mxu0 0
    %7971 = vmatpush1.bf16.msra.mxu0 %v7906
    %7972 = vmatprep.subr.bf16.mxu0 0
    %7973 = vmatpush1.bf16.msra.mxu0 0
    %7974 = vmatprep.subr.bf16.mxu0 0
    %7975 = vmatpush1.bf16.msra.mxu0 0
    %7976 = vmatprep.subr.bf16.mxu0 0
    %7977 = vmatpush1.bf16.msra.mxu0 0
    %7978 = vmatprep.subr.bf16.mxu0 0
    %7979 = vmatpush1.bf16.msra.mxu0 0
    %7980 = vmatprep.subr.bf16.mxu0 0
    %7981 = vmatpush1.bf16.msra.mxu0 0
    %7982 = vmatprep.subr.bf16.mxu0 0
    %7983 = vmatpush1.bf16.msra.mxu0 0
    %7984 = vmatprep.subr.bf16.mxu0 0
    %7985 = vmatpush1.bf16.msra.mxu0 0
    %7986 = vmatprep.subr.bf16.mxu0 0
    %7987 = vmatpush1.bf16.msra.mxu0 0
    %7988 = vmatprep.subr.bf16.mxu0 0
    %7989 = vmatpush1.bf16.msra.mxu0 0
    %7990 = vmatprep.subr.bf16.mxu0 0
    %7991 = vmatpush1.bf16.msra.mxu0 0
    %7992 = vmatprep.subr.bf16.mxu0 0
    %7993 = vmatpush1.bf16.msra.mxu0 0
    %7994 = vmatprep.subr.bf16.mxu0 0
    %7995 = vmatpush1.bf16.msra.mxu0 0
    %7996 = vmatprep.subr.bf16.mxu0 0
    %7997 = vmatpush1.bf16.msra.mxu0 0
    %7998 = vmatprep.subr.bf16.mxu0 0
    %7999 = vmatpush1.bf16.msra.mxu0 0
    %8000 = vmatprep.mubr.bf16.mxu0 0
    %8001 = vmatmul.mubr.bf16.gmra.mrb[0].mxu0 %v7926
    %v8002 = vpop.f32.mrb[0].mxu0
    %v8003 = vadd.f32 %v7963, %v8002
    %v8004 = vpop.f32.mrb[0].mxu0
    %v8005 = vpop.f32.mrb[0].mxu0
    %v8006 = vpop.f32.mrb[0].mxu0
    %8007 = vdwg.mxu0
    %v8008 = vadd.f32 %v7768, %v8003
    %v8009 = vld [vmem:[#allocation3] sm:$0x10]
    %v8010 = vld [vmem:[#allocation3 + $0x8] sm:$0x10]
    %v8011 = vld [vmem:[#allocation3 + $0x10] sm:$0x10]
    %s8012 = scalar_lea.vmem %s7, 576
    %v8013 = vld [vmem:[%s8012] sm:$0xf]
    %v8014 = vld [vmem:[%s8012 + $0x4] sm:$0xf]
    %v8015 = vld [vmem:[%s8012 + $0x8] sm:$0xf]
    %v8016 = vld [vmem:[%s8012 + $0xc] sm:$0xf]
    %v8017 = vld [vmem:[%s8012 + $0x10] sm:$0xf]
    %v8018 = vld [vmem:[%s8012 + $0x14] sm:$0xf]
    %v8019 = vld [vmem:[%s8012 + $0x18] sm:$0xf]
    %v8020 = vld [vmem:[%s8012 + $0x1c] sm:$0xf]
    %v8021 = vld [vmem:[%s8012 + $0x20] sm:$0xf]
    %v8022 = vld [vmem:[%s8012 + $0x24] sm:$0xf]
    %v8023 = vld [vmem:[%s8012 + $0x28] sm:$0xf]
    %v8024 = vld [vmem:[%s8012 + $0x2c] sm:$0xf]
    %v8025 = vld [vmem:[%s8012 + $0x30] sm:$0xf]
    %v8026 = vld [vmem:[%s8012 + $0x34] sm:$0xf]
    %v8027 = vld [vmem:[%s8012 + $0x38] sm:$0xf]
    %v8028 = vld [vmem:[%s8012 + $0x3c] sm:$0xf]
    %v8029 = vld [vmem:[%s8012 + $0x40] sm:$0xf]
    %v8030 = vld [vmem:[%s8012 + $0x44] sm:$0xf]
    %v8031 = vld [vmem:[%s8012 + $0x48] sm:$0xf]
    %v8032 = vld [vmem:[%s8012 + $0x4c] sm:$0xf]
    %v8033 = vld [vmem:[%s8012 + $0x50] sm:$0xf]
    %v8034 = vld [vmem:[%s8012 + $0x54] sm:$0xf]
    %v8035 = vld [vmem:[%s8012 + $0x58] sm:$0xf]
    %v8036 = vld [vmem:[%s8012 + $0x5c] sm:$0xf]
    %v8037 = vld [vmem:[%s8012 + $0x60] sm:$0xf]
    %v8038 = vld [vmem:[%s8012 + $0x64] sm:$0xf]
    %v8039 = vld [vmem:[%s8012 + $0x68] sm:$0xf]
    %v8040 = vld [vmem:[%s8012 + $0x6c] sm:$0xf]
    %v8041 = vld [vmem:[%s8012 + $0x70] sm:$0xf]
    %v8042 = vld [vmem:[%s8012 + $0x74] sm:$0xf]
    %v8043 = vld [vmem:[%s8012 + $0x78] sm:$0xf]
    %v8044 = vld [vmem:[%s8012 + $0x7c] sm:$0xf]
    %v8045 = vld [vmem:[%s8012 + $0x80] sm:$0xf]
    %v8046 = vld [vmem:[%s8012 + $0x84] sm:$0xf]
    %v8047 = vld [vmem:[%s8012 + $0x88] sm:$0xf]
    %v8048 = vld [vmem:[%s8012 + $0x8c] sm:$0xf]
    %v8052 = vrot.slane %v8009, 4
    %v8053 = vrot.slane %v8010, 4
    %v8054 = vrot.slane %v8011, 4
    %v8093 = vunpack.c.l.b16 %v8013
    %v8094 = vunpack.c.l.b16 %v8014
    %v8095 = vunpack.c.l.b16 %v8015
    %v8096 = vunpack.c.l.b16 %v8016
    %v8097 = vunpack.c.l.b16 %v8017
    %v8098 = vunpack.c.l.b16 %v8018
    %v8099 = vunpack.c.l.b16 %v8019
    %v8100 = vunpack.c.l.b16 %v8020
    %v8101 = vunpack.c.l.b16 %v8021
    %v8102 = vunpack.c.l.b16 %v8022
    %v8103 = vunpack.c.l.b16 %v8023
    %v8104 = vunpack.c.l.b16 %v8024
    %v8105 = vunpack.c.l.b16 %v8025
    %v8106 = vunpack.c.l.b16 %v8026
    %v8107 = vunpack.c.l.b16 %v8027
    %v8108 = vunpack.c.l.b16 %v8028
    %v8109 = vunpack.c.l.b16 %v8029
    %v8110 = vunpack.c.l.b16 %v8030
    %v8111 = vunpack.c.l.b16 %v8031
    %v8112 = vunpack.c.l.b16 %v8032
    %v8113 = vunpack.c.l.b16 %v8033
    %v8114 = vunpack.c.l.b16 %v8034
    %v8115 = vunpack.c.l.b16 %v8035
    %v8116 = vunpack.c.l.b16 %v8036
    %v8117 = vunpack.c.l.b16 %v8037
    %v8118 = vunpack.c.l.b16 %v8038
    %v8119 = vunpack.c.l.b16 %v8039
    %v8120 = vunpack.c.l.b16 %v8040
    %v8121 = vunpack.c.l.b16 %v8041
    %v8122 = vunpack.c.l.b16 %v8042
    %v8123 = vunpack.c.l.b16 %v8043
    %v8124 = vunpack.c.l.b16 %v8044
    %v8125 = vunpack.c.l.b16 %v8045
    %v8126 = vunpack.c.l.b16 %v8046
    %v8127 = vunpack.c.l.b16 %v8047
    %v8128 = vunpack.c.l.b16 %v8048
    %v8129 = vpack.c.b16 %v8094, %v8093
    %v8130 = vpack.c.b16 %v8096, %v8095
    %v8131 = vpack.c.b16 %v8098, %v8097
    %v8132 = vpack.c.b16 %v8100, %v8099
    %v8133 = vpack.c.b16 %v8102, %v8101
    %v8134 = vpack.c.b16 %v8104, %v8103
    %v8135 = vpack.c.b16 %v8106, %v8105
    %v8136 = vpack.c.b16 %v8108, %v8107
    %v8137 = vpack.c.b16 %v8110, %v8109
    %v8138 = vpack.c.b16 %v8112, %v8111
    %v8139 = vpack.c.b16 %v8114, %v8113
    %v8140 = vpack.c.b16 %v8116, %v8115
    %v8141 = vpack.c.b16 %v8118, %v8117
    %v8142 = vpack.c.b16 %v8120, %v8119
    %v8143 = vpack.c.b16 %v8122, %v8121
    %v8144 = vpack.c.b16 %v8124, %v8123
    %v8145 = vpack.c.b16 %v8126, %v8125
    %v8146 = vpack.c.b16 %v8128, %v8127
    %v8166 = vsel %vm7055, %v8054, 0
    %8168 = vmatprep.subr.bf16.mxu0 0
    %8169 = vmatpush1.bf16.msra.mxu0 %v8129
    %8170 = vmatprep.subr.bf16.mxu0 0
    %8171 = vmatpush1.bf16.msra.mxu0 %v8130
    %8172 = vmatprep.subr.bf16.mxu0 0
    %8173 = vmatpush1.bf16.msra.mxu0 %v8131
    %8174 = vmatprep.subr.bf16.mxu0 0
    %8175 = vmatpush1.bf16.msra.mxu0 %v8132
    %8176 = vmatprep.subr.bf16.mxu0 0
    %8177 = vmatpush1.bf16.msra.mxu0 %v8133
    %8178 = vmatprep.subr.bf16.mxu0 0
    %8179 = vmatpush1.bf16.msra.mxu0 %v8134
    %8180 = vmatprep.subr.bf16.mxu0 0
    %8181 = vmatpush1.bf16.msra.mxu0 %v8135
    %8182 = vmatprep.subr.bf16.mxu0 0
    %8183 = vmatpush1.bf16.msra.mxu0 %v8136
    %8184 = vmatprep.subr.bf16.mxu0 0
    %8185 = vmatpush1.bf16.msra.mxu0 %v8137
    %8186 = vmatprep.subr.bf16.mxu0 0
    %8187 = vmatpush1.bf16.msra.mxu0 %v8138
    %8188 = vmatprep.subr.bf16.mxu0 0
    %8189 = vmatpush1.bf16.msra.mxu0 %v8139
    %8190 = vmatprep.subr.bf16.mxu0 0
    %8191 = vmatpush1.bf16.msra.mxu0 %v8140
    %8192 = vmatprep.subr.bf16.mxu0 0
    %8193 = vmatpush1.bf16.msra.mxu0 %v8141
    %8194 = vmatprep.subr.bf16.mxu0 0
    %8195 = vmatpush1.bf16.msra.mxu0 %v8142
    %8196 = vmatprep.subr.bf16.mxu0 0
    %8197 = vmatpush1.bf16.msra.mxu0 %v8143
    %8198 = vmatprep.subr.bf16.mxu0 0
    %8199 = vmatpush1.bf16.msra.mxu0 %v8144
    %8200 = vmatprep.mubr.bf16.mxu0 %v8053
    %8201 = vmatmul.mubr.bf16.gmra.mrb[0].mxu0 %v8052
    %v8202 = vpop.f32.mrb[0].mxu0
    %v8203 = vadd.f32 0.0, %v8202
    %v8204 = vpop.f32.mrb[0].mxu0
    %v8205 = vpop.f32.mrb[0].mxu0
    %v8206 = vpop.f32.mrb[0].mxu0
    %8207 = vdwg.mxu0
    %8208 = vmatprep.subr.bf16.mxu0 0
    %8209 = vmatpush1.bf16.msra.mxu0 %v8145
    %8210 = vmatprep.subr.bf16.mxu0 0
    %8211 = vmatpush1.bf16.msra.mxu0 %v8146
    %8212 = vmatprep.subr.bf16.mxu0 0
    %8213 = vmatpush1.bf16.msra.mxu0 0
    %8214 = vmatprep.subr.bf16.mxu0 0
    %8215 = vmatpush1.bf16.msra.mxu0 0
    %8216 = vmatprep.subr.bf16.mxu0 0
    %8217 = vmatpush1.bf16.msra.mxu0 0
    %8218 = vmatprep.subr.bf16.mxu0 0
    %8219 = vmatpush1.bf16.msra.mxu0 0
    %8220 = vmatprep.subr.bf16.mxu0 0
    %8221 = vmatpush1.bf16.msra.mxu0 0
    %8222 = vmatprep.subr.bf16.mxu0 0
    %8223 = vmatpush1.bf16.msra.mxu0 0
    %8224 = vmatprep.subr.bf16.mxu0 0
    %8225 = vmatpush1.bf16.msra.mxu0 0
    %8226 = vmatprep.subr.bf16.mxu0 0
    %8227 = vmatpush1.bf16.msra.mxu0 0
    %8228 = vmatprep.subr.bf16.mxu0 0
    %8229 = vmatpush1.bf16.msra.mxu0 0
    %8230 = vmatprep.subr.bf16.mxu0 0
    %8231 = vmatpush1.bf16.msra.mxu0 0
    %8232 = vmatprep.subr.bf16.mxu0 0
    %8233 = vmatpush1.bf16.msra.mxu0 0
    %8234 = vmatprep.subr.bf16.mxu0 0
    %8235 = vmatpush1.bf16.msra.mxu0 0
    %8236 = vmatprep.subr.bf16.mxu0 0
    %8237 = vmatpush1.bf16.msra.mxu0 0
    %8238 = vmatprep.subr.bf16.mxu0 0
    %8239 = vmatpush1.bf16.msra.mxu0 0
    %8240 = vmatprep.mubr.bf16.mxu0 0
    %8241 = vmatmul.mubr.bf16.gmra.mrb[0].mxu0 %v8166
    %v8242 = vpop.f32.mrb[0].mxu0
    %v8243 = vadd.f32 %v8203, %v8242
    %v8244 = vpop.f32.mrb[0].mxu0
    %v8245 = vpop.f32.mrb[0].mxu0
    %v8246 = vpop.f32.mrb[0].mxu0
    %8247 = vdwg.mxu0
    %v8248 = vadd.f32 %v8008, %v8243
    %v8249 = vld [vmem:[#allocation3] sm:$0x20]
    %v8250 = vld [vmem:[#allocation3 + $0x8] sm:$0x20]
    %v8251 = vld [vmem:[#allocation3 + $0x10] sm:$0x20]
    %s8252 = scalar_lea.vmem %s7, 720
    %v8253 = vld [vmem:[%s8252] sm:$0xf]
    %v8254 = vld [vmem:[%s8252 + $0x4] sm:$0xf]
    %v8255 = vld [vmem:[%s8252 + $0x8] sm:$0xf]
    %v8256 = vld [vmem:[%s8252 + $0xc] sm:$0xf]
    %v8257 = vld [vmem:[%s8252 + $0x10] sm:$0xf]
    %v8258 = vld [vmem:[%s8252 + $0x14] sm:$0xf]
    %v8259 = vld [vmem:[%s8252 + $0x18] sm:$0xf]
    %v8260 = vld [vmem:[%s8252 + $0x1c] sm:$0xf]
    %v8261 = vld [vmem:[%s8252 + $0x20] sm:$0xf]
    %v8262 = vld [vmem:[%s8252 + $0x24] sm:$0xf]
    %v8263 = vld [vmem:[%s8252 + $0x28] sm:$0xf]
    %v8264 = vld [vmem:[%s8252 + $0x2c] sm:$0xf]
    %v8265 = vld [vmem:[%s8252 + $0x30] sm:$0xf]
    %v8266 = vld [vmem:[%s8252 + $0x34] sm:$0xf]
    %v8267 = vld [vmem:[%s8252 + $0x38] sm:$0xf]
    %v8268 = vld [vmem:[%s8252 + $0x3c] sm:$0xf]
    %v8269 = vld [vmem:[%s8252 + $0x40] sm:$0xf]
    %v8270 = vld [vmem:[%s8252 + $0x44] sm:$0xf]
    %v8271 = vld [vmem:[%s8252 + $0x48] sm:$0xf]
    %v8272 = vld [vmem:[%s8252 + $0x4c] sm:$0xf]
    %v8273 = vld [vmem:[%s8252 + $0x50] sm:$0xf]
    %v8274 = vld [vmem:[%s8252 + $0x54] sm:$0xf]
    %v8275 = vld [vmem:[%s8252 + $0x58] sm:$0xf]
    %v8276 = vld [vmem:[%s8252 + $0x5c] sm:$0xf]
    %v8277 = vld [vmem:[%s8252 + $0x60] sm:$0xf]
    %v8278 = vld [vmem:[%s8252 + $0x64] sm:$0xf]
    %v8279 = vld [vmem:[%s8252 + $0x68] sm:$0xf]
    %v8280 = vld [vmem:[%s8252 + $0x6c] sm:$0xf]
    %v8281 = vld [vmem:[%s8252 + $0x70] sm:$0xf]
    %v8282 = vld [vmem:[%s8252 + $0x74] sm:$0xf]
    %v8283 = vld [vmem:[%s8252 + $0x78] sm:$0xf]
    %v8284 = vld [vmem:[%s8252 + $0x7c] sm:$0xf]
    %v8285 = vld [vmem:[%s8252 + $0x80] sm:$0xf]
    %v8286 = vld [vmem:[%s8252 + $0x84] sm:$0xf]
    %v8287 = vld [vmem:[%s8252 + $0x88] sm:$0xf]
    %v8288 = vld [vmem:[%s8252 + $0x8c] sm:$0xf]
    %v8292 = vrot.slane %v8249, 5
    %v8293 = vrot.slane %v8250, 5
    %v8294 = vrot.slane %v8251, 5
    %v8333 = vunpack.c.l.b16 %v8253
    %v8334 = vunpack.c.l.b16 %v8254
    %v8335 = vunpack.c.l.b16 %v8255
    %v8336 = vunpack.c.l.b16 %v8256
    %v8337 = vunpack.c.l.b16 %v8257
    %v8338 = vunpack.c.l.b16 %v8258
    %v8339 = vunpack.c.l.b16 %v8259
    %v8340 = vunpack.c.l.b16 %v8260
    %v8341 = vunpack.c.l.b16 %v8261
    %v8342 = vunpack.c.l.b16 %v8262
    %v8343 = vunpack.c.l.b16 %v8263
    %v8344 = vunpack.c.l.b16 %v8264
    %v8345 = vunpack.c.l.b16 %v8265
    %v8346 = vunpack.c.l.b16 %v8266
    %v8347 = vunpack.c.l.b16 %v8267
    %v8348 = vunpack.c.l.b16 %v8268
    %v8349 = vunpack.c.l.b16 %v8269
    %v8350 = vunpack.c.l.b16 %v8270
    %v8351 = vunpack.c.l.b16 %v8271
    %v8352 = vunpack.c.l.b16 %v8272
    %v8353 = vunpack.c.l.b16 %v8273
    %v8354 = vunpack.c.l.b16 %v8274
    %v8355 = vunpack.c.l.b16 %v8275
    %v8356 = vunpack.c.l.b16 %v8276
    %v8357 = vunpack.c.l.b16 %v8277
    %v8358 = vunpack.c.l.b16 %v8278
    %v8359 = vunpack.c.l.b16 %v8279
    %v8360 = vunpack.c.l.b16 %v8280
    %v8361 = vunpack.c.l.b16 %v8281
    %v8362 = vunpack.c.l.b16 %v8282
    %v8363 = vunpack.c.l.b16 %v8283
    %v8364 = vunpack.c.l.b16 %v8284
    %v8365 = vunpack.c.l.b16 %v8285
    %v8366 = vunpack.c.l.b16 %v8286
    %v8367 = vunpack.c.l.b16 %v8287
    %v8368 = vunpack.c.l.b16 %v8288
    %v8369 = vpack.c.b16 %v8334, %v8333
    %v8370 = vpack.c.b16 %v8336, %v8335
    %v8371 = vpack.c.b16 %v8338, %v8337
    %v8372 = vpack.c.b16 %v8340, %v8339
    %v8373 = vpack.c.b16 %v8342, %v8341
    %v8374 = vpack.c.b16 %v8344, %v8343
    %v8375 = vpack.c.b16 %v8346, %v8345
    %v8376 = vpack.c.b16 %v8348, %v8347
    %v8377 = vpack.c.b16 %v8350, %v8349
    %v8378 = vpack.c.b16 %v8352, %v8351
    %v8379 = vpack.c.b16 %v8354, %v8353
    %v8380 = vpack.c.b16 %v8356, %v8355
    %v8381 = vpack.c.b16 %v8358, %v8357
    %v8382 = vpack.c.b16 %v8360, %v8359
    %v8383 = vpack.c.b16 %v8362, %v8361
    %v8384 = vpack.c.b16 %v8364, %v8363
    %v8385 = vpack.c.b16 %v8366, %v8365
    %v8386 = vpack.c.b16 %v8368, %v8367
    %v8406 = vsel %vm7055, %v8294, 0
    %8408 = vmatprep.subr.bf16.mxu0 0
    %8409 = vmatpush1.bf16.msra.mxu0 %v8369
    %8410 = vmatprep.subr.bf16.mxu0 0
    %8411 = vmatpush1.bf16.msra.mxu0 %v8370
    %8412 = vmatprep.subr.bf16.mxu0 0
    %8413 = vmatpush1.bf16.msra.mxu0 %v8371
    %8414 = vmatprep.subr.bf16.mxu0 0
    %8415 = vmatpush1.bf16.msra.mxu0 %v8372
    %8416 = vmatprep.subr.bf16.mxu0 0
    %8417 = vmatpush1.bf16.msra.mxu0 %v8373
    %8418 = vmatprep.subr.bf16.mxu0 0
    %8419 = vmatpush1.bf16.msra.mxu0 %v8374
    %8420 = vmatprep.subr.bf16.mxu0 0
    %8421 = vmatpush1.bf16.msra.mxu0 %v8375
    %8422 = vmatprep.subr.bf16.mxu0 0
    %8423 = vmatpush1.bf16.msra.mxu0 %v8376
    %8424 = vmatprep.subr.bf16.mxu0 0
    %8425 = vmatpush1.bf16.msra.mxu0 %v8377
    %8426 = vmatprep.subr.bf16.mxu0 0
    %8427 = vmatpush1.bf16.msra.mxu0 %v8378
    %8428 = vmatprep.subr.bf16.mxu0 0
    %8429 = vmatpush1.bf16.msra.mxu0 %v8379
    %8430 = vmatprep.subr.bf16.mxu0 0
    %8431 = vmatpush1.bf16.msra.mxu0 %v8380
    %8432 = vmatprep.subr.bf16.mxu0 0
    %8433 = vmatpush1.bf16.msra.mxu0 %v8381
    %8434 = vmatprep.subr.bf16.mxu0 0
    %8435 = vmatpush1.bf16.msra.mxu0 %v8382
    %8436 = vmatprep.subr.bf16.mxu0 0
    %8437 = vmatpush1.bf16.msra.mxu0 %v8383
    %8438 = vmatprep.subr.bf16.mxu0 0
    %8439 = vmatpush1.bf16.msra.mxu0 %v8384
    %8440 = vmatprep.mubr.bf16.mxu0 %v8293
    %8441 = vmatmul.mubr.bf16.gmra.mrb[0].mxu0 %v8292
    %v8442 = vpop.f32.mrb[0].mxu0
    %v8443 = vadd.f32 0.0, %v8442
    %v8444 = vpop.f32.mrb[0].mxu0
    %v8445 = vpop.f32.mrb[0].mxu0
    %v8446 = vpop.f32.mrb[0].mxu0
    %8447 = vdwg.mxu0
    %8448 = vmatprep.subr.bf16.mxu0 0
    %8449 = vmatpush1.bf16.msra.mxu0 %v8385
    %8450 = vmatprep.subr.bf16.mxu0 0
    %8451 = vmatpush1.bf16.msra.mxu0 %v8386
    %8452 = vmatprep.subr.bf16.mxu0 0
    %8453 = vmatpush1.bf16.msra.mxu0 0
    %8454 = vmatprep.subr.bf16.mxu0 0
    %8455 = vmatpush1.bf16.msra.mxu0 0
    %8456 = vmatprep.subr.bf16.mxu0 0
    %8457 = vmatpush1.bf16.msra.mxu0 0
    %8458 = vmatprep.subr.bf16.mxu0 0
    %8459 = vmatpush1.bf16.msra.mxu0 0
    %8460 = vmatprep.subr.bf16.mxu0 0
    %8461 = vmatpush1.bf16.msra.mxu0 0
    %8462 = vmatprep.subr.bf16.mxu0 0
    %8463 = vmatpush1.bf16.msra.mxu0 0
    %8464 = vmatprep.subr.bf16.mxu0 0
    %8465 = vmatpush1.bf16.msra.mxu0 0
    %8466 = vmatprep.subr.bf16.mxu0 0
    %8467 = vmatpush1.bf16.msra.mxu0 0
    %8468 = vmatprep.subr.bf16.mxu0 0
    %8469 = vmatpush1.bf16.msra.mxu0 0
    %8470 = vmatprep.subr.bf16.mxu0 0
    %8471 = vmatpush1.bf16.msra.mxu0 0
    %8472 = vmatprep.subr.bf16.mxu0 0
    %8473 = vmatpush1.bf16.msra.mxu0 0
    %8474 = vmatprep.subr.bf16.mxu0 0
    %8475 = vmatpush1.bf16.msra.mxu0 0
    %8476 = vmatprep.subr.bf16.mxu0 0
    %8477 = vmatpush1.bf16.msra.mxu0 0
    %8478 = vmatprep.subr.bf16.mxu0 0
    %8479 = vmatpush1.bf16.msra.mxu0 0
    %8480 = vmatprep.mubr.bf16.mxu0 0
    %8481 = vmatmul.mubr.bf16.gmra.mrb[0].mxu0 %v8406
    %v8482 = vpop.f32.mrb[0].mxu0
    %v8483 = vadd.f32 %v8443, %v8482
    %v8484 = vpop.f32.mrb[0].mxu0
    %v8485 = vpop.f32.mrb[0].mxu0
    %v8486 = vpop.f32.mrb[0].mxu0
    %8487 = vdwg.mxu0
    %v8488 = vadd.f32 %v8248, %v8483
    %v8489 = vld [vmem:[#allocation3] sm:$0x40]
    %v8490 = vld [vmem:[#allocation3 + $0x8] sm:$0x40]
    %v8491 = vld [vmem:[#allocation3 + $0x10] sm:$0x40]
    %s8492 = scalar_lea.vmem %s7, 864
    %v8493 = vld [vmem:[%s8492] sm:$0xf]
    %v8494 = vld [vmem:[%s8492 + $0x4] sm:$0xf]
    %v8495 = vld [vmem:[%s8492 + $0x8] sm:$0xf]
    %v8496 = vld [vmem:[%s8492 + $0xc] sm:$0xf]
    %v8497 = vld [vmem:[%s8492 + $0x10] sm:$0xf]
    %v8498 = vld [vmem:[%s8492 + $0x14] sm:$0xf]
    %v8499 = vld [vmem:[%s8492 + $0x18] sm:$0xf]
    %v8500 = vld [vmem:[%s8492 + $0x1c] sm:$0xf]
    %v8501 = vld [vmem:[%s8492 + $0x20] sm:$0xf]
    %v8502 = vld [vmem:[%s8492 + $0x24] sm:$0xf]
    %v8503 = vld [vmem:[%s8492 + $0x28] sm:$0xf]
    %v8504 = vld [vmem:[%s8492 + $0x2c] sm:$0xf]
    %v8505 = vld [vmem:[%s8492 + $0x30] sm:$0xf]
    %v8506 = vld [vmem:[%s8492 + $0x34] sm:$0xf]
    %v8507 = vld [vmem:[%s8492 + $0x38] sm:$0xf]
    %v8508 = vld [vmem:[%s8492 + $0x3c] sm:$0xf]
    %v8509 = vld [vmem:[%s8492 + $0x40] sm:$0xf]
    %v8510 = vld [vmem:[%s8492 + $0x44] sm:$0xf]
    %v8511 = vld [vmem:[%s8492 + $0x48] sm:$0xf]
    %v8512 = vld [vmem:[%s8492 + $0x4c] sm:$0xf]
    %v8513 = vld [vmem:[%s8492 + $0x50] sm:$0xf]
    %v8514 = vld [vmem:[%s8492 + $0x54] sm:$0xf]
    %v8515 = vld [vmem:[%s8492 + $0x58] sm:$0xf]
    %v8516 = vld [vmem:[%s8492 + $0x5c] sm:$0xf]
    %v8517 = vld [vmem:[%s8492 + $0x60] sm:$0xf]
    %v8518 = vld [vmem:[%s8492 + $0x64] sm:$0xf]
    %v8519 = vld [vmem:[%s8492 + $0x68] sm:$0xf]
    %v8520 = vld [vmem:[%s8492 + $0x6c] sm:$0xf]
    %v8521 = vld [vmem:[%s8492 + $0x70] sm:$0xf]
    %v8522 = vld [vmem:[%s8492 + $0x74] sm:$0xf]
    %v8523 = vld [vmem:[%s8492 + $0x78] sm:$0xf]
    %v8524 = vld [vmem:[%s8492 + $0x7c] sm:$0xf]
    %v8525 = vld [vmem:[%s8492 + $0x80] sm:$0xf]
    %v8526 = vld [vmem:[%s8492 + $0x84] sm:$0xf]
    %v8527 = vld [vmem:[%s8492 + $0x88] sm:$0xf]
    %v8528 = vld [vmem:[%s8492 + $0x8c] sm:$0xf]
    %v8532 = vrot.slane %v8489, 6
    %v8533 = vrot.slane %v8490, 6
    %v8534 = vrot.slane %v8491, 6
    %v8573 = vunpack.c.l.b16 %v8493
    %v8574 = vunpack.c.l.b16 %v8494
    %v8575 = vunpack.c.l.b16 %v8495
    %v8576 = vunpack.c.l.b16 %v8496
    %v8577 = vunpack.c.l.b16 %v8497
    %v8578 = vunpack.c.l.b16 %v8498
    %v8579 = vunpack.c.l.b16 %v8499
    %v8580 = vunpack.c.l.b16 %v8500
    %v8581 = vunpack.c.l.b16 %v8501
    %v8582 = vunpack.c.l.b16 %v8502
    %v8583 = vunpack.c.l.b16 %v8503
    %v8584 = vunpack.c.l.b16 %v8504
    %v8585 = vunpack.c.l.b16 %v8505
    %v8586 = vunpack.c.l.b16 %v8506
    %v8587 = vunpack.c.l.b16 %v8507
    %v8588 = vunpack.c.l.b16 %v8508
    %v8589 = vunpack.c.l.b16 %v8509
    %v8590 = vunpack.c.l.b16 %v8510
    %v8591 = vunpack.c.l.b16 %v8511
    %v8592 = vunpack.c.l.b16 %v8512
    %v8593 = vunpack.c.l.b16 %v8513
    %v8594 = vunpack.c.l.b16 %v8514
    %v8595 = vunpack.c.l.b16 %v8515
    %v8596 = vunpack.c.l.b16 %v8516
    %v8597 = vunpack.c.l.b16 %v8517
    %v8598 = vunpack.c.l.b16 %v8518
    %v8599 = vunpack.c.l.b16 %v8519
    %v8600 = vunpack.c.l.b16 %v8520
    %v8601 = vunpack.c.l.b16 %v8521
    %v8602 = vunpack.c.l.b16 %v8522
    %v8603 = vunpack.c.l.b16 %v8523
    %v8604 = vunpack.c.l.b16 %v8524
    %v8605 = vunpack.c.l.b16 %v8525
    %v8606 = vunpack.c.l.b16 %v8526
    %v8607 = vunpack.c.l.b16 %v8527
    %v8608 = vunpack.c.l.b16 %v8528
    %v8609 = vpack.c.b16 %v8574, %v8573
    %v8610 = vpack.c.b16 %v8576, %v8575
    %v8611 = vpack.c.b16 %v8578, %v8577
    %v8612 = vpack.c.b16 %v8580, %v8579
    %v8613 = vpack.c.b16 %v8582, %v8581
    %v8614 = vpack.c.b16 %v8584, %v8583
    %v8615 = vpack.c.b16 %v8586, %v8585
    %v8616 = vpack.c.b16 %v8588, %v8587
    %v8617 = vpack.c.b16 %v8590, %v8589
    %v8618 = vpack.c.b16 %v8592, %v8591
    %v8619 = vpack.c.b16 %v8594, %v8593
    %v8620 = vpack.c.b16 %v8596, %v8595
    %v8621 = vpack.c.b16 %v8598, %v8597
    %v8622 = vpack.c.b16 %v8600, %v8599
    %v8623 = vpack.c.b16 %v8602, %v8601
    %v8624 = vpack.c.b16 %v8604, %v8603
    %v8625 = vpack.c.b16 %v8606, %v8605
    %v8626 = vpack.c.b16 %v8608, %v8607
    %v8646 = vsel %vm7055, %v8534, 0
    %8648 = vmatprep.subr.bf16.mxu0 0
    %8649 = vmatpush1.bf16.msra.mxu0 %v8609
    %8650 = vmatprep.subr.bf16.mxu0 0
    %8651 = vmatpush1.bf16.msra.mxu0 %v8610
    %8652 = vmatprep.subr.bf16.mxu0 0
    %8653 = vmatpush1.bf16.msra.mxu0 %v8611
    %8654 = vmatprep.subr.bf16.mxu0 0
    %8655 = vmatpush1.bf16.msra.mxu0 %v8612
    %8656 = vmatprep.subr.bf16.mxu0 0
    %8657 = vmatpush1.bf16.msra.mxu0 %v8613
    %8658 = vmatprep.subr.bf16.mxu0 0
    %8659 = vmatpush1.bf16.msra.mxu0 %v8614
    %8660 = vmatprep.subr.bf16.mxu0 0
    %8661 = vmatpush1.bf16.msra.mxu0 %v8615
    %8662 = vmatprep.subr.bf16.mxu0 0
    %8663 = vmatpush1.bf16.msra.mxu0 %v8616
    %8664 = vmatprep.subr.bf16.mxu0 0
    %8665 = vmatpush1.bf16.msra.mxu0 %v8617
    %8666 = vmatprep.subr.bf16.mxu0 0
    %8667 = vmatpush1.bf16.msra.mxu0 %v8618
    %8668 = vmatprep.subr.bf16.mxu0 0
    %8669 = vmatpush1.bf16.msra.mxu0 %v8619
    %8670 = vmatprep.subr.bf16.mxu0 0
    %8671 = vmatpush1.bf16.msra.mxu0 %v8620
    %8672 = vmatprep.subr.bf16.mxu0 0
    %8673 = vmatpush1.bf16.msra.mxu0 %v8621
    %8674 = vmatprep.subr.bf16.mxu0 0
    %8675 = vmatpush1.bf16.msra.mxu0 %v8622
    %8676 = vmatprep.subr.bf16.mxu0 0
    %8677 = vmatpush1.bf16.msra.mxu0 %v8623
    %8678 = vmatprep.subr.bf16.mxu0 0
    %8679 = vmatpush1.bf16.msra.mxu0 %v8624
    %8680 = vmatprep.mubr.bf16.mxu0 %v8533
    %8681 = vmatmul.mubr.bf16.gmra.mrb[0].mxu0 %v8532
    %v8682 = vpop.f32.mrb[0].mxu0
    %v8683 = vadd.f32 0.0, %v8682
    %v8684 = vpop.f32.mrb[0].mxu0
    %v8685 = vpop.f32.mrb[0].mxu0
    %v8686 = vpop.f32.mrb[0].mxu0
    %8687 = vdwg.mxu0
    %8688 = vmatprep.subr.bf16.mxu0 0
    %8689 = vmatpush1.bf16.msra.mxu0 %v8625
    %8690 = vmatprep.subr.bf16.mxu0 0
    %8691 = vmatpush1.bf16.msra.mxu0 %v8626
    %8692 = vmatprep.subr.bf16.mxu0 0
    %8693 = vmatpush1.bf16.msra.mxu0 0
    %8694 = vmatprep.subr.bf16.mxu0 0
    %8695 = vmatpush1.bf16.msra.mxu0 0
    %8696 = vmatprep.subr.bf16.mxu0 0
    %8697 = vmatpush1.bf16.msra.mxu0 0
    %8698 = vmatprep.subr.bf16.mxu0 0
    %8699 = vmatpush1.bf16.msra.mxu0 0
    %8700 = vmatprep.subr.bf16.mxu0 0
    %8701 = vmatpush1.bf16.msra.mxu0 0
    %8702 = vmatprep.subr.bf16.mxu0 0
    %8703 = vmatpush1.bf16.msra.mxu0 0
    %8704 = vmatprep.subr.bf16.mxu0 0
    %8705 = vmatpush1.bf16.msra.mxu0 0
    %8706 = vmatprep.subr.bf16.mxu0 0
    %8707 = vmatpush1.bf16.msra.mxu0 0
    %8708 = vmatprep.subr.bf16.mxu0 0
    %8709 = vmatpush1.bf16.msra.mxu0 0
    %8710 = vmatprep.subr.bf16.mxu0 0
    %8711 = vmatpush1.bf16.msra.mxu0 0
    %8712 = vmatprep.subr.bf16.mxu0 0
    %8713 = vmatpush1.bf16.msra.mxu0 0
    %8714 = vmatprep.subr.bf16.mxu0 0
    %8715 = vmatpush1.bf16.msra.mxu0 0
    %8716 = vmatprep.subr.bf16.mxu0 0
    %8717 = vmatpush1.bf16.msra.mxu0 0
    %8718 = vmatprep.subr.bf16.mxu0 0
    %8719 = vmatpush1.bf16.msra.mxu0 0
    %8720 = vmatprep.mubr.bf16.mxu0 0
    %8721 = vmatmul.mubr.bf16.gmra.mrb[0].mxu0 %v8646
    %v8722 = vpop.f32.mrb[0].mxu0
    %v8723 = vadd.f32 %v8683, %v8722
    %v8724 = vpop.f32.mrb[0].mxu0
    %v8725 = vpop.f32.mrb[0].mxu0
    %v8726 = vpop.f32.mrb[0].mxu0
    %8727 = vdwg.mxu0
    %v8728 = vadd.f32 %v8488, %v8723
    %v8729 = vld [vmem:[#allocation3] sm:$0x80]
    %v8730 = vld [vmem:[#allocation3 + $0x8] sm:$0x80]
    %v8731 = vld [vmem:[#allocation3 + $0x10] sm:$0x80]
    %s8732 = scalar_lea.vmem %s7, 1008
    %v8733 = vld [vmem:[%s8732] sm:$0xf]
    %v8734 = vld [vmem:[%s8732 + $0x4] sm:$0xf]
    %v8735 = vld [vmem:[%s8732 + $0x8] sm:$0xf]
    %v8736 = vld [vmem:[%s8732 + $0xc] sm:$0xf]
    %v8737 = vld [vmem:[%s8732 + $0x10] sm:$0xf]
    %v8738 = vld [vmem:[%s8732 + $0x14] sm:$0xf]
    %v8739 = vld [vmem:[%s8732 + $0x18] sm:$0xf]
    %v8740 = vld [vmem:[%s8732 + $0x1c] sm:$0xf]
    %v8741 = vld [vmem:[%s8732 + $0x20] sm:$0xf]
    %v8742 = vld [vmem:[%s8732 + $0x24] sm:$0xf]
    %v8743 = vld [vmem:[%s8732 + $0x28] sm:$0xf]
    %v8744 = vld [vmem:[%s8732 + $0x2c] sm:$0xf]
    %v8745 = vld [vmem:[%s8732 + $0x30] sm:$0xf]
    %v8746 = vld [vmem:[%s8732 + $0x34] sm:$0xf]
    %v8747 = vld [vmem:[%s8732 + $0x38] sm:$0xf]
    %v8748 = vld [vmem:[%s8732 + $0x3c] sm:$0xf]
    %v8749 = vld [vmem:[%s8732 + $0x40] sm:$0xf]
    %v8750 = vld [vmem:[%s8732 + $0x44] sm:$0xf]
    %v8751 = vld [vmem:[%s8732 + $0x48] sm:$0xf]
    %v8752 = vld [vmem:[%s8732 + $0x4c] sm:$0xf]
    %v8753 = vld [vmem:[%s8732 + $0x50] sm:$0xf]
    %v8754 = vld [vmem:[%s8732 + $0x54] sm:$0xf]
    %v8755 = vld [vmem:[%s8732 + $0x58] sm:$0xf]
    %v8756 = vld [vmem:[%s8732 + $0x5c] sm:$0xf]
    %v8757 = vld [vmem:[%s8732 + $0x60] sm:$0xf]
    %v8758 = vld [vmem:[%s8732 + $0x64] sm:$0xf]
    %v8759 = vld [vmem:[%s8732 + $0x68] sm:$0xf]
    %v8760 = vld [vmem:[%s8732 + $0x6c] sm:$0xf]
    %v8761 = vld [vmem:[%s8732 + $0x70] sm:$0xf]
    %v8762 = vld [vmem:[%s8732 + $0x74] sm:$0xf]
    %v8763 = vld [vmem:[%s8732 + $0x78] sm:$0xf]
    %v8764 = vld [vmem:[%s8732 + $0x7c] sm:$0xf]
    %v8765 = vld [vmem:[%s8732 + $0x80] sm:$0xf]
    %v8766 = vld [vmem:[%s8732 + $0x84] sm:$0xf]
    %v8767 = vld [vmem:[%s8732 + $0x88] sm:$0xf]
    %v8768 = vld [vmem:[%s8732 + $0x8c] sm:$0xf]
    %v8772 = vrot.slane %v8729, 7
    %v8773 = vrot.slane %v8730, 7
    %v8774 = vrot.slane %v8731, 7
    %v8813 = vunpack.c.l.b16 %v8733
    %v8814 = vunpack.c.l.b16 %v8734
    %v8815 = vunpack.c.l.b16 %v8735
    %v8816 = vunpack.c.l.b16 %v8736
    %v8817 = vunpack.c.l.b16 %v8737
    %v8818 = vunpack.c.l.b16 %v8738
    %v8819 = vunpack.c.l.b16 %v8739
    %v8820 = vunpack.c.l.b16 %v8740
    %v8821 = vunpack.c.l.b16 %v8741
    %v8822 = vunpack.c.l.b16 %v8742
    %v8823 = vunpack.c.l.b16 %v8743
    %v8824 = vunpack.c.l.b16 %v8744
    %v8825 = vunpack.c.l.b16 %v8745
    %v8826 = vunpack.c.l.b16 %v8746
    %v8827 = vunpack.c.l.b16 %v8747
    %v8828 = vunpack.c.l.b16 %v8748
    %v8829 = vunpack.c.l.b16 %v8749
    %v8830 = vunpack.c.l.b16 %v8750
    %v8831 = vunpack.c.l.b16 %v8751
    %v8832 = vunpack.c.l.b16 %v8752
    %v8833 = vunpack.c.l.b16 %v8753
    %v8834 = vunpack.c.l.b16 %v8754
    %v8835 = vunpack.c.l.b16 %v8755
    %v8836 = vunpack.c.l.b16 %v8756
    %v8837 = vunpack.c.l.b16 %v8757
    %v8838 = vunpack.c.l.b16 %v8758
    %v8839 = vunpack.c.l.b16 %v8759
    %v8840 = vunpack.c.l.b16 %v8760
    %v8841 = vunpack.c.l.b16 %v8761
    %v8842 = vunpack.c.l.b16 %v8762
    %v8843 = vunpack.c.l.b16 %v8763
    %v8844 = vunpack.c.l.b16 %v8764
    %v8845 = vunpack.c.l.b16 %v8765
    %v8846 = vunpack.c.l.b16 %v8766
    %v8847 = vunpack.c.l.b16 %v8767
    %v8848 = vunpack.c.l.b16 %v8768
    %v8849 = vpack.c.b16 %v8814, %v8813
    %v8850 = vpack.c.b16 %v8816, %v8815
    %v8851 = vpack.c.b16 %v8818, %v8817
    %v8852 = vpack.c.b16 %v8820, %v8819
    %v8853 = vpack.c.b16 %v8822, %v8821
    %v8854 = vpack.c.b16 %v8824, %v8823
    %v8855 = vpack.c.b16 %v8826, %v8825
    %v8856 = vpack.c.b16 %v8828, %v8827
    %v8857 = vpack.c.b16 %v8830, %v8829
    %v8858 = vpack.c.b16 %v8832, %v8831
    %v8859 = vpack.c.b16 %v8834, %v8833
    %v8860 = vpack.c.b16 %v8836, %v8835
    %v8861 = vpack.c.b16 %v8838, %v8837
    %v8862 = vpack.c.b16 %v8840, %v8839
    %v8863 = vpack.c.b16 %v8842, %v8841
    %v8864 = vpack.c.b16 %v8844, %v8843
    %v8865 = vpack.c.b16 %v8846, %v8845
    %v8866 = vpack.c.b16 %v8848, %v8847
    %v8886 = vsel %vm7055, %v8774, 0
    %8888 = vmatprep.subr.bf16.mxu0 0
    %8889 = vmatpush1.bf16.msra.mxu0 %v8849
    %8890 = vmatprep.subr.bf16.mxu0 0
    %8891 = vmatpush1.bf16.msra.mxu0 %v8850
    %8892 = vmatprep.subr.bf16.mxu0 0
    %8893 = vmatpush1.bf16.msra.mxu0 %v8851
    %8894 = vmatprep.subr.bf16.mxu0 0
    %8895 = vmatpush1.bf16.msra.mxu0 %v8852
    %8896 = vmatprep.subr.bf16.mxu0 0
    %8897 = vmatpush1.bf16.msra.mxu0 %v8853
    %8898 = vmatprep.subr.bf16.mxu0 0
    %8899 = vmatpush1.bf16.msra.mxu0 %v8854
    %8900 = vmatprep.subr.bf16.mxu0 0
    %8901 = vmatpush1.bf16.msra.mxu0 %v8855
    %8902 = vmatprep.subr.bf16.mxu0 0
    %8903 = vmatpush1.bf16.msra.mxu0 %v8856
    %8904 = vmatprep.subr.bf16.mxu0 0
    %8905 = vmatpush1.bf16.msra.mxu0 %v8857
    %8906 = vmatprep.subr.bf16.mxu0 0
    %8907 = vmatpush1.bf16.msra.mxu0 %v8858
    %8908 = vmatprep.subr.bf16.mxu0 0
    %8909 = vmatpush1.bf16.msra.mxu0 %v8859
    %8910 = vmatprep.subr.bf16.mxu0 0
    %8911 = vmatpush1.bf16.msra.mxu0 %v8860
    %8912 = vmatprep.subr.bf16.mxu0 0
    %8913 = vmatpush1.bf16.msra.mxu0 %v8861
    %8914 = vmatprep.subr.bf16.mxu0 0
    %8915 = vmatpush1.bf16.msra.mxu0 %v8862
    %8916 = vmatprep.subr.bf16.mxu0 0
    %8917 = vmatpush1.bf16.msra.mxu0 %v8863
    %8918 = vmatprep.subr.bf16.mxu0 0
    %8919 = vmatpush1.bf16.msra.mxu0 %v8864
    %8920 = vmatprep.mubr.bf16.mxu0 %v8773
    %8921 = vmatmul.mubr.bf16.gmra.mrb[0].mxu0 %v8772
    %v8922 = vpop.f32.mrb[0].mxu0
    %v8923 = vadd.f32 0.0, %v8922
    %v8924 = vpop.f32.mrb[0].mxu0
    %v8925 = vpop.f32.mrb[0].mxu0
    %v8926 = vpop.f32.mrb[0].mxu0
    %8927 = vdwg.mxu0
    %8928 = vmatprep.subr.bf16.mxu0 0
    %8929 = vmatpush1.bf16.msra.mxu0 %v8865
    %8930 = vmatprep.subr.bf16.mxu0 0
    %8931 = vmatpush1.bf16.msra.mxu0 %v8866
    %8932 = vmatprep.subr.bf16.mxu0 0
    %8933 = vmatpush1.bf16.msra.mxu0 0
    %8934 = vmatprep.subr.bf16.mxu0 0
    %8935 = vmatpush1.bf16.msra.mxu0 0
    %8936 = vmatprep.subr.bf16.mxu0 0
    %8937 = vmatpush1.bf16.msra.mxu0 0
    %8938 = vmatprep.subr.bf16.mxu0 0
    %8939 = vmatpush1.bf16.msra.mxu0 0
    %8940 = vmatprep.subr.bf16.mxu0 0
    %8941 = vmatpush1.bf16.msra.mxu0 0
    %8942 = vmatprep.subr.bf16.mxu0 0
    %8943 = vmatpush1.bf16.msra.mxu0 0
    %8944 = vmatprep.subr.bf16.mxu0 0
    %8945 = vmatpush1.bf16.msra.mxu0 0
    %8946 = vmatprep.subr.bf16.mxu0 0
    %8947 = vmatpush1.bf16.msra.mxu0 0
    %8948 = vmatprep.subr.bf16.mxu0 0
    %8949 = vmatpush1.bf16.msra.mxu0 0
    %8950 = vmatprep.subr.bf16.mxu0 0
    %8951 = vmatpush1.bf16.msra.mxu0 0
    %8952 = vmatprep.subr.bf16.mxu0 0
    %8953 = vmatpush1.bf16.msra.mxu0 0
    %8954 = vmatprep.subr.bf16.mxu0 0
    %8955 = vmatpush1.bf16.msra.mxu0 0
    %8956 = vmatprep.subr.bf16.mxu0 0
    %8957 = vmatpush1.bf16.msra.mxu0 0
    %8958 = vmatprep.subr.bf16.mxu0 0
    %8959 = vmatpush1.bf16.msra.mxu0 0
    %8960 = vmatprep.mubr.bf16.mxu0 0
    %8961 = vmatmul.mubr.bf16.gmra.mrb[0].mxu0 %v8886
    %v8962 = vpop.f32.mrb[0].mxu0
    %v8963 = vadd.f32 %v8923, %v8962
    %v8964 = vpop.f32.mrb[0].mxu0
    %v8965 = vpop.f32.mrb[0].mxu0
    %v8966 = vpop.f32.mrb[0].mxu0
    %8967 = vdwg.mxu0
    %v8968 = vadd.f32 %v8728, %v8963
    %v8969 = vld [vmem:[#allocation3 + $0x18] sm:$0x1]
    %v8970 = vld [vmem:[#allocation3 + $0x20] sm:$0x1]
    %v8971 = vld [vmem:[#allocation3 + $0x28] sm:$0x1]
    %s8972 = scalar_lea.vmem %s7, 1152
    %v8973 = vld [vmem:[%s8972] sm:$0xf]
    %v8974 = vld [vmem:[%s8972 + $0x4] sm:$0xf]
    %v8975 = vld [vmem:[%s8972 + $0x8] sm:$0xf]
    %v8976 = vld [vmem:[%s8972 + $0xc] sm:$0xf]
    %v8977 = vld [vmem:[%s8972 + $0x10] sm:$0xf]
    %v8978 = vld [vmem:[%s8972 + $0x14] sm:$0xf]
    %v8979 = vld [vmem:[%s8972 + $0x18] sm:$0xf]
    %v8980 = vld [vmem:[%s8972 + $0x1c] sm:$0xf]
    %v8981 = vld [vmem:[%s8972 + $0x20] sm:$0xf]
    %v8982 = vld [vmem:[%s8972 + $0x24] sm:$0xf]
    %v8983 = vld [vmem:[%s8972 + $0x28] sm:$0xf]
    %v8984 = vld [vmem:[%s8972 + $0x2c] sm:$0xf]
    %v8985 = vld [vmem:[%s8972 + $0x30] sm:$0xf]
    %v8986 = vld [vmem:[%s8972 + $0x34] sm:$0xf]
    %v8987 = vld [vmem:[%s8972 + $0x38] sm:$0xf]
    %v8988 = vld [vmem:[%s8972 + $0x3c] sm:$0xf]
    %v8989 = vld [vmem:[%s8972 + $0x40] sm:$0xf]
    %v8990 = vld [vmem:[%s8972 + $0x44] sm:$0xf]
    %v8991 = vld [vmem:[%s8972 + $0x48] sm:$0xf]
    %v8992 = vld [vmem:[%s8972 + $0x4c] sm:$0xf]
    %v8993 = vld [vmem:[%s8972 + $0x50] sm:$0xf]
    %v8994 = vld [vmem:[%s8972 + $0x54] sm:$0xf]
    %v8995 = vld [vmem:[%s8972 + $0x58] sm:$0xf]
    %v8996 = vld [vmem:[%s8972 + $0x5c] sm:$0xf]
    %v8997 = vld [vmem:[%s8972 + $0x60] sm:$0xf]
    %v8998 = vld [vmem:[%s8972 + $0x64] sm:$0xf]
    %v8999 = vld [vmem:[%s8972 + $0x68] sm:$0xf]
    %v9000 = vld [vmem:[%s8972 + $0x6c] sm:$0xf]
    %v9001 = vld [vmem:[%s8972 + $0x70] sm:$0xf]
    %v9002 = vld [vmem:[%s8972 + $0x74] sm:$0xf]
    %v9003 = vld [vmem:[%s8972 + $0x78] sm:$0xf]
    %v9004 = vld [vmem:[%s8972 + $0x7c] sm:$0xf]
    %v9005 = vld [vmem:[%s8972 + $0x80] sm:$0xf]
    %v9006 = vld [vmem:[%s8972 + $0x84] sm:$0xf]
    %v9007 = vld [vmem:[%s8972 + $0x88] sm:$0xf]
    %v9008 = vld [vmem:[%s8972 + $0x8c] sm:$0xf]
    %v9045 = vunpack.c.l.b16 %v8973
    %v9046 = vunpack.c.l.b16 %v8974
    %v9047 = vunpack.c.l.b16 %v8975
    %v9048 = vunpack.c.l.b16 %v8976
    %v9049 = vunpack.c.l.b16 %v8977
    %v9050 = vunpack.c.l.b16 %v8978
    %v9051 = vunpack.c.l.b16 %v8979
    %v9052 = vunpack.c.l.b16 %v8980
    %v9053 = vunpack.c.l.b16 %v8981
    %v9054 = vunpack.c.l.b16 %v8982
    %v9055 = vunpack.c.l.b16 %v8983
    %v9056 = vunpack.c.l.b16 %v8984
    %v9057 = vunpack.c.l.b16 %v8985
    %v9058 = vunpack.c.l.b16 %v8986
    %v9059 = vunpack.c.l.b16 %v8987
    %v9060 = vunpack.c.l.b16 %v8988
    %v9061 = vunpack.c.l.b16 %v8989
    %v9062 = vunpack.c.l.b16 %v8990
    %v9063 = vunpack.c.l.b16 %v8991
    %v9064 = vunpack.c.l.b16 %v8992
    %v9065 = vunpack.c.l.b16 %v8993
    %v9066 = vunpack.c.l.b16 %v8994
    %v9067 = vunpack.c.l.b16 %v8995
    %v9068 = vunpack.c.l.b16 %v8996
    %v9069 = vunpack.c.l.b16 %v8997
    %v9070 = vunpack.c.l.b16 %v8998
    %v9071 = vunpack.c.l.b16 %v8999
    %v9072 = vunpack.c.l.b16 %v9000
    %v9073 = vunpack.c.l.b16 %v9001
    %v9074 = vunpack.c.l.b16 %v9002
    %v9075 = vunpack.c.l.b16 %v9003
    %v9076 = vunpack.c.l.b16 %v9004
    %v9077 = vunpack.c.l.b16 %v9005
    %v9078 = vunpack.c.l.b16 %v9006
    %v9079 = vunpack.c.l.b16 %v9007
    %v9080 = vunpack.c.l.b16 %v9008
    %v9081 = vpack.c.b16 %v9046, %v9045
    %v9082 = vpack.c.b16 %v9048, %v9047
    %v9083 = vpack.c.b16 %v9050, %v9049
    %v9084 = vpack.c.b16 %v9052, %v9051
    %v9085 = vpack.c.b16 %v9054, %v9053
    %v9086 = vpack.c.b16 %v9056, %v9055
    %v9087 = vpack.c.b16 %v9058, %v9057
    %v9088 = vpack.c.b16 %v9060, %v9059
    %v9089 = vpack.c.b16 %v9062, %v9061
    %v9090 = vpack.c.b16 %v9064, %v9063
    %v9091 = vpack.c.b16 %v9066, %v9065
    %v9092 = vpack.c.b16 %v9068, %v9067
    %v9093 = vpack.c.b16 %v9070, %v9069
    %v9094 = vpack.c.b16 %v9072, %v9071
    %v9095 = vpack.c.b16 %v9074, %v9073
    %v9096 = vpack.c.b16 %v9076, %v9075
    %v9097 = vpack.c.b16 %v9078, %v9077
    %v9098 = vpack.c.b16 %v9080, %v9079
    %v9118 = vsel %vm7055, %v8971, 0
    %9120 = vmatprep.subr.bf16.mxu0 0
    %9121 = vmatpush1.bf16.msra.mxu0 %v9081
    %9122 = vmatprep.subr.bf16.mxu0 0
    %9123 = vmatpush1.bf16.msra.mxu0 %v9082
    %9124 = vmatprep.subr.bf16.mxu0 0
    %9125 = vmatpush1.bf16.msra.mxu0 %v9083
    %9126 = vmatprep.subr.bf16.mxu0 0
    %9127 = vmatpush1.bf16.msra.mxu0 %v9084
    %9128 = vmatprep.subr.bf16.mxu0 0
    %9129 = vmatpush1.bf16.msra.mxu0 %v9085
    %9130 = vmatprep.subr.bf16.mxu0 0
    %9131 = vmatpush1.bf16.msra.mxu0 %v9086
    %9132 = vmatprep.subr.bf16.mxu0 0
    %9133 = vmatpush1.bf16.msra.mxu0 %v9087
    %9134 = vmatprep.subr.bf16.mxu0 0
    %9135 = vmatpush1.bf16.msra.mxu0 %v9088
    %9136 = vmatprep.subr.bf16.mxu0 0
    %9137 = vmatpush1.bf16.msra.mxu0 %v9089
    %9138 = vmatprep.subr.bf16.mxu0 0
    %9139 = vmatpush1.bf16.msra.mxu0 %v9090
    %9140 = vmatprep.subr.bf16.mxu0 0
    %9141 = vmatpush1.bf16.msra.mxu0 %v9091
    %9142 = vmatprep.subr.bf16.mxu0 0
    %9143 = vmatpush1.bf16.msra.mxu0 %v9092
    %9144 = vmatprep.subr.bf16.mxu0 0
    %9145 = vmatpush1.bf16.msra.mxu0 %v9093
    %9146 = vmatprep.subr.bf16.mxu0 0
    %9147 = vmatpush1.bf16.msra.mxu0 %v9094
    %9148 = vmatprep.subr.bf16.mxu0 0
    %9149 = vmatpush1.bf16.msra.mxu0 %v9095
    %9150 = vmatprep.subr.bf16.mxu0 0
    %9151 = vmatpush1.bf16.msra.mxu0 %v9096
    %9152 = vmatprep.mubr.bf16.mxu0 %v8970
    %9153 = vmatmul.mubr.bf16.gmra.mrb[0].mxu0 %v8969
    %v9154 = vpop.f32.mrb[0].mxu0
    %v9155 = vadd.f32 0.0, %v9154
    %v9156 = vpop.f32.mrb[0].mxu0
    %v9157 = vpop.f32.mrb[0].mxu0
    %v9158 = vpop.f32.mrb[0].mxu0
    %9159 = vdwg.mxu0
    %9160 = vmatprep.subr.bf16.mxu0 0
    %9161 = vmatpush1.bf16.msra.mxu0 %v9097
    %9162 = vmatprep.subr.bf16.mxu0 0
    %9163 = vmatpush1.bf16.msra.mxu0 %v9098
    %9164 = vmatprep.subr.bf16.mxu0 0
    %9165 = vmatpush1.bf16.msra.mxu0 0
    %9166 = vmatprep.subr.bf16.mxu0 0
    %9167 = vmatpush1.bf16.msra.mxu0 0
    %9168 = vmatprep.subr.bf16.mxu0 0
    %9169 = vmatpush1.bf16.msra.mxu0 0
    %9170 = vmatprep.subr.bf16.mxu0 0
    %9171 = vmatpush1.bf16.msra.mxu0 0
    %9172 = vmatprep.subr.bf16.mxu0 0
    %9173 = vmatpush1.bf16.msra.mxu0 0
    %9174 = vmatprep.subr.bf16.mxu0 0
    %9175 = vmatpush1.bf16.msra.mxu0 0
    %9176 = vmatprep.subr.bf16.mxu0 0
    %9177 = vmatpush1.bf16.msra.mxu0 0
    %9178 = vmatprep.subr.bf16.mxu0 0
    %9179 = vmatpush1.bf16.msra.mxu0 0
    %9180 = vmatprep.subr.bf16.mxu0 0
    %9181 = vmatpush1.bf16.msra.mxu0 0
    %9182 = vmatprep.subr.bf16.mxu0 0
    %9183 = vmatpush1.bf16.msra.mxu0 0
    %9184 = vmatprep.subr.bf16.mxu0 0
    %9185 = vmatpush1.bf16.msra.mxu0 0
    %9186 = vmatprep.subr.bf16.mxu0 0
    %9187 = vmatpush1.bf16.msra.mxu0 0
    %9188 = vmatprep.subr.bf16.mxu0 0
    %9189 = vmatpush1.bf16.msra.mxu0 0
    %9190 = vmatprep.subr.bf16.mxu0 0
    %9191 = vmatpush1.bf16.msra.mxu0 0
    %9192 = vmatprep.mubr.bf16.mxu0 0
    %9193 = vmatmul.mubr.bf16.gmra.mrb[0].mxu0 %v9118
    %v9194 = vpop.f32.mrb[0].mxu0
    %v9195 = vadd.f32 %v9155, %v9194
    %v9196 = vpop.f32.mrb[0].mxu0
    %v9197 = vpop.f32.mrb[0].mxu0
    %v9198 = vpop.f32.mrb[0].mxu0
    %9199 = vdwg.mxu0
    %v9200 = vadd.f32 %v8968, %v9195
    %v9201 = vld [vmem:[#allocation3 + $0x18] sm:$0x2]
    %v9202 = vld [vmem:[#allocation3 + $0x20] sm:$0x2]
    %v9203 = vld [vmem:[#allocation3 + $0x28] sm:$0x2]
    %s9204 = scalar_lea.vmem %s7, 1296
    %v9205 = vld [vmem:[%s9204] sm:$0xf]
    %v9206 = vld [vmem:[%s9204 + $0x4] sm:$0xf]
    %v9207 = vld [vmem:[%s9204 + $0x8] sm:$0xf]
    %v9208 = vld [vmem:[%s9204 + $0xc] sm:$0xf]
    %v9209 = vld [vmem:[%s9204 + $0x10] sm:$0xf]
    %v9210 = vld [vmem:[%s9204 + $0x14] sm:$0xf]
    %v9211 = vld [vmem:[%s9204 + $0x18] sm:$0xf]
    %v9212 = vld [vmem:[%s9204 + $0x1c] sm:$0xf]
    %v9213 = vld [vmem:[%s9204 + $0x20] sm:$0xf]
    %v9214 = vld [vmem:[%s9204 + $0x24] sm:$0xf]
    %v9215 = vld [vmem:[%s9204 + $0x28] sm:$0xf]
    %v9216 = vld [vmem:[%s9204 + $0x2c] sm:$0xf]
    %v9217 = vld [vmem:[%s9204 + $0x30] sm:$0xf]
    %v9218 = vld [vmem:[%s9204 + $0x34] sm:$0xf]
    %v9219 = vld [vmem:[%s9204 + $0x38] sm:$0xf]
    %v9220 = vld [vmem:[%s9204 + $0x3c] sm:$0xf]
    %v9221 = vld [vmem:[%s9204 + $0x40] sm:$0xf]
    %v9222 = vld [vmem:[%s9204 + $0x44] sm:$0xf]
    %v9223 = vld [vmem:[%s9204 + $0x48] sm:$0xf]
    %v9224 = vld [vmem:[%s9204 + $0x4c] sm:$0xf]
    %v9225 = vld [vmem:[%s9204 + $0x50] sm:$0xf]
    %v9226 = vld [vmem:[%s9204 + $0x54] sm:$0xf]
    %v9227 = vld [vmem:[%s9204 + $0x58] sm:$0xf]
    %v9228 = vld [vmem:[%s9204 + $0x5c] sm:$0xf]
    %v9229 = vld [vmem:[%s9204 + $0x60] sm:$0xf]
    %v9230 = vld [vmem:[%s9204 + $0x64] sm:$0xf]
    %v9231 = vld [vmem:[%s9204 + $0x68] sm:$0xf]
    %v9232 = vld [vmem:[%s9204 + $0x6c] sm:$0xf]
    %v9233 = vld [vmem:[%s9204 + $0x70] sm:$0xf]
    %v9234 = vld [vmem:[%s9204 + $0x74] sm:$0xf]
    %v9235 = vld [vmem:[%s9204 + $0x78] sm:$0xf]
    %v9236 = vld [vmem:[%s9204 + $0x7c] sm:$0xf]
    %v9237 = vld [vmem:[%s9204 + $0x80] sm:$0xf]
    %v9238 = vld [vmem:[%s9204 + $0x84] sm:$0xf]
    %v9239 = vld [vmem:[%s9204 + $0x88] sm:$0xf]
    %v9240 = vld [vmem:[%s9204 + $0x8c] sm:$0xf]
    %v9244 = vrot.slane %v9201, 1
    %v9245 = vrot.slane %v9202, 1
    %v9246 = vrot.slane %v9203, 1
    %v9285 = vunpack.c.l.b16 %v9205
    %v9286 = vunpack.c.l.b16 %v9206
    %v9287 = vunpack.c.l.b16 %v9207
    %v9288 = vunpack.c.l.b16 %v9208
    %v9289 = vunpack.c.l.b16 %v9209
    %v9290 = vunpack.c.l.b16 %v9210
    %v9291 = vunpack.c.l.b16 %v9211
    %v9292 = vunpack.c.l.b16 %v9212
    %v9293 = vunpack.c.l.b16 %v9213
    %v9294 = vunpack.c.l.b16 %v9214
    %v9295 = vunpack.c.l.b16 %v9215
    %v9296 = vunpack.c.l.b16 %v9216
    %v9297 = vunpack.c.l.b16 %v9217
    %v9298 = vunpack.c.l.b16 %v9218
    %v9299 = vunpack.c.l.b16 %v9219
    %v9300 = vunpack.c.l.b16 %v9220
    %v9301 = vunpack.c.l.b16 %v9221
    %v9302 = vunpack.c.l.b16 %v9222
    %v9303 = vunpack.c.l.b16 %v9223
    %v9304 = vunpack.c.l.b16 %v9224
    %v9305 = vunpack.c.l.b16 %v9225
    %v9306 = vunpack.c.l.b16 %v9226
    %v9307 = vunpack.c.l.b16 %v9227
    %v9308 = vunpack.c.l.b16 %v9228
    %v9309 = vunpack.c.l.b16 %v9229
    %v9310 = vunpack.c.l.b16 %v9230
    %v9311 = vunpack.c.l.b16 %v9231
    %v9312 = vunpack.c.l.b16 %v9232
    %v9313 = vunpack.c.l.b16 %v9233
    %v9314 = vunpack.c.l.b16 %v9234
    %v9315 = vunpack.c.l.b16 %v9235
    %v9316 = vunpack.c.l.b16 %v9236
    %v9317 = vunpack.c.l.b16 %v9237
    %v9318 = vunpack.c.l.b16 %v9238
    %v9319 = vunpack.c.l.b16 %v9239
    %v9320 = vunpack.c.l.b16 %v9240
    %v9321 = vpack.c.b16 %v9286, %v9285
    %v9322 = vpack.c.b16 %v9288, %v9287
    %v9323 = vpack.c.b16 %v9290, %v9289
    %v9324 = vpack.c.b16 %v9292, %v9291
    %v9325 = vpack.c.b16 %v9294, %v9293
    %v9326 = vpack.c.b16 %v9296, %v9295
    %v9327 = vpack.c.b16 %v9298, %v9297
    %v9328 = vpack.c.b16 %v9300, %v9299
    %v9329 = vpack.c.b16 %v9302, %v9301
    %v9330 = vpack.c.b16 %v9304, %v9303
    %v9331 = vpack.c.b16 %v9306, %v9305
    %v9332 = vpack.c.b16 %v9308, %v9307
    %v9333 = vpack.c.b16 %v9310, %v9309
    %v9334 = vpack.c.b16 %v9312, %v9311
    %v9335 = vpack.c.b16 %v9314, %v9313
    %v9336 = vpack.c.b16 %v9316, %v9315
    %v9337 = vpack.c.b16 %v9318, %v9317
    %v9338 = vpack.c.b16 %v9320, %v9319
    %v9358 = vsel %vm7055, %v9246, 0
    %9360 = vmatprep.subr.bf16.mxu0 0
    %9361 = vmatpush1.bf16.msra.mxu0 %v9321
    %9362 = vmatprep.subr.bf16.mxu0 0
    %9363 = vmatpush1.bf16.msra.mxu0 %v9322
    %9364 = vmatprep.subr.bf16.mxu0 0
    %9365 = vmatpush1.bf16.msra.mxu0 %v9323
    %9366 = vmatprep.subr.bf16.mxu0 0
    %9367 = vmatpush1.bf16.msra.mxu0 %v9324
    %9368 = vmatprep.subr.bf16.mxu0 0
    %9369 = vmatpush1.bf16.msra.mxu0 %v9325
    %9370 = vmatprep.subr.bf16.mxu0 0
    %9371 = vmatpush1.bf16.msra.mxu0 %v9326
    %9372 = vmatprep.subr.bf16.mxu0 0
    %9373 = vmatpush1.bf16.msra.mxu0 %v9327
    %9374 = vmatprep.subr.bf16.mxu0 0
    %9375 = vmatpush1.bf16.msra.mxu0 %v9328
    %9376 = vmatprep.subr.bf16.mxu0 0
    %9377 = vmatpush1.bf16.msra.mxu0 %v9329
    %9378 = vmatprep.subr.bf16.mxu0 0
    %9379 = vmatpush1.bf16.msra.mxu0 %v9330
    %9380 = vmatprep.subr.bf16.mxu0 0
    %9381 = vmatpush1.bf16.msra.mxu0 %v9331
    %9382 = vmatprep.subr.bf16.mxu0 0
    %9383 = vmatpush1.bf16.msra.mxu0 %v9332
    %9384 = vmatprep.subr.bf16.mxu0 0
    %9385 = vmatpush1.bf16.msra.mxu0 %v9333
    %9386 = vmatprep.subr.bf16.mxu0 0
    %9387 = vmatpush1.bf16.msra.mxu0 %v9334
    %9388 = vmatprep.subr.bf16.mxu0 0
    %9389 = vmatpush1.bf16.msra.mxu0 %v9335
    %9390 = vmatprep.subr.bf16.mxu0 0
    %9391 = vmatpush1.bf16.msra.mxu0 %v9336
    %9392 = vmatprep.mubr.bf16.mxu0 %v9245
    %9393 = vmatmul.mubr.bf16.gmra.mrb[0].mxu0 %v9244
    %v9394 = vpop.f32.mrb[0].mxu0
    %v9395 = vadd.f32 0.0, %v9394
    %v9396 = vpop.f32.mrb[0].mxu0
    %v9397 = vpop.f32.mrb[0].mxu0
    %v9398 = vpop.f32.mrb[0].mxu0
    %9399 = vdwg.mxu0
    %9400 = vmatprep.subr.bf16.mxu0 0
    %9401 = vmatpush1.bf16.msra.mxu0 %v9337
    %9402 = vmatprep.subr.bf16.mxu0 0
    %9403 = vmatpush1.bf16.msra.mxu0 %v9338
    %9404 = vmatprep.subr.bf16.mxu0 0
    %9405 = vmatpush1.bf16.msra.mxu0 0
    %9406 = vmatprep.subr.bf16.mxu0 0
    %9407 = vmatpush1.bf16.msra.mxu0 0
    %9408 = vmatprep.subr.bf16.mxu0 0
    %9409 = vmatpush1.bf16.msra.mxu0 0
    %9410 = vmatprep.subr.bf16.mxu0 0
    %9411 = vmatpush1.bf16.msra.mxu0 0
    %9412 = vmatprep.subr.bf16.mxu0 0
    %9413 = vmatpush1.bf16.msra.mxu0 0
    %9414 = vmatprep.subr.bf16.mxu0 0
    %9415 = vmatpush1.bf16.msra.mxu0 0
    %9416 = vmatprep.subr.bf16.mxu0 0
    %9417 = vmatpush1.bf16.msra.mxu0 0
    %9418 = vmatprep.subr.bf16.mxu0 0
    %9419 = vmatpush1.bf16.msra.mxu0 0
    %9420 = vmatprep.subr.bf16.mxu0 0
    %9421 = vmatpush1.bf16.msra.mxu0 0
    %9422 = vmatprep.subr.bf16.mxu0 0
    %9423 = vmatpush1.bf16.msra.mxu0 0
    %9424 = vmatprep.subr.bf16.mxu0 0
    %9425 = vmatpush1.bf16.msra.mxu0 0
    %9426 = vmatprep.subr.bf16.mxu0 0
    %9427 = vmatpush1.bf16.msra.mxu0 0
    %9428 = vmatprep.subr.bf16.mxu0 0
    %9429 = vmatpush1.bf16.msra.mxu0 0
    %9430 = vmatprep.subr.bf16.mxu0 0
    %9431 = vmatpush1.bf16.msra.mxu0 0
    %9432 = vmatprep.mubr.bf16.mxu0 0
    %9433 = vmatmul.mubr.bf16.gmra.mrb[0].mxu0 %v9358
    %v9434 = vpop.f32.mrb[0].mxu0
    %v9435 = vadd.f32 %v9395, %v9434
    %v9436 = vpop.f32.mrb[0].mxu0
    %v9437 = vpop.f32.mrb[0].mxu0
    %v9438 = vpop.f32.mrb[0].mxu0
    %9439 = vdwg.mxu0
    %v9440 = vadd.f32 %v9200, %v9435
    %v9441 = vld [vmem:[#allocation3 + $0x18] sm:$0x4]
    %v9442 = vld [vmem:[#allocation3 + $0x20] sm:$0x4]
    %v9443 = vld [vmem:[#allocation3 + $0x28] sm:$0x4]
    %s9444 = scalar_lea.vmem %s7, 1440
    %v9445 = vld [vmem:[%s9444] sm:$0xf]
    %v9446 = vld [vmem:[%s9444 + $0x4] sm:$0xf]
    %v9447 = vld [vmem:[%s9444 + $0x8] sm:$0xf]
    %v9448 = vld [vmem:[%s9444 + $0xc] sm:$0xf]
    %v9449 = vld [vmem:[%s9444 + $0x10] sm:$0xf]
    %v9450 = vld [vmem:[%s9444 + $0x14] sm:$0xf]
    %v9451 = vld [vmem:[%s9444 + $0x18] sm:$0xf]
    %v9452 = vld [vmem:[%s9444 + $0x1c] sm:$0xf]
    %v9453 = vld [vmem:[%s9444 + $0x20] sm:$0xf]
    %v9454 = vld [vmem:[%s9444 + $0x24] sm:$0xf]
    %v9455 = vld [vmem:[%s9444 + $0x28] sm:$0xf]
    %v9456 = vld [vmem:[%s9444 + $0x2c] sm:$0xf]
    %v9457 = vld [vmem:[%s9444 + $0x30] sm:$0xf]
    %v9458 = vld [vmem:[%s9444 + $0x34] sm:$0xf]
    %v9459 = vld [vmem:[%s9444 + $0x38] sm:$0xf]
    %v9460 = vld [vmem:[%s9444 + $0x3c] sm:$0xf]
    %v9461 = vld [vmem:[%s9444 + $0x40] sm:$0xf]
    %v9462 = vld [vmem:[%s9444 + $0x44] sm:$0xf]
    %v9463 = vld [vmem:[%s9444 + $0x48] sm:$0xf]
    %v9464 = vld [vmem:[%s9444 + $0x4c] sm:$0xf]
    %v9465 = vld [vmem:[%s9444 + $0x50] sm:$0xf]
    %v9466 = vld [vmem:[%s9444 + $0x54] sm:$0xf]
    %v9467 = vld [vmem:[%s9444 + $0x58] sm:$0xf]
    %v9468 = vld [vmem:[%s9444 + $0x5c] sm:$0xf]
    %v9469 = vld [vmem:[%s9444 + $0x60] sm:$0xf]
    %v9470 = vld [vmem:[%s9444 + $0x64] sm:$0xf]
    %v9471 = vld [vmem:[%s9444 + $0x68] sm:$0xf]
    %v9472 = vld [vmem:[%s9444 + $0x6c] sm:$0xf]
    %v9473 = vld [vmem:[%s9444 + $0x70] sm:$0xf]
    %v9474 = vld [vmem:[%s9444 + $0x74] sm:$0xf]
    %v9475 = vld [vmem:[%s9444 + $0x78] sm:$0xf]
    %v9476 = vld [vmem:[%s9444 + $0x7c] sm:$0xf]
    %v9477 = vld [vmem:[%s9444 + $0x80] sm:$0xf]
    %v9478 = vld [vmem:[%s9444 + $0x84] sm:$0xf]
    %v9479 = vld [vmem:[%s9444 + $0x88] sm:$0xf]
    %v9480 = vld [vmem:[%s9444 + $0x8c] sm:$0xf]
    %v9484 = vrot.slane %v9441, 2
    %v9485 = vrot.slane %v9442, 2
    %v9486 = vrot.slane %v9443, 2
    %v9525 = vunpack.c.l.b16 %v9445
    %v9526 = vunpack.c.l.b16 %v9446
    %v9527 = vunpack.c.l.b16 %v9447
    %v9528 = vunpack.c.l.b16 %v9448
    %v9529 = vunpack.c.l.b16 %v9449
    %v9530 = vunpack.c.l.b16 %v9450
    %v9531 = vunpack.c.l.b16 %v9451
    %v9532 = vunpack.c.l.b16 %v9452
    %v9533 = vunpack.c.l.b16 %v9453
    %v9534 = vunpack.c.l.b16 %v9454
    %v9535 = vunpack.c.l.b16 %v9455
    %v9536 = vunpack.c.l.b16 %v9456
    %v9537 = vunpack.c.l.b16 %v9457
    %v9538 = vunpack.c.l.b16 %v9458
    %v9539 = vunpack.c.l.b16 %v9459
    %v9540 = vunpack.c.l.b16 %v9460
    %v9541 = vunpack.c.l.b16 %v9461
    %v9542 = vunpack.c.l.b16 %v9462
    %v9543 = vunpack.c.l.b16 %v9463
    %v9544 = vunpack.c.l.b16 %v9464
    %v9545 = vunpack.c.l.b16 %v9465
    %v9546 = vunpack.c.l.b16 %v9466
    %v9547 = vunpack.c.l.b16 %v9467
    %v9548 = vunpack.c.l.b16 %v9468
    %v9549 = vunpack.c.l.b16 %v9469
    %v9550 = vunpack.c.l.b16 %v9470
    %v9551 = vunpack.c.l.b16 %v9471
    %v9552 = vunpack.c.l.b16 %v9472
    %v9553 = vunpack.c.l.b16 %v9473
    %v9554 = vunpack.c.l.b16 %v9474
    %v9555 = vunpack.c.l.b16 %v9475
    %v9556 = vunpack.c.l.b16 %v9476
    %v9557 = vunpack.c.l.b16 %v9477
    %v9558 = vunpack.c.l.b16 %v9478
    %v9559 = vunpack.c.l.b16 %v9479
    %v9560 = vunpack.c.l.b16 %v9480
    %v9561 = vpack.c.b16 %v9526, %v9525
    %v9562 = vpack.c.b16 %v9528, %v9527
    %v9563 = vpack.c.b16 %v9530, %v9529
    %v9564 = vpack.c.b16 %v9532, %v9531
    %v9565 = vpack.c.b16 %v9534, %v9533
    %v9566 = vpack.c.b16 %v9536, %v9535
    %v9567 = vpack.c.b16 %v9538, %v9537
    %v9568 = vpack.c.b16 %v9540, %v9539
    %v9569 = vpack.c.b16 %v9542, %v9541
    %v9570 = vpack.c.b16 %v9544, %v9543
    %v9571 = vpack.c.b16 %v9546, %v9545
    %v9572 = vpack.c.b16 %v9548, %v9547
    %v9573 = vpack.c.b16 %v9550, %v9549
    %v9574 = vpack.c.b16 %v9552, %v9551
    %v9575 = vpack.c.b16 %v9554, %v9553
    %v9576 = vpack.c.b16 %v9556, %v9555
    %v9577 = vpack.c.b16 %v9558, %v9557
    %v9578 = vpack.c.b16 %v9560, %v9559
    %v9598 = vsel %vm7055, %v9486, 0
    %9600 = vmatprep.subr.bf16.mxu0 0
    %9601 = vmatpush1.bf16.msra.mxu0 %v9561
    %9602 = vmatprep.subr.bf16.mxu0 0
    %9603 = vmatpush1.bf16.msra.mxu0 %v9562
    %9604 = vmatprep.subr.bf16.mxu0 0
    %9605 = vmatpush1.bf16.msra.mxu0 %v9563
    %9606 = vmatprep.subr.bf16.mxu0 0
    %9607 = vmatpush1.bf16.msra.mxu0 %v9564
    %9608 = vmatprep.subr.bf16.mxu0 0
    %9609 = vmatpush1.bf16.msra.mxu0 %v9565
    %9610 = vmatprep.subr.bf16.mxu0 0
    %9611 = vmatpush1.bf16.msra.mxu0 %v9566
    %9612 = vmatprep.subr.bf16.mxu0 0
    %9613 = vmatpush1.bf16.msra.mxu0 %v9567
    %9614 = vmatprep.subr.bf16.mxu0 0
    %9615 = vmatpush1.bf16.msra.mxu0 %v9568
    %9616 = vmatprep.subr.bf16.mxu0 0
    %9617 = vmatpush1.bf16.msra.mxu0 %v9569
    %9618 = vmatprep.subr.bf16.mxu0 0
    %9619 = vmatpush1.bf16.msra.mxu0 %v9570
    %9620 = vmatprep.subr.bf16.mxu0 0
    %9621 = vmatpush1.bf16.msra.mxu0 %v9571
    %9622 = vmatprep.subr.bf16.mxu0 0
    %9623 = vmatpush1.bf16.msra.mxu0 %v9572
    %9624 = vmatprep.subr.bf16.mxu0 0
    %9625 = vmatpush1.bf16.msra.mxu0 %v9573
    %9626 = vmatprep.subr.bf16.mxu0 0
    %9627 = vmatpush1.bf16.msra.mxu0 %v9574
    %9628 = vmatprep.subr.bf16.mxu0 0
    %9629 = vmatpush1.bf16.msra.mxu0 %v9575
    %9630 = vmatprep.subr.bf16.mxu0 0
    %9631 = vmatpush1.bf16.msra.mxu0 %v9576
    %9632 = vmatprep.mubr.bf16.mxu0 %v9485
    %9633 = vmatmul.mubr.bf16.gmra.mrb[0].mxu0 %v9484
    %v9634 = vpop.f32.mrb[0].mxu0
    %v9635 = vadd.f32 0.0, %v9634
    %v9636 = vpop.f32.mrb[0].mxu0
    %v9637 = vpop.f32.mrb[0].mxu0
    %v9638 = vpop.f32.mrb[0].mxu0
    %9639 = vdwg.mxu0
    %9640 = vmatprep.subr.bf16.mxu0 0
    %9641 = vmatpush1.bf16.msra.mxu0 %v9577
    %9642 = vmatprep.subr.bf16.mxu0 0
    %9643 = vmatpush1.bf16.msra.mxu0 %v9578
    %9644 = vmatprep.subr.bf16.mxu0 0
    %9645 = vmatpush1.bf16.msra.mxu0 0
    %9646 = vmatprep.subr.bf16.mxu0 0
    %9647 = vmatpush1.bf16.msra.mxu0 0
    %9648 = vmatprep.subr.bf16.mxu0 0
    %9649 = vmatpush1.bf16.msra.mxu0 0
    %9650 = vmatprep.subr.bf16.mxu0 0
    %9651 = vmatpush1.bf16.msra.mxu0 0
    %9652 = vmatprep.subr.bf16.mxu0 0
    %9653 = vmatpush1.bf16.msra.mxu0 0
    %9654 = vmatprep.subr.bf16.mxu0 0
    %9655 = vmatpush1.bf16.msra.mxu0 0
    %9656 = vmatprep.subr.bf16.mxu0 0
    %9657 = vmatpush1.bf16.msra.mxu0 0
    %9658 = vmatprep.subr.bf16.mxu0 0
    %9659 = vmatpush1.bf16.msra.mxu0 0
    %9660 = vmatprep.subr.bf16.mxu0 0
    %9661 = vmatpush1.bf16.msra.mxu0 0
    %9662 = vmatprep.subr.bf16.mxu0 0
    %9663 = vmatpush1.bf16.msra.mxu0 0
    %9664 = vmatprep.subr.bf16.mxu0 0
    %9665 = vmatpush1.bf16.msra.mxu0 0
    %9666 = vmatprep.subr.bf16.mxu0 0
    %9667 = vmatpush1.bf16.msra.mxu0 0
    %9668 = vmatprep.subr.bf16.mxu0 0
    %9669 = vmatpush1.bf16.msra.mxu0 0
    %9670 = vmatprep.subr.bf16.mxu0 0
    %9671 = vmatpush1.bf16.msra.mxu0 0
    %9672 = vmatprep.mubr.bf16.mxu0 0
    %9673 = vmatmul.mubr.bf16.gmra.mrb[0].mxu0 %v9598
    %v9674 = vpop.f32.mrb[0].mxu0
    %v9675 = vadd.f32 %v9635, %v9674
    %v9676 = vpop.f32.mrb[0].mxu0
    %v9677 = vpop.f32.mrb[0].mxu0
    %v9678 = vpop.f32.mrb[0].mxu0
    %9679 = vdwg.mxu0
    %v9680 = vadd.f32 %v9440, %v9675
    %v9681 = vld [vmem:[#allocation3 + $0x18] sm:$0x8]
    %v9682 = vld [vmem:[#allocation3 + $0x20] sm:$0x8]
    %v9683 = vld [vmem:[#allocation3 + $0x28] sm:$0x8]
    %s9684 = scalar_lea.vmem %s7, 1584
    %v9685 = vld [vmem:[%s9684] sm:$0xf]
    %v9686 = vld [vmem:[%s9684 + $0x4] sm:$0xf]
    %v9687 = vld [vmem:[%s9684 + $0x8] sm:$0xf]
    %v9688 = vld [vmem:[%s9684 + $0xc] sm:$0xf]
    %v9689 = vld [vmem:[%s9684 + $0x10] sm:$0xf]
    %v9690 = vld [vmem:[%s9684 + $0x14] sm:$0xf]
    %v9691 = vld [vmem:[%s9684 + $0x18] sm:$0xf]
    %v9692 = vld [vmem:[%s9684 + $0x1c] sm:$0xf]
    %v9693 = vld [vmem:[%s9684 + $0x20] sm:$0xf]
    %v9694 = vld [vmem:[%s9684 + $0x24] sm:$0xf]
    %v9695 = vld [vmem:[%s9684 + $0x28] sm:$0xf]
    %v9696 = vld [vmem:[%s9684 + $0x2c] sm:$0xf]
    %v9697 = vld [vmem:[%s9684 + $0x30] sm:$0xf]
    %v9698 = vld [vmem:[%s9684 + $0x34] sm:$0xf]
    %v9699 = vld [vmem:[%s9684 + $0x38] sm:$0xf]
    %v9700 = vld [vmem:[%s9684 + $0x3c] sm:$0xf]
    %v9701 = vld [vmem:[%s9684 + $0x40] sm:$0xf]
    %v9702 = vld [vmem:[%s9684 + $0x44] sm:$0xf]
    %v9703 = vld [vmem:[%s9684 + $0x48] sm:$0xf]
    %v9704 = vld [vmem:[%s9684 + $0x4c] sm:$0xf]
    %v9705 = vld [vmem:[%s9684 + $0x50] sm:$0xf]
    %v9706 = vld [vmem:[%s9684 + $0x54] sm:$0xf]
    %v9707 = vld [vmem:[%s9684 + $0x58] sm:$0xf]
    %v9708 = vld [vmem:[%s9684 + $0x5c] sm:$0xf]
    %v9709 = vld [vmem:[%s9684 + $0x60] sm:$0xf]
    %v9710 = vld [vmem:[%s9684 + $0x64] sm:$0xf]
    %v9711 = vld [vmem:[%s9684 + $0x68] sm:$0xf]
    %v9712 = vld [vmem:[%s9684 + $0x6c] sm:$0xf]
    %v9713 = vld [vmem:[%s9684 + $0x70] sm:$0xf]
    %v9714 = vld [vmem:[%s9684 + $0x74] sm:$0xf]
    %v9715 = vld [vmem:[%s9684 + $0x78] sm:$0xf]
    %v9716 = vld [vmem:[%s9684 + $0x7c] sm:$0xf]
    %v9717 = vld [vmem:[%s9684 + $0x80] sm:$0xf]
    %v9718 = vld [vmem:[%s9684 + $0x84] sm:$0xf]
    %v9719 = vld [vmem:[%s9684 + $0x88] sm:$0xf]
    %v9720 = vld [vmem:[%s9684 + $0x8c] sm:$0xf]
    %v9724 = vrot.slane %v9681, 3
    %v9725 = vrot.slane %v9682, 3
    %v9726 = vrot.slane %v9683, 3
    %v9765 = vunpack.c.l.b16 %v9685
    %v9766 = vunpack.c.l.b16 %v9686
    %v9767 = vunpack.c.l.b16 %v9687
    %v9768 = vunpack.c.l.b16 %v9688
    %v9769 = vunpack.c.l.b16 %v9689
    %v9770 = vunpack.c.l.b16 %v9690
    %v9771 = vunpack.c.l.b16 %v9691
    %v9772 = vunpack.c.l.b16 %v9692
    %v9773 = vunpack.c.l.b16 %v9693
    %v9774 = vunpack.c.l.b16 %v9694
    %v9775 = vunpack.c.l.b16 %v9695
    %v9776 = vunpack.c.l.b16 %v9696
    %v9777 = vunpack.c.l.b16 %v9697
    %v9778 = vunpack.c.l.b16 %v9698
    %v9779 = vunpack.c.l.b16 %v9699
    %v9780 = vunpack.c.l.b16 %v9700
    %v9781 = vunpack.c.l.b16 %v9701
    %v9782 = vunpack.c.l.b16 %v9702
    %v9783 = vunpack.c.l.b16 %v9703
    %v9784 = vunpack.c.l.b16 %v9704
    %v9785 = vunpack.c.l.b16 %v9705
    %v9786 = vunpack.c.l.b16 %v9706
    %v9787 = vunpack.c.l.b16 %v9707
    %v9788 = vunpack.c.l.b16 %v9708
    %v9789 = vunpack.c.l.b16 %v9709
    %v9790 = vunpack.c.l.b16 %v9710
    %v9791 = vunpack.c.l.b16 %v9711
    %v9792 = vunpack.c.l.b16 %v9712
    %v9793 = vunpack.c.l.b16 %v9713
    %v9794 = vunpack.c.l.b16 %v9714
    %v9795 = vunpack.c.l.b16 %v9715
    %v9796 = vunpack.c.l.b16 %v9716
    %v9797 = vunpack.c.l.b16 %v9717
    %v9798 = vunpack.c.l.b16 %v9718
    %v9799 = vunpack.c.l.b16 %v9719
    %v9800 = vunpack.c.l.b16 %v9720
    %v9801 = vpack.c.b16 %v9766, %v9765
    %v9802 = vpack.c.b16 %v9768, %v9767
    %v9803 = vpack.c.b16 %v9770, %v9769
    %v9804 = vpack.c.b16 %v9772, %v9771
    %v9805 = vpack.c.b16 %v9774, %v9773
    %v9806 = vpack.c.b16 %v9776, %v9775
    %v9807 = vpack.c.b16 %v9778, %v9777
    %v9808 = vpack.c.b16 %v9780, %v9779
    %v9809 = vpack.c.b16 %v9782, %v9781
    %v9810 = vpack.c.b16 %v9784, %v9783
    %v9811 = vpack.c.b16 %v9786, %v9785
    %v9812 = vpack.c.b16 %v9788, %v9787
    %v9813 = vpack.c.b16 %v9790, %v9789
    %v9814 = vpack.c.b16 %v9792, %v9791
    %v9815 = vpack.c.b16 %v9794, %v9793
    %v9816 = vpack.c.b16 %v9796, %v9795
    %v9817 = vpack.c.b16 %v9798, %v9797
    %v9818 = vpack.c.b16 %v9800, %v9799
    %v9838 = vsel %vm7055, %v9726, 0
    %9840 = vmatprep.subr.bf16.mxu0 0
    %9841 = vmatpush1.bf16.msra.mxu0 %v9801
    %9842 = vmatprep.subr.bf16.mxu0 0
    %9843 = vmatpush1.bf16.msra.mxu0 %v9802
    %9844 = vmatprep.subr.bf16.mxu0 0
    %9845 = vmatpush1.bf16.msra.mxu0 %v9803
    %9846 = vmatprep.subr.bf16.mxu0 0
    %9847 = vmatpush1.bf16.msra.mxu0 %v9804
    %9848 = vmatprep.subr.bf16.mxu0 0
    %9849 = vmatpush1.bf16.msra.mxu0 %v9805
    %9850 = vmatprep.subr.bf16.mxu0 0
    %9851 = vmatpush1.bf16.msra.mxu0 %v9806
    %9852 = vmatprep.subr.bf16.mxu0 0
    %9853 = vmatpush1.bf16.msra.mxu0 %v9807
    %9854 = vmatprep.subr.bf16.mxu0 0
    %9855 = vmatpush1.bf16.msra.mxu0 %v9808
    %9856 = vmatprep.subr.bf16.mxu0 0
    %9857 = vmatpush1.bf16.msra.mxu0 %v9809
    %9858 = vmatprep.subr.bf16.mxu0 0
    %9859 = vmatpush1.bf16.msra.mxu0 %v9810
    %9860 = vmatprep.subr.bf16.mxu0 0
    %9861 = vmatpush1.bf16.msra.mxu0 %v9811
    %9862 = vmatprep.subr.bf16.mxu0 0
    %9863 = vmatpush1.bf16.msra.mxu0 %v9812
    %9864 = vmatprep.subr.bf16.mxu0 0
    %9865 = vmatpush1.bf16.msra.mxu0 %v9813
    %9866 = vmatprep.subr.bf16.mxu0 0
    %9867 = vmatpush1.bf16.msra.mxu0 %v9814
    %9868 = vmatprep.subr.bf16.mxu0 0
    %9869 = vmatpush1.bf16.msra.mxu0 %v9815
    %9870 = vmatprep.subr.bf16.mxu0 0
    %9871 = vmatpush1.bf16.msra.mxu0 %v9816
    %9872 = vmatprep.mubr.bf16.mxu0 %v9725
    %9873 = vmatmul.mubr.bf16.gmra.mrb[0].mxu0 %v9724
    %v9874 = vpop.f32.mrb[0].mxu0
    %v9875 = vadd.f32 0.0, %v9874
    %v9876 = vpop.f32.mrb[0].mxu0
    %v9877 = vpop.f32.mrb[0].mxu0
    %v9878 = vpop.f32.mrb[0].mxu0
    %9879 = vdwg.mxu0
    %9880 = vmatprep.subr.bf16.mxu0 0
    %9881 = vmatpush1.bf16.msra.mxu0 %v9817
    %9882 = vmatprep.subr.bf16.mxu0 0
    %9883 = vmatpush1.bf16.msra.mxu0 %v9818
    %9884 = vmatprep.subr.bf16.mxu0 0
    %9885 = vmatpush1.bf16.msra.mxu0 0
    %9886 = vmatprep.subr.bf16.mxu0 0
    %9887 = vmatpush1.bf16.msra.mxu0 0
    %9888 = vmatprep.subr.bf16.mxu0 0
    %9889 = vmatpush1.bf16.msra.mxu0 0
    %9890 = vmatprep.subr.bf16.mxu0 0
    %9891 = vmatpush1.bf16.msra.mxu0 0
    %9892 = vmatprep.subr.bf16.mxu0 0
    %9893 = vmatpush1.bf16.msra.mxu0 0
    %9894 = vmatprep.subr.bf16.mxu0 0
    %9895 = vmatpush1.bf16.msra.mxu0 0
    %9896 = vmatprep.subr.bf16.mxu0 0
    %9897 = vmatpush1.bf16.msra.mxu0 0
    %9898 = vmatprep.subr.bf16.mxu0 0
    %9899 = vmatpush1.bf16.msra.mxu0 0
    %9900 = vmatprep.subr.bf16.mxu0 0
    %9901 = vmatpush1.bf16.msra.mxu0 0
    %9902 = vmatprep.subr.bf16.mxu0 0
    %9903 = vmatpush1.bf16.msra.mxu0 0
    %9904 = vmatprep.subr.bf16.mxu0 0
    %9905 = vmatpush1.bf16.msra.mxu0 0
    %9906 = vmatprep.subr.bf16.mxu0 0
    %9907 = vmatpush1.bf16.msra.mxu0 0
    %9908 = vmatprep.subr.bf16.mxu0 0
    %9909 = vmatpush1.bf16.msra.mxu0 0
    %9910 = vmatprep.subr.bf16.mxu0 0
    %9911 = vmatpush1.bf16.msra.mxu0 0
    %9912 = vmatprep.mubr.bf16.mxu0 0
    %9913 = vmatmul.mubr.bf16.gmra.mrb[0].mxu0 %v9838
    %v9914 = vpop.f32.mrb[0].mxu0
    %v9915 = vadd.f32 %v9875, %v9914
    %v9916 = vpop.f32.mrb[0].mxu0
    %v9917 = vpop.f32.mrb[0].mxu0
    %v9918 = vpop.f32.mrb[0].mxu0
    %9919 = vdwg.mxu0
    %v9920 = vadd.f32 %v9680, %v9915
    %v9921 = vld [vmem:[#allocation3 + $0x18] sm:$0x10]
    %v9922 = vld [vmem:[#allocation3 + $0x20] sm:$0x10]
    %v9923 = vld [vmem:[#allocation3 + $0x28] sm:$0x10]
    %s9924 = scalar_lea.vmem %s7, 1728
    %v9925 = vld [vmem:[%s9924] sm:$0xf]
    %v9926 = vld [vmem:[%s9924 + $0x4] sm:$0xf]
    %v9927 = vld [vmem:[%s9924 + $0x8] sm:$0xf]
    %v9928 = vld [vmem:[%s9924 + $0xc] sm:$0xf]
    %v9929 = vld [vmem:[%s9924 + $0x10] sm:$0xf]
    %v9930 = vld [vmem:[%s9924 + $0x14] sm:$0xf]
    %v9931 = vld [vmem:[%s9924 + $0x18] sm:$0xf]
    %v9932 = vld [vmem:[%s9924 + $0x1c] sm:$0xf]
    %v9933 = vld [vmem:[%s9924 + $0x20] sm:$0xf]
    %v9934 = vld [vmem:[%s9924 + $0x24] sm:$0xf]
    %v9935 = vld [vmem:[%s9924 + $0x28] sm:$0xf]
    %v9936 = vld [vmem:[%s9924 + $0x2c] sm:$0xf]
    %v9937 = vld [vmem:[%s9924 + $0x30] sm:$0xf]
    %v9938 = vld [vmem:[%s9924 + $0x34] sm:$0xf]
    %v9939 = vld [vmem:[%s9924 + $0x38] sm:$0xf]
    %v9940 = vld [vmem:[%s9924 + $0x3c] sm:$0xf]
    %v9941 = vld [vmem:[%s9924 + $0x40] sm:$0xf]
    %v9942 = vld [vmem:[%s9924 + $0x44] sm:$0xf]
    %v9943 = vld [vmem:[%s9924 + $0x48] sm:$0xf]
    %v9944 = vld [vmem:[%s9924 + $0x4c] sm:$0xf]
    %v9945 = vld [vmem:[%s9924 + $0x50] sm:$0xf]
    %v9946 = vld [vmem:[%s9924 + $0x54] sm:$0xf]
    %v9947 = vld [vmem:[%s9924 + $0x58] sm:$0xf]
    %v9948 = vld [vmem:[%s9924 + $0x5c] sm:$0xf]
    %v9949 = vld [vmem:[%s9924 + $0x60] sm:$0xf]
    %v9950 = vld [vmem:[%s9924 + $0x64] sm:$0xf]
    %v9951 = vld [vmem:[%s9924 + $0x68] sm:$0xf]
    %v9952 = vld [vmem:[%s9924 + $0x6c] sm:$0xf]
    %v9953 = vld [vmem:[%s9924 + $0x70] sm:$0xf]
    %v9954 = vld [vmem:[%s9924 + $0x74] sm:$0xf]
    %v9955 = vld [vmem:[%s9924 + $0x78] sm:$0xf]
    %v9956 = vld [vmem:[%s9924 + $0x7c] sm:$0xf]
    %v9957 = vld [vmem:[%s9924 + $0x80] sm:$0xf]
    %v9958 = vld [vmem:[%s9924 + $0x84] sm:$0xf]
    %v9959 = vld [vmem:[%s9924 + $0x88] sm:$0xf]
    %v9960 = vld [vmem:[%s9924 + $0x8c] sm:$0xf]
    %v9964 = vrot.slane %v9921, 4
    %v9965 = vrot.slane %v9922, 4
    %v9966 = vrot.slane %v9923, 4
    %v10005 = vunpack.c.l.b16 %v9925
    %v10006 = vunpack.c.l.b16 %v9926
    %v10007 = vunpack.c.l.b16 %v9927
    %v10008 = vunpack.c.l.b16 %v9928
    %v10009 = vunpack.c.l.b16 %v9929
    %v10010 = vunpack.c.l.b16 %v9930
    %v10011 = vunpack.c.l.b16 %v9931
    %v10012 = vunpack.c.l.b16 %v9932
    %v10013 = vunpack.c.l.b16 %v9933
    %v10014 = vunpack.c.l.b16 %v9934
    %v10015 = vunpack.c.l.b16 %v9935
    %v10016 = vunpack.c.l.b16 %v9936
    %v10017 = vunpack.c.l.b16 %v9937
    %v10018 = vunpack.c.l.b16 %v9938
    %v10019 = vunpack.c.l.b16 %v9939
    %v10020 = vunpack.c.l.b16 %v9940
    %v10021 = vunpack.c.l.b16 %v9941
    %v10022 = vunpack.c.l.b16 %v9942
    %v10023 = vunpack.c.l.b16 %v9943
    %v10024 = vunpack.c.l.b16 %v9944
    %v10025 = vunpack.c.l.b16 %v9945
    %v10026 = vunpack.c.l.b16 %v9946
    %v10027 = vunpack.c.l.b16 %v9947
    %v10028 = vunpack.c.l.b16 %v9948
    %v10029 = vunpack.c.l.b16 %v9949
    %v10030 = vunpack.c.l.b16 %v9950
    %v10031 = vunpack.c.l.b16 %v9951
    %v10032 = vunpack.c.l.b16 %v9952
    %v10033 = vunpack.c.l.b16 %v9953
    %v10034 = vunpack.c.l.b16 %v9954
    %v10035 = vunpack.c.l.b16 %v9955
    %v10036 = vunpack.c.l.b16 %v9956
    %v10037 = vunpack.c.l.b16 %v9957
    %v10038 = vunpack.c.l.b16 %v9958
    %v10039 = vunpack.c.l.b16 %v9959
    %v10040 = vunpack.c.l.b16 %v9960
    %v10041 = vpack.c.b16 %v10006, %v10005
    %v10042 = vpack.c.b16 %v10008, %v10007
    %v10043 = vpack.c.b16 %v10010, %v10009
    %v10044 = vpack.c.b16 %v10012, %v10011
    %v10045 = vpack.c.b16 %v10014, %v10013
    %v10046 = vpack.c.b16 %v10016, %v10015
    %v10047 = vpack.c.b16 %v10018, %v10017
    %v10048 = vpack.c.b16 %v10020, %v10019
    %v10049 = vpack.c.b16 %v10022, %v10021
    %v10050 = vpack.c.b16 %v10024, %v10023
    %v10051 = vpack.c.b16 %v10026, %v10025
    %v10052 = vpack.c.b16 %v10028, %v10027
    %v10053 = vpack.c.b16 %v10030, %v10029
    %v10054 = vpack.c.b16 %v10032, %v10031
    %v10055 = vpack.c.b16 %v10034, %v10033
    %v10056 = vpack.c.b16 %v10036, %v10035
    %v10057 = vpack.c.b16 %v10038, %v10037
    %v10058 = vpack.c.b16 %v10040, %v10039
    %v10078 = vsel %vm7055, %v9966, 0
    %10080 = vmatprep.subr.bf16.mxu0 0
    %10081 = vmatpush1.bf16.msra.mxu0 %v10041
    %10082 = vmatprep.subr.bf16.mxu0 0
    %10083 = vmatpush1.bf16.msra.mxu0 %v10042
    %10084 = vmatprep.subr.bf16.mxu0 0
    %10085 = vmatpush1.bf16.msra.mxu0 %v10043
    %10086 = vmatprep.subr.bf16.mxu0 0
    %10087 = vmatpush1.bf16.msra.mxu0 %v10044
    %10088 = vmatprep.subr.bf16.mxu0 0
    %10089 = vmatpush1.bf16.msra.mxu0 %v10045
    %10090 = vmatprep.subr.bf16.mxu0 0
    %10091 = vmatpush1.bf16.msra.mxu0 %v10046
    %10092 = vmatprep.subr.bf16.mxu0 0
    %10093 = vmatpush1.bf16.msra.mxu0 %v10047
    %10094 = vmatprep.subr.bf16.mxu0 0
    %10095 = vmatpush1.bf16.msra.mxu0 %v10048
    %10096 = vmatprep.subr.bf16.mxu0 0
    %10097 = vmatpush1.bf16.msra.mxu0 %v10049
    %10098 = vmatprep.subr.bf16.mxu0 0
    %10099 = vmatpush1.bf16.msra.mxu0 %v10050
    %10100 = vmatprep.subr.bf16.mxu0 0
    %10101 = vmatpush1.bf16.msra.mxu0 %v10051
    %10102 = vmatprep.subr.bf16.mxu0 0
    %10103 = vmatpush1.bf16.msra.mxu0 %v10052
    %10104 = vmatprep.subr.bf16.mxu0 0
    %10105 = vmatpush1.bf16.msra.mxu0 %v10053
    %10106 = vmatprep.subr.bf16.mxu0 0
    %10107 = vmatpush1.bf16.msra.mxu0 %v10054
    %10108 = vmatprep.subr.bf16.mxu0 0
    %10109 = vmatpush1.bf16.msra.mxu0 %v10055
    %10110 = vmatprep.subr.bf16.mxu0 0
    %10111 = vmatpush1.bf16.msra.mxu0 %v10056
    %10112 = vmatprep.mubr.bf16.mxu0 %v9965
    %10113 = vmatmul.mubr.bf16.gmra.mrb[0].mxu0 %v9964
    %v10114 = vpop.f32.mrb[0].mxu0
    %v10115 = vadd.f32 0.0, %v10114
    %v10116 = vpop.f32.mrb[0].mxu0
    %v10117 = vpop.f32.mrb[0].mxu0
    %v10118 = vpop.f32.mrb[0].mxu0
    %10119 = vdwg.mxu0
    %10120 = vmatprep.subr.bf16.mxu0 0
    %10121 = vmatpush1.bf16.msra.mxu0 %v10057
    %10122 = vmatprep.subr.bf16.mxu0 0
    %10123 = vmatpush1.bf16.msra.mxu0 %v10058
    %10124 = vmatprep.subr.bf16.mxu0 0
    %10125 = vmatpush1.bf16.msra.mxu0 0
    %10126 = vmatprep.subr.bf16.mxu0 0
    %10127 = vmatpush1.bf16.msra.mxu0 0
    %10128 = vmatprep.subr.bf16.mxu0 0
    %10129 = vmatpush1.bf16.msra.mxu0 0
    %10130 = vmatprep.subr.bf16.mxu0 0
    %10131 = vmatpush1.bf16.msra.mxu0 0
    %10132 = vmatprep.subr.bf16.mxu0 0
    %10133 = vmatpush1.bf16.msra.mxu0 0
    %10134 = vmatprep.subr.bf16.mxu0 0
    %10135 = vmatpush1.bf16.msra.mxu0 0
    %10136 = vmatprep.subr.bf16.mxu0 0
    %10137 = vmatpush1.bf16.msra.mxu0 0
    %10138 = vmatprep.subr.bf16.mxu0 0
    %10139 = vmatpush1.bf16.msra.mxu0 0
    %10140 = vmatprep.subr.bf16.mxu0 0
    %10141 = vmatpush1.bf16.msra.mxu0 0
    %10142 = vmatprep.subr.bf16.mxu0 0
    %10143 = vmatpush1.bf16.msra.mxu0 0
    %10144 = vmatprep.subr.bf16.mxu0 0
    %10145 = vmatpush1.bf16.msra.mxu0 0
    %10146 = vmatprep.subr.bf16.mxu0 0
    %10147 = vmatpush1.bf16.msra.mxu0 0
    %10148 = vmatprep.subr.bf16.mxu0 0
    %10149 = vmatpush1.bf16.msra.mxu0 0
    %10150 = vmatprep.subr.bf16.mxu0 0
    %10151 = vmatpush1.bf16.msra.mxu0 0
    %10152 = vmatprep.mubr.bf16.mxu0 0
    %10153 = vmatmul.mubr.bf16.gmra.mrb[0].mxu0 %v10078
    %v10154 = vpop.f32.mrb[0].mxu0
    %v10155 = vadd.f32 %v10115, %v10154
    %v10156 = vpop.f32.mrb[0].mxu0
    %v10157 = vpop.f32.mrb[0].mxu0
    %v10158 = vpop.f32.mrb[0].mxu0
    %10159 = vdwg.mxu0
    %v10160 = vadd.f32 %v9920, %v10155
    %v10161 = vld [vmem:[#allocation3 + $0x18] sm:$0x20]
    %v10162 = vld [vmem:[#allocation3 + $0x20] sm:$0x20]
    %v10163 = vld [vmem:[#allocation3 + $0x28] sm:$0x20]
    %s10164 = scalar_lea.vmem %s7, 1872
    %v10165 = vld [vmem:[%s10164] sm:$0xf]
    %v10166 = vld [vmem:[%s10164 + $0x4] sm:$0xf]
    %v10167 = vld [vmem:[%s10164 + $0x8] sm:$0xf]
    %v10168 = vld [vmem:[%s10164 + $0xc] sm:$0xf]
    %v10169 = vld [vmem:[%s10164 + $0x10] sm:$0xf]
    %v10170 = vld [vmem:[%s10164 + $0x14] sm:$0xf]
    %v10171 = vld [vmem:[%s10164 + $0x18] sm:$0xf]
    %v10172 = vld [vmem:[%s10164 + $0x1c] sm:$0xf]
    %v10173 = vld [vmem:[%s10164 + $0x20] sm:$0xf]
    %v10174 = vld [vmem:[%s10164 + $0x24] sm:$0xf]
    %v10175 = vld [vmem:[%s10164 + $0x28] sm:$0xf]
    %v10176 = vld [vmem:[%s10164 + $0x2c] sm:$0xf]
    %v10177 = vld [vmem:[%s10164 + $0x30] sm:$0xf]
    %v10178 = vld [vmem:[%s10164 + $0x34] sm:$0xf]
    %v10179 = vld [vmem:[%s10164 + $0x38] sm:$0xf]
    %v10180 = vld [vmem:[%s10164 + $0x3c] sm:$0xf]
    %v10181 = vld [vmem:[%s10164 + $0x40] sm:$0xf]
    %v10182 = vld [vmem:[%s10164 + $0x44] sm:$0xf]
    %v10183 = vld [vmem:[%s10164 + $0x48] sm:$0xf]
    %v10184 = vld [vmem:[%s10164 + $0x4c] sm:$0xf]
    %v10185 = vld [vmem:[%s10164 + $0x50] sm:$0xf]
    %v10186 = vld [vmem:[%s10164 + $0x54] sm:$0xf]
    %v10187 = vld [vmem:[%s10164 + $0x58] sm:$0xf]
    %v10188 = vld [vmem:[%s10164 + $0x5c] sm:$0xf]
    %v10189 = vld [vmem:[%s10164 + $0x60] sm:$0xf]
    %v10190 = vld [vmem:[%s10164 + $0x64] sm:$0xf]
    %v10191 = vld [vmem:[%s10164 + $0x68] sm:$0xf]
    %v10192 = vld [vmem:[%s10164 + $0x6c] sm:$0xf]
    %v10193 = vld [vmem:[%s10164 + $0x70] sm:$0xf]
    %v10194 = vld [vmem:[%s10164 + $0x74] sm:$0xf]
    %v10195 = vld [vmem:[%s10164 + $0x78] sm:$0xf]
    %v10196 = vld [vmem:[%s10164 + $0x7c] sm:$0xf]
    %v10197 = vld [vmem:[%s10164 + $0x80] sm:$0xf]
    %v10198 = vld [vmem:[%s10164 + $0x84] sm:$0xf]
    %v10199 = vld [vmem:[%s10164 + $0x88] sm:$0xf]
    %v10200 = vld [vmem:[%s10164 + $0x8c] sm:$0xf]
    %v10204 = vrot.slane %v10161, 5
    %v10205 = vrot.slane %v10162, 5
    %v10206 = vrot.slane %v10163, 5
    %v10245 = vunpack.c.l.b16 %v10165
    %v10246 = vunpack.c.l.b16 %v10166
    %v10247 = vunpack.c.l.b16 %v10167
    %v10248 = vunpack.c.l.b16 %v10168
    %v10249 = vunpack.c.l.b16 %v10169
    %v10250 = vunpack.c.l.b16 %v10170
    %v10251 = vunpack.c.l.b16 %v10171
    %v10252 = vunpack.c.l.b16 %v10172
    %v10253 = vunpack.c.l.b16 %v10173
    %v10254 = vunpack.c.l.b16 %v10174
    %v10255 = vunpack.c.l.b16 %v10175
    %v10256 = vunpack.c.l.b16 %v10176
    %v10257 = vunpack.c.l.b16 %v10177
    %v10258 = vunpack.c.l.b16 %v10178
    %v10259 = vunpack.c.l.b16 %v10179
    %v10260 = vunpack.c.l.b16 %v10180
    %v10261 = vunpack.c.l.b16 %v10181
    %v10262 = vunpack.c.l.b16 %v10182
    %v10263 = vunpack.c.l.b16 %v10183
    %v10264 = vunpack.c.l.b16 %v10184
    %v10265 = vunpack.c.l.b16 %v10185
    %v10266 = vunpack.c.l.b16 %v10186
    %v10267 = vunpack.c.l.b16 %v10187
    %v10268 = vunpack.c.l.b16 %v10188
    %v10269 = vunpack.c.l.b16 %v10189
    %v10270 = vunpack.c.l.b16 %v10190
    %v10271 = vunpack.c.l.b16 %v10191
    %v10272 = vunpack.c.l.b16 %v10192
    %v10273 = vunpack.c.l.b16 %v10193
    %v10274 = vunpack.c.l.b16 %v10194
    %v10275 = vunpack.c.l.b16 %v10195
    %v10276 = vunpack.c.l.b16 %v10196
    %v10277 = vunpack.c.l.b16 %v10197
    %v10278 = vunpack.c.l.b16 %v10198
    %v10279 = vunpack.c.l.b16 %v10199
    %v10280 = vunpack.c.l.b16 %v10200
    %v10281 = vpack.c.b16 %v10246, %v10245
    %v10282 = vpack.c.b16 %v10248, %v10247
    %v10283 = vpack.c.b16 %v10250, %v10249
    %v10284 = vpack.c.b16 %v10252, %v10251
    %v10285 = vpack.c.b16 %v10254, %v10253
    %v10286 = vpack.c.b16 %v10256, %v10255
    %v10287 = vpack.c.b16 %v10258, %v10257
    %v10288 = vpack.c.b16 %v10260, %v10259
    %v10289 = vpack.c.b16 %v10262, %v10261
    %v10290 = vpack.c.b16 %v10264, %v10263
    %v10291 = vpack.c.b16 %v10266, %v10265
    %v10292 = vpack.c.b16 %v10268, %v10267
    %v10293 = vpack.c.b16 %v10270, %v10269
    %v10294 = vpack.c.b16 %v10272, %v10271
    %v10295 = vpack.c.b16 %v10274, %v10273
    %v10296 = vpack.c.b16 %v10276, %v10275
    %v10297 = vpack.c.b16 %v10278, %v10277
    %v10298 = vpack.c.b16 %v10280, %v10279
    %v10318 = vsel %vm7055, %v10206, 0
    %10320 = vmatprep.subr.bf16.mxu0 0
    %10321 = vmatpush1.bf16.msra.mxu0 %v10281
    %10322 = vmatprep.subr.bf16.mxu0 0
    %10323 = vmatpush1.bf16.msra.mxu0 %v10282
    %10324 = vmatprep.subr.bf16.mxu0 0
    %10325 = vmatpush1.bf16.msra.mxu0 %v10283
    %10326 = vmatprep.subr.bf16.mxu0 0
    %10327 = vmatpush1.bf16.msra.mxu0 %v10284
    %10328 = vmatprep.subr.bf16.mxu0 0
    %10329 = vmatpush1.bf16.msra.mxu0 %v10285
    %10330 = vmatprep.subr.bf16.mxu0 0
    %10331 = vmatpush1.bf16.msra.mxu0 %v10286
    %10332 = vmatprep.subr.bf16.mxu0 0
    %10333 = vmatpush1.bf16.msra.mxu0 %v10287
    %10334 = vmatprep.subr.bf16.mxu0 0
    %10335 = vmatpush1.bf16.msra.mxu0 %v10288
    %10336 = vmatprep.subr.bf16.mxu0 0
    %10337 = vmatpush1.bf16.msra.mxu0 %v10289
    %10338 = vmatprep.subr.bf16.mxu0 0
    %10339 = vmatpush1.bf16.msra.mxu0 %v10290
    %10340 = vmatprep.subr.bf16.mxu0 0
    %10341 = vmatpush1.bf16.msra.mxu0 %v10291
    %10342 = vmatprep.subr.bf16.mxu0 0
    %10343 = vmatpush1.bf16.msra.mxu0 %v10292
    %10344 = vmatprep.subr.bf16.mxu0 0
    %10345 = vmatpush1.bf16.msra.mxu0 %v10293
    %10346 = vmatprep.subr.bf16.mxu0 0
    %10347 = vmatpush1.bf16.msra.mxu0 %v10294
    %10348 = vmatprep.subr.bf16.mxu0 0
    %10349 = vmatpush1.bf16.msra.mxu0 %v10295
    %10350 = vmatprep.subr.bf16.mxu0 0
    %10351 = vmatpush1.bf16.msra.mxu0 %v10296
    %10352 = vmatprep.mubr.bf16.mxu0 %v10205
    %10353 = vmatmul.mubr.bf16.gmra.mrb[0].mxu0 %v10204
    %v10354 = vpop.f32.mrb[0].mxu0
    %v10355 = vadd.f32 0.0, %v10354
    %v10356 = vpop.f32.mrb[0].mxu0
    %v10357 = vpop.f32.mrb[0].mxu0
    %v10358 = vpop.f32.mrb[0].mxu0
    %10359 = vdwg.mxu0
    %10360 = vmatprep.subr.bf16.mxu0 0
    %10361 = vmatpush1.bf16.msra.mxu0 %v10297
    %10362 = vmatprep.subr.bf16.mxu0 0
    %10363 = vmatpush1.bf16.msra.mxu0 %v10298
    %10364 = vmatprep.subr.bf16.mxu0 0
    %10365 = vmatpush1.bf16.msra.mxu0 0
    %10366 = vmatprep.subr.bf16.mxu0 0
    %10367 = vmatpush1.bf16.msra.mxu0 0
    %10368 = vmatprep.subr.bf16.mxu0 0
    %10369 = vmatpush1.bf16.msra.mxu0 0
    %10370 = vmatprep.subr.bf16.mxu0 0
    %10371 = vmatpush1.bf16.msra.mxu0 0
    %10372 = vmatprep.subr.bf16.mxu0 0
    %10373 = vmatpush1.bf16.msra.mxu0 0
    %10374 = vmatprep.subr.bf16.mxu0 0
    %10375 = vmatpush1.bf16.msra.mxu0 0
    %10376 = vmatprep.subr.bf16.mxu0 0
    %10377 = vmatpush1.bf16.msra.mxu0 0
    %10378 = vmatprep.subr.bf16.mxu0 0
    %10379 = vmatpush1.bf16.msra.mxu0 0
    %10380 = vmatprep.subr.bf16.mxu0 0
    %10381 = vmatpush1.bf16.msra.mxu0 0
    %10382 = vmatprep.subr.bf16.mxu0 0
    %10383 = vmatpush1.bf16.msra.mxu0 0
    %10384 = vmatprep.subr.bf16.mxu0 0
    %10385 = vmatpush1.bf16.msra.mxu0 0
    %10386 = vmatprep.subr.bf16.mxu0 0
    %10387 = vmatpush1.bf16.msra.mxu0 0
    %10388 = vmatprep.subr.bf16.mxu0 0
    %10389 = vmatpush1.bf16.msra.mxu0 0
    %10390 = vmatprep.subr.bf16.mxu0 0
    %10391 = vmatpush1.bf16.msra.mxu0 0
    %10392 = vmatprep.mubr.bf16.mxu0 0
    %10393 = vmatmul.mubr.bf16.gmra.mrb[0].mxu0 %v10318
    %v10394 = vpop.f32.mrb[0].mxu0
    %v10395 = vadd.f32 %v10355, %v10394
    %v10396 = vpop.f32.mrb[0].mxu0
    %v10397 = vpop.f32.mrb[0].mxu0
    %v10398 = vpop.f32.mrb[0].mxu0
    %10399 = vdwg.mxu0
    %v10400 = vadd.f32 %v10160, %v10395
    %v10401 = vld [vmem:[#allocation3 + $0x18] sm:$0x40]
    %v10402 = vld [vmem:[#allocation3 + $0x20] sm:$0x40]
    %v10403 = vld [vmem:[#allocation3 + $0x28] sm:$0x40]
    %s10404 = scalar_lea.vmem %s7, 2016
    %v10405 = vld [vmem:[%s10404] sm:$0xf]
    %v10406 = vld [vmem:[%s10404 + $0x4] sm:$0xf]
    %v10407 = vld [vmem:[%s10404 + $0x8] sm:$0xf]
    %v10408 = vld [vmem:[%s10404 + $0xc] sm:$0xf]
    %v10409 = vld [vmem:[%s10404 + $0x10] sm:$0xf]
    %v10410 = vld [vmem:[%s10404 + $0x14] sm:$0xf]
    %v10411 = vld [vmem:[%s10404 + $0x18] sm:$0xf]
    %v10412 = vld [vmem:[%s10404 + $0x1c] sm:$0xf]
    %v10413 = vld [vmem:[%s10404 + $0x20] sm:$0xf]
    %v10414 = vld [vmem:[%s10404 + $0x24] sm:$0xf]
    %v10415 = vld [vmem:[%s10404 + $0x28] sm:$0xf]
    %v10416 = vld [vmem:[%s10404 + $0x2c] sm:$0xf]
    %v10417 = vld [vmem:[%s10404 + $0x30] sm:$0xf]
    %v10418 = vld [vmem:[%s10404 + $0x34] sm:$0xf]
    %v10419 = vld [vmem:[%s10404 + $0x38] sm:$0xf]
    %v10420 = vld [vmem:[%s10404 + $0x3c] sm:$0xf]
    %v10421 = vld [vmem:[%s10404 + $0x40] sm:$0xf]
    %v10422 = vld [vmem:[%s10404 + $0x44] sm:$0xf]
    %v10423 = vld [vmem:[%s10404 + $0x48] sm:$0xf]
    %v10424 = vld [vmem:[%s10404 + $0x4c] sm:$0xf]
    %v10425 = vld [vmem:[%s10404 + $0x50] sm:$0xf]
    %v10426 = vld [vmem:[%s10404 + $0x54] sm:$0xf]
    %v10427 = vld [vmem:[%s10404 + $0x58] sm:$0xf]
    %v10428 = vld [vmem:[%s10404 + $0x5c] sm:$0xf]
    %v10429 = vld [vmem:[%s10404 + $0x60] sm:$0xf]
    %v10430 = vld [vmem:[%s10404 + $0x64] sm:$0xf]
    %v10431 = vld [vmem:[%s10404 + $0x68] sm:$0xf]
    %v10432 = vld [vmem:[%s10404 + $0x6c] sm:$0xf]
    %v10433 = vld [vmem:[%s10404 + $0x70] sm:$0xf]
    %v10434 = vld [vmem:[%s10404 + $0x74] sm:$0xf]
    %v10435 = vld [vmem:[%s10404 + $0x78] sm:$0xf]
    %v10436 = vld [vmem:[%s10404 + $0x7c] sm:$0xf]
    %v10437 = vld [vmem:[%s10404 + $0x80] sm:$0xf]
    %v10438 = vld [vmem:[%s10404 + $0x84] sm:$0xf]
    %v10439 = vld [vmem:[%s10404 + $0x88] sm:$0xf]
    %v10440 = vld [vmem:[%s10404 + $0x8c] sm:$0xf]
    %v10444 = vrot.slane %v10401, 6
    %v10445 = vrot.slane %v10402, 6
    %v10446 = vrot.slane %v10403, 6
    %v10485 = vunpack.c.l.b16 %v10405
    %v10486 = vunpack.c.l.b16 %v10406
    %v10487 = vunpack.c.l.b16 %v10407
    %v10488 = vunpack.c.l.b16 %v10408
    %v10489 = vunpack.c.l.b16 %v10409
    %v10490 = vunpack.c.l.b16 %v10410
    %v10491 = vunpack.c.l.b16 %v10411
    %v10492 = vunpack.c.l.b16 %v10412
    %v10493 = vunpack.c.l.b16 %v10413
    %v10494 = vunpack.c.l.b16 %v10414
    %v10495 = vunpack.c.l.b16 %v10415
    %v10496 = vunpack.c.l.b16 %v10416
    %v10497 = vunpack.c.l.b16 %v10417
    %v10498 = vunpack.c.l.b16 %v10418
    %v10499 = vunpack.c.l.b16 %v10419
    %v10500 = vunpack.c.l.b16 %v10420
    %v10501 = vunpack.c.l.b16 %v10421
    %v10502 = vunpack.c.l.b16 %v10422
    %v10503 = vunpack.c.l.b16 %v10423
    %v10504 = vunpack.c.l.b16 %v10424
    %v10505 = vunpack.c.l.b16 %v10425
    %v10506 = vunpack.c.l.b16 %v10426
    %v10507 = vunpack.c.l.b16 %v10427
    %v10508 = vunpack.c.l.b16 %v10428
    %v10509 = vunpack.c.l.b16 %v10429
    %v10510 = vunpack.c.l.b16 %v10430
    %v10511 = vunpack.c.l.b16 %v10431
    %v10512 = vunpack.c.l.b16 %v10432
    %v10513 = vunpack.c.l.b16 %v10433
    %v10514 = vunpack.c.l.b16 %v10434
    %v10515 = vunpack.c.l.b16 %v10435
    %v10516 = vunpack.c.l.b16 %v10436
    %v10517 = vunpack.c.l.b16 %v10437
    %v10518 = vunpack.c.l.b16 %v10438
    %v10519 = vunpack.c.l.b16 %v10439
    %v10520 = vunpack.c.l.b16 %v10440
    %v10521 = vpack.c.b16 %v10486, %v10485
    %v10522 = vpack.c.b16 %v10488, %v10487
    %v10523 = vpack.c.b16 %v10490, %v10489
    %v10524 = vpack.c.b16 %v10492, %v10491
    %v10525 = vpack.c.b16 %v10494, %v10493
    %v10526 = vpack.c.b16 %v10496, %v10495
    %v10527 = vpack.c.b16 %v10498, %v10497
    %v10528 = vpack.c.b16 %v10500, %v10499
    %v10529 = vpack.c.b16 %v10502, %v10501
    %v10530 = vpack.c.b16 %v10504, %v10503
    %v10531 = vpack.c.b16 %v10506, %v10505
    %v10532 = vpack.c.b16 %v10508, %v10507
    %v10533 = vpack.c.b16 %v10510, %v10509
    %v10534 = vpack.c.b16 %v10512, %v10511
    %v10535 = vpack.c.b16 %v10514, %v10513
    %v10536 = vpack.c.b16 %v10516, %v10515
    %v10537 = vpack.c.b16 %v10518, %v10517
    %v10538 = vpack.c.b16 %v10520, %v10519
    %v10558 = vsel %vm7055, %v10446, 0
    %10560 = vmatprep.subr.bf16.mxu0 0
    %10561 = vmatpush1.bf16.msra.mxu0 %v10521
    %10562 = vmatprep.subr.bf16.mxu0 0
    %10563 = vmatpush1.bf16.msra.mxu0 %v10522
    %10564 = vmatprep.subr.bf16.mxu0 0
    %10565 = vmatpush1.bf16.msra.mxu0 %v10523
    %10566 = vmatprep.subr.bf16.mxu0 0
    %10567 = vmatpush1.bf16.msra.mxu0 %v10524
    %10568 = vmatprep.subr.bf16.mxu0 0
    %10569 = vmatpush1.bf16.msra.mxu0 %v10525
    %10570 = vmatprep.subr.bf16.mxu0 0
    %10571 = vmatpush1.bf16.msra.mxu0 %v10526
    %10572 = vmatprep.subr.bf16.mxu0 0
    %10573 = vmatpush1.bf16.msra.mxu0 %v10527
    %10574 = vmatprep.subr.bf16.mxu0 0
    %10575 = vmatpush1.bf16.msra.mxu0 %v10528
    %10576 = vmatprep.subr.bf16.mxu0 0
    %10577 = vmatpush1.bf16.msra.mxu0 %v10529
    %10578 = vmatprep.subr.bf16.mxu0 0
    %10579 = vmatpush1.bf16.msra.mxu0 %v10530
    %10580 = vmatprep.subr.bf16.mxu0 0
    %10581 = vmatpush1.bf16.msra.mxu0 %v10531
    %10582 = vmatprep.subr.bf16.mxu0 0
    %10583 = vmatpush1.bf16.msra.mxu0 %v10532
    %10584 = vmatprep.subr.bf16.mxu0 0
    %10585 = vmatpush1.bf16.msra.mxu0 %v10533
    %10586 = vmatprep.subr.bf16.mxu0 0
    %10587 = vmatpush1.bf16.msra.mxu0 %v10534
    %10588 = vmatprep.subr.bf16.mxu0 0
    %10589 = vmatpush1.bf16.msra.mxu0 %v10535
    %10590 = vmatprep.subr.bf16.mxu0 0
    %10591 = vmatpush1.bf16.msra.mxu0 %v10536
    %10592 = vmatprep.mubr.bf16.mxu0 %v10445
    %10593 = vmatmul.mubr.bf16.gmra.mrb[0].mxu0 %v10444
    %v10594 = vpop.f32.mrb[0].mxu0
    %v10595 = vadd.f32 0.0, %v10594
    %v10596 = vpop.f32.mrb[0].mxu0
    %v10597 = vpop.f32.mrb[0].mxu0
    %v10598 = vpop.f32.mrb[0].mxu0
    %10599 = vdwg.mxu0
    %10600 = vmatprep.subr.bf16.mxu0 0
    %10601 = vmatpush1.bf16.msra.mxu0 %v10537
    %10602 = vmatprep.subr.bf16.mxu0 0
    %10603 = vmatpush1.bf16.msra.mxu0 %v10538
    %10604 = vmatprep.subr.bf16.mxu0 0
    %10605 = vmatpush1.bf16.msra.mxu0 0
    %10606 = vmatprep.subr.bf16.mxu0 0
    %10607 = vmatpush1.bf16.msra.mxu0 0
    %10608 = vmatprep.subr.bf16.mxu0 0
    %10609 = vmatpush1.bf16.msra.mxu0 0
    %10610 = vmatprep.subr.bf16.mxu0 0
    %10611 = vmatpush1.bf16.msra.mxu0 0
    %10612 = vmatprep.subr.bf16.mxu0 0
    %10613 = vmatpush1.bf16.msra.mxu0 0
    %10614 = vmatprep.subr.bf16.mxu0 0
    %10615 = vmatpush1.bf16.msra.mxu0 0
    %10616 = vmatprep.subr.bf16.mxu0 0
    %10617 = vmatpush1.bf16.msra.mxu0 0
    %10618 = vmatprep.subr.bf16.mxu0 0
    %10619 = vmatpush1.bf16.msra.mxu0 0
    %10620 = vmatprep.subr.bf16.mxu0 0
    %10621 = vmatpush1.bf16.msra.mxu0 0
    %10622 = vmatprep.subr.bf16.mxu0 0
    %10623 = vmatpush1.bf16.msra.mxu0 0
    %10624 = vmatprep.subr.bf16.mxu0 0
    %10625 = vmatpush1.bf16.msra.mxu0 0
    %10626 = vmatprep.subr.bf16.mxu0 0
    %10627 = vmatpush1.bf16.msra.mxu0 0
    %10628 = vmatprep.subr.bf16.mxu0 0
    %10629 = vmatpush1.bf16.msra.mxu0 0
    %10630 = vmatprep.subr.bf16.mxu0 0
    %10631 = vmatpush1.bf16.msra.mxu0 0
    %10632 = vmatprep.mubr.bf16.mxu0 0
    %10633 = vmatmul.mubr.bf16.gmra.mrb[0].mxu0 %v10558
    %v10634 = vpop.f32.mrb[0].mxu0
    %v10635 = vadd.f32 %v10595, %v10634
    %v10636 = vpop.f32.mrb[0].mxu0
    %v10637 = vpop.f32.mrb[0].mxu0
    %v10638 = vpop.f32.mrb[0].mxu0
    %10639 = vdwg.mxu0
    %v10640 = vadd.f32 %v10400, %v10635
    %v10641 = vld [vmem:[#allocation3 + $0x18] sm:$0x80]
    %v10642 = vld [vmem:[#allocation3 + $0x20] sm:$0x80]
    %v10643 = vld [vmem:[#allocation3 + $0x28] sm:$0x80]
    %s10644 = scalar_lea.vmem %s7, 2160
    %v10645 = vld [vmem:[%s10644] sm:$0xf]
    %v10646 = vld [vmem:[%s10644 + $0x4] sm:$0xf]
    %v10647 = vld [vmem:[%s10644 + $0x8] sm:$0xf]
    %v10648 = vld [vmem:[%s10644 + $0xc] sm:$0xf]
    %v10649 = vld [vmem:[%s10644 + $0x10] sm:$0xf]
    %v10650 = vld [vmem:[%s10644 + $0x14] sm:$0xf]
    %v10651 = vld [vmem:[%s10644 + $0x18] sm:$0xf]
    %v10652 = vld [vmem:[%s10644 + $0x1c] sm:$0xf]
    %v10653 = vld [vmem:[%s10644 + $0x20] sm:$0xf]
    %v10654 = vld [vmem:[%s10644 + $0x24] sm:$0xf]
    %v10655 = vld [vmem:[%s10644 + $0x28] sm:$0xf]
    %v10656 = vld [vmem:[%s10644 + $0x2c] sm:$0xf]
    %v10657 = vld [vmem:[%s10644 + $0x30] sm:$0xf]
    %v10658 = vld [vmem:[%s10644 + $0x34] sm:$0xf]
    %v10659 = vld [vmem:[%s10644 + $0x38] sm:$0xf]
    %v10660 = vld [vmem:[%s10644 + $0x3c] sm:$0xf]
    %v10661 = vld [vmem:[%s10644 + $0x40] sm:$0xf]
    %v10662 = vld [vmem:[%s10644 + $0x44] sm:$0xf]
    %v10663 = vld [vmem:[%s10644 + $0x48] sm:$0xf]
    %v10664 = vld [vmem:[%s10644 + $0x4c] sm:$0xf]
    %v10665 = vld [vmem:[%s10644 + $0x50] sm:$0xf]
    %v10666 = vld [vmem:[%s10644 + $0x54] sm:$0xf]
    %v10667 = vld [vmem:[%s10644 + $0x58] sm:$0xf]
    %v10668 = vld [vmem:[%s10644 + $0x5c] sm:$0xf]
    %v10669 = vld [vmem:[%s10644 + $0x60] sm:$0xf]
    %v10670 = vld [vmem:[%s10644 + $0x64] sm:$0xf]
    %v10671 = vld [vmem:[%s10644 + $0x68] sm:$0xf]
    %v10672 = vld [vmem:[%s10644 + $0x6c] sm:$0xf]
    %v10673 = vld [vmem:[%s10644 + $0x70] sm:$0xf]
    %v10674 = vld [vmem:[%s10644 + $0x74] sm:$0xf]
    %v10675 = vld [vmem:[%s10644 + $0x78] sm:$0xf]
    %v10676 = vld [vmem:[%s10644 + $0x7c] sm:$0xf]
    %v10677 = vld [vmem:[%s10644 + $0x80] sm:$0xf]
    %v10678 = vld [vmem:[%s10644 + $0x84] sm:$0xf]
    %v10679 = vld [vmem:[%s10644 + $0x88] sm:$0xf]
    %v10680 = vld [vmem:[%s10644 + $0x8c] sm:$0xf]
    %v10684 = vrot.slane %v10641, 7
    %v10685 = vrot.slane %v10642, 7
    %v10686 = vrot.slane %v10643, 7
    %v10725 = vunpack.c.l.b16 %v10645
    %v10726 = vunpack.c.l.b16 %v10646
    %v10727 = vunpack.c.l.b16 %v10647
    %v10728 = vunpack.c.l.b16 %v10648
    %v10729 = vunpack.c.l.b16 %v10649
    %v10730 = vunpack.c.l.b16 %v10650
    %v10731 = vunpack.c.l.b16 %v10651
    %v10732 = vunpack.c.l.b16 %v10652
    %v10733 = vunpack.c.l.b16 %v10653
    %v10734 = vunpack.c.l.b16 %v10654
    %v10735 = vunpack.c.l.b16 %v10655
    %v10736 = vunpack.c.l.b16 %v10656
    %v10737 = vunpack.c.l.b16 %v10657
    %v10738 = vunpack.c.l.b16 %v10658
    %v10739 = vunpack.c.l.b16 %v10659
    %v10740 = vunpack.c.l.b16 %v10660
    %v10741 = vunpack.c.l.b16 %v10661
    %v10742 = vunpack.c.l.b16 %v10662
    %v10743 = vunpack.c.l.b16 %v10663
    %v10744 = vunpack.c.l.b16 %v10664
    %v10745 = vunpack.c.l.b16 %v10665
    %v10746 = vunpack.c.l.b16 %v10666
    %v10747 = vunpack.c.l.b16 %v10667
    %v10748 = vunpack.c.l.b16 %v10668
    %v10749 = vunpack.c.l.b16 %v10669
    %v10750 = vunpack.c.l.b16 %v10670
    %v10751 = vunpack.c.l.b16 %v10671
    %v10752 = vunpack.c.l.b16 %v10672
    %v10753 = vunpack.c.l.b16 %v10673
    %v10754 = vunpack.c.l.b16 %v10674
    %v10755 = vunpack.c.l.b16 %v10675
    %v10756 = vunpack.c.l.b16 %v10676
    %v10757 = vunpack.c.l.b16 %v10677
    %v10758 = vunpack.c.l.b16 %v10678
    %v10759 = vunpack.c.l.b16 %v10679
    %v10760 = vunpack.c.l.b16 %v10680
    %v10761 = vpack.c.b16 %v10726, %v10725
    %v10762 = vpack.c.b16 %v10728, %v10727
    %v10763 = vpack.c.b16 %v10730, %v10729
    %v10764 = vpack.c.b16 %v10732, %v10731
    %v10765 = vpack.c.b16 %v10734, %v10733
    %v10766 = vpack.c.b16 %v10736, %v10735
    %v10767 = vpack.c.b16 %v10738, %v10737
    %v10768 = vpack.c.b16 %v10740, %v10739
    %v10769 = vpack.c.b16 %v10742, %v10741
    %v10770 = vpack.c.b16 %v10744, %v10743
    %v10771 = vpack.c.b16 %v10746, %v10745
    %v10772 = vpack.c.b16 %v10748, %v10747
    %v10773 = vpack.c.b16 %v10750, %v10749
    %v10774 = vpack.c.b16 %v10752, %v10751
    %v10775 = vpack.c.b16 %v10754, %v10753
    %v10776 = vpack.c.b16 %v10756, %v10755
    %v10777 = vpack.c.b16 %v10758, %v10757
    %v10778 = vpack.c.b16 %v10760, %v10759
    %v10798 = vsel %vm7055, %v10686, 0
    %10800 = vmatprep.subr.bf16.mxu0 0
    %10801 = vmatpush1.bf16.msra.mxu0 %v10761
    %10802 = vmatprep.subr.bf16.mxu0 0
    %10803 = vmatpush1.bf16.msra.mxu0 %v10762
    %10804 = vmatprep.subr.bf16.mxu0 0
    %10805 = vmatpush1.bf16.msra.mxu0 %v10763
    %10806 = vmatprep.subr.bf16.mxu0 0
    %10807 = vmatpush1.bf16.msra.mxu0 %v10764
    %10808 = vmatprep.subr.bf16.mxu0 0
    %10809 = vmatpush1.bf16.msra.mxu0 %v10765
    %10810 = vmatprep.subr.bf16.mxu0 0
    %10811 = vmatpush1.bf16.msra.mxu0 %v10766
    %10812 = vmatprep.subr.bf16.mxu0 0
    %10813 = vmatpush1.bf16.msra.mxu0 %v10767
    %10814 = vmatprep.subr.bf16.mxu0 0
    %10815 = vmatpush1.bf16.msra.mxu0 %v10768
    %10816 = vmatprep.subr.bf16.mxu0 0
    %10817 = vmatpush1.bf16.msra.mxu0 %v10769
    %10818 = vmatprep.subr.bf16.mxu0 0
    %10819 = vmatpush1.bf16.msra.mxu0 %v10770
    %10820 = vmatprep.subr.bf16.mxu0 0
    %10821 = vmatpush1.bf16.msra.mxu0 %v10771
    %10822 = vmatprep.subr.bf16.mxu0 0
    %10823 = vmatpush1.bf16.msra.mxu0 %v10772
    %10824 = vmatprep.subr.bf16.mxu0 0
    %10825 = vmatpush1.bf16.msra.mxu0 %v10773
    %10826 = vmatprep.subr.bf16.mxu0 0
    %10827 = vmatpush1.bf16.msra.mxu0 %v10774
    %10828 = vmatprep.subr.bf16.mxu0 0
    %10829 = vmatpush1.bf16.msra.mxu0 %v10775
    %10830 = vmatprep.subr.bf16.mxu0 0
    %10831 = vmatpush1.bf16.msra.mxu0 %v10776
    %10832 = vmatprep.mubr.bf16.mxu0 %v10685
    %10833 = vmatmul.mubr.bf16.gmra.mrb[0].mxu0 %v10684
    %v10834 = vpop.f32.mrb[0].mxu0
    %v10835 = vadd.f32 0.0, %v10834
    %v10836 = vpop.f32.mrb[0].mxu0
    %v10837 = vpop.f32.mrb[0].mxu0
    %v10838 = vpop.f32.mrb[0].mxu0
    %10839 = vdwg.mxu0
    %10840 = vmatprep.subr.bf16.mxu0 0
    %10841 = vmatpush1.bf16.msra.mxu0 %v10777
    %10842 = vmatprep.subr.bf16.mxu0 0
    %10843 = vmatpush1.bf16.msra.mxu0 %v10778
    %10844 = vmatprep.subr.bf16.mxu0 0
    %10845 = vmatpush1.bf16.msra.mxu0 0
    %10846 = vmatprep.subr.bf16.mxu0 0
    %10847 = vmatpush1.bf16.msra.mxu0 0
    %10848 = vmatprep.subr.bf16.mxu0 0
    %10849 = vmatpush1.bf16.msra.mxu0 0
    %10850 = vmatprep.subr.bf16.mxu0 0
    %10851 = vmatpush1.bf16.msra.mxu0 0
    %10852 = vmatprep.subr.bf16.mxu0 0
    %10853 = vmatpush1.bf16.msra.mxu0 0
    %10854 = vmatprep.subr.bf16.mxu0 0
    %10855 = vmatpush1.bf16.msra.mxu0 0
    %10856 = vmatprep.subr.bf16.mxu0 0
    %10857 = vmatpush1.bf16.msra.mxu0 0
    %10858 = vmatprep.subr.bf16.mxu0 0
    %10859 = vmatpush1.bf16.msra.mxu0 0
    %10860 = vmatprep.subr.bf16.mxu0 0
    %10861 = vmatpush1.bf16.msra.mxu0 0
    %10862 = vmatprep.subr.bf16.mxu0 0
    %10863 = vmatpush1.bf16.msra.mxu0 0
    %10864 = vmatprep.subr.bf16.mxu0 0
    %10865 = vmatpush1.bf16.msra.mxu0 0
    %10866 = vmatprep.subr.bf16.mxu0 0
    %10867 = vmatpush1.bf16.msra.mxu0 0
    %10868 = vmatprep.subr.bf16.mxu0 0
    %10869 = vmatpush1.bf16.msra.mxu0 0
    %10870 = vmatprep.subr.bf16.mxu0 0
    %10871 = vmatpush1.bf16.msra.mxu0 0
    %10872 = vmatprep.mubr.bf16.mxu0 0
    %10873 = vmatmul.mubr.bf16.gmra.mrb[0].mxu0 %v10798
    %v10874 = vpop.f32.mrb[0].mxu0
    %v10875 = vadd.f32 %v10835, %v10874
    %v10876 = vpop.f32.mrb[0].mxu0
    %v10877 = vpop.f32.mrb[0].mxu0
    %v10878 = vpop.f32.mrb[0].mxu0
    %10879 = vdwg.mxu0
    %v10880 = vadd.f32 %v10640, %v10875
    %v10881 = vld [vmem:[%s8] sm:$0x1]
    %v10883 = vlaneseq
    %v10884 = vshrl.u32 %v10883, 7
    %v10885 = vsub.s32 0, %v10884
    %v10886 = vrot.slane %v10881, %v10885
    %v10888 = vadd.f32 %v10880, %v10886
    %vm10889 = vcmp.ge.f32.partialorder %v10888, 0.0
    %v10890 = vmul.f32 %v10888, 0.01
    %v10891 = vsel %vm10889, %v10888, %v10890
    %v10892 = vpack.c.bf16 %v10891, %v10891
    %v10893 = vld [vmem:[%s9] sm:$0xf]
    %v10894 = vld [vmem:[%s9 + $0x4] sm:$0xf]
    %v10895 = vld [vmem:[%s9 + $0x8] sm:$0xf]
    %v10896 = vld [vmem:[%s9 + $0xc] sm:$0xf]
    %v10897 = vld [vmem:[%s9 + $0x10] sm:$0xf]
    %v10898 = vld [vmem:[%s9 + $0x14] sm:$0xf]
    %v10899 = vld [vmem:[%s9 + $0x18] sm:$0xf]
    %v10900 = vld [vmem:[%s9 + $0x1c] sm:$0xf]
    %v10901 = vld [vmem:[%s9 + $0x20] sm:$0xf]
    %v10902 = vld [vmem:[%s9 + $0x24] sm:$0xf]
    %v10903 = vld [vmem:[%s9 + $0x28] sm:$0xf]
    %v10904 = vld [vmem:[%s9 + $0x2c] sm:$0xf]
    %v10905 = vld [vmem:[%s9 + $0x30] sm:$0xf]
    %v10906 = vld [vmem:[%s9 + $0x34] sm:$0xf]
    %v10907 = vld [vmem:[%s9 + $0x38] sm:$0xf]
    %v10908 = vld [vmem:[%s9 + $0x3c] sm:$0xf]
    %v10909 = vld [vmem:[%s10] sm:$0x1]
    %v10911 = vlaneseq
    %v10912 = vshrl.u32 %v10911, 7
    %v10913 = vsub.s32 0, %v10912
    %v10914 = vrot.slane %v10909, %v10913
    %v10932 = vunpack.c.l.b16 %v10893
    %v10933 = vunpack.c.l.b16 %v10894
    %v10934 = vunpack.c.l.b16 %v10895
    %v10935 = vunpack.c.l.b16 %v10896
    %v10936 = vunpack.c.l.b16 %v10897
    %v10937 = vunpack.c.l.b16 %v10898
    %v10938 = vunpack.c.l.b16 %v10899
    %v10939 = vunpack.c.l.b16 %v10900
    %v10940 = vunpack.c.l.b16 %v10901
    %v10941 = vunpack.c.l.b16 %v10902
    %v10942 = vunpack.c.l.b16 %v10903
    %v10943 = vunpack.c.l.b16 %v10904
    %v10944 = vunpack.c.l.b16 %v10905
    %v10945 = vunpack.c.l.b16 %v10906
    %v10946 = vunpack.c.l.b16 %v10907
    %v10947 = vunpack.c.l.b16 %v10908
    %v10948 = vpack.c.b16 %v10933, %v10932
    %v10949 = vpack.c.b16 %v10935, %v10934
    %v10950 = vpack.c.b16 %v10937, %v10936
    %v10951 = vpack.c.b16 %v10939, %v10938
    %v10952 = vpack.c.b16 %v10941, %v10940
    %v10953 = vpack.c.b16 %v10943, %v10942
    %v10954 = vpack.c.b16 %v10945, %v10944
    %v10955 = vpack.c.b16 %v10947, %v10946
    %10964 = vmatprep.subr.bf16.mxu0 0
    %10965 = vmatpush1.bf16.msra.mxu0 %v10948
    %10966 = vmatprep.subr.bf16.mxu0 0
    %10967 = vmatpush1.bf16.msra.mxu0 %v10949
    %10968 = vmatprep.subr.bf16.mxu0 0
    %10969 = vmatpush1.bf16.msra.mxu0 %v10950
    %10970 = vmatprep.subr.bf16.mxu0 0
    %10971 = vmatpush1.bf16.msra.mxu0 %v10951
    %10972 = vmatprep.subr.bf16.mxu0 0
    %10973 = vmatpush1.bf16.msra.mxu0 %v10952
    %10974 = vmatprep.subr.bf16.mxu0 0
    %10975 = vmatpush1.bf16.msra.mxu0 %v10953
    %10976 = vmatprep.subr.bf16.mxu0 0
    %10977 = vmatpush1.bf16.msra.mxu0 %v10954
    %10978 = vmatprep.subr.bf16.mxu0 0
    %10979 = vmatpush1.bf16.msra.mxu0 %v10955
    %10980 = vmatprep.subr.bf16.mxu0 0
    %10981 = vmatpush1.bf16.msra.mxu0 0
    %10982 = vmatprep.subr.bf16.mxu0 0
    %10983 = vmatpush1.bf16.msra.mxu0 0
    %10984 = vmatprep.subr.bf16.mxu0 0
    %10985 = vmatpush1.bf16.msra.mxu0 0
    %10986 = vmatprep.subr.bf16.mxu0 0
    %10987 = vmatpush1.bf16.msra.mxu0 0
    %10988 = vmatprep.subr.bf16.mxu0 0
    %10989 = vmatpush1.bf16.msra.mxu0 0
    %10990 = vmatprep.subr.bf16.mxu0 0
    %10991 = vmatpush1.bf16.msra.mxu0 0
    %10992 = vmatprep.subr.bf16.mxu0 0
    %10993 = vmatpush1.bf16.msra.mxu0 0
    %10994 = vmatprep.subr.bf16.mxu0 0
    %10995 = vmatpush1.bf16.msra.mxu0 0
    %10996 = vmatprep.mubr.bf16.mxu0 0
    %10997 = vmatmul.mubr.bf16.gmra.mrb[0].mxu0 %v10892
    %v10998 = vpop.f32.mrb[0].mxu0
    %v10999 = vadd.f32 %v10914, %v10998
    %v11000 = vpop.f32.mrb[0].mxu0
    %v11001 = vpop.f32.mrb[0].mxu0
    %v11002 = vpop.f32.mrb[0].mxu0
    %11003 = vdwg.mxu0
    %11004 = vst [vmem:[#allocation4] sm:$0x3] %v10999
    // Predicated region
    $region46: #{bird_dqn_forward.1} parent=1 // pred_check
      _
    $region47: #{bird_dqn_forward.1} parent=1 // pred_check_branch
      %11006 = sbr.rel (0) target = $region49
    $region48: #{bird_dqn_forward.1} parent=1 // pred_region
      %s11008 = ssub.s32 32, 32
      %11009 = vsyncadd [#allocation5], %s11008
      %s11011 = sshll.u32 [#allocation4], 4
      %s11012 = int_to_ptr.vmem [resolvable:$true] %s11011
      %11014 = dma.vmem_to_hbm [thread:$0]  %s11012, 32, %s11, [#allocation5]
    $region49: #{bird_dqn_forward.1} parent=1 // pred_fallthru
      _
    // Predicated region
    $region50: #{bird_dqn_forward.1} parent=1 // pred_check
      _
    $region51: #{bird_dqn_forward.1} parent=1 // pred_check_branch
      %11016 = sbr.rel (0) target = $region53
    $region52: #{bird_dqn_forward.1} parent=1 // pred_region
      %11017 = dma.done [#allocation5], 32
    $region53: #{bird_dqn_forward.1} parent=1 // pred_fallthru
      _
    %11018 = vsyncpa [#allocation5], 1

</llo_original>
